<compile_context>
chip_gen: v5e
topology: v5e:2x2
jax: 0.10.0
libtpu: 0.0.40
codegen_flags: <defaults>
</compile_context>

<pallas_src>
import functools

import jax
import jax.numpy as jnp
from jax import lax
from jax.experimental import pallas as pl
from jax.experimental.pallas import tpu as pltpu


# ---------------------------------------------------------------------------
# Fused kernel (one grid step == one batch element).
# ---------------------------------------------------------------------------
def _pool_cross_kernel(x_ref, wp12_ref, bp12_ref, wpc_ref, bmid_ref,
                       wc1_ref, wc2t_ref, bc2_ref,
                       o_ref, xpad_s, ppad_s, *, H, W, dim, mid, S):
    f32 = jnp.float32
    bf16 = jnp.bfloat16

    def taps(pad_ref, dy, h0, size, cin):
        # (size*W, 3*cin) im2col-over-W slab for kernel row dy -> one K=3*cin matmul.
        rows = pad_ref[dy + h0:dy + h0 + size, :, :]                 # (size, W+2, cin)
        t = jnp.concatenate(
            [rows[:, 0:W, :], rows[:, 1:W + 1, :], rows[:, 2:W + 2, :]], axis=-1)
        return t.reshape(size * W, 3 * cin).astype(bf16)

    # ---- stage 0: zero ONLY the 1-px halo borders (cheap, every grid step so it is
    #      correct under megacore grid sharding); stash x into the interior.
    x_hwc = x_ref[0]                                                 # (H, W, dim) f32
    xpad_s[0:1, :, :] = jnp.zeros((1, W + 2, dim), f32)
    xpad_s[H + 1:H + 2, :, :] = jnp.zeros((1, W + 2, dim), f32)
    xpad_s[:, 0:1, :] = jnp.zeros((H + 2, 1, dim), f32)
    xpad_s[:, W + 1:W + 2, :] = jnp.zeros((H + 2, 1, dim), f32)
    xpad_s[1:H + 1, 1:W + 1, :] = x_hwc

    ppad_s[0:1, :, :] = jnp.zeros((1, W + 2, mid), f32)
    ppad_s[H + 1:H + 2, :, :] = jnp.zeros((1, W + 2, mid), f32)
    ppad_s[:, 0:1, :] = jnp.zeros((H + 2, 1, mid), f32)
    ppad_s[:, W + 1:W + 2, :] = jnp.zeros((H + 2, 1, mid), f32)

    # hoisted operand loads (BN scale already folded into bf16 weights)
    w_p12 = wp12_ref[...]      # (3, 3*dim, 2*mid)  p1/p2 branch convs fused along N
    b_p12 = bp12_ref[...]      # (1, 2*mid)
    w_pc = wpc_ref[...]        # (3, 3*mid, dim)
    b_mid = bmid_ref[...]      # (1, dim)  == bias(p_bn1) + bias(bn1), folded in wrapper
    w_c1 = wc1_ref[...]        # (dim, dim)
    w_c2t = wc2t_ref[...]      # (3, dim, 3*dim)
    b_c2 = bc2_ref[...]        # (dim, 1)

    # ---- stage 1: p1/p2 = ReLU(BN(conv3x3(x))) via a single fused N=2*mid matmul
    #      per tap row (fills the 256-wide MXU), reduced on the fly to
    #      colmax (max over H per column) and rowmax (max over W per row);
    #      the big (H, W, 128) intermediates are never materialized.
    colmax = None
    row_parts = []
    for h0 in range(0, H, S):
        acc = jnp.zeros((S * W, 2 * mid), f32)
        for dy in range(3):
            t = taps(xpad_s, dy, h0, S, dim)                         # (S*W, 3*dim)
            acc = acc + jnp.dot(t, w_p12[dy], preferred_element_type=f32)
        p12 = jnp.maximum(acc + b_p12, 0.0).reshape(S, W, 2 * mid)   # ReLU output >= 0
        p1 = p12[:, :, :mid]
        p2 = p12[:, :, mid:]
        cm = jnp.max(p1, axis=0)                                     # (W, mid)
        colmax = cm if colmax is None else jnp.maximum(colmax, cm)
        row_parts.append(jnp.max(p2, axis=1))                        # (S, mid)
    rowmax = row_parts[0] if len(row_parts) == 1 else jnp.concatenate(row_parts, axis=0)

    # ---- stage 2: pooled = pool3(pool1(p1)) + pool4(pool2(p2)) = colmax + rowmax,
    #      written into the zero-haloed VMEM scratch for the next 3x3 conv.
    ppad_s[1:H + 1, 1:W + 1, :] = colmax[None, :, :] + rowmax[:, None, :]

    # ---- stage 3: relu1 = ReLU(BN(conv3x3(pooled)) + BN(conv1x1(x))),
    #      written back into xpad_s (halo stays zero for stage 4).
    for h0 in range(0, H, S):
        accp = jnp.zeros((S * W, dim), f32)
        for dy in range(3):
            t = taps(ppad_s, dy, h0, S, mid)                         # (S*W, 3*mid)
            accp = accp + jnp.dot(t, w_pc[dy], preferred_element_type=f32)
        xs = x_hwc[h0:h0 + S].reshape(S * W, dim).astype(bf16)
        accp = accp + jnp.dot(xs, w_c1, preferred_element_type=f32)  # 1x1 conv
        relu1 = jnp.maximum(accp + b_mid, 0.0)
        xpad_s[h0 + 1:h0 + 1 + S, 1:W + 1, :] = relu1.reshape(S, W, dim)

    # ---- stage 4: out = ReLU(BN(conv3x3(relu1))), produced channels-major
    #      (dim, S*W) via transpose-RHS matmuls so the HBM store is lane-dense.
    for h0 in range(0, H, S):
        acco = jnp.zeros((dim, S * W), f32)
        for dy in range(3):
            t = taps(xpad_s, dy, h0, S, dim)                         # (S*W, 3*dim)
            acco = acco + lax.dot_general(
                w_c2t[dy], t, (((1,), (1,)), ((), ())),
                preferred_element_type=f32)                          # (dim, S*W)
        o_strip = jnp.maximum(acco + b_c2, 0.0)                      # b_c2: (dim, 1)
        o_ref[0, :, h0 * W:(h0 + S) * W] = o_strip.astype(o_ref.dtype)


# ---------------------------------------------------------------------------
# Wrapper: BN fold, weight fuse/reshape/cast, layout plumbing, pallas_call.
# ---------------------------------------------------------------------------
def _row_strip(H, W, target_rows=128):
    s = 1
    for cand in range(1, H + 1):
        if H % cand == 0 and cand * W <= target_rows:
            s = cand
    return s


def _prep_operands(params, dim, mid):
    """Fold eval-mode BN scale into the (bias-free) conv weights, reshape 3x3 kernels
    to (3, 3*Cin, Cout) matmul form, fuse the two dim->mid branch convs along the
    output dim, fold the p_bn1/bn1 biases together, cast weights to bf16 for the MXU."""
    def fold3x3(w, sb):
        s, b = sb
        co = w.shape[-1]
        wf = (w * s.reshape(1, 1, 1, co)).reshape(3, 3 * w.shape[2], co)
        return wf.astype(jnp.bfloat16), b.reshape(1, co).astype(jnp.float32)

    wp1, bp1 = fold3x3(params["w_p1"], params["sb_p1"])
    wp2, bp2 = fold3x3(params["w_p2"], params["sb_p2"])
    wp12 = jnp.concatenate([wp1, wp2], axis=-1)           # (3, 3*dim, 2*mid)
    bp12 = jnp.concatenate([bp1, bp2], axis=-1)           # (1, 2*mid)

    wpc, bpc = fold3x3(params["w_pc"], params["sb_pbn1"])
    s1, b1 = params["sb_bn1"]
    wc1 = (params["w_c1"] * s1.reshape(1, dim)).astype(jnp.bfloat16)
    bmid = (bpc + b1.reshape(1, dim)).astype(jnp.float32)  # bias(p_bn1) + bias(bn1)

    wc2, bc2 = fold3x3(params["w_c2"], params["sb_c2"])
    wc2t = jnp.transpose(wc2, (0, 2, 1))                   # (3, dim, 3*dim)
    bc2 = bc2.reshape(dim, 1)
    return wp12, bp12, wpc, bmid, wc1, wc2t, bc2


def pool_cross_forward(x_nchw, params):
    N, dim, H, W = x_nchw.shape
    mid = params["w_p1"].shape[-1]
    S = _row_strip(H, W)
    x_nhwc = jnp.transpose(x_nchw, (0, 2, 3, 1))
    wp12, bp12, wpc, bmid, wc1, wc2t, bc2 = _prep_operands(params, dim, mid)

    kernel = functools.partial(_pool_cross_kernel, H=H, W=W, dim=dim, mid=mid, S=S)
    out = pl.pallas_call(
        kernel,
        out_shape=jax.ShapeDtypeStruct((N, dim, H * W), x_nchw.dtype),
        grid_spec=pltpu.PrefetchScalarGridSpec(
            num_scalar_prefetch=0,
            grid=(N,),
            in_specs=[
                pl.BlockSpec((1, H, W, dim), lambda n: (n, 0, 0, 0)),       # x
                pl.BlockSpec((3, 3 * dim, 2 * mid), lambda n: (0, 0, 0)),   # w_p1|w_p2 fused
                pl.BlockSpec((1, 2 * mid), lambda n: (0, 0)),               # b_p1|b_p2
                pl.BlockSpec((3, 3 * mid, dim), lambda n: (0, 0, 0)),       # w_pc
                pl.BlockSpec((1, dim), lambda n: (0, 0)),                   # b_pbn1 + b_bn1
                pl.BlockSpec((dim, dim), lambda n: (0, 0)),                 # w_c1
                pl.BlockSpec((3, dim, 3 * dim), lambda n: (0, 0, 0)),       # w_c2 (transposed)
                pl.BlockSpec((dim, 1), lambda n: (0, 0)),                   # b_c2
            ],
            out_specs=pl.BlockSpec((1, dim, H * W), lambda n: (n, 0, 0)),   # lane-dense output
            scratch_shapes=[
                pltpu.VMEM((H + 2, W + 2, dim), jnp.float32),   # padded x, reused for relu1
                pltpu.VMEM((H + 2, W + 2, mid), jnp.float32),   # padded pooled
            ],
        ),
        compiler_params=pltpu.CompilerParams(dimension_semantics=("parallel",)),
    )(x_nhwc, wp12, bp12, wpc, bmid, wc1, wc2t, bc2)
    return out.reshape(N, dim, H, W)


# ---------------------------------------------------------------------------
# Deterministic synthetic parameters (eval-mode BN folded to scale/bias).
# ---------------------------------------------------------------------------
def _bn_fold(gamma, beta, mean, var, eps=1e-5):
    scale = gamma / jnp.sqrt(var + eps)
    bias = beta - mean * scale
    return scale.astype(jnp.float32), bias.astype(jnp.float32)


def _make_bn(key, c):
    k1, k2, k3, k4 = jax.random.split(key, 4)
    gamma = 1.0 + 0.1 * jax.random.normal(k1, (c,), jnp.float32)
    beta = 0.1 * jax.random.normal(k2, (c,), jnp.float32)
    mean = 0.1 * jax.random.normal(k3, (c,), jnp.float32)
    var = 1.0 + 0.1 * jnp.abs(jax.random.normal(k4, (c,), jnp.float32))
    return _bn_fold(gamma, beta, mean, var)


def init_params(key, dim, mid=128):
    ks = jax.random.split(key, 10)
    w = lambda k, shape: 0.05 * jax.random.normal(k, shape, jnp.float32)
    return {
        "w_p1": w(ks[0], (3, 3, dim, mid)),  "sb_p1": _make_bn(ks[1], mid),
        "w_p2": w(ks[2], (3, 3, dim, mid)),  "sb_p2": _make_bn(ks[3], mid),
        "w_pc": w(ks[4], (3, 3, mid, dim)),  "sb_pbn1": _make_bn(ks[5], dim),
        "w_c1": w(ks[6], (dim, dim)),        "sb_bn1": _make_bn(ks[7], dim),
        "w_c2": w(ks[8], (3, 3, dim, dim)),  "sb_c2": _make_bn(ks[9], dim),
    }


# ---------------------------------------------------------------------------
# Pure-JAX reference (loose sanity check; kernel uses bf16 weights).
# ---------------------------------------------------------------------------
def _reference(x_nchw, params):
    def conv(x, w):
        return lax.conv_general_dilated(
            x, w, window_strides=(1, 1), padding="SAME",
            dimension_numbers=("NCHW", "HWIO", "NCHW"))

    def bn(y, sb):
        s, b = sb
        return y * s.reshape(1, -1, 1, 1) + b.reshape(1, -1, 1, 1)

    dim = x_nchw.shape[1]
    p1 = jax.nn.relu(bn(conv(x_nchw, params["w_p1"]), params["sb_p1"]))
    p2 = jax.nn.relu(bn(conv(x_nchw, params["w_p2"]), params["sb_p2"]))
    pooled = jnp.max(p1, axis=2, keepdims=True) + jnp.max(p2, axis=3, keepdims=True)
    p_bn1 = bn(conv(pooled, params["w_pc"]), params["sb_pbn1"])
    bn1 = bn(conv(x_nchw, params["w_c1"].reshape(1, 1, dim, dim)), params["sb_bn1"])
    relu1 = jax.nn.relu(p_bn1 + bn1)
    return jax.nn.relu(bn(conv(relu1, params["w_c2"]), params["sb_c2"]))


if __name__ == "__main__":
    N, dim, H, W = 2, 4, 16, 16
    key = jax.random.PRNGKey(0)
    kx, kp = jax.random.split(key)
    x = jax.random.normal(kx, (N, dim, H, W), jnp.float32)   # NCHW like the PyTorch module
    params = init_params(kp, dim)

    fwd = jax.jit(pool_cross_forward)
    out = fwd(x, params)
    jax.block_until_ready(out)

    assert out.shape == (N, dim, H, W)
    ref = _reference(x, params)
    assert bool(jnp.isfinite(out).all())
    assert bool(jnp.allclose(out, ref, rtol=0.1, atol=0.1)), "mismatch vs. pure-JAX reference"
    print("KERNEL_OK")
</pallas_src>

<mosaic_0001>
module attributes {stable_mosaic.version = 11 : i64} {
  func.func @_pool_cross_kernel(%arg0: i32, %arg1: memref<1x16x16x4xf32, #tpu.memory_space<vmem>>, %arg2: memref<3x12x256xbf16, #tpu.memory_space<vmem>>, %arg3: memref<1x256xf32, #tpu.memory_space<vmem>>, %arg4: memref<3x384x4xbf16, #tpu.memory_space<vmem>>, %arg5: memref<1x4xf32, #tpu.memory_space<vmem>>, %arg6: memref<4x4xbf16, #tpu.memory_space<vmem>>, %arg7: memref<3x4x12xbf16, #tpu.memory_space<vmem>>, %arg8: memref<4x1xf32, #tpu.memory_space<vmem>>, %arg9: memref<1x4x256xf32, #tpu.memory_space<vmem>>, %arg10: memref<18x18x4xf32, #tpu.memory_space<vmem>>, %arg11: memref<18x18x128xf32, #tpu.memory_space<vmem>>) attributes {dimension_semantics = [#tpu.dimension_semantics<parallel>], iteration_bounds = array<i64: 2>, scalar_prefetch = 0 : i64, scratch_operands = 2 : i64, tpu.core_type = #tpu.core_type<tc>, window_params = [{transform_indices = @transform_0, window_bounds = array<i64: 1, 16, 16, 4>}, {pipeline_mode = #tpu.pipeline_mode<synchronous>, transform_indices = @transform_1, window_bounds = array<i64: 3, 12, 256>}, {pipeline_mode = #tpu.pipeline_mode<synchronous>, transform_indices = @transform_2, window_bounds = array<i64: 1, 256>}, {pipeline_mode = #tpu.pipeline_mode<synchronous>, transform_indices = @transform_3, window_bounds = array<i64: 3, 384, 4>}, {pipeline_mode = #tpu.pipeline_mode<synchronous>, transform_indices = @transform_4, window_bounds = array<i64: 1, 4>}, {pipeline_mode = #tpu.pipeline_mode<synchronous>, transform_indices = @transform_5, window_bounds = array<i64: 4, 4>}, {pipeline_mode = #tpu.pipeline_mode<synchronous>, transform_indices = @transform_6, window_bounds = array<i64: 3, 4, 12>}, {pipeline_mode = #tpu.pipeline_mode<synchronous>, transform_indices = @transform_7, window_bounds = array<i64: 4, 1>}, {transform_indices = @transform_8, window_bounds = array<i64: 1, 4, 256>}]} {
    %c0 = arith.constant 0 : index
    %c0_0 = arith.constant 0 : index
    %c0_1 = arith.constant 0 : index
    %c0_2 = arith.constant 0 : index
    %0 = vector.load %arg1[%c0, %c0_0, %c0_1, %c0_2] : memref<1x16x16x4xf32, #tpu.memory_space<vmem>>, vector<1x16x16x4xf32>
    %1 = vector.shape_cast %0 : vector<1x16x16x4xf32> to vector<16x16x4xf32>
    %cst = arith.constant 0.000000e+00 : f32
    %2 = vector.broadcast %cst : f32 to vector<1x18x4xf32>
    %c0_3 = arith.constant 0 : index
    %c0_4 = arith.constant 0 : index
    %c0_5 = arith.constant 0 : index
    %3 = vector.load %arg10[%c0_3, %c0_4, %c0_5] : memref<18x18x4xf32, #tpu.memory_space<vmem>>, vector<1x18x4xf32>
    tpu.vector_store %arg10[%c0_3, %c0_4, %c0_5], %2 {strides = array<i32>} : memref<18x18x4xf32, #tpu.memory_space<vmem>>, vector<1x18x4xf32>,
    %cst_6 = arith.constant 0.000000e+00 : f32
    %4 = vector.broadcast %cst_6 : f32 to vector<1x18x4xf32>
    %c17 = arith.constant 17 : index
    %c0_7 = arith.constant 0 : index
    %c0_8 = arith.constant 0 : index
    %5 = vector.load %arg10[%c17, %c0_7, %c0_8] : memref<18x18x4xf32, #tpu.memory_space<vmem>>, vector<1x18x4xf32>
    tpu.vector_store %arg10[%c17, %c0_7, %c0_8], %4 {strides = array<i32>} : memref<18x18x4xf32, #tpu.memory_space<vmem>>, vector<1x18x4xf32>,
    %cst_9 = arith.constant 0.000000e+00 : f32
    %6 = vector.broadcast %cst_9 : f32 to vector<18x1x4xf32>
    %c0_10 = arith.constant 0 : index
    %c0_11 = arith.constant 0 : index
    %c0_12 = arith.constant 0 : index
    %7 = vector.load %arg10[%c0_10, %c0_11, %c0_12] : memref<18x18x4xf32, #tpu.memory_space<vmem>>, vector<18x1x4xf32>
    tpu.vector_store %arg10[%c0_10, %c0_11, %c0_12], %6 {strides = array<i32>} : memref<18x18x4xf32, #tpu.memory_space<vmem>>, vector<18x1x4xf32>,
    %cst_13 = arith.constant 0.000000e+00 : f32
    %8 = vector.broadcast %cst_13 : f32 to vector<18x1x4xf32>
    %c0_14 = arith.constant 0 : index
    %c17_15 = arith.constant 17 : index
    %c0_16 = arith.constant 0 : index
    %9 = vector.load %arg10[%c0_14, %c17_15, %c0_16] : memref<18x18x4xf32, #tpu.memory_space<vmem>>, vector<18x1x4xf32>
    tpu.vector_store %arg10[%c0_14, %c17_15, %c0_16], %8 {strides = array<i32>} : memref<18x18x4xf32, #tpu.memory_space<vmem>>, vector<18x1x4xf32>,
    %c1 = arith.constant 1 : index
    %c1_17 = arith.constant 1 : index
    %c0_18 = arith.constant 0 : index
    %10 = vector.load %arg10[%c1, %c1_17, %c0_18] : memref<18x18x4xf32, #tpu.memory_space<vmem>>, vector<16x16x4xf32>
    tpu.vector_store %arg10[%c1, %c1_17, %c0_18], %1 {strides = array<i32>} : memref<18x18x4xf32, #tpu.memory_space<vmem>>, vector<16x16x4xf32>,
    %cst_19 = arith.constant 0.000000e+00 : f32
    %11 = vector.broadcast %cst_19 : f32 to vector<1x18x128xf32>
    %c0_20 = arith.constant 0 : index
    %c0_21 = arith.constant 0 : index
    %c0_22 = arith.constant 0 : index
    %12 = vector.load %arg11[%c0_20, %c0_21, %c0_22] : memref<18x18x128xf32, #tpu.memory_space<vmem>>, vector<1x18x128xf32>
    tpu.vector_store %arg11[%c0_20, %c0_21, %c0_22], %11 {strides = array<i32>} : memref<18x18x128xf32, #tpu.memory_space<vmem>>, vector<1x18x128xf32>,
    %cst_23 = arith.constant 0.000000e+00 : f32
    %13 = vector.broadcast %cst_23 : f32 to vector<1x18x128xf32>
    %c17_24 = arith.constant 17 : index
    %c0_25 = arith.constant 0 : index
    %c0_26 = arith.constant 0 : index
    %14 = vector.load %arg11[%c17_24, %c0_25, %c0_26] : memref<18x18x128xf32, #tpu.memory_space<vmem>>, vector<1x18x128xf32>
    tpu.vector_store %arg11[%c17_24, %c0_25, %c0_26], %13 {strides = array<i32>} : memref<18x18x128xf32, #tpu.memory_space<vmem>>, vector<1x18x128xf32>,
    %cst_27 = arith.constant 0.000000e+00 : f32
    %15 = vector.broadcast %cst_27 : f32 to vector<18x1x128xf32>
    %c0_28 = arith.constant 0 : index
    %c0_29 = arith.constant 0 : index
    %c0_30 = arith.constant 0 : index
    %16 = vector.load %arg11[%c0_28, %c0_29, %c0_30] : memref<18x18x128xf32, #tpu.memory_space<vmem>>, vector<18x1x128xf32>
    tpu.vector_store %arg11[%c0_28, %c0_29, %c0_30], %15 {strides = array<i32>} : memref<18x18x128xf32, #tpu.memory_space<vmem>>, vector<18x1x128xf32>,
    %cst_31 = arith.constant 0.000000e+00 : f32
    %17 = vector.broadcast %cst_31 : f32 to vector<18x1x128xf32>
    %c0_32 = arith.constant 0 : index
    %c17_33 = arith.constant 17 : index
    %c0_34 = arith.constant 0 : index
    %18 = vector.load %arg11[%c0_32, %c17_33, %c0_34] : memref<18x18x128xf32, #tpu.memory_space<vmem>>, vector<18x1x128xf32>
    tpu.vector_store %arg11[%c0_32, %c17_33, %c0_34], %17 {strides = array<i32>} : memref<18x18x128xf32, #tpu.memory_space<vmem>>, vector<18x1x128xf32>,
    %c0_35 = arith.constant 0 : index
    %c0_36 = arith.constant 0 : index
    %c0_37 = arith.constant 0 : index
    %19 = vector.load %arg2[%c0_35, %c0_36, %c0_37] : memref<3x12x256xbf16, #tpu.memory_space<vmem>>, vector<3x12x256xbf16>
    %c0_38 = arith.constant 0 : index
    %c0_39 = arith.constant 0 : index
    %20 = vector.load %arg3[%c0_38, %c0_39] : memref<1x256xf32, #tpu.memory_space<vmem>>, vector<1x256xf32>
    %c0_40 = arith.constant 0 : index
    %c0_41 = arith.constant 0 : index
    %c0_42 = arith.constant 0 : index
    %21 = vector.load %arg4[%c0_40, %c0_41, %c0_42] : memref<3x384x4xbf16, #tpu.memory_space<vmem>>, vector<3x384x4xbf16>
    %c0_43 = arith.constant 0 : index
    %c0_44 = arith.constant 0 : index
    %22 = vector.load %arg5[%c0_43, %c0_44] : memref<1x4xf32, #tpu.memory_space<vmem>>, vector<1x4xf32>
    %c0_45 = arith.constant 0 : index
    %c0_46 = arith.constant 0 : index
    %23 = vector.load %arg6[%c0_45, %c0_46] : memref<4x4xbf16, #tpu.memory_space<vmem>>, vector<4x4xbf16>
    %c0_47 = arith.constant 0 : index
    %c0_48 = arith.constant 0 : index
    %c0_49 = arith.constant 0 : index
    %24 = vector.load %arg7[%c0_47, %c0_48, %c0_49] : memref<3x4x12xbf16, #tpu.memory_space<vmem>>, vector<3x4x12xbf16>
    %c0_50 = arith.constant 0 : index
    %c0_51 = arith.constant 0 : index
    %25 = vector.load %arg8[%c0_50, %c0_51] : memref<4x1xf32, #tpu.memory_space<vmem>>, vector<4x1xf32>
    %cst_52 = arith.constant 0.000000e+00 : f32
    %26 = vector.broadcast %cst_52 : f32 to vector<128x256xf32>
    %c0_53 = arith.constant 0 : index
    %c0_54 = arith.constant 0 : index
    %c0_55 = arith.constant 0 : index
    %27 = vector.load %arg10[%c0_53, %c0_54, %c0_55] : memref<18x18x4xf32, #tpu.memory_space<vmem>>, vector<8x18x4xf32>
    %28 = vector.extract_strided_slice %27 {offsets = [0, 0, 0], sizes = [8, 16, 4], strides = [1, 1, 1]} : vector<8x18x4xf32> to vector<8x16x4xf32>
    %29 = vector.extract_strided_slice %27 {offsets = [0, 1, 0], sizes = [8, 16, 4], strides = [1, 1, 1]} : vector<8x18x4xf32> to vector<8x16x4xf32>
    %30 = vector.extract_strided_slice %27 {offsets = [0, 2, 0], sizes = [8, 16, 4], strides = [1, 1, 1]} : vector<8x18x4xf32> to vector<8x16x4xf32>
    %31 = tpu.concatenate %28, %29, %30 in 2 : vector<8x16x4xf32>, vector<8x16x4xf32>, vector<8x16x4xf32> -> vector<8x16x12xf32>
    %32 = vector.shape_cast %31 : vector<8x16x12xf32> to vector<128x12xf32>
    %33 = arith.truncf %32 : vector<128x12xf32> to vector<128x12xbf16>
    %34 = vector.extract_strided_slice %19 {offsets = [0, 0, 0], sizes = [1, 12, 256], strides = [1, 1, 1]} : vector<3x12x256xbf16> to vector<1x12x256xbf16>
    %35 = vector.shape_cast %34 : vector<1x12x256xbf16> to vector<12x256xbf16>
    %cst_56 = arith.constant dense<0.000000e+00> : vector<128x256xf32>
    %36 = tpu.matmul %33, %35, %cst_56 {dimension_numbers = #tpu.dot_dimension_numbers<[1], [0], [0], [1], [0, 0, 1, 1], [], []>} : vector<128x12xbf16>, vector<12x256xbf16>, vector<128x256xf32> -> vector<128x256xf32>
    %37 = arith.addf %26, %36 : vector<128x256xf32>
    %c1_57 = arith.constant 1 : index
    %c0_58 = arith.constant 0 : index
    %c0_59 = arith.constant 0 : index
    %38 = vector.load %arg10[%c1_57, %c0_58, %c0_59] : memref<18x18x4xf32, #tpu.memory_space<vmem>>, vector<8x18x4xf32>
    %39 = vector.extract_strided_slice %38 {offsets = [0, 0, 0], sizes = [8, 16, 4], strides = [1, 1, 1]} : vector<8x18x4xf32> to vector<8x16x4xf32>
    %40 = vector.extract_strided_slice %38 {offsets = [0, 1, 0], sizes = [8, 16, 4], strides = [1, 1, 1]} : vector<8x18x4xf32> to vector<8x16x4xf32>
    %41 = vector.extract_strided_slice %38 {offsets = [0, 2, 0], sizes = [8, 16, 4], strides = [1, 1, 1]} : vector<8x18x4xf32> to vector<8x16x4xf32>
    %42 = tpu.concatenate %39, %40, %41 in 2 : vector<8x16x4xf32>, vector<8x16x4xf32>, vector<8x16x4xf32> -> vector<8x16x12xf32>
    %43 = vector.shape_cast %42 : vector<8x16x12xf32> to vector<128x12xf32>
    %44 = arith.truncf %43 : vector<128x12xf32> to vector<128x12xbf16>
    %45 = vector.extract_strided_slice %19 {offsets = [1, 0, 0], sizes = [1, 12, 256], strides = [1, 1, 1]} : vector<3x12x256xbf16> to vector<1x12x256xbf16>
    %46 = vector.shape_cast %45 : vector<1x12x256xbf16> to vector<12x256xbf16>
    %cst_60 = arith.constant dense<0.000000e+00> : vector<128x256xf32>
    %47 = tpu.matmul %44, %46, %cst_60 {dimension_numbers = #tpu.dot_dimension_numbers<[1], [0], [0], [1], [0, 0, 1, 1], [], []>} : vector<128x12xbf16>, vector<12x256xbf16>, vector<128x256xf32> -> vector<128x256xf32>
    %48 = arith.addf %37, %47 : vector<128x256xf32>
    %c2 = arith.constant 2 : index
    %c0_61 = arith.constant 0 : index
    %c0_62 = arith.constant 0 : index
    %49 = vector.load %arg10[%c2, %c0_61, %c0_62] : memref<18x18x4xf32, #tpu.memory_space<vmem>>, vector<8x18x4xf32>
    %50 = vector.extract_strided_slice %49 {offsets = [0, 0, 0], sizes = [8, 16, 4], strides = [1, 1, 1]} : vector<8x18x4xf32> to vector<8x16x4xf32>
    %51 = vector.extract_strided_slice %49 {offsets = [0, 1, 0], sizes = [8, 16, 4], strides = [1, 1, 1]} : vector<8x18x4xf32> to vector<8x16x4xf32>
    %52 = vector.extract_strided_slice %49 {offsets = [0, 2, 0], sizes = [8, 16, 4], strides = [1, 1, 1]} : vector<8x18x4xf32> to vector<8x16x4xf32>
    %53 = tpu.concatenate %50, %51, %52 in 2 : vector<8x16x4xf32>, vector<8x16x4xf32>, vector<8x16x4xf32> -> vector<8x16x12xf32>
    %54 = vector.shape_cast %53 : vector<8x16x12xf32> to vector<128x12xf32>
    %55 = arith.truncf %54 : vector<128x12xf32> to vector<128x12xbf16>
    %56 = vector.extract_strided_slice %19 {offsets = [2, 0, 0], sizes = [1, 12, 256], strides = [1, 1, 1]} : vector<3x12x256xbf16> to vector<1x12x256xbf16>
    %57 = vector.shape_cast %56 : vector<1x12x256xbf16> to vector<12x256xbf16>
    %cst_63 = arith.constant dense<0.000000e+00> : vector<128x256xf32>
    %58 = tpu.matmul %55, %57, %cst_63 {dimension_numbers = #tpu.dot_dimension_numbers<[1], [0], [0], [1], [0, 0, 1, 1], [], []>} : vector<128x12xbf16>, vector<12x256xbf16>, vector<128x256xf32> -> vector<128x256xf32>
    %59 = arith.addf %48, %58 : vector<128x256xf32>
    %60 = vector.broadcast %20 : vector<1x256xf32> to vector<128x256xf32>
    %61 = arith.addf %59, %60 : vector<128x256xf32>
    %cst_64 = arith.constant 0.000000e+00 : f32
    %62 = vector.broadcast %cst_64 : f32 to vector<128x256xf32>
    %63 = arith.maximumf %61, %62 : vector<128x256xf32>
    %64 = vector.shape_cast %63 : vector<128x256xf32> to vector<8x16x256xf32>
    %65 = vector.extract_strided_slice %64 {offsets = [0, 0, 0], sizes = [8, 16, 128], strides = [1, 1, 1]} : vector<8x16x256xf32> to vector<8x16x128xf32>
    %66 = vector.extract_strided_slice %64 {offsets = [0, 0, 128], sizes = [8, 16, 128], strides = [1, 1, 1]} : vector<8x16x256xf32> to vector<8x16x128xf32>
    %cst_65 = arith.constant dense<0xFF800000> : vector<16x128xf32>
    %67 = vector.multi_reduction <maximumf>, %65, %cst_65 [0] : vector<8x16x128xf32> to vector<16x128xf32>
    %cst_66 = arith.constant dense<0xFF800000> : vector<8x128xf32>
    %68 = vector.multi_reduction <maximumf>, %66, %cst_66 [1] : vector<8x16x128xf32> to vector<8x128xf32>
    %cst_67 = arith.constant 0.000000e+00 : f32
    %69 = vector.broadcast %cst_67 : f32 to vector<128x256xf32>
    %c8 = arith.constant 8 : index
    %c0_68 = arith.constant 0 : index
    %c0_69 = arith.constant 0 : index
    %70 = vector.load %arg10[%c8, %c0_68, %c0_69] : memref<18x18x4xf32, #tpu.memory_space<vmem>>, vector<8x18x4xf32>
    %71 = vector.extract_strided_slice %70 {offsets = [0, 0, 0], sizes = [8, 16, 4], strides = [1, 1, 1]} : vector<8x18x4xf32> to vector<8x16x4xf32>
    %72 = vector.extract_strided_slice %70 {offsets = [0, 1, 0], sizes = [8, 16, 4], strides = [1, 1, 1]} : vector<8x18x4xf32> to vector<8x16x4xf32>
    %73 = vector.extract_strided_slice %70 {offsets = [0, 2, 0], sizes = [8, 16, 4], strides = [1, 1, 1]} : vector<8x18x4xf32> to vector<8x16x4xf32>
    %74 = tpu.concatenate %71, %72, %73 in 2 : vector<8x16x4xf32>, vector<8x16x4xf32>, vector<8x16x4xf32> -> vector<8x16x12xf32>
    %75 = vector.shape_cast %74 : vector<8x16x12xf32> to vector<128x12xf32>
    %76 = arith.truncf %75 : vector<128x12xf32> to vector<128x12xbf16>
    %77 = vector.extract_strided_slice %19 {offsets = [0, 0, 0], sizes = [1, 12, 256], strides = [1, 1, 1]} : vector<3x12x256xbf16> to vector<1x12x256xbf16>
    %78 = vector.shape_cast %77 : vector<1x12x256xbf16> to vector<12x256xbf16>
    %cst_70 = arith.constant dense<0.000000e+00> : vector<128x256xf32>
    %79 = tpu.matmul %76, %78, %cst_70 {dimension_numbers = #tpu.dot_dimension_numbers<[1], [0], [0], [1], [0, 0, 1, 1], [], []>} : vector<128x12xbf16>, vector<12x256xbf16>, vector<128x256xf32> -> vector<128x256xf32>
    %80 = arith.addf %69, %79 : vector<128x256xf32>
    %c9 = arith.constant 9 : index
    %c0_71 = arith.constant 0 : index
    %c0_72 = arith.constant 0 : index
    %81 = vector.load %arg10[%c9, %c0_71, %c0_72] : memref<18x18x4xf32, #tpu.memory_space<vmem>>, vector<8x18x4xf32>
    %82 = vector.extract_strided_slice %81 {offsets = [0, 0, 0], sizes = [8, 16, 4], strides = [1, 1, 1]} : vector<8x18x4xf32> to vector<8x16x4xf32>
    %83 = vector.extract_strided_slice %81 {offsets = [0, 1, 0], sizes = [8, 16, 4], strides = [1, 1, 1]} : vector<8x18x4xf32> to vector<8x16x4xf32>
    %84 = vector.extract_strided_slice %81 {offsets = [0, 2, 0], sizes = [8, 16, 4], strides = [1, 1, 1]} : vector<8x18x4xf32> to vector<8x16x4xf32>
    %85 = tpu.concatenate %82, %83, %84 in 2 : vector<8x16x4xf32>, vector<8x16x4xf32>, vector<8x16x4xf32> -> vector<8x16x12xf32>
    %86 = vector.shape_cast %85 : vector<8x16x12xf32> to vector<128x12xf32>
    %87 = arith.truncf %86 : vector<128x12xf32> to vector<128x12xbf16>
    %88 = vector.extract_strided_slice %19 {offsets = [1, 0, 0], sizes = [1, 12, 256], strides = [1, 1, 1]} : vector<3x12x256xbf16> to vector<1x12x256xbf16>
    %89 = vector.shape_cast %88 : vector<1x12x256xbf16> to vector<12x256xbf16>
    %cst_73 = arith.constant dense<0.000000e+00> : vector<128x256xf32>
    %90 = tpu.matmul %87, %89, %cst_73 {dimension_numbers = #tpu.dot_dimension_numbers<[1], [0], [0], [1], [0, 0, 1, 1], [], []>} : vector<128x12xbf16>, vector<12x256xbf16>, vector<128x256xf32> -> vector<128x256xf32>
    %91 = arith.addf %80, %90 : vector<128x256xf32>
    %c10 = arith.constant 10 : index
    %c0_74 = arith.constant 0 : index
    %c0_75 = arith.constant 0 : index
    %92 = vector.load %arg10[%c10, %c0_74, %c0_75] : memref<18x18x4xf32, #tpu.memory_space<vmem>>, vector<8x18x4xf32>
    %93 = vector.extract_strided_slice %92 {offsets = [0, 0, 0], sizes = [8, 16, 4], strides = [1, 1, 1]} : vector<8x18x4xf32> to vector<8x16x4xf32>
    %94 = vector.extract_strided_slice %92 {offsets = [0, 1, 0], sizes = [8, 16, 4], strides = [1, 1, 1]} : vector<8x18x4xf32> to vector<8x16x4xf32>
    %95 = vector.extract_strided_slice %92 {offsets = [0, 2, 0], sizes = [8, 16, 4], strides = [1, 1, 1]} : vector<8x18x4xf32> to vector<8x16x4xf32>
    %96 = tpu.concatenate %93, %94, %95 in 2 : vector<8x16x4xf32>, vector<8x16x4xf32>, vector<8x16x4xf32> -> vector<8x16x12xf32>
    %97 = vector.shape_cast %96 : vector<8x16x12xf32> to vector<128x12xf32>
    %98 = arith.truncf %97 : vector<128x12xf32> to vector<128x12xbf16>
    %99 = vector.extract_strided_slice %19 {offsets = [2, 0, 0], sizes = [1, 12, 256], strides = [1, 1, 1]} : vector<3x12x256xbf16> to vector<1x12x256xbf16>
    %100 = vector.shape_cast %99 : vector<1x12x256xbf16> to vector<12x256xbf16>
    %cst_76 = arith.constant dense<0.000000e+00> : vector<128x256xf32>
    %101 = tpu.matmul %98, %100, %cst_76 {dimension_numbers = #tpu.dot_dimension_numbers<[1], [0], [0], [1], [0, 0, 1, 1], [], []>} : vector<128x12xbf16>, vector<12x256xbf16>, vector<128x256xf32> -> vector<128x256xf32>
    %102 = arith.addf %91, %101 : vector<128x256xf32>
    %103 = vector.broadcast %20 : vector<1x256xf32> to vector<128x256xf32>
    %104 = arith.addf %102, %103 : vector<128x256xf32>
    %cst_77 = arith.constant 0.000000e+00 : f32
    %105 = vector.broadcast %cst_77 : f32 to vector<128x256xf32>
    %106 = arith.maximumf %104, %105 : vector<128x256xf32>
    %107 = vector.shape_cast %106 : vector<128x256xf32> to vector<8x16x256xf32>
    %108 = vector.extract_strided_slice %107 {offsets = [0, 0, 0], sizes = [8, 16, 128], strides = [1, 1, 1]} : vector<8x16x256xf32> to vector<8x16x128xf32>
    %109 = vector.extract_strided_slice %107 {offsets = [0, 0, 128], sizes = [8, 16, 128], strides = [1, 1, 1]} : vector<8x16x256xf32> to vector<8x16x128xf32>
    %cst_78 = arith.constant dense<0xFF800000> : vector<16x128xf32>
    %110 = vector.multi_reduction <maximumf>, %108, %cst_78 [0] : vector<8x16x128xf32> to vector<16x128xf32>
    %111 = arith.maximumf %67, %110 : vector<16x128xf32>
    %cst_79 = arith.constant dense<0xFF800000> : vector<8x128xf32>
    %112 = vector.multi_reduction <maximumf>, %109, %cst_79 [1] : vector<8x16x128xf32> to vector<8x128xf32>
    %113 = tpu.concatenate %68, %112 in 0 : vector<8x128xf32>, vector<8x128xf32> -> vector<16x128xf32>
    %114 = vector.shape_cast %111 : vector<16x128xf32> to vector<1x16x128xf32>
    %115 = vector.shape_cast %113 : vector<16x128xf32> to vector<16x1x128xf32>
    %116 = vector.broadcast %114 : vector<1x16x128xf32> to vector<16x16x128xf32>
    %117 = vector.broadcast %115 : vector<16x1x128xf32> to vector<16x16x128xf32>
    %118 = arith.addf %116, %117 : vector<16x16x128xf32>
    %c1_80 = arith.constant 1 : index
    %c1_81 = arith.constant 1 : index
    %c0_82 = arith.constant 0 : index
    %119 = vector.load %arg11[%c1_80, %c1_81, %c0_82] : memref<18x18x128xf32, #tpu.memory_space<vmem>>, vector<16x16x128xf32>
    tpu.vector_store %arg11[%c1_80, %c1_81, %c0_82], %118 {strides = array<i32>} : memref<18x18x128xf32, #tpu.memory_space<vmem>>, vector<16x16x128xf32>,
    %cst_83 = arith.constant 0.000000e+00 : f32
    %120 = vector.broadcast %cst_83 : f32 to vector<128x4xf32>
    %c0_84 = arith.constant 0 : index
    %c0_85 = arith.constant 0 : index
    %c0_86 = arith.constant 0 : index
    %121 = vector.load %arg11[%c0_84, %c0_85, %c0_86] : memref<18x18x128xf32, #tpu.memory_space<vmem>>, vector<8x18x128xf32>
    %122 = vector.extract_strided_slice %121 {offsets = [0, 0, 0], sizes = [8, 16, 128], strides = [1, 1, 1]} : vector<8x18x128xf32> to vector<8x16x128xf32>
    %123 = vector.extract_strided_slice %121 {offsets = [0, 1, 0], sizes = [8, 16, 128], strides = [1, 1, 1]} : vector<8x18x128xf32> to vector<8x16x128xf32>
    %124 = vector.extract_strided_slice %121 {offsets = [0, 2, 0], sizes = [8, 16, 128], strides = [1, 1, 1]} : vector<8x18x128xf32> to vector<8x16x128xf32>
    %125 = tpu.concatenate %122, %123, %124 in 2 : vector<8x16x128xf32>, vector<8x16x128xf32>, vector<8x16x128xf32> -> vector<8x16x384xf32>
    %126 = vector.shape_cast %125 : vector<8x16x384xf32> to vector<128x384xf32>
    %127 = arith.truncf %126 : vector<128x384xf32> to vector<128x384xbf16>
    %128 = vector.extract_strided_slice %21 {offsets = [0, 0, 0], sizes = [1, 384, 4], strides = [1, 1, 1]} : vector<3x384x4xbf16> to vector<1x384x4xbf16>
    %129 = vector.shape_cast %128 : vector<1x384x4xbf16> to vector<384x4xbf16>
    %cst_87 = arith.constant dense<0.000000e+00> : vector<128x4xf32>
    %130 = tpu.matmul %127, %129, %cst_87 {dimension_numbers = #tpu.dot_dimension_numbers<[1], [0], [0], [1], [0, 0, 1, 1], [], []>} : vector<128x384xbf16>, vector<384x4xbf16>, vector<128x4xf32> -> vector<128x4xf32>
    %131 = arith.addf %120, %130 : vector<128x4xf32>
    %c1_88 = arith.constant 1 : index
    %c0_89 = arith.constant 0 : index
    %c0_90 = arith.constant 0 : index
    %132 = vector.load %arg11[%c1_88, %c0_89, %c0_90] : memref<18x18x128xf32, #tpu.memory_space<vmem>>, vector<8x18x128xf32>
    %133 = vector.extract_strided_slice %132 {offsets = [0, 0, 0], sizes = [8, 16, 128], strides = [1, 1, 1]} : vector<8x18x128xf32> to vector<8x16x128xf32>
    %134 = vector.extract_strided_slice %132 {offsets = [0, 1, 0], sizes = [8, 16, 128], strides = [1, 1, 1]} : vector<8x18x128xf32> to vector<8x16x128xf32>
    %135 = vector.extract_strided_slice %132 {offsets = [0, 2, 0], sizes = [8, 16, 128], strides = [1, 1, 1]} : vector<8x18x128xf32> to vector<8x16x128xf32>
    %136 = tpu.concatenate %133, %134, %135 in 2 : vector<8x16x128xf32>, vector<8x16x128xf32>, vector<8x16x128xf32> -> vector<8x16x384xf32>
    %137 = vector.shape_cast %136 : vector<8x16x384xf32> to vector<128x384xf32>
    %138 = arith.truncf %137 : vector<128x384xf32> to vector<128x384xbf16>
    %139 = vector.extract_strided_slice %21 {offsets = [1, 0, 0], sizes = [1, 384, 4], strides = [1, 1, 1]} : vector<3x384x4xbf16> to vector<1x384x4xbf16>
    %140 = vector.shape_cast %139 : vector<1x384x4xbf16> to vector<384x4xbf16>
    %cst_91 = arith.constant dense<0.000000e+00> : vector<128x4xf32>
    %141 = tpu.matmul %138, %140, %cst_91 {dimension_numbers = #tpu.dot_dimension_numbers<[1], [0], [0], [1], [0, 0, 1, 1], [], []>} : vector<128x384xbf16>, vector<384x4xbf16>, vector<128x4xf32> -> vector<128x4xf32>
    %142 = arith.addf %131, %141 : vector<128x4xf32>
    %c2_92 = arith.constant 2 : index
    %c0_93 = arith.constant 0 : index
    %c0_94 = arith.constant 0 : index
    %143 = vector.load %arg11[%c2_92, %c0_93, %c0_94] : memref<18x18x128xf32, #tpu.memory_space<vmem>>, vector<8x18x128xf32>
    %144 = vector.extract_strided_slice %143 {offsets = [0, 0, 0], sizes = [8, 16, 128], strides = [1, 1, 1]} : vector<8x18x128xf32> to vector<8x16x128xf32>
    %145 = vector.extract_strided_slice %143 {offsets = [0, 1, 0], sizes = [8, 16, 128], strides = [1, 1, 1]} : vector<8x18x128xf32> to vector<8x16x128xf32>
    %146 = vector.extract_strided_slice %143 {offsets = [0, 2, 0], sizes = [8, 16, 128], strides = [1, 1, 1]} : vector<8x18x128xf32> to vector<8x16x128xf32>
    %147 = tpu.concatenate %144, %145, %146 in 2 : vector<8x16x128xf32>, vector<8x16x128xf32>, vector<8x16x128xf32> -> vector<8x16x384xf32>
    %148 = vector.shape_cast %147 : vector<8x16x384xf32> to vector<128x384xf32>
    %149 = arith.truncf %148 : vector<128x384xf32> to vector<128x384xbf16>
    %150 = vector.extract_strided_slice %21 {offsets = [2, 0, 0], sizes = [1, 384, 4], strides = [1, 1, 1]} : vector<3x384x4xbf16> to vector<1x384x4xbf16>
    %151 = vector.shape_cast %150 : vector<1x384x4xbf16> to vector<384x4xbf16>
    %cst_95 = arith.constant dense<0.000000e+00> : vector<128x4xf32>
    %152 = tpu.matmul %149, %151, %cst_95 {dimension_numbers = #tpu.dot_dimension_numbers<[1], [0], [0], [1], [0, 0, 1, 1], [], []>} : vector<128x384xbf16>, vector<384x4xbf16>, vector<128x4xf32> -> vector<128x4xf32>
    %153 = arith.addf %142, %152 : vector<128x4xf32>
    %154 = vector.extract_strided_slice %1 {offsets = [0, 0, 0], sizes = [8, 16, 4], strides = [1, 1, 1]} : vector<16x16x4xf32> to vector<8x16x4xf32>
    %155 = vector.shape_cast %154 : vector<8x16x4xf32> to vector<128x4xf32>
    %156 = arith.truncf %155 : vector<128x4xf32> to vector<128x4xbf16>
    %cst_96 = arith.constant dense<0.000000e+00> : vector<128x4xf32>
    %157 = tpu.matmul %156, %23, %cst_96 {dimension_numbers = #tpu.dot_dimension_numbers<[1], [0], [0], [1], [0, 0, 1, 1], [], []>} : vector<128x4xbf16>, vector<4x4xbf16>, vector<128x4xf32> -> vector<128x4xf32>
    %158 = arith.addf %153, %157 : vector<128x4xf32>
    %159 = vector.broadcast %22 : vector<1x4xf32> to vector<128x4xf32>
    %160 = arith.addf %158, %159 : vector<128x4xf32>
    %cst_97 = arith.constant 0.000000e+00 : f32
    %161 = vector.broadcast %cst_97 : f32 to vector<128x4xf32>
    %162 = arith.maximumf %160, %161 : vector<128x4xf32>
    %163 = vector.shape_cast %162 : vector<128x4xf32> to vector<8x16x4xf32>
    %c1_98 = arith.constant 1 : index
    %c1_99 = arith.constant 1 : index
    %c0_100 = arith.constant 0 : index
    %164 = vector.load %arg10[%c1_98, %c1_99, %c0_100] : memref<18x18x4xf32, #tpu.memory_space<vmem>>, vector<8x16x4xf32>
    tpu.vector_store %arg10[%c1_98, %c1_99, %c0_100], %163 {strides = array<i32>} : memref<18x18x4xf32, #tpu.memory_space<vmem>>, vector<8x16x4xf32>,
    %cst_101 = arith.constant 0.000000e+00 : f32
    %165 = vector.broadcast %cst_101 : f32 to vector<128x4xf32>
    %c8_102 = arith.constant 8 : index
    %c0_103 = arith.constant 0 : index
    %c0_104 = arith.constant 0 : index
    %166 = vector.load %arg11[%c8_102, %c0_103, %c0_104] : memref<18x18x128xf32, #tpu.memory_space<vmem>>, vector<8x18x128xf32>
    %167 = vector.extract_strided_slice %166 {offsets = [0, 0, 0], sizes = [8, 16, 128], strides = [1, 1, 1]} : vector<8x18x128xf32> to vector<8x16x128xf32>
    %168 = vector.extract_strided_slice %166 {offsets = [0, 1, 0], sizes = [8, 16, 128], strides = [1, 1, 1]} : vector<8x18x128xf32> to vector<8x16x128xf32>
    %169 = vector.extract_strided_slice %166 {offsets = [0, 2, 0], sizes = [8, 16, 128], strides = [1, 1, 1]} : vector<8x18x128xf32> to vector<8x16x128xf32>
    %170 = tpu.concatenate %167, %168, %169 in 2 : vector<8x16x128xf32>, vector<8x16x128xf32>, vector<8x16x128xf32> -> vector<8x16x384xf32>
    %171 = vector.shape_cast %170 : vector<8x16x384xf32> to vector<128x384xf32>
    %172 = arith.truncf %171 : vector<128x384xf32> to vector<128x384xbf16>
    %173 = vector.extract_strided_slice %21 {offsets = [0, 0, 0], sizes = [1, 384, 4], strides = [1, 1, 1]} : vector<3x384x4xbf16> to vector<1x384x4xbf16>
    %174 = vector.shape_cast %173 : vector<1x384x4xbf16> to vector<384x4xbf16>
    %cst_105 = arith.constant dense<0.000000e+00> : vector<128x4xf32>
    %175 = tpu.matmul %172, %174, %cst_105 {dimension_numbers = #tpu.dot_dimension_numbers<[1], [0], [0], [1], [0, 0, 1, 1], [], []>} : vector<128x384xbf16>, vector<384x4xbf16>, vector<128x4xf32> -> vector<128x4xf32>
    %176 = arith.addf %165, %175 : vector<128x4xf32>
    %c9_106 = arith.constant 9 : index
    %c0_107 = arith.constant 0 : index
    %c0_108 = arith.constant 0 : index
    %177 = vector.load %arg11[%c9_106, %c0_107, %c0_108] : memref<18x18x128xf32, #tpu.memory_space<vmem>>, vector<8x18x128xf32>
    %178 = vector.extract_strided_slice %177 {offsets = [0, 0, 0], sizes = [8, 16, 128], strides = [1, 1, 1]} : vector<8x18x128xf32> to vector<8x16x128xf32>
    %179 = vector.extract_strided_slice %177 {offsets = [0, 1, 0], sizes = [8, 16, 128], strides = [1, 1, 1]} : vector<8x18x128xf32> to vector<8x16x128xf32>
    %180 = vector.extract_strided_slice %177 {offsets = [0, 2, 0], sizes = [8, 16, 128], strides = [1, 1, 1]} : vector<8x18x128xf32> to vector<8x16x128xf32>
    %181 = tpu.concatenate %178, %179, %180 in 2 : vector<8x16x128xf32>, vector<8x16x128xf32>, vector<8x16x128xf32> -> vector<8x16x384xf32>
    %182 = vector.shape_cast %181 : vector<8x16x384xf32> to vector<128x384xf32>
    %183 = arith.truncf %182 : vector<128x384xf32> to vector<128x384xbf16>
    %184 = vector.extract_strided_slice %21 {offsets = [1, 0, 0], sizes = [1, 384, 4], strides = [1, 1, 1]} : vector<3x384x4xbf16> to vector<1x384x4xbf16>
    %185 = vector.shape_cast %184 : vector<1x384x4xbf16> to vector<384x4xbf16>
    %cst_109 = arith.constant dense<0.000000e+00> : vector<128x4xf32>
    %186 = tpu.matmul %183, %185, %cst_109 {dimension_numbers = #tpu.dot_dimension_numbers<[1], [0], [0], [1], [0, 0, 1, 1], [], []>} : vector<128x384xbf16>, vector<384x4xbf16>, vector<128x4xf32> -> vector<128x4xf32>
    %187 = arith.addf %176, %186 : vector<128x4xf32>
    %c10_110 = arith.constant 10 : index
    %c0_111 = arith.constant 0 : index
    %c0_112 = arith.constant 0 : index
    %188 = vector.load %arg11[%c10_110, %c0_111, %c0_112] : memref<18x18x128xf32, #tpu.memory_space<vmem>>, vector<8x18x128xf32>
    %189 = vector.extract_strided_slice %188 {offsets = [0, 0, 0], sizes = [8, 16, 128], strides = [1, 1, 1]} : vector<8x18x128xf32> to vector<8x16x128xf32>
    %190 = vector.extract_strided_slice %188 {offsets = [0, 1, 0], sizes = [8, 16, 128], strides = [1, 1, 1]} : vector<8x18x128xf32> to vector<8x16x128xf32>
    %191 = vector.extract_strided_slice %188 {offsets = [0, 2, 0], sizes = [8, 16, 128], strides = [1, 1, 1]} : vector<8x18x128xf32> to vector<8x16x128xf32>
    %192 = tpu.concatenate %189, %190, %191 in 2 : vector<8x16x128xf32>, vector<8x16x128xf32>, vector<8x16x128xf32> -> vector<8x16x384xf32>
    %193 = vector.shape_cast %192 : vector<8x16x384xf32> to vector<128x384xf32>
    %194 = arith.truncf %193 : vector<128x384xf32> to vector<128x384xbf16>
    %195 = vector.extract_strided_slice %21 {offsets = [2, 0, 0], sizes = [1, 384, 4], strides = [1, 1, 1]} : vector<3x384x4xbf16> to vector<1x384x4xbf16>
    %196 = vector.shape_cast %195 : vector<1x384x4xbf16> to vector<384x4xbf16>
    %cst_113 = arith.constant dense<0.000000e+00> : vector<128x4xf32>
    %197 = tpu.matmul %194, %196, %cst_113 {dimension_numbers = #tpu.dot_dimension_numbers<[1], [0], [0], [1], [0, 0, 1, 1], [], []>} : vector<128x384xbf16>, vector<384x4xbf16>, vector<128x4xf32> -> vector<128x4xf32>
    %198 = arith.addf %187, %197 : vector<128x4xf32>
    %199 = vector.extract_strided_slice %1 {offsets = [8, 0, 0], sizes = [8, 16, 4], strides = [1, 1, 1]} : vector<16x16x4xf32> to vector<8x16x4xf32>
    %200 = vector.shape_cast %199 : vector<8x16x4xf32> to vector<128x4xf32>
    %201 = arith.truncf %200 : vector<128x4xf32> to vector<128x4xbf16>
    %cst_114 = arith.constant dense<0.000000e+00> : vector<128x4xf32>
    %202 = tpu.matmul %201, %23, %cst_114 {dimension_numbers = #tpu.dot_dimension_numbers<[1], [0], [0], [1], [0, 0, 1, 1], [], []>} : vector<128x4xbf16>, vector<4x4xbf16>, vector<128x4xf32> -> vector<128x4xf32>
    %203 = arith.addf %198, %202 : vector<128x4xf32>
    %204 = vector.broadcast %22 : vector<1x4xf32> to vector<128x4xf32>
    %205 = arith.addf %203, %204 : vector<128x4xf32>
    %cst_115 = arith.constant 0.000000e+00 : f32
    %206 = vector.broadcast %cst_115 : f32 to vector<128x4xf32>
    %207 = arith.maximumf %205, %206 : vector<128x4xf32>
    %208 = vector.shape_cast %207 : vector<128x4xf32> to vector<8x16x4xf32>
    %c9_116 = arith.constant 9 : index
    %c1_117 = arith.constant 1 : index
    %c0_118 = arith.constant 0 : index
    %209 = vector.load %arg10[%c9_116, %c1_117, %c0_118] : memref<18x18x4xf32, #tpu.memory_space<vmem>>, vector<8x16x4xf32>
    tpu.vector_store %arg10[%c9_116, %c1_117, %c0_118], %208 {strides = array<i32>} : memref<18x18x4xf32, #tpu.memory_space<vmem>>, vector<8x16x4xf32>,
    %cst_119 = arith.constant 0.000000e+00 : f32
    %210 = vector.broadcast %cst_119 : f32 to vector<4x128xf32>
    %c0_120 = arith.constant 0 : index
    %c0_121 = arith.constant 0 : index
    %c0_122 = arith.constant 0 : index
    %211 = vector.load %arg10[%c0_120, %c0_121, %c0_122] : memref<18x18x4xf32, #tpu.memory_space<vmem>>, vector<8x18x4xf32>
    %212 = vector.extract_strided_slice %211 {offsets = [0, 0, 0], sizes = [8, 16, 4], strides = [1, 1, 1]} : vector<8x18x4xf32> to vector<8x16x4xf32>
    %213 = vector.extract_strided_slice %211 {offsets = [0, 1, 0], sizes = [8, 16, 4], strides = [1, 1, 1]} : vector<8x18x4xf32> to vector<8x16x4xf32>
    %214 = vector.extract_strided_slice %211 {offsets = [0, 2, 0], sizes = [8, 16, 4], strides = [1, 1, 1]} : vector<8x18x4xf32> to vector<8x16x4xf32>
    %215 = tpu.concatenate %212, %213, %214 in 2 : vector<8x16x4xf32>, vector<8x16x4xf32>, vector<8x16x4xf32> -> vector<8x16x12xf32>
    %216 = vector.shape_cast %215 : vector<8x16x12xf32> to vector<128x12xf32>
    %217 = arith.truncf %216 : vector<128x12xf32> to vector<128x12xbf16>
    %218 = vector.extract_strided_slice %24 {offsets = [0, 0, 0], sizes = [1, 4, 12], strides = [1, 1, 1]} : vector<3x4x12xbf16> to vector<1x4x12xbf16>
    %219 = vector.shape_cast %218 : vector<1x4x12xbf16> to vector<4x12xbf16>
    %cst_123 = arith.constant dense<0.000000e+00> : vector<4x128xf32>
    %220 = tpu.matmul %219, %217, %cst_123 {dimension_numbers = #tpu.dot_dimension_numbers<[1], [1], [0], [0], [0, 0, 1, 0], [], []>} : vector<4x12xbf16>, vector<128x12xbf16>, vector<4x128xf32> -> vector<4x128xf32>
    %221 = arith.addf %210, %220 : vector<4x128xf32>
    %c1_124 = arith.constant 1 : index
    %c0_125 = arith.constant 0 : index
    %c0_126 = arith.constant 0 : index
    %222 = vector.load %arg10[%c1_124, %c0_125, %c0_126] : memref<18x18x4xf32, #tpu.memory_space<vmem>>, vector<8x18x4xf32>
    %223 = vector.extract_strided_slice %222 {offsets = [0, 0, 0], sizes = [8, 16, 4], strides = [1, 1, 1]} : vector<8x18x4xf32> to vector<8x16x4xf32>
    %224 = vector.extract_strided_slice %222 {offsets = [0, 1, 0], sizes = [8, 16, 4], strides = [1, 1, 1]} : vector<8x18x4xf32> to vector<8x16x4xf32>
    %225 = vector.extract_strided_slice %222 {offsets = [0, 2, 0], sizes = [8, 16, 4], strides = [1, 1, 1]} : vector<8x18x4xf32> to vector<8x16x4xf32>
    %226 = tpu.concatenate %223, %224, %225 in 2 : vector<8x16x4xf32>, vector<8x16x4xf32>, vector<8x16x4xf32> -> vector<8x16x12xf32>
    %227 = vector.shape_cast %226 : vector<8x16x12xf32> to vector<128x12xf32>
    %228 = arith.truncf %227 : vector<128x12xf32> to vector<128x12xbf16>
    %229 = vector.extract_strided_slice %24 {offsets = [1, 0, 0], sizes = [1, 4, 12], strides = [1, 1, 1]} : vector<3x4x12xbf16> to vector<1x4x12xbf16>
    %230 = vector.shape_cast %229 : vector<1x4x12xbf16> to vector<4x12xbf16>
    %cst_127 = arith.constant dense<0.000000e+00> : vector<4x128xf32>
    %231 = tpu.matmul %230, %228, %cst_127 {dimension_numbers = #tpu.dot_dimension_numbers<[1], [1], [0], [0], [0, 0, 1, 0], [], []>} : vector<4x12xbf16>, vector<128x12xbf16>, vector<4x128xf32> -> vector<4x128xf32>
    %232 = arith.addf %221, %231 : vector<4x128xf32>
    %c2_128 = arith.constant 2 : index
    %c0_129 = arith.constant 0 : index
    %c0_130 = arith.constant 0 : index
    %233 = vector.load %arg10[%c2_128, %c0_129, %c0_130] : memref<18x18x4xf32, #tpu.memory_space<vmem>>, vector<8x18x4xf32>
    %234 = vector.extract_strided_slice %233 {offsets = [0, 0, 0], sizes = [8, 16, 4], strides = [1, 1, 1]} : vector<8x18x4xf32> to vector<8x16x4xf32>
    %235 = vector.extract_strided_slice %233 {offsets = [0, 1, 0], sizes = [8, 16, 4], strides = [1, 1, 1]} : vector<8x18x4xf32> to vector<8x16x4xf32>
    %236 = vector.extract_strided_slice %233 {offsets = [0, 2, 0], sizes = [8, 16, 4], strides = [1, 1, 1]} : vector<8x18x4xf32> to vector<8x16x4xf32>
    %237 = tpu.concatenate %234, %235, %236 in 2 : vector<8x16x4xf32>, vector<8x16x4xf32>, vector<8x16x4xf32> -> vector<8x16x12xf32>
    %238 = vector.shape_cast %237 : vector<8x16x12xf32> to vector<128x12xf32>
    %239 = arith.truncf %238 : vector<128x12xf32> to vector<128x12xbf16>
    %240 = vector.extract_strided_slice %24 {offsets = [2, 0, 0], sizes = [1, 4, 12], strides = [1, 1, 1]} : vector<3x4x12xbf16> to vector<1x4x12xbf16>
    %241 = vector.shape_cast %240 : vector<1x4x12xbf16> to vector<4x12xbf16>
    %cst_131 = arith.constant dense<0.000000e+00> : vector<4x128xf32>
    %242 = tpu.matmul %241, %239, %cst_131 {dimension_numbers = #tpu.dot_dimension_numbers<[1], [1], [0], [0], [0, 0, 1, 0], [], []>} : vector<4x12xbf16>, vector<128x12xbf16>, vector<4x128xf32> -> vector<4x128xf32>
    %243 = arith.addf %232, %242 : vector<4x128xf32>
    %244 = vector.broadcast %25 : vector<4x1xf32> to vector<4x128xf32>
    %245 = arith.addf %243, %244 : vector<4x128xf32>
    %cst_132 = arith.constant 0.000000e+00 : f32
    %246 = vector.broadcast %cst_132 : f32 to vector<4x128xf32>
    %247 = arith.maximumf %245, %246 : vector<4x128xf32>
    %c0_133 = arith.constant 0 : index
    %c0_134 = arith.constant 0 : index
    %c0_135 = arith.constant 0 : index
    %248 = vector.load %arg9[%c0_133, %c0_134, %c0_135] : memref<1x4x256xf32, #tpu.memory_space<vmem>>, vector<1x4x128xf32>
    %249 = vector.shape_cast %248 : vector<1x4x128xf32> to vector<4x128xf32>
    %250 = vector.shape_cast %247 : vector<4x128xf32> to vector<1x4x128xf32>
    tpu.vector_store %arg9[%c0_133, %c0_134, %c0_135], %250 {strides = array<i32>} : memref<1x4x256xf32, #tpu.memory_space<vmem>>, vector<1x4x128xf32>,
    %cst_136 = arith.constant 0.000000e+00 : f32
    %251 = vector.broadcast %cst_136 : f32 to vector<4x128xf32>
    %c8_137 = arith.constant 8 : index
    %c0_138 = arith.constant 0 : index
    %c0_139 = arith.constant 0 : index
    %252 = vector.load %arg10[%c8_137, %c0_138, %c0_139] : memref<18x18x4xf32, #tpu.memory_space<vmem>>, vector<8x18x4xf32>
    %253 = vector.extract_strided_slice %252 {offsets = [0, 0, 0], sizes = [8, 16, 4], strides = [1, 1, 1]} : vector<8x18x4xf32> to vector<8x16x4xf32>
    %254 = vector.extract_strided_slice %252 {offsets = [0, 1, 0], sizes = [8, 16, 4], strides = [1, 1, 1]} : vector<8x18x4xf32> to vector<8x16x4xf32>
    %255 = vector.extract_strided_slice %252 {offsets = [0, 2, 0], sizes = [8, 16, 4], strides = [1, 1, 1]} : vector<8x18x4xf32> to vector<8x16x4xf32>
    %256 = tpu.concatenate %253, %254, %255 in 2 : vector<8x16x4xf32>, vector<8x16x4xf32>, vector<8x16x4xf32> -> vector<8x16x12xf32>
    %257 = vector.shape_cast %256 : vector<8x16x12xf32> to vector<128x12xf32>
    %258 = arith.truncf %257 : vector<128x12xf32> to vector<128x12xbf16>
    %259 = vector.extract_strided_slice %24 {offsets = [0, 0, 0], sizes = [1, 4, 12], strides = [1, 1, 1]} : vector<3x4x12xbf16> to vector<1x4x12xbf16>
    %260 = vector.shape_cast %259 : vector<1x4x12xbf16> to vector<4x12xbf16>
    %cst_140 = arith.constant dense<0.000000e+00> : vector<4x128xf32>
    %261 = tpu.matmul %260, %258, %cst_140 {dimension_numbers = #tpu.dot_dimension_numbers<[1], [1], [0], [0], [0, 0, 1, 0], [], []>} : vector<4x12xbf16>, vector<128x12xbf16>, vector<4x128xf32> -> vector<4x128xf32>
    %262 = arith.addf %251, %261 : vector<4x128xf32>
    %c9_141 = arith.constant 9 : index
    %c0_142 = arith.constant 0 : index
    %c0_143 = arith.constant 0 : index
    %263 = vector.load %arg10[%c9_141, %c0_142, %c0_143] : memref<18x18x4xf32, #tpu.memory_space<vmem>>, vector<8x18x4xf32>
    %264 = vector.extract_strided_slice %263 {offsets = [0, 0, 0], sizes = [8, 16, 4], strides = [1, 1, 1]} : vector<8x18x4xf32> to vector<8x16x4xf32>
    %265 = vector.extract_strided_slice %263 {offsets = [0, 1, 0], sizes = [8, 16, 4], strides = [1, 1, 1]} : vector<8x18x4xf32> to vector<8x16x4xf32>
    %266 = vector.extract_strided_slice %263 {offsets = [0, 2, 0], sizes = [8, 16, 4], strides = [1, 1, 1]} : vector<8x18x4xf32> to vector<8x16x4xf32>
    %267 = tpu.concatenate %264, %265, %266 in 2 : vector<8x16x4xf32>, vector<8x16x4xf32>, vector<8x16x4xf32> -> vector<8x16x12xf32>
    %268 = vector.shape_cast %267 : vector<8x16x12xf32> to vector<128x12xf32>
    %269 = arith.truncf %268 : vector<128x12xf32> to vector<128x12xbf16>
    %270 = vector.extract_strided_slice %24 {offsets = [1, 0, 0], sizes = [1, 4, 12], strides = [1, 1, 1]} : vector<3x4x12xbf16> to vector<1x4x12xbf16>
    %271 = vector.shape_cast %270 : vector<1x4x12xbf16> to vector<4x12xbf16>
    %cst_144 = arith.constant dense<0.000000e+00> : vector<4x128xf32>
    %272 = tpu.matmul %271, %269, %cst_144 {dimension_numbers = #tpu.dot_dimension_numbers<[1], [1], [0], [0], [0, 0, 1, 0], [], []>} : vector<4x12xbf16>, vector<128x12xbf16>, vector<4x128xf32> -> vector<4x128xf32>
    %273 = arith.addf %262, %272 : vector<4x128xf32>
    %c10_145 = arith.constant 10 : index
    %c0_146 = arith.constant 0 : index
    %c0_147 = arith.constant 0 : index
    %274 = vector.load %arg10[%c10_145, %c0_146, %c0_147] : memref<18x18x4xf32, #tpu.memory_space<vmem>>, vector<8x18x4xf32>
    %275 = vector.extract_strided_slice %274 {offsets = [0, 0, 0], sizes = [8, 16, 4], strides = [1, 1, 1]} : vector<8x18x4xf32> to vector<8x16x4xf32>
    %276 = vector.extract_strided_slice %274 {offsets = [0, 1, 0], sizes = [8, 16, 4], strides = [1, 1, 1]} : vector<8x18x4xf32> to vector<8x16x4xf32>
    %277 = vector.extract_strided_slice %274 {offsets = [0, 2, 0], sizes = [8, 16, 4], strides = [1, 1, 1]} : vector<8x18x4xf32> to vector<8x16x4xf32>
    %278 = tpu.concatenate %275, %276, %277 in 2 : vector<8x16x4xf32>, vector<8x16x4xf32>, vector<8x16x4xf32> -> vector<8x16x12xf32>
    %279 = vector.shape_cast %278 : vector<8x16x12xf32> to vector<128x12xf32>
    %280 = arith.truncf %279 : vector<128x12xf32> to vector<128x12xbf16>
    %281 = vector.extract_strided_slice %24 {offsets = [2, 0, 0], sizes = [1, 4, 12], strides = [1, 1, 1]} : vector<3x4x12xbf16> to vector<1x4x12xbf16>
    %282 = vector.shape_cast %281 : vector<1x4x12xbf16> to vector<4x12xbf16>
    %cst_148 = arith.constant dense<0.000000e+00> : vector<4x128xf32>
    %283 = tpu.matmul %282, %280, %cst_148 {dimension_numbers = #tpu.dot_dimension_numbers<[1], [1], [0], [0], [0, 0, 1, 0], [], []>} : vector<4x12xbf16>, vector<128x12xbf16>, vector<4x128xf32> -> vector<4x128xf32>
    %284 = arith.addf %273, %283 : vector<4x128xf32>
    %285 = vector.broadcast %25 : vector<4x1xf32> to vector<4x128xf32>
    %286 = arith.addf %284, %285 : vector<4x128xf32>
    %cst_149 = arith.constant 0.000000e+00 : f32
    %287 = vector.broadcast %cst_149 : f32 to vector<4x128xf32>
    %288 = arith.maximumf %286, %287 : vector<4x128xf32>
    %c0_150 = arith.constant 0 : index
    %c0_151 = arith.constant 0 : index
    %c128 = arith.constant 128 : index
    %289 = vector.load %arg9[%c0_150, %c0_151, %c128] : memref<1x4x256xf32, #tpu.memory_space<vmem>>, vector<1x4x128xf32>
    %290 = vector.shape_cast %289 : vector<1x4x128xf32> to vector<4x128xf32>
    %291 = vector.shape_cast %288 : vector<4x128xf32> to vector<1x4x128xf32>
    tpu.vector_store %arg9[%c0_150, %c0_151, %c128], %291 {strides = array<i32>} : memref<1x4x256xf32, #tpu.memory_space<vmem>>, vector<1x4x128xf32>,
    return
  }
  func.func @transform_0(%arg0: i32) -> (i32, i32, i32, i32) {
    %c0_i32 = arith.constant 0 : i32
    %c0_i32_0 = arith.constant 0 : i32
    %c0_i32_1 = arith.constant 0 : i32
    %c0_i32_2 = arith.constant 0 : i32
    return %arg0, %c0_i32, %c0_i32_0, %c0_i32_1 : i32, i32, i32, i32
  }
  func.func @transform_1(%arg0: i32) -> (i32, i32, i32) {
    %c0_i32 = arith.constant 0 : i32
    %c0_i32_0 = arith.constant 0 : i32
    %c0_i32_1 = arith.constant 0 : i32
    %c0_i32_2 = arith.constant 0 : i32
    return %c0_i32, %c0_i32_0, %c0_i32_1 : i32, i32, i32
  }
  func.func @transform_2(%arg0: i32) -> (i32, i32) {
    %c0_i32 = arith.constant 0 : i32
    %c0_i32_0 = arith.constant 0 : i32
    %c0_i32_1 = arith.constant 0 : i32
    return %c0_i32, %c0_i32_0 : i32, i32
  }
  func.func @transform_3(%arg0: i32) -> (i32, i32, i32) {
    %c0_i32 = arith.constant 0 : i32
    %c0_i32_0 = arith.constant 0 : i32
    %c0_i32_1 = arith.constant 0 : i32
    %c0_i32_2 = arith.constant 0 : i32
    return %c0_i32, %c0_i32_0, %c0_i32_1 : i32, i32, i32
  }
  func.func @transform_4(%arg0: i32) -> (i32, i32) {
    %c0_i32 = arith.constant 0 : i32
    %c0_i32_0 = arith.constant 0 : i32
    %c0_i32_1 = arith.constant 0 : i32
    return %c0_i32, %c0_i32_0 : i32, i32
  }
  func.func @transform_5(%arg0: i32) -> (i32, i32) {
    %c0_i32 = arith.constant 0 : i32
    %c0_i32_0 = arith.constant 0 : i32
    %c0_i32_1 = arith.constant 0 : i32
    return %c0_i32, %c0_i32_0 : i32, i32
  }
  func.func @transform_6(%arg0: i32) -> (i32, i32, i32) {
    %c0_i32 = arith.constant 0 : i32
    %c0_i32_0 = arith.constant 0 : i32
    %c0_i32_1 = arith.constant 0 : i32
    %c0_i32_2 = arith.constant 0 : i32
    return %c0_i32, %c0_i32_0, %c0_i32_1 : i32, i32, i32
  }
  func.func @transform_7(%arg0: i32) -> (i32, i32) {
    %c0_i32 = arith.constant 0 : i32
    %c0_i32_0 = arith.constant 0 : i32
    %c0_i32_1 = arith.constant 0 : i32
    return %c0_i32, %c0_i32_0 : i32, i32
  }
  func.func @transform_8(%arg0: i32) -> (i32, i32, i32) {
    %c0_i32 = arith.constant 0 : i32
    %c0_i32_0 = arith.constant 0 : i32
    %c0_i32_1 = arith.constant 0 : i32
    return %arg0, %c0_i32, %c0_i32_0 : i32, i32, i32
  }
}

</mosaic_0001>

<llo_original>
// kernel: pool_cross_forward.1
$region0: #{pool_cross_forward.1}
  #allocation0 [shape = 'u32[]', space=smem, size = 0x4, offset = 0x4, fixed_abs, tag = 'smem constant byte address 0x4 - core index']
  #allocation1 [shape = 'u32[72,128]{1,0:T(1,128)}', space=vmem, size = 0x9000, scoped, tag = 'internal scratch']
  #allocation2 [shape = 'f32[18,18,4]{2,1,0:T(8,128)}', space=vmem, size = 0x36000, scoped, tag = 'scratch operand']
  #allocation3 [shape = 'f32[18,18,128]{2,1,0:T(8,128)}', space=vmem, size = 0x36000, scoped, tag = 'scratch operand']
  %s0 = inlined_call_operand.vmem [shape: f32[2,16,16,4], index: 0, kind: input, shape index: {}]
  %s1 = inlined_call_operand.vmem [shape: bf16[3,12,256], index: 1, kind: input, shape index: {}]
  %s2 = inlined_call_operand.vmem [shape: f32[1,256], index: 2, kind: input, shape index: {}]
  %s3 = inlined_call_operand.vmem [shape: bf16[3,384,4], index: 3, kind: input, shape index: {}]
  %s4 = inlined_call_operand.vmem [shape: f32[1,4], index: 4, kind: input, shape index: {}]
  %s5 = inlined_call_operand.vmem [shape: bf16[4,4], index: 5, kind: input, shape index: {}]
  %s6 = inlined_call_operand.vmem [shape: bf16[3,4,12], index: 6, kind: input, shape index: {}]
  %s7 = inlined_call_operand.vmem [shape: f32[4,1], index: 7, kind: input, shape index: {}]
  %s8 = inlined_call_operand.vmem [shape: f32[2,4,256], index: 8, kind: output, shape index: {}]
  %s9 = sld [smem:[#allocation0]]
  $region65: #{pool_cross_forward.1} parent=0
    _
  %s11 = ssub.s32 1, %s9
  %s12 = scalar_select 0, %s11, %s9
  loop: start=0, step=1, limit=4
  $region2: #{pool_cross_forward.1} parent=0 // loop_pre_header
    _
  $region3: #{pool_cross_forward.1} parent=0 // loop_header
    %s14 = sphi 0, %s18
    %p15 = scmp.ge.s32.totalorder %s14, 4
    %s24 = sphi 0, %s26
    %s27 = sphi 0, %s24
    %s28 = sphi 0, %s27
    %s44 = sphi 0, %s28
    %s48 = sphi 0, %s48
    %s50 = sphi 0, %s48
    %s51 = sphi 0, %s50
    %s65 = sphi 0, %s51
    %s69 = sphi 0, %s69
    %s71 = sphi 0, %s69
    %s72 = sphi 0, %s71
    %s86 = sphi 0, %s72
    %s90 = sphi 0, %s90
    %s92 = sphi 0, %s90
    %s93 = sphi 0, %s92
    %s107 = sphi 0, %s93
    %s111 = sphi 0, %s111
    %s113 = sphi 0, %s111
    %s114 = sphi 0, %s113
    %s128 = sphi 0, %s114
    %s132 = sphi 0, %s132
    %s134 = sphi 0, %s132
    %s135 = sphi 0, %s134
    %s149 = sphi 0, %s135
    %s153 = sphi 0, %s153
    %s155 = sphi 0, %s153
    %s156 = sphi 0, %s155
    %s170 = sphi 0, %s156
    %s174 = sphi 0, %s174
    %s176 = sphi 0, %s174
    %s177 = sphi 0, %s176
    %s191 = sphi 0, %s177
    %s197 = sphi 0, %s199
    %s200 = sphi 0, %s197
    %s201 = sphi 0, %s200
    %s217 = sphi 0, %s201
  $region4: #{pool_cross_forward.1} parent=0 // loop_header_branch
    %17 = sbr.rel (%p15) target = $region8
  $region5: #{pool_cross_forward.1} parent=0 // loop_body
    %s19 = ssub.s32 %s14, 1
    %s20 = ssub.s32 %s14, 2
    %s21 = sadd.s32 %s14, 1
    %s22 = ssub.s32 %s14, %s21
    %p23 = scmp.eq.s32.totalorder %s22, 0
    %s25 = sadd.s32 %s24, 1
    %s26 = scalar_select %p23, %s24, %s25
    %p29 = pneg %p23
    %p30 = scmp.eq.s32.totalorder %s14, 1
    %p31 = por %p29, %p30
    %p32 = scmp.ne.s32.totalorder %s24, %s27
    %p33 = scmp.eq.s32.totalorder %s14, 0
    %p34 = por %p32, %p33
    %p35 = scmp.ne.s32.totalorder %s24, %s27
    %p36 = scmp.eq.s32.totalorder %s19, 1
    %p37 = por %p35, %p36
    %p38 = scmp.ne.s32.totalorder %s27, %s28
    %p39 = scmp.eq.s32.totalorder %s19, 0
    %p40 = por %p38, %p39
    %p41 = scmp.ne.s32.totalorder %s27, %s28
    %p42 = scmp.eq.s32.totalorder %s20, 1
    %p43 = por %p41, %p42
    %p45 = scmp.ne.s32.totalorder %s28, %s44
    %p46 = scmp.eq.s32.totalorder %s20, 0
    %p47 = por %p45, %p46
    %s49 = sadd.s32 %s48, 1
    %p52 = scmp.eq.s32.totalorder %s14, 1
    %p53 = scmp.ne.s32.totalorder %s48, %s50
    %p54 = scmp.eq.s32.totalorder %s14, 0
    %p55 = por %p53, %p54
    %p56 = scmp.ne.s32.totalorder %s48, %s50
    %p57 = scmp.eq.s32.totalorder %s19, 1
    %p58 = por %p56, %p57
    %p59 = scmp.ne.s32.totalorder %s50, %s51
    %p60 = scmp.eq.s32.totalorder %s19, 0
    %p61 = por %p59, %p60
    %p62 = scmp.ne.s32.totalorder %s50, %s51
    %p63 = scmp.eq.s32.totalorder %s20, 1
    %p64 = por %p62, %p63
    %p66 = scmp.ne.s32.totalorder %s51, %s65
    %p67 = scmp.eq.s32.totalorder %s20, 0
    %p68 = por %p66, %p67
    %s70 = sadd.s32 %s69, 1
    %p73 = scmp.eq.s32.totalorder %s14, 1
    %p74 = scmp.ne.s32.totalorder %s69, %s71
    %p75 = scmp.eq.s32.totalorder %s14, 0
    %p76 = por %p74, %p75
    %p77 = scmp.ne.s32.totalorder %s69, %s71
    %p78 = scmp.eq.s32.totalorder %s19, 1
    %p79 = por %p77, %p78
    %p80 = scmp.ne.s32.totalorder %s71, %s72
    %p81 = scmp.eq.s32.totalorder %s19, 0
    %p82 = por %p80, %p81
    %p83 = scmp.ne.s32.totalorder %s71, %s72
    %p84 = scmp.eq.s32.totalorder %s20, 1
    %p85 = por %p83, %p84
    %p87 = scmp.ne.s32.totalorder %s72, %s86
    %p88 = scmp.eq.s32.totalorder %s20, 0
    %p89 = por %p87, %p88
    %s91 = sadd.s32 %s90, 1
    %p94 = scmp.eq.s32.totalorder %s14, 1
    %p95 = scmp.ne.s32.totalorder %s90, %s92
    %p96 = scmp.eq.s32.totalorder %s14, 0
    %p97 = por %p95, %p96
    %p98 = scmp.ne.s32.totalorder %s90, %s92
    %p99 = scmp.eq.s32.totalorder %s19, 1
    %p100 = por %p98, %p99
    %p101 = scmp.ne.s32.totalorder %s92, %s93
    %p102 = scmp.eq.s32.totalorder %s19, 0
    %p103 = por %p101, %p102
    %p104 = scmp.ne.s32.totalorder %s92, %s93
    %p105 = scmp.eq.s32.totalorder %s20, 1
    %p106 = por %p104, %p105
    %p108 = scmp.ne.s32.totalorder %s93, %s107
    %p109 = scmp.eq.s32.totalorder %s20, 0
    %p110 = por %p108, %p109
    %s112 = sadd.s32 %s111, 1
    %p115 = scmp.eq.s32.totalorder %s14, 1
    %p116 = scmp.ne.s32.totalorder %s111, %s113
    %p117 = scmp.eq.s32.totalorder %s14, 0
    %p118 = por %p116, %p117
    %p119 = scmp.ne.s32.totalorder %s111, %s113
    %p120 = scmp.eq.s32.totalorder %s19, 1
    %p121 = por %p119, %p120
    %p122 = scmp.ne.s32.totalorder %s113, %s114
    %p123 = scmp.eq.s32.totalorder %s19, 0
    %p124 = por %p122, %p123
    %p125 = scmp.ne.s32.totalorder %s113, %s114
    %p126 = scmp.eq.s32.totalorder %s20, 1
    %p127 = por %p125, %p126
    %p129 = scmp.ne.s32.totalorder %s114, %s128
    %p130 = scmp.eq.s32.totalorder %s20, 0
    %p131 = por %p129, %p130
    %s133 = sadd.s32 %s132, 1
    %p136 = scmp.eq.s32.totalorder %s14, 1
    %p137 = scmp.ne.s32.totalorder %s132, %s134
    %p138 = scmp.eq.s32.totalorder %s14, 0
    %p139 = por %p137, %p138
    %p140 = scmp.ne.s32.totalorder %s132, %s134
    %p141 = scmp.eq.s32.totalorder %s19, 1
    %p142 = por %p140, %p141
    %p143 = scmp.ne.s32.totalorder %s134, %s135
    %p144 = scmp.eq.s32.totalorder %s19, 0
    %p145 = por %p143, %p144
    %p146 = scmp.ne.s32.totalorder %s134, %s135
    %p147 = scmp.eq.s32.totalorder %s20, 1
    %p148 = por %p146, %p147
    %p150 = scmp.ne.s32.totalorder %s135, %s149
    %p151 = scmp.eq.s32.totalorder %s20, 0
    %p152 = por %p150, %p151
    %s154 = sadd.s32 %s153, 1
    %p157 = scmp.eq.s32.totalorder %s14, 1
    %p158 = scmp.ne.s32.totalorder %s153, %s155
    %p159 = scmp.eq.s32.totalorder %s14, 0
    %p160 = por %p158, %p159
    %p161 = scmp.ne.s32.totalorder %s153, %s155
    %p162 = scmp.eq.s32.totalorder %s19, 1
    %p163 = por %p161, %p162
    %p164 = scmp.ne.s32.totalorder %s155, %s156
    %p165 = scmp.eq.s32.totalorder %s19, 0
    %p166 = por %p164, %p165
    %p167 = scmp.ne.s32.totalorder %s155, %s156
    %p168 = scmp.eq.s32.totalorder %s20, 1
    %p169 = por %p167, %p168
    %p171 = scmp.ne.s32.totalorder %s156, %s170
    %p172 = scmp.eq.s32.totalorder %s20, 0
    %p173 = por %p171, %p172
    %s175 = sadd.s32 %s174, 1
    %p178 = scmp.eq.s32.totalorder %s14, 1
    %p179 = scmp.ne.s32.totalorder %s174, %s176
    %p180 = scmp.eq.s32.totalorder %s14, 0
    %p181 = por %p179, %p180
    %p182 = scmp.ne.s32.totalorder %s174, %s176
    %p183 = scmp.eq.s32.totalorder %s19, 1
    %p184 = por %p182, %p183
    %p185 = scmp.ne.s32.totalorder %s176, %s177
    %p186 = scmp.eq.s32.totalorder %s19, 0
    %p187 = por %p185, %p186
    %p188 = scmp.ne.s32.totalorder %s176, %s177
    %p189 = scmp.eq.s32.totalorder %s20, 1
    %p190 = por %p188, %p189
    %p192 = scmp.ne.s32.totalorder %s177, %s191
    %p193 = scmp.eq.s32.totalorder %s20, 0
    %p194 = por %p192, %p193
    %s195 = ssub.s32 %s14, %s21
    %p196 = scmp.eq.s32.totalorder %s195, 0
    %s198 = sadd.s32 %s197, 1
    %s199 = scalar_select %p196, %s197, %s198
    %p202 = pneg %p196
    %p203 = scmp.eq.s32.totalorder %s14, 1
    %p204 = por %p202, %p203
    %p205 = scmp.ne.s32.totalorder %s197, %s200
    %p206 = scmp.eq.s32.totalorder %s14, 0
    %p207 = por %p205, %p206
    %p208 = scmp.ne.s32.totalorder %s197, %s200
    %p209 = scmp.eq.s32.totalorder %s19, 1
    %p210 = por %p208, %p209
    %p211 = scmp.ne.s32.totalorder %s200, %s201
    %p212 = scmp.eq.s32.totalorder %s19, 0
    %p213 = por %p211, %p212
    %p214 = scmp.ne.s32.totalorder %s200, %s201
    %p215 = scmp.eq.s32.totalorder %s20, 1
    %p216 = por %p214, %p215
    %p218 = scmp.ne.s32.totalorder %s201, %s217
    %p219 = scmp.eq.s32.totalorder %s20, 0
    %p220 = por %p218, %p219
    %p221 = scmp.le.s32.totalorder 1, %s14
    %p222 = scmp.lt.s32.totalorder %s14, 3
    %p223 = pnand %p221, %p222
    %p224 = pneg %p223
    // Predicated region
    $region9: #{pool_cross_forward.1} parent=5 // pred_check
      _
    $region10: #{pool_cross_forward.1} parent=5 // pred_check_branch
      %226 = sbr.rel (%p223) target = $region12
    $region11: #{pool_cross_forward.1} parent=5 // pred_region
      %s227 = ssub.s32 %s14, 1
      // Predicated region
      $region13: #{pool_cross_forward.1} parent=11 // pred_check
        %p228 = pneg %p61
      $region14: #{pool_cross_forward.1} parent=11 // pred_check_branch
        %230 = sbr.rel (%p228) target = $region16
      $region15: #{pool_cross_forward.1} parent=11 // pred_region
        _
      $region16: #{pool_cross_forward.1} parent=11 // pred_fallthru
        _
      // Predicated region
      $region17: #{pool_cross_forward.1} parent=11 // pred_check
        %p231 = pneg %p82
      $region18: #{pool_cross_forward.1} parent=11 // pred_check_branch
        %233 = sbr.rel (%p231) target = $region20
      $region19: #{pool_cross_forward.1} parent=11 // pred_region
        _
      $region20: #{pool_cross_forward.1} parent=11 // pred_fallthru
        _
      // Predicated region
      $region21: #{pool_cross_forward.1} parent=11 // pred_check
        %p234 = pneg %p103
      $region22: #{pool_cross_forward.1} parent=11 // pred_check_branch
        %236 = sbr.rel (%p234) target = $region24
      $region23: #{pool_cross_forward.1} parent=11 // pred_region
        _
      $region24: #{pool_cross_forward.1} parent=11 // pred_fallthru
        _
      // Predicated region
      $region25: #{pool_cross_forward.1} parent=11 // pred_check
        %p237 = pneg %p124
      $region26: #{pool_cross_forward.1} parent=11 // pred_check_branch
        %239 = sbr.rel (%p237) target = $region28
      $region27: #{pool_cross_forward.1} parent=11 // pred_region
        _
      $region28: #{pool_cross_forward.1} parent=11 // pred_fallthru
        _
      // Predicated region
      $region29: #{pool_cross_forward.1} parent=11 // pred_check
        %p240 = pneg %p145
      $region30: #{pool_cross_forward.1} parent=11 // pred_check_branch
        %242 = sbr.rel (%p240) target = $region32
      $region31: #{pool_cross_forward.1} parent=11 // pred_region
        _
      $region32: #{pool_cross_forward.1} parent=11 // pred_fallthru
        _
      // Predicated region
      $region33: #{pool_cross_forward.1} parent=11 // pred_check
        %p243 = pneg %p166
      $region34: #{pool_cross_forward.1} parent=11 // pred_check_branch
        %245 = sbr.rel (%p243) target = $region36
      $region35: #{pool_cross_forward.1} parent=11 // pred_region
        _
      $region36: #{pool_cross_forward.1} parent=11 // pred_fallthru
        _
      // Predicated region
      $region37: #{pool_cross_forward.1} parent=11 // pred_check
        %p246 = pneg %p187
      $region38: #{pool_cross_forward.1} parent=11 // pred_check_branch
        %248 = sbr.rel (%p246) target = $region40
      $region39: #{pool_cross_forward.1} parent=11 // pred_region
        _
      $region40: #{pool_cross_forward.1} parent=11 // pred_fallthru
        _
    $region12: #{pool_cross_forward.1} parent=5 // pred_fallthru
      _
    %p249 = scmp.lt.s32.totalorder %s14, 2
    // Predicated region
    $region41: #{pool_cross_forward.1} parent=5 // pred_check
      %p250 = pneg %p249
    $region42: #{pool_cross_forward.1} parent=5 // pred_check_branch
      %252 = sbr.rel (%p250) target = $region44
    $region43: #{pool_cross_forward.1} parent=5 // pred_region
      // Predicated region
      $region45: #{pool_cross_forward.1} parent=43 // pred_check
        %p253 = pneg %p34
      $region46: #{pool_cross_forward.1} parent=43 // pred_check_branch
        %255 = sbr.rel (%p253) target = $region48
      $region47: #{pool_cross_forward.1} parent=43 // pred_region
        %p256 = scmp.lt.s32.totalorder %s14, 1
        %s257 = scalar_select %p256, %s14, 1
        %s258 = smul.addr %s257, 32
        %s259 = smul.addr %s258, 8
        %s260 = scalar_lea.vmem %s0, %s259
      $region48: #{pool_cross_forward.1} parent=43 // pred_fallthru
        _
    $region44: #{pool_cross_forward.1} parent=5 // pred_fallthru
      _
    %p261 = scmp.le.s32.totalorder 1, %s14
    %p262 = scmp.lt.s32.totalorder %s14, 3
    %p263 = pnand %p261, %p262
    %p264 = pneg %p263
    // Predicated region
    $region49: #{pool_cross_forward.1} parent=5 // pred_check
      _
    $region50: #{pool_cross_forward.1} parent=5 // pred_check_branch
      %266 = sbr.rel (%p263) target = $region52
    $region51: #{pool_cross_forward.1} parent=5 // pred_region
      %s267 = ssub.s32 %s14, 1
      %p268 = scmp.lt.s32.totalorder %s19, 1
      %s269 = scalar_select %p268, %s19, 1
      %s270 = smul.addr %s269, 32
      %s271 = smul.addr %s270, 8
      %s272 = scalar_lea.vmem %s0, %s271
      %p273 = pneg %p40
      %p274 = pneg %p37
      %p275 = pneg %p61
      %p276 = pneg %p58
      %p277 = pneg %p82
      %p278 = pneg %p79
      %p279 = pneg %p103
      %p280 = pneg %p100
      %p281 = pneg %p124
      %p282 = pneg %p121
      %p283 = pneg %p145
      %p284 = pneg %p142
      %p285 = pneg %p166
      %p286 = pneg %p163
      %p287 = pneg %p187
      %p288 = pneg %p184
      %p289 = pneg %p213
      %p290 = pneg %p210
      %p291 = scmp.lt.s32.totalorder %s19, 1
      %s292 = scalar_select %p291, %s19, 1
      %s293 = smul.addr %s292, 2
      %s294 = smul.addr %s293, 4
      %s295 = scalar_lea.vmem %s8, %s294
      %p296 = scmp.lt.s32.totalorder %s19, 1
      %s297 = scalar_select %p296, %s19, 1
      %s298 = smul.addr %s297, 32
      %s299 = smul.addr %s298, 8
      %s300 = scalar_lea.vmem %s0, %s299
      %p301 = scmp.lt.s32.totalorder %s19, 1
      %s302 = scalar_select %p301, %s19, 1
      %s303 = smul.addr %s302, 2
      %s304 = smul.addr %s303, 4
      %s305 = scalar_lea.vmem %s8, %s304
      %v307 = vld [vmem:[%s300] sm:$0xff]
      %v308 = vld [vmem:[%s300 + $0x8] sm:$0xff]
      %v309 = vld [vmem:[%s300 + $0x10] sm:$0xff]
      %v310 = vld [vmem:[%s300 + $0x18] sm:$0xff]
      %v311 = vld [vmem:[%s300 + $0x20] sm:$0xff]
      %v312 = vld [vmem:[%s300 + $0x28] sm:$0xff]
      %v313 = vld [vmem:[%s300 + $0x30] sm:$0xff]
      %v314 = vld [vmem:[%s300 + $0x38] sm:$0xff]
      %v315 = vld [vmem:[%s300 + $0x40] sm:$0xff]
      %v316 = vld [vmem:[%s300 + $0x48] sm:$0xff]
      %v317 = vld [vmem:[%s300 + $0x50] sm:$0xff]
      %v318 = vld [vmem:[%s300 + $0x58] sm:$0xff]
      %v319 = vld [vmem:[%s300 + $0x60] sm:$0xff]
      %v320 = vld [vmem:[%s300 + $0x68] sm:$0xff]
      %v321 = vld [vmem:[%s300 + $0x70] sm:$0xff]
      %v322 = vld [vmem:[%s300 + $0x78] sm:$0xff]
      %v323 = vld [vmem:[%s300 + $0x80] sm:$0xff]
      %v324 = vld [vmem:[%s300 + $0x88] sm:$0xff]
      %v325 = vld [vmem:[%s300 + $0x90] sm:$0xff]
      %v326 = vld [vmem:[%s300 + $0x98] sm:$0xff]
      %v327 = vld [vmem:[%s300 + $0xa0] sm:$0xff]
      %v328 = vld [vmem:[%s300 + $0xa8] sm:$0xff]
      %v329 = vld [vmem:[%s300 + $0xb0] sm:$0xff]
      %v330 = vld [vmem:[%s300 + $0xb8] sm:$0xff]
      %v331 = vld [vmem:[%s300 + $0xc0] sm:$0xff]
      %v332 = vld [vmem:[%s300 + $0xc8] sm:$0xff]
      %v333 = vld [vmem:[%s300 + $0xd0] sm:$0xff]
      %v334 = vld [vmem:[%s300 + $0xd8] sm:$0xff]
      %v335 = vld [vmem:[%s300 + $0xe0] sm:$0xff]
      %v336 = vld [vmem:[%s300 + $0xe8] sm:$0xff]
      %v337 = vld [vmem:[%s300 + $0xf0] sm:$0xff]
      %v338 = vld [vmem:[%s300 + $0xf8] sm:$0xff]
      %vm339 = vcmask 31744
      %340 = vst.msk [vmem:[#allocation2] sm:$0xff] %vm339, 0.0
      %341 = vst.msk [vmem:[#allocation2 + $0x8] sm:$0xff] %vm339, 0.0
      %vm342 = vcmask 25600
      %343 = vst.msk [vmem:[#allocation2 + $0x10] sm:$0x3] %vm342, 0.0
      %s344 = scalar_lea.vmem [#allocation2], 408
      %345 = vst.msk [vmem:[%s344] sm:$0xff] %vm339, 0.0
      %346 = vst.msk [vmem:[%s344 + $0x8] sm:$0xff] %vm339, 0.0
      %347 = vst.msk [vmem:[%s344 + $0x10] sm:$0x3] %vm342, 0.0
      %vm348 = vcmask 24576
      %349 = vst.msk [vmem:[#allocation2] sm:$0x1] %vm348, 0.0
      %350 = vst.msk [vmem:[#allocation2 + $0x18] sm:$0x1] %vm348, 0.0
      %351 = vst.msk [vmem:[#allocation2 + $0x30] sm:$0x1] %vm348, 0.0
      %352 = vst.msk [vmem:[#allocation2 + $0x48] sm:$0x1] %vm348, 0.0
      %353 = vst.msk [vmem:[#allocation2 + $0x60] sm:$0x1] %vm348, 0.0
      %354 = vst.msk [vmem:[#allocation2 + $0x78] sm:$0x1] %vm348, 0.0
      %355 = vst.msk [vmem:[#allocation2 + $0x90] sm:$0x1] %vm348, 0.0
      %356 = vst.msk [vmem:[#allocation2 + $0xa8] sm:$0x1] %vm348, 0.0
      %357 = vst.msk [vmem:[#allocation2 + $0xc0] sm:$0x1] %vm348, 0.0
      %358 = vst.msk [vmem:[#allocation2 + $0xd8] sm:$0x1] %vm348, 0.0
      %359 = vst.msk [vmem:[#allocation2 + $0xf0] sm:$0x1] %vm348, 0.0
      %360 = vst.msk [vmem:[#allocation2 + $0x108] sm:$0x1] %vm348, 0.0
      %361 = vst.msk [vmem:[#allocation2 + $0x120] sm:$0x1] %vm348, 0.0
      %362 = vst.msk [vmem:[#allocation2 + $0x138] sm:$0x1] %vm348, 0.0
      %363 = vst.msk [vmem:[#allocation2 + $0x150] sm:$0x1] %vm348, 0.0
      %364 = vst.msk [vmem:[#allocation2 + $0x168] sm:$0x1] %vm348, 0.0
      %365 = vst.msk [vmem:[#allocation2 + $0x180] sm:$0x1] %vm348, 0.0
      %366 = vst.msk [vmem:[#allocation2 + $0x198] sm:$0x1] %vm348, 0.0
      %367 = vst.msk [vmem:[#allocation2 + $0x11] sm:$0x1] %vm348, 0.0
      %368 = vst.msk [vmem:[#allocation2 + $0x29] sm:$0x1] %vm348, 0.0
      %369 = vst.msk [vmem:[#allocation2 + $0x41] sm:$0x1] %vm348, 0.0
      %370 = vst.msk [vmem:[#allocation2 + $0x59] sm:$0x1] %vm348, 0.0
      %371 = vst.msk [vmem:[#allocation2 + $0x71] sm:$0x1] %vm348, 0.0
      %372 = vst.msk [vmem:[#allocation2 + $0x89] sm:$0x1] %vm348, 0.0
      %373 = vst.msk [vmem:[#allocation2 + $0xa1] sm:$0x1] %vm348, 0.0
      %374 = vst.msk [vmem:[#allocation2 + $0xb9] sm:$0x1] %vm348, 0.0
      %375 = vst.msk [vmem:[#allocation2 + $0xd1] sm:$0x1] %vm348, 0.0
      %376 = vst.msk [vmem:[#allocation2 + $0xe9] sm:$0x1] %vm348, 0.0
      %377 = vst.msk [vmem:[#allocation2 + $0x101] sm:$0x1] %vm348, 0.0
      %378 = vst.msk [vmem:[#allocation2 + $0x119] sm:$0x1] %vm348, 0.0
      %379 = vst.msk [vmem:[#allocation2 + $0x131] sm:$0x1] %vm348, 0.0
      %380 = vst.msk [vmem:[#allocation2 + $0x149] sm:$0x1] %vm348, 0.0
      %381 = vst.msk [vmem:[#allocation2 + $0x161] sm:$0x1] %vm348, 0.0
      %382 = vst.msk [vmem:[#allocation2 + $0x179] sm:$0x1] %vm348, 0.0
      %383 = vst.msk [vmem:[#allocation2 + $0x191] sm:$0x1] %vm348, 0.0
      %384 = vst.msk [vmem:[#allocation2 + $0x1a9] sm:$0x1] %vm348, 0.0
      %s385 = scalar_lea.vmem [#allocation2], 24
      %386 = vst.msk [vmem:[%s385 + $0x1] sm:$0xff] %vm339, %v307
      %387 = vst.msk [vmem:[%s385 + $0x9] sm:$0xff] %vm339, %v308
      %388 = vst.msk [vmem:[%s385 + $0x19] sm:$0xff] %vm339, %v309
      %389 = vst.msk [vmem:[%s385 + $0x21] sm:$0xff] %vm339, %v310
      %390 = vst.msk [vmem:[%s385 + $0x31] sm:$0xff] %vm339, %v311
      %391 = vst.msk [vmem:[%s385 + $0x39] sm:$0xff] %vm339, %v312
      %392 = vst.msk [vmem:[%s385 + $0x49] sm:$0xff] %vm339, %v313
      %393 = vst.msk [vmem:[%s385 + $0x51] sm:$0xff] %vm339, %v314
      %394 = vst.msk [vmem:[%s385 + $0x61] sm:$0xff] %vm339, %v315
      %395 = vst.msk [vmem:[%s385 + $0x69] sm:$0xff] %vm339, %v316
      %396 = vst.msk [vmem:[%s385 + $0x79] sm:$0xff] %vm339, %v317
      %397 = vst.msk [vmem:[%s385 + $0x81] sm:$0xff] %vm339, %v318
      %398 = vst.msk [vmem:[%s385 + $0x91] sm:$0xff] %vm339, %v319
      %399 = vst.msk [vmem:[%s385 + $0x99] sm:$0xff] %vm339, %v320
      %400 = vst.msk [vmem:[%s385 + $0xa9] sm:$0xff] %vm339, %v321
      %401 = vst.msk [vmem:[%s385 + $0xb1] sm:$0xff] %vm339, %v322
      %402 = vst.msk [vmem:[%s385 + $0xc1] sm:$0xff] %vm339, %v323
      %403 = vst.msk [vmem:[%s385 + $0xc9] sm:$0xff] %vm339, %v324
      %404 = vst.msk [vmem:[%s385 + $0xd9] sm:$0xff] %vm339, %v325
      %405 = vst.msk [vmem:[%s385 + $0xe1] sm:$0xff] %vm339, %v326
      %406 = vst.msk [vmem:[%s385 + $0xf1] sm:$0xff] %vm339, %v327
      %407 = vst.msk [vmem:[%s385 + $0xf9] sm:$0xff] %vm339, %v328
      %408 = vst.msk [vmem:[%s385 + $0x109] sm:$0xff] %vm339, %v329
      %409 = vst.msk [vmem:[%s385 + $0x111] sm:$0xff] %vm339, %v330
      %410 = vst.msk [vmem:[%s385 + $0x121] sm:$0xff] %vm339, %v331
      %411 = vst.msk [vmem:[%s385 + $0x129] sm:$0xff] %vm339, %v332
      %412 = vst.msk [vmem:[%s385 + $0x139] sm:$0xff] %vm339, %v333
      %413 = vst.msk [vmem:[%s385 + $0x141] sm:$0xff] %vm339, %v334
      %414 = vst.msk [vmem:[%s385 + $0x151] sm:$0xff] %vm339, %v335
      %415 = vst.msk [vmem:[%s385 + $0x159] sm:$0xff] %vm339, %v336
      %416 = vst.msk [vmem:[%s385 + $0x169] sm:$0xff] %vm339, %v337
      %417 = vst.msk [vmem:[%s385 + $0x171] sm:$0xff] %vm339, %v338
      %418 = vst [vmem:[#allocation3] sm:$0xff] 0.0
      %419 = vst [vmem:[#allocation3 + $0x8] sm:$0xff] 0.0
      %420 = vst [vmem:[#allocation3 + $0x10] sm:$0x3] 0.0
      %s421 = scalar_lea.vmem [#allocation3], 408
      %422 = vst [vmem:[%s421] sm:$0xff] 0.0
      %423 = vst [vmem:[%s421 + $0x8] sm:$0xff] 0.0
      %424 = vst [vmem:[%s421 + $0x10] sm:$0x3] 0.0
      %425 = vst [vmem:[#allocation3] sm:$0x1] 0.0
      %426 = vst [vmem:[#allocation3 + $0x18] sm:$0x1] 0.0
      %427 = vst [vmem:[#allocation3 + $0x30] sm:$0x1] 0.0
      %428 = vst [vmem:[#allocation3 + $0x48] sm:$0x1] 0.0
      %429 = vst [vmem:[#allocation3 + $0x60] sm:$0x1] 0.0
      %430 = vst [vmem:[#allocation3 + $0x78] sm:$0x1] 0.0
      %431 = vst [vmem:[#allocation3 + $0x90] sm:$0x1] 0.0
      %432 = vst [vmem:[#allocation3 + $0xa8] sm:$0x1] 0.0
      %433 = vst [vmem:[#allocation3 + $0xc0] sm:$0x1] 0.0
      %434 = vst [vmem:[#allocation3 + $0xd8] sm:$0x1] 0.0
      %435 = vst [vmem:[#allocation3 + $0xf0] sm:$0x1] 0.0
      %436 = vst [vmem:[#allocation3 + $0x108] sm:$0x1] 0.0
      %437 = vst [vmem:[#allocation3 + $0x120] sm:$0x1] 0.0
      %438 = vst [vmem:[#allocation3 + $0x138] sm:$0x1] 0.0
      %439 = vst [vmem:[#allocation3 + $0x150] sm:$0x1] 0.0
      %440 = vst [vmem:[#allocation3 + $0x168] sm:$0x1] 0.0
      %441 = vst [vmem:[#allocation3 + $0x180] sm:$0x1] 0.0
      %442 = vst [vmem:[#allocation3 + $0x198] sm:$0x1] 0.0
      %443 = vst [vmem:[#allocation3 + $0x11] sm:$0x1] 0.0
      %444 = vst [vmem:[#allocation3 + $0x29] sm:$0x1] 0.0
      %445 = vst [vmem:[#allocation3 + $0x41] sm:$0x1] 0.0
      %446 = vst [vmem:[#allocation3 + $0x59] sm:$0x1] 0.0
      %447 = vst [vmem:[#allocation3 + $0x71] sm:$0x1] 0.0
      %448 = vst [vmem:[#allocation3 + $0x89] sm:$0x1] 0.0
      %449 = vst [vmem:[#allocation3 + $0xa1] sm:$0x1] 0.0
      %450 = vst [vmem:[#allocation3 + $0xb9] sm:$0x1] 0.0
      %451 = vst [vmem:[#allocation3 + $0xd1] sm:$0x1] 0.0
      %452 = vst [vmem:[#allocation3 + $0xe9] sm:$0x1] 0.0
      %453 = vst [vmem:[#allocation3 + $0x101] sm:$0x1] 0.0
      %454 = vst [vmem:[#allocation3 + $0x119] sm:$0x1] 0.0
      %455 = vst [vmem:[#allocation3 + $0x131] sm:$0x1] 0.0
      %456 = vst [vmem:[#allocation3 + $0x149] sm:$0x1] 0.0
      %457 = vst [vmem:[#allocation3 + $0x161] sm:$0x1] 0.0
      %458 = vst [vmem:[#allocation3 + $0x179] sm:$0x1] 0.0
      %459 = vst [vmem:[#allocation3 + $0x191] sm:$0x1] 0.0
      %460 = vst [vmem:[#allocation3 + $0x1a9] sm:$0x1] 0.0
      %v461 = vld [vmem:[%s1] sm:$0xff]
      %v462 = vld [vmem:[%s1 + $0x8] sm:$0x33]
      %v463 = vld [vmem:[%s1 + $0x10] sm:$0xff]
      %v464 = vld [vmem:[%s1 + $0x18] sm:$0x33]
      %v465 = vld [vmem:[%s1 + $0x20] sm:$0xff]
      %v466 = vld [vmem:[%s1 + $0x28] sm:$0x33]
      %v467 = vld [vmem:[%s2] sm:$0x3]
      %v468 = vld [vmem:[%s3] sm:$0xf]
      %v469 = vld [vmem:[%s3 + $0x4] sm:$0xf]
      %v470 = vld [vmem:[%s3 + $0x8] sm:$0xf]
      %v471 = vld [vmem:[%s3 + $0xc] sm:$0xf]
      %v472 = vld [vmem:[%s3 + $0x10] sm:$0xf]
      %v473 = vld [vmem:[%s3 + $0x14] sm:$0xf]
      %v474 = vld [vmem:[%s3 + $0x18] sm:$0xf]
      %v475 = vld [vmem:[%s3 + $0x1c] sm:$0xf]
      %v476 = vld [vmem:[%s3 + $0x20] sm:$0xf]
      %v477 = vld [vmem:[%s3 + $0x24] sm:$0xf]
      %v478 = vld [vmem:[%s3 + $0x28] sm:$0xf]
      %v479 = vld [vmem:[%s3 + $0x2c] sm:$0xf]
      %v480 = vld [vmem:[%s3 + $0x30] sm:$0xf]
      %v481 = vld [vmem:[%s3 + $0x34] sm:$0xf]
      %v482 = vld [vmem:[%s3 + $0x38] sm:$0xf]
      %v483 = vld [vmem:[%s3 + $0x3c] sm:$0xf]
      %v484 = vld [vmem:[%s3 + $0x40] sm:$0xf]
      %v485 = vld [vmem:[%s3 + $0x44] sm:$0xf]
      %v486 = vld [vmem:[%s3 + $0x48] sm:$0xf]
      %v487 = vld [vmem:[%s3 + $0x4c] sm:$0xf]
      %v488 = vld [vmem:[%s3 + $0x50] sm:$0xf]
      %v489 = vld [vmem:[%s3 + $0x54] sm:$0xf]
      %v490 = vld [vmem:[%s3 + $0x58] sm:$0xf]
      %v491 = vld [vmem:[%s3 + $0x5c] sm:$0xf]
      %v492 = vld [vmem:[%s3 + $0x60] sm:$0xf]
      %v493 = vld [vmem:[%s3 + $0x64] sm:$0xf]
      %v494 = vld [vmem:[%s3 + $0x68] sm:$0xf]
      %v495 = vld [vmem:[%s3 + $0x6c] sm:$0xf]
      %v496 = vld [vmem:[%s3 + $0x70] sm:$0xf]
      %v497 = vld [vmem:[%s3 + $0x74] sm:$0xf]
      %v498 = vld [vmem:[%s3 + $0x78] sm:$0xf]
      %v499 = vld [vmem:[%s3 + $0x7c] sm:$0xf]
      %v500 = vld [vmem:[%s3 + $0x80] sm:$0xf]
      %v501 = vld [vmem:[%s3 + $0x84] sm:$0xf]
      %v502 = vld [vmem:[%s3 + $0x88] sm:$0xf]
      %v503 = vld [vmem:[%s3 + $0x8c] sm:$0xf]
      %v504 = vld [vmem:[%s3 + $0x90] sm:$0xf]
      %v505 = vld [vmem:[%s3 + $0x94] sm:$0xf]
      %v506 = vld [vmem:[%s3 + $0x98] sm:$0xf]
      %v507 = vld [vmem:[%s3 + $0x9c] sm:$0xf]
      %v508 = vld [vmem:[%s3 + $0xa0] sm:$0xf]
      %v509 = vld [vmem:[%s3 + $0xa4] sm:$0xf]
      %v510 = vld [vmem:[%s3 + $0xa8] sm:$0xf]
      %v511 = vld [vmem:[%s3 + $0xac] sm:$0xf]
      %v512 = vld [vmem:[%s3 + $0xb0] sm:$0xf]
      %v513 = vld [vmem:[%s3 + $0xb4] sm:$0xf]
      %v514 = vld [vmem:[%s3 + $0xb8] sm:$0xf]
      %v515 = vld [vmem:[%s3 + $0xbc] sm:$0xf]
      %v516 = vld [vmem:[%s3 + $0xc0] sm:$0xf]
      %v517 = vld [vmem:[%s3 + $0xc4] sm:$0xf]
      %v518 = vld [vmem:[%s3 + $0xc8] sm:$0xf]
      %v519 = vld [vmem:[%s3 + $0xcc] sm:$0xf]
      %v520 = vld [vmem:[%s3 + $0xd0] sm:$0xf]
      %v521 = vld [vmem:[%s3 + $0xd4] sm:$0xf]
      %v522 = vld [vmem:[%s3 + $0xd8] sm:$0xf]
      %v523 = vld [vmem:[%s3 + $0xdc] sm:$0xf]
      %v524 = vld [vmem:[%s3 + $0xe0] sm:$0xf]
      %v525 = vld [vmem:[%s3 + $0xe4] sm:$0xf]
      %v526 = vld [vmem:[%s3 + $0xe8] sm:$0xf]
      %v527 = vld [vmem:[%s3 + $0xec] sm:$0xf]
      %v528 = vld [vmem:[%s3 + $0xf0] sm:$0xf]
      %v529 = vld [vmem:[%s3 + $0xf4] sm:$0xf]
      %v530 = vld [vmem:[%s3 + $0xf8] sm:$0xf]
      %v531 = vld [vmem:[%s3 + $0xfc] sm:$0xf]
      %v532 = vld [vmem:[%s3 + $0x100] sm:$0xf]
      %v533 = vld [vmem:[%s3 + $0x104] sm:$0xf]
      %v534 = vld [vmem:[%s3 + $0x108] sm:$0xf]
      %v535 = vld [vmem:[%s3 + $0x10c] sm:$0xf]
      %v536 = vld [vmem:[%s3 + $0x110] sm:$0xf]
      %v537 = vld [vmem:[%s3 + $0x114] sm:$0xf]
      %v538 = vld [vmem:[%s3 + $0x118] sm:$0xf]
      %v539 = vld [vmem:[%s3 + $0x11c] sm:$0xf]
      %v540 = vld [vmem:[%s3 + $0x120] sm:$0xf]
      %v541 = vld [vmem:[%s3 + $0x124] sm:$0xf]
      %v542 = vld [vmem:[%s3 + $0x128] sm:$0xf]
      %v543 = vld [vmem:[%s3 + $0x12c] sm:$0xf]
      %v544 = vld [vmem:[%s3 + $0x130] sm:$0xf]
      %v545 = vld [vmem:[%s3 + $0x134] sm:$0xf]
      %v546 = vld [vmem:[%s3 + $0x138] sm:$0xf]
      %v547 = vld [vmem:[%s3 + $0x13c] sm:$0xf]
      %v548 = vld [vmem:[%s3 + $0x140] sm:$0xf]
      %v549 = vld [vmem:[%s3 + $0x144] sm:$0xf]
      %v550 = vld [vmem:[%s3 + $0x148] sm:$0xf]
      %v551 = vld [vmem:[%s3 + $0x14c] sm:$0xf]
      %v552 = vld [vmem:[%s3 + $0x150] sm:$0xf]
      %v553 = vld [vmem:[%s3 + $0x154] sm:$0xf]
      %v554 = vld [vmem:[%s3 + $0x158] sm:$0xf]
      %v555 = vld [vmem:[%s3 + $0x15c] sm:$0xf]
      %v556 = vld [vmem:[%s3 + $0x160] sm:$0xf]
      %v557 = vld [vmem:[%s3 + $0x164] sm:$0xf]
      %v558 = vld [vmem:[%s3 + $0x168] sm:$0xf]
      %v559 = vld [vmem:[%s3 + $0x16c] sm:$0xf]
      %v560 = vld [vmem:[%s3 + $0x170] sm:$0xf]
      %v561 = vld [vmem:[%s3 + $0x174] sm:$0xf]
      %v562 = vld [vmem:[%s3 + $0x178] sm:$0xf]
      %v563 = vld [vmem:[%s3 + $0x17c] sm:$0xf]
      %v564 = vld [vmem:[%s3 + $0x180] sm:$0xf]
      %v565 = vld [vmem:[%s3 + $0x184] sm:$0xf]
      %v566 = vld [vmem:[%s3 + $0x188] sm:$0xf]
      %v567 = vld [vmem:[%s3 + $0x18c] sm:$0xf]
      %v568 = vld [vmem:[%s3 + $0x190] sm:$0xf]
      %v569 = vld [vmem:[%s3 + $0x194] sm:$0xf]
      %v570 = vld [vmem:[%s3 + $0x198] sm:$0xf]
      %v571 = vld [vmem:[%s3 + $0x19c] sm:$0xf]
      %v572 = vld [vmem:[%s3 + $0x1a0] sm:$0xf]
      %v573 = vld [vmem:[%s3 + $0x1a4] sm:$0xf]
      %v574 = vld [vmem:[%s3 + $0x1a8] sm:$0xf]
      %v575 = vld [vmem:[%s3 + $0x1ac] sm:$0xf]
      %v576 = vld [vmem:[%s3 + $0x1b0] sm:$0xf]
      %v577 = vld [vmem:[%s3 + $0x1b4] sm:$0xf]
      %v578 = vld [vmem:[%s3 + $0x1b8] sm:$0xf]
      %v579 = vld [vmem:[%s3 + $0x1bc] sm:$0xf]
      %v580 = vld [vmem:[%s3 + $0x1c0] sm:$0xf]
      %v581 = vld [vmem:[%s3 + $0x1c4] sm:$0xf]
      %v582 = vld [vmem:[%s3 + $0x1c8] sm:$0xf]
      %v583 = vld [vmem:[%s3 + $0x1cc] sm:$0xf]
      %v584 = vld [vmem:[%s3 + $0x1d0] sm:$0xf]
      %v585 = vld [vmem:[%s3 + $0x1d4] sm:$0xf]
      %v586 = vld [vmem:[%s3 + $0x1d8] sm:$0xf]
      %v587 = vld [vmem:[%s3 + $0x1dc] sm:$0xf]
      %v588 = vld [vmem:[%s3 + $0x1e0] sm:$0xf]
      %v589 = vld [vmem:[%s3 + $0x1e4] sm:$0xf]
      %v590 = vld [vmem:[%s3 + $0x1e8] sm:$0xf]
      %v591 = vld [vmem:[%s3 + $0x1ec] sm:$0xf]
      %v592 = vld [vmem:[%s3 + $0x1f0] sm:$0xf]
      %v593 = vld [vmem:[%s3 + $0x1f4] sm:$0xf]
      %v594 = vld [vmem:[%s3 + $0x1f8] sm:$0xf]
      %v595 = vld [vmem:[%s3 + $0x1fc] sm:$0xf]
      %v596 = vld [vmem:[%s3 + $0x200] sm:$0xf]
      %v597 = vld [vmem:[%s3 + $0x204] sm:$0xf]
      %v598 = vld [vmem:[%s3 + $0x208] sm:$0xf]
      %v599 = vld [vmem:[%s3 + $0x20c] sm:$0xf]
      %v600 = vld [vmem:[%s3 + $0x210] sm:$0xf]
      %v601 = vld [vmem:[%s3 + $0x214] sm:$0xf]
      %v602 = vld [vmem:[%s3 + $0x218] sm:$0xf]
      %v603 = vld [vmem:[%s3 + $0x21c] sm:$0xf]
      %v604 = vld [vmem:[%s3 + $0x220] sm:$0xf]
      %v605 = vld [vmem:[%s3 + $0x224] sm:$0xf]
      %v606 = vld [vmem:[%s3 + $0x228] sm:$0xf]
      %v607 = vld [vmem:[%s3 + $0x22c] sm:$0xf]
      %v608 = vld [vmem:[%s3 + $0x230] sm:$0xf]
      %v609 = vld [vmem:[%s3 + $0x234] sm:$0xf]
      %v610 = vld [vmem:[%s3 + $0x238] sm:$0xf]
      %v611 = vld [vmem:[%s3 + $0x23c] sm:$0xf]
      %v612 = vld [vmem:[%s4] sm:$0x1]
      %v613 = vld [vmem:[%s5] sm:$0x3]
      %v614 = vld [vmem:[%s6] sm:$0x3]
      %v615 = vld [vmem:[%s6 + $0x2] sm:$0x3]
      %v616 = vld [vmem:[%s6 + $0x4] sm:$0x3]
      %v617 = vld [vmem:[%s7] sm:$0xf]
      %v618 = vld [vmem:[#allocation2] sm:$0xff]
      %v619 = vld [vmem:[#allocation2 + $0x8] sm:$0xff]
      %v620 = vld [vmem:[#allocation2 + $0x10] sm:$0x3]
      %v621 = vld [vmem:[#allocation2 + $0x18] sm:$0xff]
      %v622 = vld [vmem:[#allocation2 + $0x20] sm:$0xff]
      %v623 = vld [vmem:[#allocation2 + $0x28] sm:$0x3]
      %v624 = vld [vmem:[#allocation2 + $0x30] sm:$0xff]
      %v625 = vld [vmem:[#allocation2 + $0x38] sm:$0xff]
      %v626 = vld [vmem:[#allocation2 + $0x40] sm:$0x3]
      %v627 = vld [vmem:[#allocation2 + $0x48] sm:$0xff]
      %v628 = vld [vmem:[#allocation2 + $0x50] sm:$0xff]
      %v629 = vld [vmem:[#allocation2 + $0x58] sm:$0x3]
      %v630 = vld [vmem:[#allocation2 + $0x60] sm:$0xff]
      %v631 = vld [vmem:[#allocation2 + $0x68] sm:$0xff]
      %v632 = vld [vmem:[#allocation2 + $0x70] sm:$0x3]
      %v633 = vld [vmem:[#allocation2 + $0x78] sm:$0xff]
      %v634 = vld [vmem:[#allocation2 + $0x80] sm:$0xff]
      %v635 = vld [vmem:[#allocation2 + $0x88] sm:$0x3]
      %v636 = vld [vmem:[#allocation2 + $0x90] sm:$0xff]
      %v637 = vld [vmem:[#allocation2 + $0x98] sm:$0xff]
      %v638 = vld [vmem:[#allocation2 + $0xa0] sm:$0x3]
      %v639 = vld [vmem:[#allocation2 + $0xa8] sm:$0xff]
      %v640 = vld [vmem:[#allocation2 + $0xb0] sm:$0xff]
      %v641 = vld [vmem:[#allocation2 + $0xb8] sm:$0x3]
      %vm666 = vcmask 1046528
      %v667 = vrot.slane %v618, 1
      %v668 = vrot.slane %v619, 1
      %v669 = vsel %vm666, %v667, %v668
      %v670 = vrot.slane %v620, 1
      %v671 = vsel %vm666, %v668, %v670
      %v672 = vrot.slane %v621, 1
      %v673 = vrot.slane %v622, 1
      %v674 = vsel %vm666, %v672, %v673
      %v675 = vrot.slane %v623, 1
      %v676 = vsel %vm666, %v673, %v675
      %v677 = vrot.slane %v624, 1
      %v678 = vrot.slane %v625, 1
      %v679 = vsel %vm666, %v677, %v678
      %v680 = vrot.slane %v626, 1
      %v681 = vsel %vm666, %v678, %v680
      %v682 = vrot.slane %v627, 1
      %v683 = vrot.slane %v628, 1
      %v684 = vsel %vm666, %v682, %v683
      %v685 = vrot.slane %v629, 1
      %v686 = vsel %vm666, %v683, %v685
      %v687 = vrot.slane %v630, 1
      %v688 = vrot.slane %v631, 1
      %v689 = vsel %vm666, %v687, %v688
      %v690 = vrot.slane %v632, 1
      %v691 = vsel %vm666, %v688, %v690
      %v692 = vrot.slane %v633, 1
      %v693 = vrot.slane %v634, 1
      %v694 = vsel %vm666, %v692, %v693
      %v695 = vrot.slane %v635, 1
      %v696 = vsel %vm666, %v693, %v695
      %v697 = vrot.slane %v636, 1
      %v698 = vrot.slane %v637, 1
      %v699 = vsel %vm666, %v697, %v698
      %v700 = vrot.slane %v638, 1
      %v701 = vsel %vm666, %v698, %v700
      %v702 = vrot.slane %v639, 1
      %v703 = vrot.slane %v640, 1
      %v704 = vsel %vm666, %v702, %v703
      %v705 = vrot.slane %v641, 1
      %v706 = vsel %vm666, %v703, %v705
      %707 = vrot.lane.b32.xlu0 %v669, 4
      %v708 = vpop.permute.xlu0 %707
      %709 = vrot.lane.b32.xlu0 %v671, 4
      %v710 = vpop.permute.xlu0 %709
      %711 = vrot.lane.b32.xlu0 %v674, 4
      %v712 = vpop.permute.xlu0 %711
      %713 = vrot.lane.b32.xlu0 %v676, 4
      %v714 = vpop.permute.xlu0 %713
      %715 = vrot.lane.b32.xlu0 %v679, 4
      %v716 = vpop.permute.xlu0 %715
      %717 = vrot.lane.b32.xlu0 %v681, 4
      %v718 = vpop.permute.xlu0 %717
      %719 = vrot.lane.b32.xlu0 %v684, 4
      %v720 = vpop.permute.xlu0 %719
      %721 = vrot.lane.b32.xlu0 %v686, 4
      %v722 = vpop.permute.xlu0 %721
      %723 = vrot.lane.b32.xlu0 %v689, 4
      %v724 = vpop.permute.xlu0 %723
      %725 = vrot.lane.b32.xlu0 %v691, 4
      %v726 = vpop.permute.xlu0 %725
      %727 = vrot.lane.b32.xlu0 %v694, 4
      %v728 = vpop.permute.xlu0 %727
      %729 = vrot.lane.b32.xlu0 %v696, 4
      %v730 = vpop.permute.xlu0 %729
      %731 = vrot.lane.b32.xlu0 %v699, 4
      %v732 = vpop.permute.xlu0 %731
      %733 = vrot.lane.b32.xlu0 %v701, 4
      %v734 = vpop.permute.xlu0 %733
      %735 = vrot.lane.b32.xlu0 %v704, 4
      %v736 = vpop.permute.xlu0 %735
      %737 = vrot.lane.b32.xlu0 %v706, 4
      %v738 = vpop.permute.xlu0 %737
      %vm755 = vcmask 1045504
      %v756 = vrot.slane %v618, 2
      %v757 = vrot.slane %v619, 2
      %v758 = vsel %vm755, %v756, %v757
      %v759 = vrot.slane %v620, 2
      %v760 = vsel %vm755, %v757, %v759
      %v761 = vrot.slane %v621, 2
      %v762 = vrot.slane %v622, 2
      %v763 = vsel %vm755, %v761, %v762
      %v764 = vrot.slane %v623, 2
      %v765 = vsel %vm755, %v762, %v764
      %v766 = vrot.slane %v624, 2
      %v767 = vrot.slane %v625, 2
      %v768 = vsel %vm755, %v766, %v767
      %v769 = vrot.slane %v626, 2
      %v770 = vsel %vm755, %v767, %v769
      %v771 = vrot.slane %v627, 2
      %v772 = vrot.slane %v628, 2
      %v773 = vsel %vm755, %v771, %v772
      %v774 = vrot.slane %v629, 2
      %v775 = vsel %vm755, %v772, %v774
      %v776 = vrot.slane %v630, 2
      %v777 = vrot.slane %v631, 2
      %v778 = vsel %vm755, %v776, %v777
      %v779 = vrot.slane %v632, 2
      %v780 = vsel %vm755, %v777, %v779
      %v781 = vrot.slane %v633, 2
      %v782 = vrot.slane %v634, 2
      %v783 = vsel %vm755, %v781, %v782
      %v784 = vrot.slane %v635, 2
      %v785 = vsel %vm755, %v782, %v784
      %v786 = vrot.slane %v636, 2
      %v787 = vrot.slane %v637, 2
      %v788 = vsel %vm755, %v786, %v787
      %v789 = vrot.slane %v638, 2
      %v790 = vsel %vm755, %v787, %v789
      %v791 = vrot.slane %v639, 2
      %v792 = vrot.slane %v640, 2
      %v793 = vsel %vm755, %v791, %v792
      %v794 = vrot.slane %v641, 2
      %v795 = vsel %vm755, %v792, %v794
      %796 = vrot.lane.b32.xlu0 %v758, 8
      %v797 = vpop.permute.xlu0 %796
      %798 = vrot.lane.b32.xlu0 %v760, 8
      %v799 = vpop.permute.xlu0 %798
      %800 = vrot.lane.b32.xlu0 %v763, 8
      %v801 = vpop.permute.xlu0 %800
      %802 = vrot.lane.b32.xlu0 %v765, 8
      %v803 = vpop.permute.xlu0 %802
      %804 = vrot.lane.b32.xlu0 %v768, 8
      %v805 = vpop.permute.xlu0 %804
      %806 = vrot.lane.b32.xlu0 %v770, 8
      %v807 = vpop.permute.xlu0 %806
      %808 = vrot.lane.b32.xlu0 %v773, 8
      %v809 = vpop.permute.xlu0 %808
      %810 = vrot.lane.b32.xlu0 %v775, 8
      %v811 = vpop.permute.xlu0 %810
      %812 = vrot.lane.b32.xlu0 %v778, 8
      %v813 = vpop.permute.xlu0 %812
      %814 = vrot.lane.b32.xlu0 %v780, 8
      %v815 = vpop.permute.xlu0 %814
      %816 = vrot.lane.b32.xlu0 %v783, 8
      %v817 = vpop.permute.xlu0 %816
      %818 = vrot.lane.b32.xlu0 %v785, 8
      %v819 = vpop.permute.xlu0 %818
      %820 = vrot.lane.b32.xlu0 %v788, 8
      %v821 = vpop.permute.xlu0 %820
      %822 = vrot.lane.b32.xlu0 %v790, 8
      %v823 = vpop.permute.xlu0 %822
      %824 = vrot.lane.b32.xlu0 %v793, 8
      %v825 = vpop.permute.xlu0 %824
      %826 = vrot.lane.b32.xlu0 %v795, 8
      %v827 = vpop.permute.xlu0 %826
      %v844 = vsel %vm339, %v618, %v708
      %v845 = vsel %vm339, %v619, %v710
      %v846 = vsel %vm339, %v621, %v712
      %v847 = vsel %vm339, %v622, %v714
      %v848 = vsel %vm339, %v624, %v716
      %v849 = vsel %vm339, %v625, %v718
      %v850 = vsel %vm339, %v627, %v720
      %v851 = vsel %vm339, %v628, %v722
      %v852 = vsel %vm339, %v630, %v724
      %v853 = vsel %vm339, %v631, %v726
      %v854 = vsel %vm339, %v633, %v728
      %v855 = vsel %vm339, %v634, %v730
      %v856 = vsel %vm339, %v636, %v732
      %v857 = vsel %vm339, %v637, %v734
      %v858 = vsel %vm339, %v639, %v736
      %v859 = vsel %vm339, %v640, %v738
      %vm860 = vcmask 64512
      %v861 = vsel %vm860, %v844, %v797
      %v862 = vsel %vm860, %v845, %v799
      %v863 = vsel %vm860, %v846, %v801
      %v864 = vsel %vm860, %v847, %v803
      %v865 = vsel %vm860, %v848, %v805
      %v866 = vsel %vm860, %v849, %v807
      %v867 = vsel %vm860, %v850, %v809
      %v868 = vsel %vm860, %v851, %v811
      %v869 = vsel %vm860, %v852, %v813
      %v870 = vsel %vm860, %v853, %v815
      %v871 = vsel %vm860, %v854, %v817
      %v872 = vsel %vm860, %v855, %v819
      %v873 = vsel %vm860, %v856, %v821
      %v874 = vsel %vm860, %v857, %v823
      %v875 = vsel %vm860, %v858, %v825
      %v876 = vsel %vm860, %v859, %v827
      %v877 = vpack.c.bf16 %v862, %v861
      %v878 = vpack.c.bf16 %v864, %v863
      %v879 = vpack.c.bf16 %v866, %v865
      %v880 = vpack.c.bf16 %v868, %v867
      %v881 = vpack.c.bf16 %v870, %v869
      %v882 = vpack.c.bf16 %v872, %v871
      %v883 = vpack.c.bf16 %v874, %v873
      %v884 = vpack.c.bf16 %v876, %v875
      %v885 = vld [vmem:[%s385] sm:$0xff]
      %v886 = vld [vmem:[%s385 + $0x8] sm:$0xff]
      %v887 = vld [vmem:[%s385 + $0x10] sm:$0x3]
      %v888 = vld [vmem:[%s385 + $0x18] sm:$0xff]
      %v889 = vld [vmem:[%s385 + $0x20] sm:$0xff]
      %v890 = vld [vmem:[%s385 + $0x28] sm:$0x3]
      %v891 = vld [vmem:[%s385 + $0x30] sm:$0xff]
      %v892 = vld [vmem:[%s385 + $0x38] sm:$0xff]
      %v893 = vld [vmem:[%s385 + $0x40] sm:$0x3]
      %v894 = vld [vmem:[%s385 + $0x48] sm:$0xff]
      %v895 = vld [vmem:[%s385 + $0x50] sm:$0xff]
      %v896 = vld [vmem:[%s385 + $0x58] sm:$0x3]
      %v897 = vld [vmem:[%s385 + $0x60] sm:$0xff]
      %v898 = vld [vmem:[%s385 + $0x68] sm:$0xff]
      %v899 = vld [vmem:[%s385 + $0x70] sm:$0x3]
      %v900 = vld [vmem:[%s385 + $0x78] sm:$0xff]
      %v901 = vld [vmem:[%s385 + $0x80] sm:$0xff]
      %v902 = vld [vmem:[%s385 + $0x88] sm:$0x3]
      %v903 = vld [vmem:[%s385 + $0x90] sm:$0xff]
      %v904 = vld [vmem:[%s385 + $0x98] sm:$0xff]
      %v905 = vld [vmem:[%s385 + $0xa0] sm:$0x3]
      %v906 = vld [vmem:[%s385 + $0xa8] sm:$0xff]
      %v907 = vld [vmem:[%s385 + $0xb0] sm:$0xff]
      %v908 = vld [vmem:[%s385 + $0xb8] sm:$0x3]
      %v933 = vrot.slane %v885, 1
      %v934 = vrot.slane %v886, 1
      %v935 = vsel %vm666, %v933, %v934
      %v936 = vrot.slane %v887, 1
      %v937 = vsel %vm666, %v934, %v936
      %v938 = vrot.slane %v888, 1
      %v939 = vrot.slane %v889, 1
      %v940 = vsel %vm666, %v938, %v939
      %v941 = vrot.slane %v890, 1
      %v942 = vsel %vm666, %v939, %v941
      %v943 = vrot.slane %v891, 1
      %v944 = vrot.slane %v892, 1
      %v945 = vsel %vm666, %v943, %v944
      %v946 = vrot.slane %v893, 1
      %v947 = vsel %vm666, %v944, %v946
      %v948 = vrot.slane %v894, 1
      %v949 = vrot.slane %v895, 1
      %v950 = vsel %vm666, %v948, %v949
      %v951 = vrot.slane %v896, 1
      %v952 = vsel %vm666, %v949, %v951
      %v953 = vrot.slane %v897, 1
      %v954 = vrot.slane %v898, 1
      %v955 = vsel %vm666, %v953, %v954
      %v956 = vrot.slane %v899, 1
      %v957 = vsel %vm666, %v954, %v956
      %v958 = vrot.slane %v900, 1
      %v959 = vrot.slane %v901, 1
      %v960 = vsel %vm666, %v958, %v959
      %v961 = vrot.slane %v902, 1
      %v962 = vsel %vm666, %v959, %v961
      %v963 = vrot.slane %v903, 1
      %v964 = vrot.slane %v904, 1
      %v965 = vsel %vm666, %v963, %v964
      %v966 = vrot.slane %v905, 1
      %v967 = vsel %vm666, %v964, %v966
      %v968 = vrot.slane %v906, 1
      %v969 = vrot.slane %v907, 1
      %v970 = vsel %vm666, %v968, %v969
      %v971 = vrot.slane %v908, 1
      %v972 = vsel %vm666, %v969, %v971
      %973 = vrot.lane.b32.xlu0 %v935, 4
      %v974 = vpop.permute.xlu0 %973
      %975 = vrot.lane.b32.xlu0 %v937, 4
      %v976 = vpop.permute.xlu0 %975
      %977 = vrot.lane.b32.xlu0 %v940, 4
      %v978 = vpop.permute.xlu0 %977
      %979 = vrot.lane.b32.xlu0 %v942, 4
      %v980 = vpop.permute.xlu0 %979
      %981 = vrot.lane.b32.xlu0 %v945, 4
      %v982 = vpop.permute.xlu0 %981
      %983 = vrot.lane.b32.xlu0 %v947, 4
      %v984 = vpop.permute.xlu0 %983
      %985 = vrot.lane.b32.xlu0 %v950, 4
      %v986 = vpop.permute.xlu0 %985
      %987 = vrot.lane.b32.xlu0 %v952, 4
      %v988 = vpop.permute.xlu0 %987
      %989 = vrot.lane.b32.xlu0 %v955, 4
      %v990 = vpop.permute.xlu0 %989
      %991 = vrot.lane.b32.xlu0 %v957, 4
      %v992 = vpop.permute.xlu0 %991
      %993 = vrot.lane.b32.xlu0 %v960, 4
      %v994 = vpop.permute.xlu0 %993
      %995 = vrot.lane.b32.xlu0 %v962, 4
      %v996 = vpop.permute.xlu0 %995
      %997 = vrot.lane.b32.xlu0 %v965, 4
      %v998 = vpop.permute.xlu0 %997
      %999 = vrot.lane.b32.xlu0 %v967, 4
      %v1000 = vpop.permute.xlu0 %999
      %1001 = vrot.lane.b32.xlu0 %v970, 4
      %v1002 = vpop.permute.xlu0 %1001
      %1003 = vrot.lane.b32.xlu0 %v972, 4
      %v1004 = vpop.permute.xlu0 %1003
      %v1021 = vrot.slane %v885, 2
      %v1022 = vrot.slane %v886, 2
      %v1023 = vsel %vm755, %v1021, %v1022
      %v1024 = vrot.slane %v887, 2
      %v1025 = vsel %vm755, %v1022, %v1024
      %v1026 = vrot.slane %v888, 2
      %v1027 = vrot.slane %v889, 2
      %v1028 = vsel %vm755, %v1026, %v1027
      %v1029 = vrot.slane %v890, 2
      %v1030 = vsel %vm755, %v1027, %v1029
      %v1031 = vrot.slane %v891, 2
      %v1032 = vrot.slane %v892, 2
      %v1033 = vsel %vm755, %v1031, %v1032
      %v1034 = vrot.slane %v893, 2
      %v1035 = vsel %vm755, %v1032, %v1034
      %v1036 = vrot.slane %v894, 2
      %v1037 = vrot.slane %v895, 2
      %v1038 = vsel %vm755, %v1036, %v1037
      %v1039 = vrot.slane %v896, 2
      %v1040 = vsel %vm755, %v1037, %v1039
      %v1041 = vrot.slane %v897, 2
      %v1042 = vrot.slane %v898, 2
      %v1043 = vsel %vm755, %v1041, %v1042
      %v1044 = vrot.slane %v899, 2
      %v1045 = vsel %vm755, %v1042, %v1044
      %v1046 = vrot.slane %v900, 2
      %v1047 = vrot.slane %v901, 2
      %v1048 = vsel %vm755, %v1046, %v1047
      %v1049 = vrot.slane %v902, 2
      %v1050 = vsel %vm755, %v1047, %v1049
      %v1051 = vrot.slane %v903, 2
      %v1052 = vrot.slane %v904, 2
      %v1053 = vsel %vm755, %v1051, %v1052
      %v1054 = vrot.slane %v905, 2
      %v1055 = vsel %vm755, %v1052, %v1054
      %v1056 = vrot.slane %v906, 2
      %v1057 = vrot.slane %v907, 2
      %v1058 = vsel %vm755, %v1056, %v1057
      %v1059 = vrot.slane %v908, 2
      %v1060 = vsel %vm755, %v1057, %v1059
      %1061 = vrot.lane.b32.xlu0 %v1023, 8
      %v1062 = vpop.permute.xlu0 %1061
      %1063 = vrot.lane.b32.xlu0 %v1025, 8
      %v1064 = vpop.permute.xlu0 %1063
      %1065 = vrot.lane.b32.xlu0 %v1028, 8
      %v1066 = vpop.permute.xlu0 %1065
      %1067 = vrot.lane.b32.xlu0 %v1030, 8
      %v1068 = vpop.permute.xlu0 %1067
      %1069 = vrot.lane.b32.xlu0 %v1033, 8
      %v1070 = vpop.permute.xlu0 %1069
      %1071 = vrot.lane.b32.xlu0 %v1035, 8
      %v1072 = vpop.permute.xlu0 %1071
      %1073 = vrot.lane.b32.xlu0 %v1038, 8
      %v1074 = vpop.permute.xlu0 %1073
      %1075 = vrot.lane.b32.xlu0 %v1040, 8
      %v1076 = vpop.permute.xlu0 %1075
      %1077 = vrot.lane.b32.xlu0 %v1043, 8
      %v1078 = vpop.permute.xlu0 %1077
      %1079 = vrot.lane.b32.xlu0 %v1045, 8
      %v1080 = vpop.permute.xlu0 %1079
      %1081 = vrot.lane.b32.xlu0 %v1048, 8
      %v1082 = vpop.permute.xlu0 %1081
      %1083 = vrot.lane.b32.xlu0 %v1050, 8
      %v1084 = vpop.permute.xlu0 %1083
      %1085 = vrot.lane.b32.xlu0 %v1053, 8
      %v1086 = vpop.permute.xlu0 %1085
      %1087 = vrot.lane.b32.xlu0 %v1055, 8
      %v1088 = vpop.permute.xlu0 %1087
      %1089 = vrot.lane.b32.xlu0 %v1058, 8
      %v1090 = vpop.permute.xlu0 %1089
      %1091 = vrot.lane.b32.xlu0 %v1060, 8
      %v1092 = vpop.permute.xlu0 %1091
      %v1109 = vsel %vm339, %v885, %v974
      %v1110 = vsel %vm339, %v886, %v976
      %v1111 = vsel %vm339, %v888, %v978
      %v1112 = vsel %vm339, %v889, %v980
      %v1113 = vsel %vm339, %v891, %v982
      %v1114 = vsel %vm339, %v892, %v984
      %v1115 = vsel %vm339, %v894, %v986
      %v1116 = vsel %vm339, %v895, %v988
      %v1117 = vsel %vm339, %v897, %v990
      %v1118 = vsel %vm339, %v898, %v992
      %v1119 = vsel %vm339, %v900, %v994
      %v1120 = vsel %vm339, %v901, %v996
      %v1121 = vsel %vm339, %v903, %v998
      %v1122 = vsel %vm339, %v904, %v1000
      %v1123 = vsel %vm339, %v906, %v1002
      %v1124 = vsel %vm339, %v907, %v1004
      %v1125 = vsel %vm860, %v1109, %v1062
      %v1126 = vsel %vm860, %v1110, %v1064
      %v1127 = vsel %vm860, %v1111, %v1066
      %v1128 = vsel %vm860, %v1112, %v1068
      %v1129 = vsel %vm860, %v1113, %v1070
      %v1130 = vsel %vm860, %v1114, %v1072
      %v1131 = vsel %vm860, %v1115, %v1074
      %v1132 = vsel %vm860, %v1116, %v1076
      %v1133 = vsel %vm860, %v1117, %v1078
      %v1134 = vsel %vm860, %v1118, %v1080
      %v1135 = vsel %vm860, %v1119, %v1082
      %v1136 = vsel %vm860, %v1120, %v1084
      %v1137 = vsel %vm860, %v1121, %v1086
      %v1138 = vsel %vm860, %v1122, %v1088
      %v1139 = vsel %vm860, %v1123, %v1090
      %v1140 = vsel %vm860, %v1124, %v1092
      %v1141 = vpack.c.bf16 %v1126, %v1125
      %v1142 = vpack.c.bf16 %v1128, %v1127
      %v1143 = vpack.c.bf16 %v1130, %v1129
      %v1144 = vpack.c.bf16 %v1132, %v1131
      %v1145 = vpack.c.bf16 %v1134, %v1133
      %v1146 = vpack.c.bf16 %v1136, %v1135
      %v1147 = vpack.c.bf16 %v1138, %v1137
      %v1148 = vpack.c.bf16 %v1140, %v1139
      %v1151 = vunpack.c.l.b16 %v463
      %v1152 = vunpack.c.h.b16 %v463
      %v1153 = vunpack.c.l.b16 %v464
      %v1154 = vunpack.c.h.b16 %v464
      %v1155 = vpack.c.b16 %v1153, %v1151
      %v1156 = vpack.c.b16 %v1154, %v1152
      %vm1157 = vcmask 97280
      %v1159 = vsel %vm1157, %v1141, 0
      %v1162 = vsel %vm1157, %v1142, 0
      %v1165 = vsel %vm1157, %v1143, 0
      %v1168 = vsel %vm1157, %v1144, 0
      %v1171 = vsel %vm1157, %v1145, 0
      %v1174 = vsel %vm1157, %v1146, 0
      %v1177 = vsel %vm1157, %v1147, 0
      %v1180 = vsel %vm1157, %v1148, 0
      %v1183 = vsel %vm755, %v1155, 0
      %v1186 = vsel %vm755, %v1156, 0
      %1188 = vmatpush.bf16.msra.mxu0 0
      %1189 = vmatpush.bf16.msra.mxu0 0
      %1190 = vmatpush.bf16.msra.mxu0 0
      %1191 = vmatpush.bf16.msra.mxu0 0
      %1192 = vmatpush.bf16.msra.mxu0 0
      %1193 = vmatpush.bf16.msra.mxu0 0
      %1194 = vmatpush.bf16.msra.mxu0 0
      %1195 = vmatpush.bf16.msra.mxu0 %v1183
      %1196 = vmatmul.bf16.gmra.mxu0 %v1159
      %v1197 = vpop.f32.mrf.mxu0
      %v1198 = vadd.f32 0.0, %v1197
      %v1199 = vpop.f32.mrf.mxu0
      %v1200 = vadd.f32 0.0, %v1199
      %1201 = vmatmul.bf16.gmra.mxu0 %v1162
      %v1202 = vpop.f32.mrf.mxu0
      %v1203 = vadd.f32 0.0, %v1202
      %v1204 = vpop.f32.mrf.mxu0
      %v1205 = vadd.f32 0.0, %v1204
      %1206 = vmatmul.bf16.gmra.mxu0 %v1165
      %v1207 = vpop.f32.mrf.mxu0
      %v1208 = vadd.f32 0.0, %v1207
      %v1209 = vpop.f32.mrf.mxu0
      %v1210 = vadd.f32 0.0, %v1209
      %1211 = vmatmul.bf16.gmra.mxu0 %v1168
      %v1212 = vpop.f32.mrf.mxu0
      %v1213 = vadd.f32 0.0, %v1212
      %v1214 = vpop.f32.mrf.mxu0
      %v1215 = vadd.f32 0.0, %v1214
      %1216 = vmatmul.bf16.gmra.mxu0 %v1171
      %v1217 = vpop.f32.mrf.mxu0
      %v1218 = vadd.f32 0.0, %v1217
      %v1219 = vpop.f32.mrf.mxu0
      %v1220 = vadd.f32 0.0, %v1219
      %1221 = vmatmul.bf16.gmra.mxu0 %v1174
      %v1222 = vpop.f32.mrf.mxu0
      %v1223 = vadd.f32 0.0, %v1222
      %v1224 = vpop.f32.mrf.mxu0
      %v1225 = vadd.f32 0.0, %v1224
      %1226 = vmatmul.bf16.gmra.mxu0 %v1177
      %v1227 = vpop.f32.mrf.mxu0
      %v1228 = vadd.f32 0.0, %v1227
      %v1229 = vpop.f32.mrf.mxu0
      %v1230 = vadd.f32 0.0, %v1229
      %1231 = vmatmul.bf16.gmra.mxu0 %v1180
      %v1232 = vpop.f32.mrf.mxu0
      %v1233 = vadd.f32 0.0, %v1232
      %v1234 = vpop.f32.mrf.mxu0
      %v1235 = vadd.f32 0.0, %v1234
      %1236 = vdwg.mxu0
      %1237 = vmatpush.bf16.msra.mxu0 0
      %1238 = vmatpush.bf16.msra.mxu0 0
      %1239 = vmatpush.bf16.msra.mxu0 0
      %1240 = vmatpush.bf16.msra.mxu0 0
      %1241 = vmatpush.bf16.msra.mxu0 0
      %1242 = vmatpush.bf16.msra.mxu0 0
      %1243 = vmatpush.bf16.msra.mxu0 0
      %1244 = vmatpush.bf16.msra.mxu0 %v1186
      %1245 = vmatmul.bf16.gmra.mxu0 %v1159
      %v1246 = vpop.f32.mrf.mxu0
      %v1247 = vadd.f32 0.0, %v1246
      %v1248 = vpop.f32.mrf.mxu0
      %v1249 = vadd.f32 0.0, %v1248
      %1250 = vmatmul.bf16.gmra.mxu0 %v1162
      %v1251 = vpop.f32.mrf.mxu0
      %v1252 = vadd.f32 0.0, %v1251
      %v1253 = vpop.f32.mrf.mxu0
      %v1254 = vadd.f32 0.0, %v1253
      %1255 = vmatmul.bf16.gmra.mxu0 %v1165
      %v1256 = vpop.f32.mrf.mxu0
      %v1257 = vadd.f32 0.0, %v1256
      %v1258 = vpop.f32.mrf.mxu0
      %v1259 = vadd.f32 0.0, %v1258
      %1260 = vmatmul.bf16.gmra.mxu0 %v1168
      %v1261 = vpop.f32.mrf.mxu0
      %v1262 = vadd.f32 0.0, %v1261
      %v1263 = vpop.f32.mrf.mxu0
      %v1264 = vadd.f32 0.0, %v1263
      %1265 = vmatmul.bf16.gmra.mxu0 %v1171
      %v1266 = vpop.f32.mrf.mxu0
      %v1267 = vadd.f32 0.0, %v1266
      %v1268 = vpop.f32.mrf.mxu0
      %v1269 = vadd.f32 0.0, %v1268
      %1270 = vmatmul.bf16.gmra.mxu0 %v1174
      %v1271 = vpop.f32.mrf.mxu0
      %v1272 = vadd.f32 0.0, %v1271
      %v1273 = vpop.f32.mrf.mxu0
      %v1274 = vadd.f32 0.0, %v1273
      %1275 = vmatmul.bf16.gmra.mxu0 %v1177
      %v1276 = vpop.f32.mrf.mxu0
      %v1277 = vadd.f32 0.0, %v1276
      %v1278 = vpop.f32.mrf.mxu0
      %v1279 = vadd.f32 0.0, %v1278
      %1280 = vmatmul.bf16.gmra.mxu0 %v1180
      %v1281 = vpop.f32.mrf.mxu0
      %v1282 = vadd.f32 0.0, %v1281
      %v1283 = vpop.f32.mrf.mxu0
      %v1284 = vadd.f32 0.0, %v1283
      %1285 = vdwg.mxu0
      %v1288 = vunpack.c.l.b16 %v461
      %v1289 = vunpack.c.h.b16 %v461
      %v1290 = vunpack.c.l.b16 %v462
      %v1291 = vunpack.c.h.b16 %v462
      %v1292 = vpack.c.b16 %v1290, %v1288
      %v1293 = vpack.c.b16 %v1291, %v1289
      %v1295 = vsel %vm1157, %v877, 0
      %v1298 = vsel %vm1157, %v878, 0
      %v1301 = vsel %vm1157, %v879, 0
      %v1304 = vsel %vm1157, %v880, 0
      %v1307 = vsel %vm1157, %v881, 0
      %v1310 = vsel %vm1157, %v882, 0
      %v1313 = vsel %vm1157, %v883, 0
      %v1316 = vsel %vm1157, %v884, 0
      %v1319 = vsel %vm755, %v1292, 0
      %v1322 = vsel %vm755, %v1293, 0
      %1324 = vmatpush.bf16.msra.mxu0 0
      %1325 = vmatpush.bf16.msra.mxu0 0
      %1326 = vmatpush.bf16.msra.mxu0 0
      %1327 = vmatpush.bf16.msra.mxu0 0
      %1328 = vmatpush.bf16.msra.mxu0 0
      %1329 = vmatpush.bf16.msra.mxu0 0
      %1330 = vmatpush.bf16.msra.mxu0 0
      %1331 = vmatpush.bf16.msra.mxu0 %v1319
      %1332 = vmatmul.bf16.gmra.mxu0 %v1295
      %v1333 = vpop.f32.mrf.mxu0
      %v1334 = vadd.f32 %v1198, %v1333
      %v1335 = vpop.f32.mrf.mxu0
      %v1336 = vadd.f32 %v1200, %v1335
      %1337 = vmatmul.bf16.gmra.mxu0 %v1298
      %v1338 = vpop.f32.mrf.mxu0
      %v1339 = vadd.f32 %v1203, %v1338
      %v1340 = vpop.f32.mrf.mxu0
      %v1341 = vadd.f32 %v1205, %v1340
      %1342 = vmatmul.bf16.gmra.mxu0 %v1301
      %v1343 = vpop.f32.mrf.mxu0
      %v1344 = vadd.f32 %v1208, %v1343
      %v1345 = vpop.f32.mrf.mxu0
      %v1346 = vadd.f32 %v1210, %v1345
      %1347 = vmatmul.bf16.gmra.mxu0 %v1304
      %v1348 = vpop.f32.mrf.mxu0
      %v1349 = vadd.f32 %v1213, %v1348
      %v1350 = vpop.f32.mrf.mxu0
      %v1351 = vadd.f32 %v1215, %v1350
      %1352 = vmatmul.bf16.gmra.mxu0 %v1307
      %v1353 = vpop.f32.mrf.mxu0
      %v1354 = vadd.f32 %v1218, %v1353
      %v1355 = vpop.f32.mrf.mxu0
      %v1356 = vadd.f32 %v1220, %v1355
      %1357 = vmatmul.bf16.gmra.mxu0 %v1310
      %v1358 = vpop.f32.mrf.mxu0
      %v1359 = vadd.f32 %v1223, %v1358
      %v1360 = vpop.f32.mrf.mxu0
      %v1361 = vadd.f32 %v1225, %v1360
      %1362 = vmatmul.bf16.gmra.mxu0 %v1313
      %v1363 = vpop.f32.mrf.mxu0
      %v1364 = vadd.f32 %v1228, %v1363
      %v1365 = vpop.f32.mrf.mxu0
      %v1366 = vadd.f32 %v1230, %v1365
      %1367 = vmatmul.bf16.gmra.mxu0 %v1316
      %v1368 = vpop.f32.mrf.mxu0
      %v1369 = vadd.f32 %v1233, %v1368
      %v1370 = vpop.f32.mrf.mxu0
      %v1371 = vadd.f32 %v1235, %v1370
      %1372 = vdwg.mxu0
      %1373 = vmatpush.bf16.msra.mxu0 0
      %1374 = vmatpush.bf16.msra.mxu0 0
      %1375 = vmatpush.bf16.msra.mxu0 0
      %1376 = vmatpush.bf16.msra.mxu0 0
      %1377 = vmatpush.bf16.msra.mxu0 0
      %1378 = vmatpush.bf16.msra.mxu0 0
      %1379 = vmatpush.bf16.msra.mxu0 0
      %1380 = vmatpush.bf16.msra.mxu0 %v1322
      %1381 = vmatmul.bf16.gmra.mxu0 %v1295
      %v1382 = vpop.f32.mrf.mxu0
      %v1383 = vadd.f32 %v1247, %v1382
      %v1384 = vpop.f32.mrf.mxu0
      %v1385 = vadd.f32 %v1249, %v1384
      %1386 = vmatmul.bf16.gmra.mxu0 %v1298
      %v1387 = vpop.f32.mrf.mxu0
      %v1388 = vadd.f32 %v1252, %v1387
      %v1389 = vpop.f32.mrf.mxu0
      %v1390 = vadd.f32 %v1254, %v1389
      %1391 = vmatmul.bf16.gmra.mxu0 %v1301
      %v1392 = vpop.f32.mrf.mxu0
      %v1393 = vadd.f32 %v1257, %v1392
      %v1394 = vpop.f32.mrf.mxu0
      %v1395 = vadd.f32 %v1259, %v1394
      %1396 = vmatmul.bf16.gmra.mxu0 %v1304
      %v1397 = vpop.f32.mrf.mxu0
      %v1398 = vadd.f32 %v1262, %v1397
      %v1399 = vpop.f32.mrf.mxu0
      %v1400 = vadd.f32 %v1264, %v1399
      %1401 = vmatmul.bf16.gmra.mxu0 %v1307
      %v1402 = vpop.f32.mrf.mxu0
      %v1403 = vadd.f32 %v1267, %v1402
      %v1404 = vpop.f32.mrf.mxu0
      %v1405 = vadd.f32 %v1269, %v1404
      %1406 = vmatmul.bf16.gmra.mxu0 %v1310
      %v1407 = vpop.f32.mrf.mxu0
      %v1408 = vadd.f32 %v1272, %v1407
      %v1409 = vpop.f32.mrf.mxu0
      %v1410 = vadd.f32 %v1274, %v1409
      %1411 = vmatmul.bf16.gmra.mxu0 %v1313
      %v1412 = vpop.f32.mrf.mxu0
      %v1413 = vadd.f32 %v1277, %v1412
      %v1414 = vpop.f32.mrf.mxu0
      %v1415 = vadd.f32 %v1279, %v1414
      %1416 = vmatmul.bf16.gmra.mxu0 %v1316
      %v1417 = vpop.f32.mrf.mxu0
      %v1418 = vadd.f32 %v1282, %v1417
      %v1419 = vpop.f32.mrf.mxu0
      %v1420 = vadd.f32 %v1284, %v1419
      %1421 = vdwg.mxu0
      %s1422 = scalar_lea.vmem [#allocation2], 48
      %v1423 = vld [vmem:[%s1422] sm:$0xff]
      %v1424 = vld [vmem:[%s1422 + $0x8] sm:$0xff]
      %v1425 = vld [vmem:[%s1422 + $0x10] sm:$0x3]
      %v1426 = vld [vmem:[%s1422 + $0x18] sm:$0xff]
      %v1427 = vld [vmem:[%s1422 + $0x20] sm:$0xff]
      %v1428 = vld [vmem:[%s1422 + $0x28] sm:$0x3]
      %v1429 = vld [vmem:[%s1422 + $0x30] sm:$0xff]
      %v1430 = vld [vmem:[%s1422 + $0x38] sm:$0xff]
      %v1431 = vld [vmem:[%s1422 + $0x40] sm:$0x3]
      %v1432 = vld [vmem:[%s1422 + $0x48] sm:$0xff]
      %v1433 = vld [vmem:[%s1422 + $0x50] sm:$0xff]
      %v1434 = vld [vmem:[%s1422 + $0x58] sm:$0x3]
      %v1435 = vld [vmem:[%s1422 + $0x60] sm:$0xff]
      %v1436 = vld [vmem:[%s1422 + $0x68] sm:$0xff]
      %v1437 = vld [vmem:[%s1422 + $0x70] sm:$0x3]
      %v1438 = vld [vmem:[%s1422 + $0x78] sm:$0xff]
      %v1439 = vld [vmem:[%s1422 + $0x80] sm:$0xff]
      %v1440 = vld [vmem:[%s1422 + $0x88] sm:$0x3]
      %v1441 = vld [vmem:[%s1422 + $0x90] sm:$0xff]
      %v1442 = vld [vmem:[%s1422 + $0x98] sm:$0xff]
      %v1443 = vld [vmem:[%s1422 + $0xa0] sm:$0x3]
      %v1444 = vld [vmem:[%s1422 + $0xa8] sm:$0xff]
      %v1445 = vld [vmem:[%s1422 + $0xb0] sm:$0xff]
      %v1446 = vld [vmem:[%s1422 + $0xb8] sm:$0x3]
      %v1471 = vrot.slane %v1423, 1
      %v1472 = vrot.slane %v1424, 1
      %v1473 = vsel %vm666, %v1471, %v1472
      %v1474 = vrot.slane %v1425, 1
      %v1475 = vsel %vm666, %v1472, %v1474
      %v1476 = vrot.slane %v1426, 1
      %v1477 = vrot.slane %v1427, 1
      %v1478 = vsel %vm666, %v1476, %v1477
      %v1479 = vrot.slane %v1428, 1
      %v1480 = vsel %vm666, %v1477, %v1479
      %v1481 = vrot.slane %v1429, 1
      %v1482 = vrot.slane %v1430, 1
      %v1483 = vsel %vm666, %v1481, %v1482
      %v1484 = vrot.slane %v1431, 1
      %v1485 = vsel %vm666, %v1482, %v1484
      %v1486 = vrot.slane %v1432, 1
      %v1487 = vrot.slane %v1433, 1
      %v1488 = vsel %vm666, %v1486, %v1487
      %v1489 = vrot.slane %v1434, 1
      %v1490 = vsel %vm666, %v1487, %v1489
      %v1491 = vrot.slane %v1435, 1
      %v1492 = vrot.slane %v1436, 1
      %v1493 = vsel %vm666, %v1491, %v1492
      %v1494 = vrot.slane %v1437, 1
      %v1495 = vsel %vm666, %v1492, %v1494
      %v1496 = vrot.slane %v1438, 1
      %v1497 = vrot.slane %v1439, 1
      %v1498 = vsel %vm666, %v1496, %v1497
      %v1499 = vrot.slane %v1440, 1
      %v1500 = vsel %vm666, %v1497, %v1499
      %v1501 = vrot.slane %v1441, 1
      %v1502 = vrot.slane %v1442, 1
      %v1503 = vsel %vm666, %v1501, %v1502
      %v1504 = vrot.slane %v1443, 1
      %v1505 = vsel %vm666, %v1502, %v1504
      %v1506 = vrot.slane %v1444, 1
      %v1507 = vrot.slane %v1445, 1
      %v1508 = vsel %vm666, %v1506, %v1507
      %v1509 = vrot.slane %v1446, 1
      %v1510 = vsel %vm666, %v1507, %v1509
      %1511 = vrot.lane.b32.xlu0 %v1473, 4
      %v1512 = vpop.permute.xlu0 %1511
      %1513 = vrot.lane.b32.xlu0 %v1475, 4
      %v1514 = vpop.permute.xlu0 %1513
      %1515 = vrot.lane.b32.xlu0 %v1478, 4
      %v1516 = vpop.permute.xlu0 %1515
      %1517 = vrot.lane.b32.xlu0 %v1480, 4
      %v1518 = vpop.permute.xlu0 %1517
      %1519 = vrot.lane.b32.xlu0 %v1483, 4
      %v1520 = vpop.permute.xlu0 %1519
      %1521 = vrot.lane.b32.xlu0 %v1485, 4
      %v1522 = vpop.permute.xlu0 %1521
      %1523 = vrot.lane.b32.xlu0 %v1488, 4
      %v1524 = vpop.permute.xlu0 %1523
      %1525 = vrot.lane.b32.xlu0 %v1490, 4
      %v1526 = vpop.permute.xlu0 %1525
      %1527 = vrot.lane.b32.xlu0 %v1493, 4
      %v1528 = vpop.permute.xlu0 %1527
      %1529 = vrot.lane.b32.xlu0 %v1495, 4
      %v1530 = vpop.permute.xlu0 %1529
      %1531 = vrot.lane.b32.xlu0 %v1498, 4
      %v1532 = vpop.permute.xlu0 %1531
      %1533 = vrot.lane.b32.xlu0 %v1500, 4
      %v1534 = vpop.permute.xlu0 %1533
      %1535 = vrot.lane.b32.xlu0 %v1503, 4
      %v1536 = vpop.permute.xlu0 %1535
      %1537 = vrot.lane.b32.xlu0 %v1505, 4
      %v1538 = vpop.permute.xlu0 %1537
      %1539 = vrot.lane.b32.xlu0 %v1508, 4
      %v1540 = vpop.permute.xlu0 %1539
      %1541 = vrot.lane.b32.xlu0 %v1510, 4
      %v1542 = vpop.permute.xlu0 %1541
      %v1559 = vrot.slane %v1423, 2
      %v1560 = vrot.slane %v1424, 2
      %v1561 = vsel %vm755, %v1559, %v1560
      %v1562 = vrot.slane %v1425, 2
      %v1563 = vsel %vm755, %v1560, %v1562
      %v1564 = vrot.slane %v1426, 2
      %v1565 = vrot.slane %v1427, 2
      %v1566 = vsel %vm755, %v1564, %v1565
      %v1567 = vrot.slane %v1428, 2
      %v1568 = vsel %vm755, %v1565, %v1567
      %v1569 = vrot.slane %v1429, 2
      %v1570 = vrot.slane %v1430, 2
      %v1571 = vsel %vm755, %v1569, %v1570
      %v1572 = vrot.slane %v1431, 2
      %v1573 = vsel %vm755, %v1570, %v1572
      %v1574 = vrot.slane %v1432, 2
      %v1575 = vrot.slane %v1433, 2
      %v1576 = vsel %vm755, %v1574, %v1575
      %v1577 = vrot.slane %v1434, 2
      %v1578 = vsel %vm755, %v1575, %v1577
      %v1579 = vrot.slane %v1435, 2
      %v1580 = vrot.slane %v1436, 2
      %v1581 = vsel %vm755, %v1579, %v1580
      %v1582 = vrot.slane %v1437, 2
      %v1583 = vsel %vm755, %v1580, %v1582
      %v1584 = vrot.slane %v1438, 2
      %v1585 = vrot.slane %v1439, 2
      %v1586 = vsel %vm755, %v1584, %v1585
      %v1587 = vrot.slane %v1440, 2
      %v1588 = vsel %vm755, %v1585, %v1587
      %v1589 = vrot.slane %v1441, 2
      %v1590 = vrot.slane %v1442, 2
      %v1591 = vsel %vm755, %v1589, %v1590
      %v1592 = vrot.slane %v1443, 2
      %v1593 = vsel %vm755, %v1590, %v1592
      %v1594 = vrot.slane %v1444, 2
      %v1595 = vrot.slane %v1445, 2
      %v1596 = vsel %vm755, %v1594, %v1595
      %v1597 = vrot.slane %v1446, 2
      %v1598 = vsel %vm755, %v1595, %v1597
      %1599 = vrot.lane.b32.xlu0 %v1561, 8
      %v1600 = vpop.permute.xlu0 %1599
      %1601 = vrot.lane.b32.xlu0 %v1563, 8
      %v1602 = vpop.permute.xlu0 %1601
      %1603 = vrot.lane.b32.xlu0 %v1566, 8
      %v1604 = vpop.permute.xlu0 %1603
      %1605 = vrot.lane.b32.xlu0 %v1568, 8
      %v1606 = vpop.permute.xlu0 %1605
      %1607 = vrot.lane.b32.xlu0 %v1571, 8
      %v1608 = vpop.permute.xlu0 %1607
      %1609 = vrot.lane.b32.xlu0 %v1573, 8
      %v1610 = vpop.permute.xlu0 %1609
      %1611 = vrot.lane.b32.xlu0 %v1576, 8
      %v1612 = vpop.permute.xlu0 %1611
      %1613 = vrot.lane.b32.xlu0 %v1578, 8
      %v1614 = vpop.permute.xlu0 %1613
      %1615 = vrot.lane.b32.xlu0 %v1581, 8
      %v1616 = vpop.permute.xlu0 %1615
      %1617 = vrot.lane.b32.xlu0 %v1583, 8
      %v1618 = vpop.permute.xlu0 %1617
      %1619 = vrot.lane.b32.xlu0 %v1586, 8
      %v1620 = vpop.permute.xlu0 %1619
      %1621 = vrot.lane.b32.xlu0 %v1588, 8
      %v1622 = vpop.permute.xlu0 %1621
      %1623 = vrot.lane.b32.xlu0 %v1591, 8
      %v1624 = vpop.permute.xlu0 %1623
      %1625 = vrot.lane.b32.xlu0 %v1593, 8
      %v1626 = vpop.permute.xlu0 %1625
      %1627 = vrot.lane.b32.xlu0 %v1596, 8
      %v1628 = vpop.permute.xlu0 %1627
      %1629 = vrot.lane.b32.xlu0 %v1598, 8
      %v1630 = vpop.permute.xlu0 %1629
      %v1647 = vsel %vm339, %v1423, %v1512
      %v1648 = vsel %vm339, %v1424, %v1514
      %v1649 = vsel %vm339, %v1426, %v1516
      %v1650 = vsel %vm339, %v1427, %v1518
      %v1651 = vsel %vm339, %v1429, %v1520
      %v1652 = vsel %vm339, %v1430, %v1522
      %v1653 = vsel %vm339, %v1432, %v1524
      %v1654 = vsel %vm339, %v1433, %v1526
      %v1655 = vsel %vm339, %v1435, %v1528
      %v1656 = vsel %vm339, %v1436, %v1530
      %v1657 = vsel %vm339, %v1438, %v1532
      %v1658 = vsel %vm339, %v1439, %v1534
      %v1659 = vsel %vm339, %v1441, %v1536
      %v1660 = vsel %vm339, %v1442, %v1538
      %v1661 = vsel %vm339, %v1444, %v1540
      %v1662 = vsel %vm339, %v1445, %v1542
      %v1663 = vsel %vm860, %v1647, %v1600
      %v1664 = vsel %vm860, %v1648, %v1602
      %v1665 = vsel %vm860, %v1649, %v1604
      %v1666 = vsel %vm860, %v1650, %v1606
      %v1667 = vsel %vm860, %v1651, %v1608
      %v1668 = vsel %vm860, %v1652, %v1610
      %v1669 = vsel %vm860, %v1653, %v1612
      %v1670 = vsel %vm860, %v1654, %v1614
      %v1671 = vsel %vm860, %v1655, %v1616
      %v1672 = vsel %vm860, %v1656, %v1618
      %v1673 = vsel %vm860, %v1657, %v1620
      %v1674 = vsel %vm860, %v1658, %v1622
      %v1675 = vsel %vm860, %v1659, %v1624
      %v1676 = vsel %vm860, %v1660, %v1626
      %v1677 = vsel %vm860, %v1661, %v1628
      %v1678 = vsel %vm860, %v1662, %v1630
      %v1679 = vpack.c.bf16 %v1664, %v1663
      %v1680 = vpack.c.bf16 %v1666, %v1665
      %v1681 = vpack.c.bf16 %v1668, %v1667
      %v1682 = vpack.c.bf16 %v1670, %v1669
      %v1683 = vpack.c.bf16 %v1672, %v1671
      %v1684 = vpack.c.bf16 %v1674, %v1673
      %v1685 = vpack.c.bf16 %v1676, %v1675
      %v1686 = vpack.c.bf16 %v1678, %v1677
      %v1689 = vunpack.c.l.b16 %v465
      %v1690 = vunpack.c.h.b16 %v465
      %v1691 = vunpack.c.l.b16 %v466
      %v1692 = vunpack.c.h.b16 %v466
      %v1693 = vpack.c.b16 %v1691, %v1689
      %v1694 = vpack.c.b16 %v1692, %v1690
      %v1696 = vsel %vm1157, %v1679, 0
      %v1699 = vsel %vm1157, %v1680, 0
      %v1702 = vsel %vm1157, %v1681, 0
      %v1705 = vsel %vm1157, %v1682, 0
      %v1708 = vsel %vm1157, %v1683, 0
      %v1711 = vsel %vm1157, %v1684, 0
      %v1714 = vsel %vm1157, %v1685, 0
      %v1717 = vsel %vm1157, %v1686, 0
      %v1720 = vsel %vm755, %v1693, 0
      %v1723 = vsel %vm755, %v1694, 0
      %1725 = vmatpush.bf16.msra.mxu0 0
      %1726 = vmatpush.bf16.msra.mxu0 0
      %1727 = vmatpush.bf16.msra.mxu0 0
      %1728 = vmatpush.bf16.msra.mxu0 0
      %1729 = vmatpush.bf16.msra.mxu0 0
      %1730 = vmatpush.bf16.msra.mxu0 0
      %1731 = vmatpush.bf16.msra.mxu0 0
      %1732 = vmatpush.bf16.msra.mxu0 %v1720
      %1733 = vmatmul.bf16.gmra.mxu0 %v1696
      %v1734 = vpop.f32.mrf.mxu0
      %v1735 = vadd.f32 0.0, %v1734
      %v1736 = vpop.f32.mrf.mxu0
      %v1737 = vadd.f32 0.0, %v1736
      %1738 = vmatmul.bf16.gmra.mxu0 %v1699
      %v1739 = vpop.f32.mrf.mxu0
      %v1740 = vadd.f32 0.0, %v1739
      %v1741 = vpop.f32.mrf.mxu0
      %v1742 = vadd.f32 0.0, %v1741
      %1743 = vmatmul.bf16.gmra.mxu0 %v1702
      %v1744 = vpop.f32.mrf.mxu0
      %v1745 = vadd.f32 0.0, %v1744
      %v1746 = vpop.f32.mrf.mxu0
      %v1747 = vadd.f32 0.0, %v1746
      %1748 = vmatmul.bf16.gmra.mxu0 %v1705
      %v1749 = vpop.f32.mrf.mxu0
      %v1750 = vadd.f32 0.0, %v1749
      %v1751 = vpop.f32.mrf.mxu0
      %v1752 = vadd.f32 0.0, %v1751
      %1753 = vmatmul.bf16.gmra.mxu0 %v1708
      %v1754 = vpop.f32.mrf.mxu0
      %v1755 = vadd.f32 0.0, %v1754
      %v1756 = vpop.f32.mrf.mxu0
      %v1757 = vadd.f32 0.0, %v1756
      %1758 = vmatmul.bf16.gmra.mxu0 %v1711
      %v1759 = vpop.f32.mrf.mxu0
      %v1760 = vadd.f32 0.0, %v1759
      %v1761 = vpop.f32.mrf.mxu0
      %v1762 = vadd.f32 0.0, %v1761
      %1763 = vmatmul.bf16.gmra.mxu0 %v1714
      %v1764 = vpop.f32.mrf.mxu0
      %v1765 = vadd.f32 0.0, %v1764
      %v1766 = vpop.f32.mrf.mxu0
      %v1767 = vadd.f32 0.0, %v1766
      %1768 = vmatmul.bf16.gmra.mxu0 %v1717
      %v1769 = vpop.f32.mrf.mxu0
      %v1770 = vadd.f32 0.0, %v1769
      %v1771 = vpop.f32.mrf.mxu0
      %v1772 = vadd.f32 0.0, %v1771
      %1773 = vdwg.mxu0
      %1774 = vmatpush.bf16.msra.mxu0 0
      %1775 = vmatpush.bf16.msra.mxu0 0
      %1776 = vmatpush.bf16.msra.mxu0 0
      %1777 = vmatpush.bf16.msra.mxu0 0
      %1778 = vmatpush.bf16.msra.mxu0 0
      %1779 = vmatpush.bf16.msra.mxu0 0
      %1780 = vmatpush.bf16.msra.mxu0 0
      %1781 = vmatpush.bf16.msra.mxu0 %v1723
      %1782 = vmatmul.bf16.gmra.mxu0 %v1696
      %v1783 = vpop.f32.mrf.mxu0
      %v1784 = vadd.f32 0.0, %v1783
      %v1785 = vpop.f32.mrf.mxu0
      %v1786 = vadd.f32 0.0, %v1785
      %1787 = vmatmul.bf16.gmra.mxu0 %v1699
      %v1788 = vpop.f32.mrf.mxu0
      %v1789 = vadd.f32 0.0, %v1788
      %v1790 = vpop.f32.mrf.mxu0
      %v1791 = vadd.f32 0.0, %v1790
      %1792 = vmatmul.bf16.gmra.mxu0 %v1702
      %v1793 = vpop.f32.mrf.mxu0
      %v1794 = vadd.f32 0.0, %v1793
      %v1795 = vpop.f32.mrf.mxu0
      %v1796 = vadd.f32 0.0, %v1795
      %1797 = vmatmul.bf16.gmra.mxu0 %v1705
      %v1798 = vpop.f32.mrf.mxu0
      %v1799 = vadd.f32 0.0, %v1798
      %v1800 = vpop.f32.mrf.mxu0
      %v1801 = vadd.f32 0.0, %v1800
      %1802 = vmatmul.bf16.gmra.mxu0 %v1708
      %v1803 = vpop.f32.mrf.mxu0
      %v1804 = vadd.f32 0.0, %v1803
      %v1805 = vpop.f32.mrf.mxu0
      %v1806 = vadd.f32 0.0, %v1805
      %1807 = vmatmul.bf16.gmra.mxu0 %v1711
      %v1808 = vpop.f32.mrf.mxu0
      %v1809 = vadd.f32 0.0, %v1808
      %v1810 = vpop.f32.mrf.mxu0
      %v1811 = vadd.f32 0.0, %v1810
      %1812 = vmatmul.bf16.gmra.mxu0 %v1714
      %v1813 = vpop.f32.mrf.mxu0
      %v1814 = vadd.f32 0.0, %v1813
      %v1815 = vpop.f32.mrf.mxu0
      %v1816 = vadd.f32 0.0, %v1815
      %1817 = vmatmul.bf16.gmra.mxu0 %v1717
      %v1818 = vpop.f32.mrf.mxu0
      %v1819 = vadd.f32 0.0, %v1818
      %v1820 = vpop.f32.mrf.mxu0
      %v1821 = vadd.f32 0.0, %v1820
      %1822 = vdwg.mxu0
      %v1823 = vadd.f32 %v1334, %v1735
      %v1824 = vadd.f32 %v1383, %v1784
      %v1825 = vadd.f32 %v1336, %v1737
      %v1826 = vadd.f32 %v1385, %v1786
      %v1827 = vadd.f32 %v1339, %v1740
      %v1828 = vadd.f32 %v1388, %v1789
      %v1829 = vadd.f32 %v1341, %v1742
      %v1830 = vadd.f32 %v1390, %v1791
      %v1831 = vadd.f32 %v1344, %v1745
      %v1832 = vadd.f32 %v1393, %v1794
      %v1833 = vadd.f32 %v1346, %v1747
      %v1834 = vadd.f32 %v1395, %v1796
      %v1835 = vadd.f32 %v1349, %v1750
      %v1836 = vadd.f32 %v1398, %v1799
      %v1837 = vadd.f32 %v1351, %v1752
      %v1838 = vadd.f32 %v1400, %v1801
      %v1839 = vadd.f32 %v1354, %v1755
      %v1840 = vadd.f32 %v1403, %v1804
      %v1841 = vadd.f32 %v1356, %v1757
      %v1842 = vadd.f32 %v1405, %v1806
      %v1843 = vadd.f32 %v1359, %v1760
      %v1844 = vadd.f32 %v1408, %v1809
      %v1845 = vadd.f32 %v1361, %v1762
      %v1846 = vadd.f32 %v1410, %v1811
      %v1847 = vadd.f32 %v1364, %v1765
      %v1848 = vadd.f32 %v1413, %v1814
      %v1849 = vadd.f32 %v1366, %v1767
      %v1850 = vadd.f32 %v1415, %v1816
      %v1851 = vadd.f32 %v1369, %v1770
      %v1852 = vadd.f32 %v1418, %v1819
      %v1853 = vadd.f32 %v1371, %v1772
      %v1854 = vadd.f32 %v1420, %v1821
      %v1856 = vperm.slane %v467, 0
      %v1857 = vperm.slane %v467, 1
      %v1860 = vadd.f32 %v1823, %v1856
      %v1861 = vadd.f32 %v1824, %v1857
      %v1862 = vadd.f32 %v1825, %v1856
      %v1863 = vadd.f32 %v1826, %v1857
      %v1864 = vadd.f32 %v1827, %v1856
      %v1865 = vadd.f32 %v1828, %v1857
      %v1866 = vadd.f32 %v1829, %v1856
      %v1867 = vadd.f32 %v1830, %v1857
      %v1868 = vadd.f32 %v1831, %v1856
      %v1869 = vadd.f32 %v1832, %v1857
      %v1870 = vadd.f32 %v1833, %v1856
      %v1871 = vadd.f32 %v1834, %v1857
      %v1872 = vadd.f32 %v1835, %v1856
      %v1873 = vadd.f32 %v1836, %v1857
      %v1874 = vadd.f32 %v1837, %v1856
      %v1875 = vadd.f32 %v1838, %v1857
      %v1876 = vadd.f32 %v1839, %v1856
      %v1877 = vadd.f32 %v1840, %v1857
      %v1878 = vadd.f32 %v1841, %v1856
      %v1879 = vadd.f32 %v1842, %v1857
      %v1880 = vadd.f32 %v1843, %v1856
      %v1881 = vadd.f32 %v1844, %v1857
      %v1882 = vadd.f32 %v1845, %v1856
      %v1883 = vadd.f32 %v1846, %v1857
      %v1884 = vadd.f32 %v1847, %v1856
      %v1885 = vadd.f32 %v1848, %v1857
      %v1886 = vadd.f32 %v1849, %v1856
      %v1887 = vadd.f32 %v1850, %v1857
      %v1888 = vadd.f32 %v1851, %v1856
      %v1889 = vadd.f32 %v1852, %v1857
      %v1890 = vadd.f32 %v1853, %v1856
      %v1891 = vadd.f32 %v1854, %v1857
      %v1892 = vmax.f32 %v1860, 0.0
      %v1893 = vmax.f32 %v1861, 0.0
      %v1894 = vmax.f32 %v1862, 0.0
      %v1895 = vmax.f32 %v1863, 0.0
      %v1896 = vmax.f32 %v1864, 0.0
      %v1897 = vmax.f32 %v1865, 0.0
      %v1898 = vmax.f32 %v1866, 0.0
      %v1899 = vmax.f32 %v1867, 0.0
      %v1900 = vmax.f32 %v1868, 0.0
      %v1901 = vmax.f32 %v1869, 0.0
      %v1902 = vmax.f32 %v1870, 0.0
      %v1903 = vmax.f32 %v1871, 0.0
      %v1904 = vmax.f32 %v1872, 0.0
      %v1905 = vmax.f32 %v1873, 0.0
      %v1906 = vmax.f32 %v1874, 0.0
      %v1907 = vmax.f32 %v1875, 0.0
      %v1908 = vmax.f32 %v1876, 0.0
      %v1909 = vmax.f32 %v1877, 0.0
      %v1910 = vmax.f32 %v1878, 0.0
      %v1911 = vmax.f32 %v1879, 0.0
      %v1912 = vmax.f32 %v1880, 0.0
      %v1913 = vmax.f32 %v1881, 0.0
      %v1914 = vmax.f32 %v1882, 0.0
      %v1915 = vmax.f32 %v1883, 0.0
      %v1916 = vmax.f32 %v1884, 0.0
      %v1917 = vmax.f32 %v1885, 0.0
      %v1918 = vmax.f32 %v1886, 0.0
      %v1919 = vmax.f32 %v1887, 0.0
      %v1920 = vmax.f32 %v1888, 0.0
      %v1921 = vmax.f32 %v1889, 0.0
      %v1922 = vmax.f32 %v1890, 0.0
      %v1923 = vmax.f32 %v1891, 0.0
      %v1924 = vmax.f32 %v1892, %v1900
      %v1925 = vmax.f32 %v1896, %v1904
      %v1926 = vmax.f32 %v1924, %v1908
      %v1927 = vmax.f32 %v1925, %v1912
      %v1928 = vmax.f32 %v1926, %v1916
      %v1929 = vmax.f32 %v1927, %v1920
      %v1930 = vmax.f32 %v1928, %v1929
      %v1931 = vmax.f32 %v1894, %v1902
      %v1932 = vmax.f32 %v1898, %v1906
      %v1933 = vmax.f32 %v1931, %v1910
      %v1934 = vmax.f32 %v1932, %v1914
      %v1935 = vmax.f32 %v1933, %v1918
      %v1936 = vmax.f32 %v1934, %v1922
      %v1937 = vmax.f32 %v1935, %v1936
      %v1938 = vmax.f32 %v1893, %v1895
      %v1939 = vrot.slane %v1938, 4
      %v1940 = vmax.f32 %v1938, %v1939
      %v1941 = vrot.slane %v1940, 2
      %v1942 = vmax.f32 %v1940, %v1941
      %v1943 = vrot.slane %v1942, 1
      %v1944 = vmax.f32 %v1942, %v1943
      %v1945 = vmax.f32 %v1897, %v1899
      %v1946 = vrot.slane %v1945, 4
      %v1947 = vmax.f32 %v1945, %v1946
      %v1948 = vrot.slane %v1947, 2
      %v1949 = vmax.f32 %v1947, %v1948
      %v1950 = vrot.slane %v1949, 1
      %v1951 = vmax.f32 %v1949, %v1950
      %v1952 = vmax.f32 %v1901, %v1903
      %v1953 = vrot.slane %v1952, 4
      %v1954 = vmax.f32 %v1952, %v1953
      %v1955 = vrot.slane %v1954, 2
      %v1956 = vmax.f32 %v1954, %v1955
      %v1957 = vrot.slane %v1956, 1
      %v1958 = vmax.f32 %v1956, %v1957
      %v1959 = vmax.f32 %v1905, %v1907
      %v1960 = vrot.slane %v1959, 4
      %v1961 = vmax.f32 %v1959, %v1960
      %v1962 = vrot.slane %v1961, 2
      %v1963 = vmax.f32 %v1961, %v1962
      %v1964 = vrot.slane %v1963, 1
      %v1965 = vmax.f32 %v1963, %v1964
      %v1966 = vmax.f32 %v1909, %v1911
      %v1967 = vrot.slane %v1966, 4
      %v1968 = vmax.f32 %v1966, %v1967
      %v1969 = vrot.slane %v1968, 2
      %v1970 = vmax.f32 %v1968, %v1969
      %v1971 = vrot.slane %v1970, 1
      %v1972 = vmax.f32 %v1970, %v1971
      %v1973 = vmax.f32 %v1913, %v1915
      %v1974 = vrot.slane %v1973, 4
      %v1975 = vmax.f32 %v1973, %v1974
      %v1976 = vrot.slane %v1975, 2
      %v1977 = vmax.f32 %v1975, %v1976
      %v1978 = vrot.slane %v1977, 1
      %v1979 = vmax.f32 %v1977, %v1978
      %v1980 = vmax.f32 %v1917, %v1919
      %v1981 = vrot.slane %v1980, 4
      %v1982 = vmax.f32 %v1980, %v1981
      %v1983 = vrot.slane %v1982, 2
      %v1984 = vmax.f32 %v1982, %v1983
      %v1985 = vrot.slane %v1984, 1
      %v1986 = vmax.f32 %v1984, %v1985
      %v1987 = vmax.f32 %v1921, %v1923
      %v1988 = vrot.slane %v1987, 4
      %v1989 = vmax.f32 %v1987, %v1988
      %v1990 = vrot.slane %v1989, 2
      %v1991 = vmax.f32 %v1989, %v1990
      %v1992 = vrot.slane %v1991, 1
      %v1993 = vmax.f32 %v1991, %v1992
      %s1994 = scalar_lea.vmem [#allocation2], 192
      %v1995 = vld [vmem:[%s1994] sm:$0xff]
      %v1996 = vld [vmem:[%s1994 + $0x8] sm:$0xff]
      %v1997 = vld [vmem:[%s1994 + $0x10] sm:$0x3]
      %v1998 = vld [vmem:[%s1994 + $0x18] sm:$0xff]
      %v1999 = vld [vmem:[%s1994 + $0x20] sm:$0xff]
      %v2000 = vld [vmem:[%s1994 + $0x28] sm:$0x3]
      %v2001 = vld [vmem:[%s1994 + $0x30] sm:$0xff]
      %v2002 = vld [vmem:[%s1994 + $0x38] sm:$0xff]
      %v2003 = vld [vmem:[%s1994 + $0x40] sm:$0x3]
      %v2004 = vld [vmem:[%s1994 + $0x48] sm:$0xff]
      %v2005 = vld [vmem:[%s1994 + $0x50] sm:$0xff]
      %v2006 = vld [vmem:[%s1994 + $0x58] sm:$0x3]
      %v2007 = vld [vmem:[%s1994 + $0x60] sm:$0xff]
      %v2008 = vld [vmem:[%s1994 + $0x68] sm:$0xff]
      %v2009 = vld [vmem:[%s1994 + $0x70] sm:$0x3]
      %v2010 = vld [vmem:[%s1994 + $0x78] sm:$0xff]
      %v2011 = vld [vmem:[%s1994 + $0x80] sm:$0xff]
      %v2012 = vld [vmem:[%s1994 + $0x88] sm:$0x3]
      %v2013 = vld [vmem:[%s1994 + $0x90] sm:$0xff]
      %v2014 = vld [vmem:[%s1994 + $0x98] sm:$0xff]
      %v2015 = vld [vmem:[%s1994 + $0xa0] sm:$0x3]
      %v2016 = vld [vmem:[%s1994 + $0xa8] sm:$0xff]
      %v2017 = vld [vmem:[%s1994 + $0xb0] sm:$0xff]
      %v2018 = vld [vmem:[%s1994 + $0xb8] sm:$0x3]
      %v2043 = vrot.slane %v1995, 1
      %v2044 = vrot.slane %v1996, 1
      %v2045 = vsel %vm666, %v2043, %v2044
      %v2046 = vrot.slane %v1997, 1
      %v2047 = vsel %vm666, %v2044, %v2046
      %v2048 = vrot.slane %v1998, 1
      %v2049 = vrot.slane %v1999, 1
      %v2050 = vsel %vm666, %v2048, %v2049
      %v2051 = vrot.slane %v2000, 1
      %v2052 = vsel %vm666, %v2049, %v2051
      %v2053 = vrot.slane %v2001, 1
      %v2054 = vrot.slane %v2002, 1
      %v2055 = vsel %vm666, %v2053, %v2054
      %v2056 = vrot.slane %v2003, 1
      %v2057 = vsel %vm666, %v2054, %v2056
      %v2058 = vrot.slane %v2004, 1
      %v2059 = vrot.slane %v2005, 1
      %v2060 = vsel %vm666, %v2058, %v2059
      %v2061 = vrot.slane %v2006, 1
      %v2062 = vsel %vm666, %v2059, %v2061
      %v2063 = vrot.slane %v2007, 1
      %v2064 = vrot.slane %v2008, 1
      %v2065 = vsel %vm666, %v2063, %v2064
      %v2066 = vrot.slane %v2009, 1
      %v2067 = vsel %vm666, %v2064, %v2066
      %v2068 = vrot.slane %v2010, 1
      %v2069 = vrot.slane %v2011, 1
      %v2070 = vsel %vm666, %v2068, %v2069
      %v2071 = vrot.slane %v2012, 1
      %v2072 = vsel %vm666, %v2069, %v2071
      %v2073 = vrot.slane %v2013, 1
      %v2074 = vrot.slane %v2014, 1
      %v2075 = vsel %vm666, %v2073, %v2074
      %v2076 = vrot.slane %v2015, 1
      %v2077 = vsel %vm666, %v2074, %v2076
      %v2078 = vrot.slane %v2016, 1
      %v2079 = vrot.slane %v2017, 1
      %v2080 = vsel %vm666, %v2078, %v2079
      %v2081 = vrot.slane %v2018, 1
      %v2082 = vsel %vm666, %v2079, %v2081
      %2083 = vrot.lane.b32.xlu0 %v2045, 4
      %v2084 = vpop.permute.xlu0 %2083
      %2085 = vrot.lane.b32.xlu0 %v2047, 4
      %v2086 = vpop.permute.xlu0 %2085
      %2087 = vrot.lane.b32.xlu0 %v2050, 4
      %v2088 = vpop.permute.xlu0 %2087
      %2089 = vrot.lane.b32.xlu0 %v2052, 4
      %v2090 = vpop.permute.xlu0 %2089
      %2091 = vrot.lane.b32.xlu0 %v2055, 4
      %v2092 = vpop.permute.xlu0 %2091
      %2093 = vrot.lane.b32.xlu0 %v2057, 4
      %v2094 = vpop.permute.xlu0 %2093
      %2095 = vrot.lane.b32.xlu0 %v2060, 4
      %v2096 = vpop.permute.xlu0 %2095
      %2097 = vrot.lane.b32.xlu0 %v2062, 4
      %v2098 = vpop.permute.xlu0 %2097
      %2099 = vrot.lane.b32.xlu0 %v2065, 4
      %v2100 = vpop.permute.xlu0 %2099
      %2101 = vrot.lane.b32.xlu0 %v2067, 4
      %v2102 = vpop.permute.xlu0 %2101
      %2103 = vrot.lane.b32.xlu0 %v2070, 4
      %v2104 = vpop.permute.xlu0 %2103
      %2105 = vrot.lane.b32.xlu0 %v2072, 4
      %v2106 = vpop.permute.xlu0 %2105
      %2107 = vrot.lane.b32.xlu0 %v2075, 4
      %v2108 = vpop.permute.xlu0 %2107
      %2109 = vrot.lane.b32.xlu0 %v2077, 4
      %v2110 = vpop.permute.xlu0 %2109
      %2111 = vrot.lane.b32.xlu0 %v2080, 4
      %v2112 = vpop.permute.xlu0 %2111
      %2113 = vrot.lane.b32.xlu0 %v2082, 4
      %v2114 = vpop.permute.xlu0 %2113
      %v2131 = vrot.slane %v1995, 2
      %v2132 = vrot.slane %v1996, 2
      %v2133 = vsel %vm755, %v2131, %v2132
      %v2134 = vrot.slane %v1997, 2
      %v2135 = vsel %vm755, %v2132, %v2134
      %v2136 = vrot.slane %v1998, 2
      %v2137 = vrot.slane %v1999, 2
      %v2138 = vsel %vm755, %v2136, %v2137
      %v2139 = vrot.slane %v2000, 2
      %v2140 = vsel %vm755, %v2137, %v2139
      %v2141 = vrot.slane %v2001, 2
      %v2142 = vrot.slane %v2002, 2
      %v2143 = vsel %vm755, %v2141, %v2142
      %v2144 = vrot.slane %v2003, 2
      %v2145 = vsel %vm755, %v2142, %v2144
      %v2146 = vrot.slane %v2004, 2
      %v2147 = vrot.slane %v2005, 2
      %v2148 = vsel %vm755, %v2146, %v2147
      %v2149 = vrot.slane %v2006, 2
      %v2150 = vsel %vm755, %v2147, %v2149
      %v2151 = vrot.slane %v2007, 2
      %v2152 = vrot.slane %v2008, 2
      %v2153 = vsel %vm755, %v2151, %v2152
      %v2154 = vrot.slane %v2009, 2
      %v2155 = vsel %vm755, %v2152, %v2154
      %v2156 = vrot.slane %v2010, 2
      %v2157 = vrot.slane %v2011, 2
      %v2158 = vsel %vm755, %v2156, %v2157
      %v2159 = vrot.slane %v2012, 2
      %v2160 = vsel %vm755, %v2157, %v2159
      %v2161 = vrot.slane %v2013, 2
      %v2162 = vrot.slane %v2014, 2
      %v2163 = vsel %vm755, %v2161, %v2162
      %v2164 = vrot.slane %v2015, 2
      %v2165 = vsel %vm755, %v2162, %v2164
      %v2166 = vrot.slane %v2016, 2
      %v2167 = vrot.slane %v2017, 2
      %v2168 = vsel %vm755, %v2166, %v2167
      %v2169 = vrot.slane %v2018, 2
      %v2170 = vsel %vm755, %v2167, %v2169
      %2171 = vrot.lane.b32.xlu0 %v2133, 8
      %v2172 = vpop.permute.xlu0 %2171
      %2173 = vrot.lane.b32.xlu0 %v2135, 8
      %v2174 = vpop.permute.xlu0 %2173
      %2175 = vrot.lane.b32.xlu0 %v2138, 8
      %v2176 = vpop.permute.xlu0 %2175
      %2177 = vrot.lane.b32.xlu0 %v2140, 8
      %v2178 = vpop.permute.xlu0 %2177
      %2179 = vrot.lane.b32.xlu0 %v2143, 8
      %v2180 = vpop.permute.xlu0 %2179
      %2181 = vrot.lane.b32.xlu0 %v2145, 8
      %v2182 = vpop.permute.xlu0 %2181
      %2183 = vrot.lane.b32.xlu0 %v2148, 8
      %v2184 = vpop.permute.xlu0 %2183
      %2185 = vrot.lane.b32.xlu0 %v2150, 8
      %v2186 = vpop.permute.xlu0 %2185
      %2187 = vrot.lane.b32.xlu0 %v2153, 8
      %v2188 = vpop.permute.xlu0 %2187
      %2189 = vrot.lane.b32.xlu0 %v2155, 8
      %v2190 = vpop.permute.xlu0 %2189
      %2191 = vrot.lane.b32.xlu0 %v2158, 8
      %v2192 = vpop.permute.xlu0 %2191
      %2193 = vrot.lane.b32.xlu0 %v2160, 8
      %v2194 = vpop.permute.xlu0 %2193
      %2195 = vrot.lane.b32.xlu0 %v2163, 8
      %v2196 = vpop.permute.xlu0 %2195
      %2197 = vrot.lane.b32.xlu0 %v2165, 8
      %v2198 = vpop.permute.xlu0 %2197
      %2199 = vrot.lane.b32.xlu0 %v2168, 8
      %v2200 = vpop.permute.xlu0 %2199
      %2201 = vrot.lane.b32.xlu0 %v2170, 8
      %v2202 = vpop.permute.xlu0 %2201
      %v2219 = vsel %vm339, %v1995, %v2084
      %v2220 = vsel %vm339, %v1996, %v2086
      %v2221 = vsel %vm339, %v1998, %v2088
      %v2222 = vsel %vm339, %v1999, %v2090
      %v2223 = vsel %vm339, %v2001, %v2092
      %v2224 = vsel %vm339, %v2002, %v2094
      %v2225 = vsel %vm339, %v2004, %v2096
      %v2226 = vsel %vm339, %v2005, %v2098
      %v2227 = vsel %vm339, %v2007, %v2100
      %v2228 = vsel %vm339, %v2008, %v2102
      %v2229 = vsel %vm339, %v2010, %v2104
      %v2230 = vsel %vm339, %v2011, %v2106
      %v2231 = vsel %vm339, %v2013, %v2108
      %v2232 = vsel %vm339, %v2014, %v2110
      %v2233 = vsel %vm339, %v2016, %v2112
      %v2234 = vsel %vm339, %v2017, %v2114
      %v2235 = vsel %vm860, %v2219, %v2172
      %v2236 = vsel %vm860, %v2220, %v2174
      %v2237 = vsel %vm860, %v2221, %v2176
      %v2238 = vsel %vm860, %v2222, %v2178
      %v2239 = vsel %vm860, %v2223, %v2180
      %v2240 = vsel %vm860, %v2224, %v2182
      %v2241 = vsel %vm860, %v2225, %v2184
      %v2242 = vsel %vm860, %v2226, %v2186
      %v2243 = vsel %vm860, %v2227, %v2188
      %v2244 = vsel %vm860, %v2228, %v2190
      %v2245 = vsel %vm860, %v2229, %v2192
      %v2246 = vsel %vm860, %v2230, %v2194
      %v2247 = vsel %vm860, %v2231, %v2196
      %v2248 = vsel %vm860, %v2232, %v2198
      %v2249 = vsel %vm860, %v2233, %v2200
      %v2250 = vsel %vm860, %v2234, %v2202
      %v2251 = vpack.c.bf16 %v2236, %v2235
      %v2252 = vpack.c.bf16 %v2238, %v2237
      %v2253 = vpack.c.bf16 %v2240, %v2239
      %v2254 = vpack.c.bf16 %v2242, %v2241
      %v2255 = vpack.c.bf16 %v2244, %v2243
      %v2256 = vpack.c.bf16 %v2246, %v2245
      %v2257 = vpack.c.bf16 %v2248, %v2247
      %v2258 = vpack.c.bf16 %v2250, %v2249
      %s2259 = scalar_lea.vmem [#allocation2], 216
      %v2260 = vld [vmem:[%s2259] sm:$0xff]
      %v2261 = vld [vmem:[%s2259 + $0x8] sm:$0xff]
      %v2262 = vld [vmem:[%s2259 + $0x10] sm:$0x3]
      %v2263 = vld [vmem:[%s2259 + $0x18] sm:$0xff]
      %v2264 = vld [vmem:[%s2259 + $0x20] sm:$0xff]
      %v2265 = vld [vmem:[%s2259 + $0x28] sm:$0x3]
      %v2266 = vld [vmem:[%s2259 + $0x30] sm:$0xff]
      %v2267 = vld [vmem:[%s2259 + $0x38] sm:$0xff]
      %v2268 = vld [vmem:[%s2259 + $0x40] sm:$0x3]
      %v2269 = vld [vmem:[%s2259 + $0x48] sm:$0xff]
      %v2270 = vld [vmem:[%s2259 + $0x50] sm:$0xff]
      %v2271 = vld [vmem:[%s2259 + $0x58] sm:$0x3]
      %v2272 = vld [vmem:[%s2259 + $0x60] sm:$0xff]
      %v2273 = vld [vmem:[%s2259 + $0x68] sm:$0xff]
      %v2274 = vld [vmem:[%s2259 + $0x70] sm:$0x3]
      %v2275 = vld [vmem:[%s2259 + $0x78] sm:$0xff]
      %v2276 = vld [vmem:[%s2259 + $0x80] sm:$0xff]
      %v2277 = vld [vmem:[%s2259 + $0x88] sm:$0x3]
      %v2278 = vld [vmem:[%s2259 + $0x90] sm:$0xff]
      %v2279 = vld [vmem:[%s2259 + $0x98] sm:$0xff]
      %v2280 = vld [vmem:[%s2259 + $0xa0] sm:$0x3]
      %v2281 = vld [vmem:[%s2259 + $0xa8] sm:$0xff]
      %v2282 = vld [vmem:[%s2259 + $0xb0] sm:$0xff]
      %v2283 = vld [vmem:[%s2259 + $0xb8] sm:$0x3]
      %v2308 = vrot.slane %v2260, 1
      %v2309 = vrot.slane %v2261, 1
      %v2310 = vsel %vm666, %v2308, %v2309
      %v2311 = vrot.slane %v2262, 1
      %v2312 = vsel %vm666, %v2309, %v2311
      %v2313 = vrot.slane %v2263, 1
      %v2314 = vrot.slane %v2264, 1
      %v2315 = vsel %vm666, %v2313, %v2314
      %v2316 = vrot.slane %v2265, 1
      %v2317 = vsel %vm666, %v2314, %v2316
      %v2318 = vrot.slane %v2266, 1
      %v2319 = vrot.slane %v2267, 1
      %v2320 = vsel %vm666, %v2318, %v2319
      %v2321 = vrot.slane %v2268, 1
      %v2322 = vsel %vm666, %v2319, %v2321
      %v2323 = vrot.slane %v2269, 1
      %v2324 = vrot.slane %v2270, 1
      %v2325 = vsel %vm666, %v2323, %v2324
      %v2326 = vrot.slane %v2271, 1
      %v2327 = vsel %vm666, %v2324, %v2326
      %v2328 = vrot.slane %v2272, 1
      %v2329 = vrot.slane %v2273, 1
      %v2330 = vsel %vm666, %v2328, %v2329
      %v2331 = vrot.slane %v2274, 1
      %v2332 = vsel %vm666, %v2329, %v2331
      %v2333 = vrot.slane %v2275, 1
      %v2334 = vrot.slane %v2276, 1
      %v2335 = vsel %vm666, %v2333, %v2334
      %v2336 = vrot.slane %v2277, 1
      %v2337 = vsel %vm666, %v2334, %v2336
      %v2338 = vrot.slane %v2278, 1
      %v2339 = vrot.slane %v2279, 1
      %v2340 = vsel %vm666, %v2338, %v2339
      %v2341 = vrot.slane %v2280, 1
      %v2342 = vsel %vm666, %v2339, %v2341
      %v2343 = vrot.slane %v2281, 1
      %v2344 = vrot.slane %v2282, 1
      %v2345 = vsel %vm666, %v2343, %v2344
      %v2346 = vrot.slane %v2283, 1
      %v2347 = vsel %vm666, %v2344, %v2346
      %2348 = vrot.lane.b32.xlu0 %v2310, 4
      %v2349 = vpop.permute.xlu0 %2348
      %2350 = vrot.lane.b32.xlu0 %v2312, 4
      %v2351 = vpop.permute.xlu0 %2350
      %2352 = vrot.lane.b32.xlu0 %v2315, 4
      %v2353 = vpop.permute.xlu0 %2352
      %2354 = vrot.lane.b32.xlu0 %v2317, 4
      %v2355 = vpop.permute.xlu0 %2354
      %2356 = vrot.lane.b32.xlu0 %v2320, 4
      %v2357 = vpop.permute.xlu0 %2356
      %2358 = vrot.lane.b32.xlu0 %v2322, 4
      %v2359 = vpop.permute.xlu0 %2358
      %2360 = vrot.lane.b32.xlu0 %v2325, 4
      %v2361 = vpop.permute.xlu0 %2360
      %2362 = vrot.lane.b32.xlu0 %v2327, 4
      %v2363 = vpop.permute.xlu0 %2362
      %2364 = vrot.lane.b32.xlu0 %v2330, 4
      %v2365 = vpop.permute.xlu0 %2364
      %2366 = vrot.lane.b32.xlu0 %v2332, 4
      %v2367 = vpop.permute.xlu0 %2366
      %2368 = vrot.lane.b32.xlu0 %v2335, 4
      %v2369 = vpop.permute.xlu0 %2368
      %2370 = vrot.lane.b32.xlu0 %v2337, 4
      %v2371 = vpop.permute.xlu0 %2370
      %2372 = vrot.lane.b32.xlu0 %v2340, 4
      %v2373 = vpop.permute.xlu0 %2372
      %2374 = vrot.lane.b32.xlu0 %v2342, 4
      %v2375 = vpop.permute.xlu0 %2374
      %2376 = vrot.lane.b32.xlu0 %v2345, 4
      %v2377 = vpop.permute.xlu0 %2376
      %2378 = vrot.lane.b32.xlu0 %v2347, 4
      %v2379 = vpop.permute.xlu0 %2378
      %v2396 = vrot.slane %v2260, 2
      %v2397 = vrot.slane %v2261, 2
      %v2398 = vsel %vm755, %v2396, %v2397
      %v2399 = vrot.slane %v2262, 2
      %v2400 = vsel %vm755, %v2397, %v2399
      %v2401 = vrot.slane %v2263, 2
      %v2402 = vrot.slane %v2264, 2
      %v2403 = vsel %vm755, %v2401, %v2402
      %v2404 = vrot.slane %v2265, 2
      %v2405 = vsel %vm755, %v2402, %v2404
      %v2406 = vrot.slane %v2266, 2
      %v2407 = vrot.slane %v2267, 2
      %v2408 = vsel %vm755, %v2406, %v2407
      %v2409 = vrot.slane %v2268, 2
      %v2410 = vsel %vm755, %v2407, %v2409
      %v2411 = vrot.slane %v2269, 2
      %v2412 = vrot.slane %v2270, 2
      %v2413 = vsel %vm755, %v2411, %v2412
      %v2414 = vrot.slane %v2271, 2
      %v2415 = vsel %vm755, %v2412, %v2414
      %v2416 = vrot.slane %v2272, 2
      %v2417 = vrot.slane %v2273, 2
      %v2418 = vsel %vm755, %v2416, %v2417
      %v2419 = vrot.slane %v2274, 2
      %v2420 = vsel %vm755, %v2417, %v2419
      %v2421 = vrot.slane %v2275, 2
      %v2422 = vrot.slane %v2276, 2
      %v2423 = vsel %vm755, %v2421, %v2422
      %v2424 = vrot.slane %v2277, 2
      %v2425 = vsel %vm755, %v2422, %v2424
      %v2426 = vrot.slane %v2278, 2
      %v2427 = vrot.slane %v2279, 2
      %v2428 = vsel %vm755, %v2426, %v2427
      %v2429 = vrot.slane %v2280, 2
      %v2430 = vsel %vm755, %v2427, %v2429
      %v2431 = vrot.slane %v2281, 2
      %v2432 = vrot.slane %v2282, 2
      %v2433 = vsel %vm755, %v2431, %v2432
      %v2434 = vrot.slane %v2283, 2
      %v2435 = vsel %vm755, %v2432, %v2434
      %2436 = vrot.lane.b32.xlu0 %v2398, 8
      %v2437 = vpop.permute.xlu0 %2436
      %2438 = vrot.lane.b32.xlu0 %v2400, 8
      %v2439 = vpop.permute.xlu0 %2438
      %2440 = vrot.lane.b32.xlu0 %v2403, 8
      %v2441 = vpop.permute.xlu0 %2440
      %2442 = vrot.lane.b32.xlu0 %v2405, 8
      %v2443 = vpop.permute.xlu0 %2442
      %2444 = vrot.lane.b32.xlu0 %v2408, 8
      %v2445 = vpop.permute.xlu0 %2444
      %2446 = vrot.lane.b32.xlu0 %v2410, 8
      %v2447 = vpop.permute.xlu0 %2446
      %2448 = vrot.lane.b32.xlu0 %v2413, 8
      %v2449 = vpop.permute.xlu0 %2448
      %2450 = vrot.lane.b32.xlu0 %v2415, 8
      %v2451 = vpop.permute.xlu0 %2450
      %2452 = vrot.lane.b32.xlu0 %v2418, 8
      %v2453 = vpop.permute.xlu0 %2452
      %2454 = vrot.lane.b32.xlu0 %v2420, 8
      %v2455 = vpop.permute.xlu0 %2454
      %2456 = vrot.lane.b32.xlu0 %v2423, 8
      %v2457 = vpop.permute.xlu0 %2456
      %2458 = vrot.lane.b32.xlu0 %v2425, 8
      %v2459 = vpop.permute.xlu0 %2458
      %2460 = vrot.lane.b32.xlu0 %v2428, 8
      %v2461 = vpop.permute.xlu0 %2460
      %2462 = vrot.lane.b32.xlu0 %v2430, 8
      %v2463 = vpop.permute.xlu0 %2462
      %2464 = vrot.lane.b32.xlu0 %v2433, 8
      %v2465 = vpop.permute.xlu0 %2464
      %2466 = vrot.lane.b32.xlu0 %v2435, 8
      %v2467 = vpop.permute.xlu0 %2466
      %v2484 = vsel %vm339, %v2260, %v2349
      %v2485 = vsel %vm339, %v2261, %v2351
      %v2486 = vsel %vm339, %v2263, %v2353
      %v2487 = vsel %vm339, %v2264, %v2355
      %v2488 = vsel %vm339, %v2266, %v2357
      %v2489 = vsel %vm339, %v2267, %v2359
      %v2490 = vsel %vm339, %v2269, %v2361
      %v2491 = vsel %vm339, %v2270, %v2363
      %v2492 = vsel %vm339, %v2272, %v2365
      %v2493 = vsel %vm339, %v2273, %v2367
      %v2494 = vsel %vm339, %v2275, %v2369
      %v2495 = vsel %vm339, %v2276, %v2371
      %v2496 = vsel %vm339, %v2278, %v2373
      %v2497 = vsel %vm339, %v2279, %v2375
      %v2498 = vsel %vm339, %v2281, %v2377
      %v2499 = vsel %vm339, %v2282, %v2379
      %v2500 = vsel %vm860, %v2484, %v2437
      %v2501 = vsel %vm860, %v2485, %v2439
      %v2502 = vsel %vm860, %v2486, %v2441
      %v2503 = vsel %vm860, %v2487, %v2443
      %v2504 = vsel %vm860, %v2488, %v2445
      %v2505 = vsel %vm860, %v2489, %v2447
      %v2506 = vsel %vm860, %v2490, %v2449
      %v2507 = vsel %vm860, %v2491, %v2451
      %v2508 = vsel %vm860, %v2492, %v2453
      %v2509 = vsel %vm860, %v2493, %v2455
      %v2510 = vsel %vm860, %v2494, %v2457
      %v2511 = vsel %vm860, %v2495, %v2459
      %v2512 = vsel %vm860, %v2496, %v2461
      %v2513 = vsel %vm860, %v2497, %v2463
      %v2514 = vsel %vm860, %v2498, %v2465
      %v2515 = vsel %vm860, %v2499, %v2467
      %v2516 = vpack.c.bf16 %v2501, %v2500
      %v2517 = vpack.c.bf16 %v2503, %v2502
      %v2518 = vpack.c.bf16 %v2505, %v2504
      %v2519 = vpack.c.bf16 %v2507, %v2506
      %v2520 = vpack.c.bf16 %v2509, %v2508
      %v2521 = vpack.c.bf16 %v2511, %v2510
      %v2522 = vpack.c.bf16 %v2513, %v2512
      %v2523 = vpack.c.bf16 %v2515, %v2514
      %v2525 = vsel %vm1157, %v2516, 0
      %v2528 = vsel %vm1157, %v2517, 0
      %v2531 = vsel %vm1157, %v2518, 0
      %v2534 = vsel %vm1157, %v2519, 0
      %v2537 = vsel %vm1157, %v2520, 0
      %v2540 = vsel %vm1157, %v2521, 0
      %v2543 = vsel %vm1157, %v2522, 0
      %v2546 = vsel %vm1157, %v2523, 0
      %2548 = vmatpush.bf16.msra.mxu0 0
      %2549 = vmatpush.bf16.msra.mxu0 0
      %2550 = vmatpush.bf16.msra.mxu0 0
      %2551 = vmatpush.bf16.msra.mxu0 0
      %2552 = vmatpush.bf16.msra.mxu0 0
      %2553 = vmatpush.bf16.msra.mxu0 0
      %2554 = vmatpush.bf16.msra.mxu0 0
      %2555 = vmatpush.bf16.msra.mxu0 %v1183
      %2556 = vmatmul.bf16.gmra.mxu0 %v2525
      %v2557 = vpop.f32.mrf.mxu0
      %v2558 = vadd.f32 0.0, %v2557
      %v2559 = vpop.f32.mrf.mxu0
      %v2560 = vadd.f32 0.0, %v2559
      %2561 = vmatmul.bf16.gmra.mxu0 %v2528
      %v2562 = vpop.f32.mrf.mxu0
      %v2563 = vadd.f32 0.0, %v2562
      %v2564 = vpop.f32.mrf.mxu0
      %v2565 = vadd.f32 0.0, %v2564
      %2566 = vmatmul.bf16.gmra.mxu0 %v2531
      %v2567 = vpop.f32.mrf.mxu0
      %v2568 = vadd.f32 0.0, %v2567
      %v2569 = vpop.f32.mrf.mxu0
      %v2570 = vadd.f32 0.0, %v2569
      %2571 = vmatmul.bf16.gmra.mxu0 %v2534
      %v2572 = vpop.f32.mrf.mxu0
      %v2573 = vadd.f32 0.0, %v2572
      %v2574 = vpop.f32.mrf.mxu0
      %v2575 = vadd.f32 0.0, %v2574
      %2576 = vmatmul.bf16.gmra.mxu0 %v2537
      %v2577 = vpop.f32.mrf.mxu0
      %v2578 = vadd.f32 0.0, %v2577
      %v2579 = vpop.f32.mrf.mxu0
      %v2580 = vadd.f32 0.0, %v2579
      %2581 = vmatmul.bf16.gmra.mxu0 %v2540
      %v2582 = vpop.f32.mrf.mxu0
      %v2583 = vadd.f32 0.0, %v2582
      %v2584 = vpop.f32.mrf.mxu0
      %v2585 = vadd.f32 0.0, %v2584
      %2586 = vmatmul.bf16.gmra.mxu0 %v2543
      %v2587 = vpop.f32.mrf.mxu0
      %v2588 = vadd.f32 0.0, %v2587
      %v2589 = vpop.f32.mrf.mxu0
      %v2590 = vadd.f32 0.0, %v2589
      %2591 = vmatmul.bf16.gmra.mxu0 %v2546
      %v2592 = vpop.f32.mrf.mxu0
      %v2593 = vadd.f32 0.0, %v2592
      %v2594 = vpop.f32.mrf.mxu0
      %v2595 = vadd.f32 0.0, %v2594
      %2596 = vdwg.mxu0
      %2597 = vmatpush.bf16.msra.mxu0 0
      %2598 = vmatpush.bf16.msra.mxu0 0
      %2599 = vmatpush.bf16.msra.mxu0 0
      %2600 = vmatpush.bf16.msra.mxu0 0
      %2601 = vmatpush.bf16.msra.mxu0 0
      %2602 = vmatpush.bf16.msra.mxu0 0
      %2603 = vmatpush.bf16.msra.mxu0 0
      %2604 = vmatpush.bf16.msra.mxu0 %v1186
      %2605 = vmatmul.bf16.gmra.mxu0 %v2525
      %v2606 = vpop.f32.mrf.mxu0
      %v2607 = vadd.f32 0.0, %v2606
      %v2608 = vpop.f32.mrf.mxu0
      %v2609 = vadd.f32 0.0, %v2608
      %2610 = vmatmul.bf16.gmra.mxu0 %v2528
      %v2611 = vpop.f32.mrf.mxu0
      %v2612 = vadd.f32 0.0, %v2611
      %v2613 = vpop.f32.mrf.mxu0
      %v2614 = vadd.f32 0.0, %v2613
      %2615 = vmatmul.bf16.gmra.mxu0 %v2531
      %v2616 = vpop.f32.mrf.mxu0
      %v2617 = vadd.f32 0.0, %v2616
      %v2618 = vpop.f32.mrf.mxu0
      %v2619 = vadd.f32 0.0, %v2618
      %2620 = vmatmul.bf16.gmra.mxu0 %v2534
      %v2621 = vpop.f32.mrf.mxu0
      %v2622 = vadd.f32 0.0, %v2621
      %v2623 = vpop.f32.mrf.mxu0
      %v2624 = vadd.f32 0.0, %v2623
      %2625 = vmatmul.bf16.gmra.mxu0 %v2537
      %v2626 = vpop.f32.mrf.mxu0
      %v2627 = vadd.f32 0.0, %v2626
      %v2628 = vpop.f32.mrf.mxu0
      %v2629 = vadd.f32 0.0, %v2628
      %2630 = vmatmul.bf16.gmra.mxu0 %v2540
      %v2631 = vpop.f32.mrf.mxu0
      %v2632 = vadd.f32 0.0, %v2631
      %v2633 = vpop.f32.mrf.mxu0
      %v2634 = vadd.f32 0.0, %v2633
      %2635 = vmatmul.bf16.gmra.mxu0 %v2543
      %v2636 = vpop.f32.mrf.mxu0
      %v2637 = vadd.f32 0.0, %v2636
      %v2638 = vpop.f32.mrf.mxu0
      %v2639 = vadd.f32 0.0, %v2638
      %2640 = vmatmul.bf16.gmra.mxu0 %v2546
      %v2641 = vpop.f32.mrf.mxu0
      %v2642 = vadd.f32 0.0, %v2641
      %v2643 = vpop.f32.mrf.mxu0
      %v2644 = vadd.f32 0.0, %v2643
      %2645 = vdwg.mxu0
      %v2647 = vsel %vm1157, %v2251, 0
      %v2650 = vsel %vm1157, %v2252, 0
      %v2653 = vsel %vm1157, %v2253, 0
      %v2656 = vsel %vm1157, %v2254, 0
      %v2659 = vsel %vm1157, %v2255, 0
      %v2662 = vsel %vm1157, %v2256, 0
      %v2665 = vsel %vm1157, %v2257, 0
      %v2668 = vsel %vm1157, %v2258, 0
      %2670 = vmatpush.bf16.msra.mxu0 0
      %2671 = vmatpush.bf16.msra.mxu0 0
      %2672 = vmatpush.bf16.msra.mxu0 0
      %2673 = vmatpush.bf16.msra.mxu0 0
      %2674 = vmatpush.bf16.msra.mxu0 0
      %2675 = vmatpush.bf16.msra.mxu0 0
      %2676 = vmatpush.bf16.msra.mxu0 0
      %2677 = vmatpush.bf16.msra.mxu0 %v1319
      %2678 = vmatmul.bf16.gmra.mxu0 %v2647
      %v2679 = vpop.f32.mrf.mxu0
      %v2680 = vadd.f32 %v2558, %v2679
      %v2681 = vpop.f32.mrf.mxu0
      %v2682 = vadd.f32 %v2560, %v2681
      %2683 = vmatmul.bf16.gmra.mxu0 %v2650
      %v2684 = vpop.f32.mrf.mxu0
      %v2685 = vadd.f32 %v2563, %v2684
      %v2686 = vpop.f32.mrf.mxu0
      %v2687 = vadd.f32 %v2565, %v2686
      %2688 = vmatmul.bf16.gmra.mxu0 %v2653
      %v2689 = vpop.f32.mrf.mxu0
      %v2690 = vadd.f32 %v2568, %v2689
      %v2691 = vpop.f32.mrf.mxu0
      %v2692 = vadd.f32 %v2570, %v2691
      %2693 = vmatmul.bf16.gmra.mxu0 %v2656
      %v2694 = vpop.f32.mrf.mxu0
      %v2695 = vadd.f32 %v2573, %v2694
      %v2696 = vpop.f32.mrf.mxu0
      %v2697 = vadd.f32 %v2575, %v2696
      %2698 = vmatmul.bf16.gmra.mxu0 %v2659
      %v2699 = vpop.f32.mrf.mxu0
      %v2700 = vadd.f32 %v2578, %v2699
      %v2701 = vpop.f32.mrf.mxu0
      %v2702 = vadd.f32 %v2580, %v2701
      %2703 = vmatmul.bf16.gmra.mxu0 %v2662
      %v2704 = vpop.f32.mrf.mxu0
      %v2705 = vadd.f32 %v2583, %v2704
      %v2706 = vpop.f32.mrf.mxu0
      %v2707 = vadd.f32 %v2585, %v2706
      %2708 = vmatmul.bf16.gmra.mxu0 %v2665
      %v2709 = vpop.f32.mrf.mxu0
      %v2710 = vadd.f32 %v2588, %v2709
      %v2711 = vpop.f32.mrf.mxu0
      %v2712 = vadd.f32 %v2590, %v2711
      %2713 = vmatmul.bf16.gmra.mxu0 %v2668
      %v2714 = vpop.f32.mrf.mxu0
      %v2715 = vadd.f32 %v2593, %v2714
      %v2716 = vpop.f32.mrf.mxu0
      %v2717 = vadd.f32 %v2595, %v2716
      %2718 = vdwg.mxu0
      %2719 = vmatpush.bf16.msra.mxu0 0
      %2720 = vmatpush.bf16.msra.mxu0 0
      %2721 = vmatpush.bf16.msra.mxu0 0
      %2722 = vmatpush.bf16.msra.mxu0 0
      %2723 = vmatpush.bf16.msra.mxu0 0
      %2724 = vmatpush.bf16.msra.mxu0 0
      %2725 = vmatpush.bf16.msra.mxu0 0
      %2726 = vmatpush.bf16.msra.mxu0 %v1322
      %2727 = vmatmul.bf16.gmra.mxu0 %v2647
      %v2728 = vpop.f32.mrf.mxu0
      %v2729 = vadd.f32 %v2607, %v2728
      %v2730 = vpop.f32.mrf.mxu0
      %v2731 = vadd.f32 %v2609, %v2730
      %2732 = vmatmul.bf16.gmra.mxu0 %v2650
      %v2733 = vpop.f32.mrf.mxu0
      %v2734 = vadd.f32 %v2612, %v2733
      %v2735 = vpop.f32.mrf.mxu0
      %v2736 = vadd.f32 %v2614, %v2735
      %2737 = vmatmul.bf16.gmra.mxu0 %v2653
      %v2738 = vpop.f32.mrf.mxu0
      %v2739 = vadd.f32 %v2617, %v2738
      %v2740 = vpop.f32.mrf.mxu0
      %v2741 = vadd.f32 %v2619, %v2740
      %2742 = vmatmul.bf16.gmra.mxu0 %v2656
      %v2743 = vpop.f32.mrf.mxu0
      %v2744 = vadd.f32 %v2622, %v2743
      %v2745 = vpop.f32.mrf.mxu0
      %v2746 = vadd.f32 %v2624, %v2745
      %2747 = vmatmul.bf16.gmra.mxu0 %v2659
      %v2748 = vpop.f32.mrf.mxu0
      %v2749 = vadd.f32 %v2627, %v2748
      %v2750 = vpop.f32.mrf.mxu0
      %v2751 = vadd.f32 %v2629, %v2750
      %2752 = vmatmul.bf16.gmra.mxu0 %v2662
      %v2753 = vpop.f32.mrf.mxu0
      %v2754 = vadd.f32 %v2632, %v2753
      %v2755 = vpop.f32.mrf.mxu0
      %v2756 = vadd.f32 %v2634, %v2755
      %2757 = vmatmul.bf16.gmra.mxu0 %v2665
      %v2758 = vpop.f32.mrf.mxu0
      %v2759 = vadd.f32 %v2637, %v2758
      %v2760 = vpop.f32.mrf.mxu0
      %v2761 = vadd.f32 %v2639, %v2760
      %2762 = vmatmul.bf16.gmra.mxu0 %v2668
      %v2763 = vpop.f32.mrf.mxu0
      %v2764 = vadd.f32 %v2642, %v2763
      %v2765 = vpop.f32.mrf.mxu0
      %v2766 = vadd.f32 %v2644, %v2765
      %2767 = vdwg.mxu0
      %s2768 = scalar_lea.vmem [#allocation2], 240
      %v2769 = vld [vmem:[%s2768] sm:$0xff]
      %v2770 = vld [vmem:[%s2768 + $0x8] sm:$0xff]
      %v2771 = vld [vmem:[%s2768 + $0x10] sm:$0x3]
      %v2772 = vld [vmem:[%s2768 + $0x18] sm:$0xff]
      %v2773 = vld [vmem:[%s2768 + $0x20] sm:$0xff]
      %v2774 = vld [vmem:[%s2768 + $0x28] sm:$0x3]
      %v2775 = vld [vmem:[%s2768 + $0x30] sm:$0xff]
      %v2776 = vld [vmem:[%s2768 + $0x38] sm:$0xff]
      %v2777 = vld [vmem:[%s2768 + $0x40] sm:$0x3]
      %v2778 = vld [vmem:[%s2768 + $0x48] sm:$0xff]
      %v2779 = vld [vmem:[%s2768 + $0x50] sm:$0xff]
      %v2780 = vld [vmem:[%s2768 + $0x58] sm:$0x3]
      %v2781 = vld [vmem:[%s2768 + $0x60] sm:$0xff]
      %v2782 = vld [vmem:[%s2768 + $0x68] sm:$0xff]
      %v2783 = vld [vmem:[%s2768 + $0x70] sm:$0x3]
      %v2784 = vld [vmem:[%s2768 + $0x78] sm:$0xff]
      %v2785 = vld [vmem:[%s2768 + $0x80] sm:$0xff]
      %v2786 = vld [vmem:[%s2768 + $0x88] sm:$0x3]
      %v2787 = vld [vmem:[%s2768 + $0x90] sm:$0xff]
      %v2788 = vld [vmem:[%s2768 + $0x98] sm:$0xff]
      %v2789 = vld [vmem:[%s2768 + $0xa0] sm:$0x3]
      %v2790 = vld [vmem:[%s2768 + $0xa8] sm:$0xff]
      %v2791 = vld [vmem:[%s2768 + $0xb0] sm:$0xff]
      %v2792 = vld [vmem:[%s2768 + $0xb8] sm:$0x3]
      %v2817 = vrot.slane %v2769, 1
      %v2818 = vrot.slane %v2770, 1
      %v2819 = vsel %vm666, %v2817, %v2818
      %v2820 = vrot.slane %v2771, 1
      %v2821 = vsel %vm666, %v2818, %v2820
      %v2822 = vrot.slane %v2772, 1
      %v2823 = vrot.slane %v2773, 1
      %v2824 = vsel %vm666, %v2822, %v2823
      %v2825 = vrot.slane %v2774, 1
      %v2826 = vsel %vm666, %v2823, %v2825
      %v2827 = vrot.slane %v2775, 1
      %v2828 = vrot.slane %v2776, 1
      %v2829 = vsel %vm666, %v2827, %v2828
      %v2830 = vrot.slane %v2777, 1
      %v2831 = vsel %vm666, %v2828, %v2830
      %v2832 = vrot.slane %v2778, 1
      %v2833 = vrot.slane %v2779, 1
      %v2834 = vsel %vm666, %v2832, %v2833
      %v2835 = vrot.slane %v2780, 1
      %v2836 = vsel %vm666, %v2833, %v2835
      %v2837 = vrot.slane %v2781, 1
      %v2838 = vrot.slane %v2782, 1
      %v2839 = vsel %vm666, %v2837, %v2838
      %v2840 = vrot.slane %v2783, 1
      %v2841 = vsel %vm666, %v2838, %v2840
      %v2842 = vrot.slane %v2784, 1
      %v2843 = vrot.slane %v2785, 1
      %v2844 = vsel %vm666, %v2842, %v2843
      %v2845 = vrot.slane %v2786, 1
      %v2846 = vsel %vm666, %v2843, %v2845
      %v2847 = vrot.slane %v2787, 1
      %v2848 = vrot.slane %v2788, 1
      %v2849 = vsel %vm666, %v2847, %v2848
      %v2850 = vrot.slane %v2789, 1
      %v2851 = vsel %vm666, %v2848, %v2850
      %v2852 = vrot.slane %v2790, 1
      %v2853 = vrot.slane %v2791, 1
      %v2854 = vsel %vm666, %v2852, %v2853
      %v2855 = vrot.slane %v2792, 1
      %v2856 = vsel %vm666, %v2853, %v2855
      %2857 = vrot.lane.b32.xlu0 %v2819, 4
      %v2858 = vpop.permute.xlu0 %2857
      %2859 = vrot.lane.b32.xlu0 %v2821, 4
      %v2860 = vpop.permute.xlu0 %2859
      %2861 = vrot.lane.b32.xlu0 %v2824, 4
      %v2862 = vpop.permute.xlu0 %2861
      %2863 = vrot.lane.b32.xlu0 %v2826, 4
      %v2864 = vpop.permute.xlu0 %2863
      %2865 = vrot.lane.b32.xlu0 %v2829, 4
      %v2866 = vpop.permute.xlu0 %2865
      %2867 = vrot.lane.b32.xlu0 %v2831, 4
      %v2868 = vpop.permute.xlu0 %2867
      %2869 = vrot.lane.b32.xlu0 %v2834, 4
      %v2870 = vpop.permute.xlu0 %2869
      %2871 = vrot.lane.b32.xlu0 %v2836, 4
      %v2872 = vpop.permute.xlu0 %2871
      %2873 = vrot.lane.b32.xlu0 %v2839, 4
      %v2874 = vpop.permute.xlu0 %2873
      %2875 = vrot.lane.b32.xlu0 %v2841, 4
      %v2876 = vpop.permute.xlu0 %2875
      %2877 = vrot.lane.b32.xlu0 %v2844, 4
      %v2878 = vpop.permute.xlu0 %2877
      %2879 = vrot.lane.b32.xlu0 %v2846, 4
      %v2880 = vpop.permute.xlu0 %2879
      %2881 = vrot.lane.b32.xlu0 %v2849, 4
      %v2882 = vpop.permute.xlu0 %2881
      %2883 = vrot.lane.b32.xlu0 %v2851, 4
      %v2884 = vpop.permute.xlu0 %2883
      %2885 = vrot.lane.b32.xlu0 %v2854, 4
      %v2886 = vpop.permute.xlu0 %2885
      %2887 = vrot.lane.b32.xlu0 %v2856, 4
      %v2888 = vpop.permute.xlu0 %2887
      %v2905 = vrot.slane %v2769, 2
      %v2906 = vrot.slane %v2770, 2
      %v2907 = vsel %vm755, %v2905, %v2906
      %v2908 = vrot.slane %v2771, 2
      %v2909 = vsel %vm755, %v2906, %v2908
      %v2910 = vrot.slane %v2772, 2
      %v2911 = vrot.slane %v2773, 2
      %v2912 = vsel %vm755, %v2910, %v2911
      %v2913 = vrot.slane %v2774, 2
      %v2914 = vsel %vm755, %v2911, %v2913
      %v2915 = vrot.slane %v2775, 2
      %v2916 = vrot.slane %v2776, 2
      %v2917 = vsel %vm755, %v2915, %v2916
      %v2918 = vrot.slane %v2777, 2
      %v2919 = vsel %vm755, %v2916, %v2918
      %v2920 = vrot.slane %v2778, 2
      %v2921 = vrot.slane %v2779, 2
      %v2922 = vsel %vm755, %v2920, %v2921
      %v2923 = vrot.slane %v2780, 2
      %v2924 = vsel %vm755, %v2921, %v2923
      %v2925 = vrot.slane %v2781, 2
      %v2926 = vrot.slane %v2782, 2
      %v2927 = vsel %vm755, %v2925, %v2926
      %v2928 = vrot.slane %v2783, 2
      %v2929 = vsel %vm755, %v2926, %v2928
      %v2930 = vrot.slane %v2784, 2
      %v2931 = vrot.slane %v2785, 2
      %v2932 = vsel %vm755, %v2930, %v2931
      %v2933 = vrot.slane %v2786, 2
      %v2934 = vsel %vm755, %v2931, %v2933
      %v2935 = vrot.slane %v2787, 2
      %v2936 = vrot.slane %v2788, 2
      %v2937 = vsel %vm755, %v2935, %v2936
      %v2938 = vrot.slane %v2789, 2
      %v2939 = vsel %vm755, %v2936, %v2938
      %v2940 = vrot.slane %v2790, 2
      %v2941 = vrot.slane %v2791, 2
      %v2942 = vsel %vm755, %v2940, %v2941
      %v2943 = vrot.slane %v2792, 2
      %v2944 = vsel %vm755, %v2941, %v2943
      %2945 = vrot.lane.b32.xlu0 %v2907, 8
      %v2946 = vpop.permute.xlu0 %2945
      %2947 = vrot.lane.b32.xlu0 %v2909, 8
      %v2948 = vpop.permute.xlu0 %2947
      %2949 = vrot.lane.b32.xlu0 %v2912, 8
      %v2950 = vpop.permute.xlu0 %2949
      %2951 = vrot.lane.b32.xlu0 %v2914, 8
      %v2952 = vpop.permute.xlu0 %2951
      %2953 = vrot.lane.b32.xlu0 %v2917, 8
      %v2954 = vpop.permute.xlu0 %2953
      %2955 = vrot.lane.b32.xlu0 %v2919, 8
      %v2956 = vpop.permute.xlu0 %2955
      %2957 = vrot.lane.b32.xlu0 %v2922, 8
      %v2958 = vpop.permute.xlu0 %2957
      %2959 = vrot.lane.b32.xlu0 %v2924, 8
      %v2960 = vpop.permute.xlu0 %2959
      %2961 = vrot.lane.b32.xlu0 %v2927, 8
      %v2962 = vpop.permute.xlu0 %2961
      %2963 = vrot.lane.b32.xlu0 %v2929, 8
      %v2964 = vpop.permute.xlu0 %2963
      %2965 = vrot.lane.b32.xlu0 %v2932, 8
      %v2966 = vpop.permute.xlu0 %2965
      %2967 = vrot.lane.b32.xlu0 %v2934, 8
      %v2968 = vpop.permute.xlu0 %2967
      %2969 = vrot.lane.b32.xlu0 %v2937, 8
      %v2970 = vpop.permute.xlu0 %2969
      %2971 = vrot.lane.b32.xlu0 %v2939, 8
      %v2972 = vpop.permute.xlu0 %2971
      %2973 = vrot.lane.b32.xlu0 %v2942, 8
      %v2974 = vpop.permute.xlu0 %2973
      %2975 = vrot.lane.b32.xlu0 %v2944, 8
      %v2976 = vpop.permute.xlu0 %2975
      %v2993 = vsel %vm339, %v2769, %v2858
      %v2994 = vsel %vm339, %v2770, %v2860
      %v2995 = vsel %vm339, %v2772, %v2862
      %v2996 = vsel %vm339, %v2773, %v2864
      %v2997 = vsel %vm339, %v2775, %v2866
      %v2998 = vsel %vm339, %v2776, %v2868
      %v2999 = vsel %vm339, %v2778, %v2870
      %v3000 = vsel %vm339, %v2779, %v2872
      %v3001 = vsel %vm339, %v2781, %v2874
      %v3002 = vsel %vm339, %v2782, %v2876
      %v3003 = vsel %vm339, %v2784, %v2878
      %v3004 = vsel %vm339, %v2785, %v2880
      %v3005 = vsel %vm339, %v2787, %v2882
      %v3006 = vsel %vm339, %v2788, %v2884
      %v3007 = vsel %vm339, %v2790, %v2886
      %v3008 = vsel %vm339, %v2791, %v2888
      %v3009 = vsel %vm860, %v2993, %v2946
      %v3010 = vsel %vm860, %v2994, %v2948
      %v3011 = vsel %vm860, %v2995, %v2950
      %v3012 = vsel %vm860, %v2996, %v2952
      %v3013 = vsel %vm860, %v2997, %v2954
      %v3014 = vsel %vm860, %v2998, %v2956
      %v3015 = vsel %vm860, %v2999, %v2958
      %v3016 = vsel %vm860, %v3000, %v2960
      %v3017 = vsel %vm860, %v3001, %v2962
      %v3018 = vsel %vm860, %v3002, %v2964
      %v3019 = vsel %vm860, %v3003, %v2966
      %v3020 = vsel %vm860, %v3004, %v2968
      %v3021 = vsel %vm860, %v3005, %v2970
      %v3022 = vsel %vm860, %v3006, %v2972
      %v3023 = vsel %vm860, %v3007, %v2974
      %v3024 = vsel %vm860, %v3008, %v2976
      %v3025 = vpack.c.bf16 %v3010, %v3009
      %v3026 = vpack.c.bf16 %v3012, %v3011
      %v3027 = vpack.c.bf16 %v3014, %v3013
      %v3028 = vpack.c.bf16 %v3016, %v3015
      %v3029 = vpack.c.bf16 %v3018, %v3017
      %v3030 = vpack.c.bf16 %v3020, %v3019
      %v3031 = vpack.c.bf16 %v3022, %v3021
      %v3032 = vpack.c.bf16 %v3024, %v3023
      %v3034 = vsel %vm1157, %v3025, 0
      %v3037 = vsel %vm1157, %v3026, 0
      %v3040 = vsel %vm1157, %v3027, 0
      %v3043 = vsel %vm1157, %v3028, 0
      %v3046 = vsel %vm1157, %v3029, 0
      %v3049 = vsel %vm1157, %v3030, 0
      %v3052 = vsel %vm1157, %v3031, 0
      %v3055 = vsel %vm1157, %v3032, 0
      %3057 = vmatpush.bf16.msra.mxu0 0
      %3058 = vmatpush.bf16.msra.mxu0 0
      %3059 = vmatpush.bf16.msra.mxu0 0
      %3060 = vmatpush.bf16.msra.mxu0 0
      %3061 = vmatpush.bf16.msra.mxu0 0
      %3062 = vmatpush.bf16.msra.mxu0 0
      %3063 = vmatpush.bf16.msra.mxu0 0
      %3064 = vmatpush.bf16.msra.mxu0 %v1720
      %3065 = vmatmul.bf16.gmra.mxu0 %v3034
      %v3066 = vpop.f32.mrf.mxu0
      %v3067 = vadd.f32 0.0, %v3066
      %v3068 = vpop.f32.mrf.mxu0
      %v3069 = vadd.f32 0.0, %v3068
      %3070 = vmatmul.bf16.gmra.mxu0 %v3037
      %v3071 = vpop.f32.mrf.mxu0
      %v3072 = vadd.f32 0.0, %v3071
      %v3073 = vpop.f32.mrf.mxu0
      %v3074 = vadd.f32 0.0, %v3073
      %3075 = vmatmul.bf16.gmra.mxu0 %v3040
      %v3076 = vpop.f32.mrf.mxu0
      %v3077 = vadd.f32 0.0, %v3076
      %v3078 = vpop.f32.mrf.mxu0
      %v3079 = vadd.f32 0.0, %v3078
      %3080 = vmatmul.bf16.gmra.mxu0 %v3043
      %v3081 = vpop.f32.mrf.mxu0
      %v3082 = vadd.f32 0.0, %v3081
      %v3083 = vpop.f32.mrf.mxu0
      %v3084 = vadd.f32 0.0, %v3083
      %3085 = vmatmul.bf16.gmra.mxu0 %v3046
      %v3086 = vpop.f32.mrf.mxu0
      %v3087 = vadd.f32 0.0, %v3086
      %v3088 = vpop.f32.mrf.mxu0
      %v3089 = vadd.f32 0.0, %v3088
      %3090 = vmatmul.bf16.gmra.mxu0 %v3049
      %v3091 = vpop.f32.mrf.mxu0
      %v3092 = vadd.f32 0.0, %v3091
      %v3093 = vpop.f32.mrf.mxu0
      %v3094 = vadd.f32 0.0, %v3093
      %3095 = vmatmul.bf16.gmra.mxu0 %v3052
      %v3096 = vpop.f32.mrf.mxu0
      %v3097 = vadd.f32 0.0, %v3096
      %v3098 = vpop.f32.mrf.mxu0
      %v3099 = vadd.f32 0.0, %v3098
      %3100 = vmatmul.bf16.gmra.mxu0 %v3055
      %v3101 = vpop.f32.mrf.mxu0
      %v3102 = vadd.f32 0.0, %v3101
      %v3103 = vpop.f32.mrf.mxu0
      %v3104 = vadd.f32 0.0, %v3103
      %3105 = vdwg.mxu0
      %3106 = vmatpush.bf16.msra.mxu0 0
      %3107 = vmatpush.bf16.msra.mxu0 0
      %3108 = vmatpush.bf16.msra.mxu0 0
      %3109 = vmatpush.bf16.msra.mxu0 0
      %3110 = vmatpush.bf16.msra.mxu0 0
      %3111 = vmatpush.bf16.msra.mxu0 0
      %3112 = vmatpush.bf16.msra.mxu0 0
      %3113 = vmatpush.bf16.msra.mxu0 %v1723
      %3114 = vmatmul.bf16.gmra.mxu0 %v3034
      %v3115 = vpop.f32.mrf.mxu0
      %v3116 = vadd.f32 0.0, %v3115
      %v3117 = vpop.f32.mrf.mxu0
      %v3118 = vadd.f32 0.0, %v3117
      %3119 = vmatmul.bf16.gmra.mxu0 %v3037
      %v3120 = vpop.f32.mrf.mxu0
      %v3121 = vadd.f32 0.0, %v3120
      %v3122 = vpop.f32.mrf.mxu0
      %v3123 = vadd.f32 0.0, %v3122
      %3124 = vmatmul.bf16.gmra.mxu0 %v3040
      %v3125 = vpop.f32.mrf.mxu0
      %v3126 = vadd.f32 0.0, %v3125
      %v3127 = vpop.f32.mrf.mxu0
      %v3128 = vadd.f32 0.0, %v3127
      %3129 = vmatmul.bf16.gmra.mxu0 %v3043
      %v3130 = vpop.f32.mrf.mxu0
      %v3131 = vadd.f32 0.0, %v3130
      %v3132 = vpop.f32.mrf.mxu0
      %v3133 = vadd.f32 0.0, %v3132
      %3134 = vmatmul.bf16.gmra.mxu0 %v3046
      %v3135 = vpop.f32.mrf.mxu0
      %v3136 = vadd.f32 0.0, %v3135
      %v3137 = vpop.f32.mrf.mxu0
      %v3138 = vadd.f32 0.0, %v3137
      %3139 = vmatmul.bf16.gmra.mxu0 %v3049
      %v3140 = vpop.f32.mrf.mxu0
      %v3141 = vadd.f32 0.0, %v3140
      %v3142 = vpop.f32.mrf.mxu0
      %v3143 = vadd.f32 0.0, %v3142
      %3144 = vmatmul.bf16.gmra.mxu0 %v3052
      %v3145 = vpop.f32.mrf.mxu0
      %v3146 = vadd.f32 0.0, %v3145
      %v3147 = vpop.f32.mrf.mxu0
      %v3148 = vadd.f32 0.0, %v3147
      %3149 = vmatmul.bf16.gmra.mxu0 %v3055
      %v3150 = vpop.f32.mrf.mxu0
      %v3151 = vadd.f32 0.0, %v3150
      %v3152 = vpop.f32.mrf.mxu0
      %v3153 = vadd.f32 0.0, %v3152
      %3154 = vdwg.mxu0
      %v3155 = vadd.f32 %v2680, %v3067
      %v3156 = vadd.f32 %v2729, %v3116
      %v3157 = vadd.f32 %v2682, %v3069
      %v3158 = vadd.f32 %v2731, %v3118
      %v3159 = vadd.f32 %v2685, %v3072
      %v3160 = vadd.f32 %v2734, %v3121
      %v3161 = vadd.f32 %v2687, %v3074
      %v3162 = vadd.f32 %v2736, %v3123
      %v3163 = vadd.f32 %v2690, %v3077
      %v3164 = vadd.f32 %v2739, %v3126
      %v3165 = vadd.f32 %v2692, %v3079
      %v3166 = vadd.f32 %v2741, %v3128
      %v3167 = vadd.f32 %v2695, %v3082
      %v3168 = vadd.f32 %v2744, %v3131
      %v3169 = vadd.f32 %v2697, %v3084
      %v3170 = vadd.f32 %v2746, %v3133
      %v3171 = vadd.f32 %v2700, %v3087
      %v3172 = vadd.f32 %v2749, %v3136
      %v3173 = vadd.f32 %v2702, %v3089
      %v3174 = vadd.f32 %v2751, %v3138
      %v3175 = vadd.f32 %v2705, %v3092
      %v3176 = vadd.f32 %v2754, %v3141
      %v3177 = vadd.f32 %v2707, %v3094
      %v3178 = vadd.f32 %v2756, %v3143
      %v3179 = vadd.f32 %v2710, %v3097
      %v3180 = vadd.f32 %v2759, %v3146
      %v3181 = vadd.f32 %v2712, %v3099
      %v3182 = vadd.f32 %v2761, %v3148
      %v3183 = vadd.f32 %v2715, %v3102
      %v3184 = vadd.f32 %v2764, %v3151
      %v3185 = vadd.f32 %v2717, %v3104
      %v3186 = vadd.f32 %v2766, %v3153
      %v3187 = vadd.f32 %v3155, %v1856
      %v3188 = vadd.f32 %v3156, %v1857
      %v3189 = vadd.f32 %v3157, %v1856
      %v3190 = vadd.f32 %v3158, %v1857
      %v3191 = vadd.f32 %v3159, %v1856
      %v3192 = vadd.f32 %v3160, %v1857
      %v3193 = vadd.f32 %v3161, %v1856
      %v3194 = vadd.f32 %v3162, %v1857
      %v3195 = vadd.f32 %v3163, %v1856
      %v3196 = vadd.f32 %v3164, %v1857
      %v3197 = vadd.f32 %v3165, %v1856
      %v3198 = vadd.f32 %v3166, %v1857
      %v3199 = vadd.f32 %v3167, %v1856
      %v3200 = vadd.f32 %v3168, %v1857
      %v3201 = vadd.f32 %v3169, %v1856
      %v3202 = vadd.f32 %v3170, %v1857
      %v3203 = vadd.f32 %v3171, %v1856
      %v3204 = vadd.f32 %v3172, %v1857
      %v3205 = vadd.f32 %v3173, %v1856
      %v3206 = vadd.f32 %v3174, %v1857
      %v3207 = vadd.f32 %v3175, %v1856
      %v3208 = vadd.f32 %v3176, %v1857
      %v3209 = vadd.f32 %v3177, %v1856
      %v3210 = vadd.f32 %v3178, %v1857
      %v3211 = vadd.f32 %v3179, %v1856
      %v3212 = vadd.f32 %v3180, %v1857
      %v3213 = vadd.f32 %v3181, %v1856
      %v3214 = vadd.f32 %v3182, %v1857
      %v3215 = vadd.f32 %v3183, %v1856
      %v3216 = vadd.f32 %v3184, %v1857
      %v3217 = vadd.f32 %v3185, %v1856
      %v3218 = vadd.f32 %v3186, %v1857
      %v3219 = vmax.f32 %v3187, 0.0
      %v3220 = vmax.f32 %v3188, 0.0
      %v3221 = vmax.f32 %v3189, 0.0
      %v3222 = vmax.f32 %v3190, 0.0
      %v3223 = vmax.f32 %v3191, 0.0
      %v3224 = vmax.f32 %v3192, 0.0
      %v3225 = vmax.f32 %v3193, 0.0
      %v3226 = vmax.f32 %v3194, 0.0
      %v3227 = vmax.f32 %v3195, 0.0
      %v3228 = vmax.f32 %v3196, 0.0
      %v3229 = vmax.f32 %v3197, 0.0
      %v3230 = vmax.f32 %v3198, 0.0
      %v3231 = vmax.f32 %v3199, 0.0
      %v3232 = vmax.f32 %v3200, 0.0
      %v3233 = vmax.f32 %v3201, 0.0
      %v3234 = vmax.f32 %v3202, 0.0
      %v3235 = vmax.f32 %v3203, 0.0
      %v3236 = vmax.f32 %v3204, 0.0
      %v3237 = vmax.f32 %v3205, 0.0
      %v3238 = vmax.f32 %v3206, 0.0
      %v3239 = vmax.f32 %v3207, 0.0
      %v3240 = vmax.f32 %v3208, 0.0
      %v3241 = vmax.f32 %v3209, 0.0
      %v3242 = vmax.f32 %v3210, 0.0
      %v3243 = vmax.f32 %v3211, 0.0
      %v3244 = vmax.f32 %v3212, 0.0
      %v3245 = vmax.f32 %v3213, 0.0
      %v3246 = vmax.f32 %v3214, 0.0
      %v3247 = vmax.f32 %v3215, 0.0
      %v3248 = vmax.f32 %v3216, 0.0
      %v3249 = vmax.f32 %v3217, 0.0
      %v3250 = vmax.f32 %v3218, 0.0
      %v3251 = vmax.f32 %v3219, %v3227
      %v3252 = vmax.f32 %v3223, %v3231
      %v3253 = vmax.f32 %v3251, %v3235
      %v3254 = vmax.f32 %v3252, %v3239
      %v3255 = vmax.f32 %v3253, %v3243
      %v3256 = vmax.f32 %v3254, %v3247
      %v3257 = vmax.f32 %v3255, %v3256
      %v3258 = vmax.f32 %v3221, %v3229
      %v3259 = vmax.f32 %v3225, %v3233
      %v3260 = vmax.f32 %v3258, %v3237
      %v3261 = vmax.f32 %v3259, %v3241
      %v3262 = vmax.f32 %v3260, %v3245
      %v3263 = vmax.f32 %v3261, %v3249
      %v3264 = vmax.f32 %v3262, %v3263
      %v3265 = vmax.f32 %v1930, %v3257
      %v3266 = vmax.f32 %v1937, %v3264
      %v3267 = vmax.f32 %v3220, %v3222
      %v3268 = vrot.slane %v3267, 4
      %v3269 = vmax.f32 %v3267, %v3268
      %v3270 = vrot.slane %v3269, 2
      %v3271 = vmax.f32 %v3269, %v3270
      %v3272 = vrot.slane %v3271, 1
      %v3273 = vmax.f32 %v3271, %v3272
      %v3274 = vmax.f32 %v3224, %v3226
      %v3275 = vrot.slane %v3274, 4
      %v3276 = vmax.f32 %v3274, %v3275
      %v3277 = vrot.slane %v3276, 2
      %v3278 = vmax.f32 %v3276, %v3277
      %v3279 = vrot.slane %v3278, 1
      %v3280 = vmax.f32 %v3278, %v3279
      %v3281 = vmax.f32 %v3228, %v3230
      %v3282 = vrot.slane %v3281, 4
      %v3283 = vmax.f32 %v3281, %v3282
      %v3284 = vrot.slane %v3283, 2
      %v3285 = vmax.f32 %v3283, %v3284
      %v3286 = vrot.slane %v3285, 1
      %v3287 = vmax.f32 %v3285, %v3286
      %v3288 = vmax.f32 %v3232, %v3234
      %v3289 = vrot.slane %v3288, 4
      %v3290 = vmax.f32 %v3288, %v3289
      %v3291 = vrot.slane %v3290, 2
      %v3292 = vmax.f32 %v3290, %v3291
      %v3293 = vrot.slane %v3292, 1
      %v3294 = vmax.f32 %v3292, %v3293
      %v3295 = vmax.f32 %v3236, %v3238
      %v3296 = vrot.slane %v3295, 4
      %v3297 = vmax.f32 %v3295, %v3296
      %v3298 = vrot.slane %v3297, 2
      %v3299 = vmax.f32 %v3297, %v3298
      %v3300 = vrot.slane %v3299, 1
      %v3301 = vmax.f32 %v3299, %v3300
      %v3302 = vmax.f32 %v3240, %v3242
      %v3303 = vrot.slane %v3302, 4
      %v3304 = vmax.f32 %v3302, %v3303
      %v3305 = vrot.slane %v3304, 2
      %v3306 = vmax.f32 %v3304, %v3305
      %v3307 = vrot.slane %v3306, 1
      %v3308 = vmax.f32 %v3306, %v3307
      %v3309 = vmax.f32 %v3244, %v3246
      %v3310 = vrot.slane %v3309, 4
      %v3311 = vmax.f32 %v3309, %v3310
      %v3312 = vrot.slane %v3311, 2
      %v3313 = vmax.f32 %v3311, %v3312
      %v3314 = vrot.slane %v3313, 1
      %v3315 = vmax.f32 %v3313, %v3314
      %v3316 = vmax.f32 %v3248, %v3250
      %v3317 = vrot.slane %v3316, 4
      %v3318 = vmax.f32 %v3316, %v3317
      %v3319 = vrot.slane %v3318, 2
      %v3320 = vmax.f32 %v3318, %v3319
      %v3321 = vrot.slane %v3320, 1
      %v3322 = vmax.f32 %v3320, %v3321
      %vm3331 = vcmask 1041409
      %v3332 = vsel %vm3331, %v1951, %v1944
      %vm3333 = vcmask 1042434
      %v3334 = vsel %vm3333, %v1958, %v3332
      %vm3335 = vcmask 1043459
      %v3336 = vsel %vm3335, %v1965, %v3334
      %vm3337 = vcmask 1044484
      %v3338 = vsel %vm3337, %v1972, %v3336
      %vm3339 = vcmask 1045509
      %v3340 = vsel %vm3339, %v1979, %v3338
      %vm3341 = vcmask 1046534
      %v3342 = vsel %vm3341, %v1986, %v3340
      %vm3343 = vcmask 1047559
      %v3344 = vsel %vm3343, %v1993, %v3342
      %v3353 = vsel %vm3331, %v3280, %v3273
      %v3354 = vsel %vm3333, %v3287, %v3353
      %v3355 = vsel %vm3335, %v3294, %v3354
      %v3356 = vsel %vm3337, %v3301, %v3355
      %v3357 = vsel %vm3339, %v3308, %v3356
      %v3358 = vsel %vm3341, %v3315, %v3357
      %v3359 = vsel %vm3343, %v3322, %v3358
      %v3360 = vrot.slane %v3344, 1
      %v3361 = vrot.slane %v3344, 2
      %v3362 = vrot.slane %v3344, 3
      %v3363 = vrot.slane %v3344, 4
      %v3364 = vrot.slane %v3344, 5
      %v3365 = vrot.slane %v3344, 6
      %v3366 = vrot.slane %v3344, 7
      %v3367 = vrot.slane %v3359, 1
      %v3368 = vrot.slane %v3359, 2
      %v3369 = vrot.slane %v3359, 3
      %v3370 = vrot.slane %v3359, 4
      %v3371 = vrot.slane %v3359, 5
      %v3372 = vrot.slane %v3359, 6
      %v3373 = vrot.slane %v3359, 7
      %v3374 = vperm.slane %v3344, 0
      %v3375 = vperm.slane %v3360, 0
      %v3376 = vperm.slane %v3361, 0
      %v3377 = vperm.slane %v3362, 0
      %v3378 = vperm.slane %v3363, 0
      %v3379 = vperm.slane %v3364, 0
      %v3380 = vperm.slane %v3365, 0
      %v3381 = vperm.slane %v3366, 0
      %v3382 = vperm.slane %v3359, 0
      %v3383 = vperm.slane %v3367, 0
      %v3384 = vperm.slane %v3368, 0
      %v3385 = vperm.slane %v3369, 0
      %v3386 = vperm.slane %v3370, 0
      %v3387 = vperm.slane %v3371, 0
      %v3388 = vperm.slane %v3372, 0
      %v3389 = vperm.slane %v3373, 0
      %v3406 = vadd.f32 %v3265, %v3374
      %v3407 = vadd.f32 %v3266, %v3374
      %v3408 = vadd.f32 %v3265, %v3375
      %v3409 = vadd.f32 %v3266, %v3375
      %v3410 = vadd.f32 %v3265, %v3376
      %v3411 = vadd.f32 %v3266, %v3376
      %v3412 = vadd.f32 %v3265, %v3377
      %v3413 = vadd.f32 %v3266, %v3377
      %v3414 = vadd.f32 %v3265, %v3378
      %v3415 = vadd.f32 %v3266, %v3378
      %v3416 = vadd.f32 %v3265, %v3379
      %v3417 = vadd.f32 %v3266, %v3379
      %v3418 = vadd.f32 %v3265, %v3380
      %v3419 = vadd.f32 %v3266, %v3380
      %v3420 = vadd.f32 %v3265, %v3381
      %v3421 = vadd.f32 %v3266, %v3381
      %v3422 = vadd.f32 %v3265, %v3382
      %v3423 = vadd.f32 %v3266, %v3382
      %v3424 = vadd.f32 %v3265, %v3383
      %v3425 = vadd.f32 %v3266, %v3383
      %v3426 = vadd.f32 %v3265, %v3384
      %v3427 = vadd.f32 %v3266, %v3384
      %v3428 = vadd.f32 %v3265, %v3385
      %v3429 = vadd.f32 %v3266, %v3385
      %v3430 = vadd.f32 %v3265, %v3386
      %v3431 = vadd.f32 %v3266, %v3386
      %v3432 = vadd.f32 %v3265, %v3387
      %v3433 = vadd.f32 %v3266, %v3387
      %v3434 = vadd.f32 %v3265, %v3388
      %v3435 = vadd.f32 %v3266, %v3388
      %v3436 = vadd.f32 %v3265, %v3389
      %v3437 = vadd.f32 %v3266, %v3389
      %s3438 = scalar_lea.vmem [#allocation3], 24
      %3439 = vst [vmem:[%s3438 + $0x1] sm:$0xff] %v3406
      %3440 = vst [vmem:[%s3438 + $0x9] sm:$0xff] %v3407
      %3441 = vst [vmem:[%s3438 + $0x19] sm:$0xff] %v3408
      %3442 = vst [vmem:[%s3438 + $0x21] sm:$0xff] %v3409
      %3443 = vst [vmem:[%s3438 + $0x31] sm:$0xff] %v3410
      %3444 = vst [vmem:[%s3438 + $0x39] sm:$0xff] %v3411
      %3445 = vst [vmem:[%s3438 + $0x49] sm:$0xff] %v3412
      %3446 = vst [vmem:[%s3438 + $0x51] sm:$0xff] %v3413
      %3447 = vst [vmem:[%s3438 + $0x61] sm:$0xff] %v3414
      %3448 = vst [vmem:[%s3438 + $0x69] sm:$0xff] %v3415
      %3449 = vst [vmem:[%s3438 + $0x79] sm:$0xff] %v3416
      %3450 = vst [vmem:[%s3438 + $0x81] sm:$0xff] %v3417
      %3451 = vst [vmem:[%s3438 + $0x91] sm:$0xff] %v3418
      %3452 = vst [vmem:[%s3438 + $0x99] sm:$0xff] %v3419
      %3453 = vst [vmem:[%s3438 + $0xa9] sm:$0xff] %v3420
      %3454 = vst [vmem:[%s3438 + $0xb1] sm:$0xff] %v3421
      %3455 = vst [vmem:[%s3438 + $0xc1] sm:$0xff] %v3422
      %3456 = vst [vmem:[%s3438 + $0xc9] sm:$0xff] %v3423
      %3457 = vst [vmem:[%s3438 + $0xd9] sm:$0xff] %v3424
      %3458 = vst [vmem:[%s3438 + $0xe1] sm:$0xff] %v3425
      %3459 = vst [vmem:[%s3438 + $0xf1] sm:$0xff] %v3426
      %3460 = vst [vmem:[%s3438 + $0xf9] sm:$0xff] %v3427
      %3461 = vst [vmem:[%s3438 + $0x109] sm:$0xff] %v3428
      %3462 = vst [vmem:[%s3438 + $0x111] sm:$0xff] %v3429
      %3463 = vst [vmem:[%s3438 + $0x121] sm:$0xff] %v3430
      %3464 = vst [vmem:[%s3438 + $0x129] sm:$0xff] %v3431
      %3465 = vst [vmem:[%s3438 + $0x139] sm:$0xff] %v3432
      %3466 = vst [vmem:[%s3438 + $0x141] sm:$0xff] %v3433
      %3467 = vst [vmem:[%s3438 + $0x151] sm:$0xff] %v3434
      %3468 = vst [vmem:[%s3438 + $0x159] sm:$0xff] %v3435
      %3469 = vst [vmem:[%s3438 + $0x169] sm:$0xff] %v3436
      %3470 = vst [vmem:[%s3438 + $0x171] sm:$0xff] %v3437
      %v3471 = vld [vmem:[#allocation3] sm:$0xff]
      %v3472 = vld [vmem:[#allocation3 + $0x8] sm:$0xff]
      %v3473 = vld [vmem:[#allocation3 + $0x10] sm:$0x3]
      %v3474 = vld [vmem:[#allocation3 + $0x18] sm:$0xff]
      %v3475 = vld [vmem:[#allocation3 + $0x20] sm:$0xff]
      %v3476 = vld [vmem:[#allocation3 + $0x28] sm:$0x3]
      %v3477 = vld [vmem:[#allocation3 + $0x30] sm:$0xff]
      %v3478 = vld [vmem:[#allocation3 + $0x38] sm:$0xff]
      %v3479 = vld [vmem:[#allocation3 + $0x40] sm:$0x3]
      %v3480 = vld [vmem:[#allocation3 + $0x48] sm:$0xff]
      %v3481 = vld [vmem:[#allocation3 + $0x50] sm:$0xff]
      %v3482 = vld [vmem:[#allocation3 + $0x58] sm:$0x3]
      %v3483 = vld [vmem:[#allocation3 + $0x60] sm:$0xff]
      %v3484 = vld [vmem:[#allocation3 + $0x68] sm:$0xff]
      %v3485 = vld [vmem:[#allocation3 + $0x70] sm:$0x3]
      %v3486 = vld [vmem:[#allocation3 + $0x78] sm:$0xff]
      %v3487 = vld [vmem:[#allocation3 + $0x80] sm:$0xff]
      %v3488 = vld [vmem:[#allocation3 + $0x88] sm:$0x3]
      %v3489 = vld [vmem:[#allocation3 + $0x90] sm:$0xff]
      %v3490 = vld [vmem:[#allocation3 + $0x98] sm:$0xff]
      %v3491 = vld [vmem:[#allocation3 + $0xa0] sm:$0x3]
      %v3492 = vld [vmem:[#allocation3 + $0xa8] sm:$0xff]
      %v3493 = vld [vmem:[#allocation3 + $0xb0] sm:$0xff]
      %v3494 = vld [vmem:[#allocation3 + $0xb8] sm:$0x3]
      %v3519 = vrot.slane %v3471, 1
      %v3520 = vrot.slane %v3472, 1
      %v3521 = vsel %vm666, %v3519, %v3520
      %v3522 = vrot.slane %v3473, 1
      %v3523 = vsel %vm666, %v3520, %v3522
      %v3524 = vrot.slane %v3474, 1
      %v3525 = vrot.slane %v3475, 1
      %v3526 = vsel %vm666, %v3524, %v3525
      %v3527 = vrot.slane %v3476, 1
      %v3528 = vsel %vm666, %v3525, %v3527
      %v3529 = vrot.slane %v3477, 1
      %v3530 = vrot.slane %v3478, 1
      %v3531 = vsel %vm666, %v3529, %v3530
      %v3532 = vrot.slane %v3479, 1
      %v3533 = vsel %vm666, %v3530, %v3532
      %v3534 = vrot.slane %v3480, 1
      %v3535 = vrot.slane %v3481, 1
      %v3536 = vsel %vm666, %v3534, %v3535
      %v3537 = vrot.slane %v3482, 1
      %v3538 = vsel %vm666, %v3535, %v3537
      %v3539 = vrot.slane %v3483, 1
      %v3540 = vrot.slane %v3484, 1
      %v3541 = vsel %vm666, %v3539, %v3540
      %v3542 = vrot.slane %v3485, 1
      %v3543 = vsel %vm666, %v3540, %v3542
      %v3544 = vrot.slane %v3486, 1
      %v3545 = vrot.slane %v3487, 1
      %v3546 = vsel %vm666, %v3544, %v3545
      %v3547 = vrot.slane %v3488, 1
      %v3548 = vsel %vm666, %v3545, %v3547
      %v3549 = vrot.slane %v3489, 1
      %v3550 = vrot.slane %v3490, 1
      %v3551 = vsel %vm666, %v3549, %v3550
      %v3552 = vrot.slane %v3491, 1
      %v3553 = vsel %vm666, %v3550, %v3552
      %v3554 = vrot.slane %v3492, 1
      %v3555 = vrot.slane %v3493, 1
      %v3556 = vsel %vm666, %v3554, %v3555
      %v3557 = vrot.slane %v3494, 1
      %v3558 = vsel %vm666, %v3555, %v3557
      %v3575 = vrot.slane %v3471, 2
      %v3576 = vrot.slane %v3472, 2
      %v3577 = vsel %vm755, %v3575, %v3576
      %v3578 = vrot.slane %v3473, 2
      %v3579 = vsel %vm755, %v3576, %v3578
      %v3580 = vrot.slane %v3474, 2
      %v3581 = vrot.slane %v3475, 2
      %v3582 = vsel %vm755, %v3580, %v3581
      %v3583 = vrot.slane %v3476, 2
      %v3584 = vsel %vm755, %v3581, %v3583
      %v3585 = vrot.slane %v3477, 2
      %v3586 = vrot.slane %v3478, 2
      %v3587 = vsel %vm755, %v3585, %v3586
      %v3588 = vrot.slane %v3479, 2
      %v3589 = vsel %vm755, %v3586, %v3588
      %v3590 = vrot.slane %v3480, 2
      %v3591 = vrot.slane %v3481, 2
      %v3592 = vsel %vm755, %v3590, %v3591
      %v3593 = vrot.slane %v3482, 2
      %v3594 = vsel %vm755, %v3591, %v3593
      %v3595 = vrot.slane %v3483, 2
      %v3596 = vrot.slane %v3484, 2
      %v3597 = vsel %vm755, %v3595, %v3596
      %v3598 = vrot.slane %v3485, 2
      %v3599 = vsel %vm755, %v3596, %v3598
      %v3600 = vrot.slane %v3486, 2
      %v3601 = vrot.slane %v3487, 2
      %v3602 = vsel %vm755, %v3600, %v3601
      %v3603 = vrot.slane %v3488, 2
      %v3604 = vsel %vm755, %v3601, %v3603
      %v3605 = vrot.slane %v3489, 2
      %v3606 = vrot.slane %v3490, 2
      %v3607 = vsel %vm755, %v3605, %v3606
      %v3608 = vrot.slane %v3491, 2
      %v3609 = vsel %vm755, %v3606, %v3608
      %v3610 = vrot.slane %v3492, 2
      %v3611 = vrot.slane %v3493, 2
      %v3612 = vsel %vm755, %v3610, %v3611
      %v3613 = vrot.slane %v3494, 2
      %v3614 = vsel %vm755, %v3611, %v3613
      %v3631 = vpack.c.bf16 %v3472, %v3471
      %v3632 = vpack.c.bf16 %v3523, %v3521
      %v3633 = vpack.c.bf16 %v3579, %v3577
      %v3634 = vpack.c.bf16 %v3475, %v3474
      %v3635 = vpack.c.bf16 %v3528, %v3526
      %v3636 = vpack.c.bf16 %v3584, %v3582
      %v3637 = vpack.c.bf16 %v3478, %v3477
      %v3638 = vpack.c.bf16 %v3533, %v3531
      %v3639 = vpack.c.bf16 %v3589, %v3587
      %v3640 = vpack.c.bf16 %v3481, %v3480
      %v3641 = vpack.c.bf16 %v3538, %v3536
      %v3642 = vpack.c.bf16 %v3594, %v3592
      %v3643 = vpack.c.bf16 %v3484, %v3483
      %v3644 = vpack.c.bf16 %v3543, %v3541
      %v3645 = vpack.c.bf16 %v3599, %v3597
      %v3646 = vpack.c.bf16 %v3487, %v3486
      %v3647 = vpack.c.bf16 %v3548, %v3546
      %v3648 = vpack.c.bf16 %v3604, %v3602
      %v3649 = vpack.c.bf16 %v3490, %v3489
      %v3650 = vpack.c.bf16 %v3553, %v3551
      %v3651 = vpack.c.bf16 %v3609, %v3607
      %v3652 = vpack.c.bf16 %v3493, %v3492
      %v3653 = vpack.c.bf16 %v3558, %v3556
      %v3654 = vpack.c.bf16 %v3614, %v3612
      %v3655 = vld [vmem:[%s3438] sm:$0xff]
      %v3656 = vld [vmem:[%s3438 + $0x8] sm:$0xff]
      %v3657 = vld [vmem:[%s3438 + $0x10] sm:$0x3]
      %v3658 = vld [vmem:[%s3438 + $0x18] sm:$0xff]
      %v3659 = vld [vmem:[%s3438 + $0x20] sm:$0xff]
      %v3660 = vld [vmem:[%s3438 + $0x28] sm:$0x3]
      %v3661 = vld [vmem:[%s3438 + $0x30] sm:$0xff]
      %v3662 = vld [vmem:[%s3438 + $0x38] sm:$0xff]
      %v3663 = vld [vmem:[%s3438 + $0x40] sm:$0x3]
      %v3664 = vld [vmem:[%s3438 + $0x48] sm:$0xff]
      %v3665 = vld [vmem:[%s3438 + $0x50] sm:$0xff]
      %v3666 = vld [vmem:[%s3438 + $0x58] sm:$0x3]
      %v3667 = vld [vmem:[%s3438 + $0x60] sm:$0xff]
      %v3668 = vld [vmem:[%s3438 + $0x68] sm:$0xff]
      %v3669 = vld [vmem:[%s3438 + $0x70] sm:$0x3]
      %v3670 = vld [vmem:[%s3438 + $0x78] sm:$0xff]
      %v3671 = vld [vmem:[%s3438 + $0x80] sm:$0xff]
      %v3672 = vld [vmem:[%s3438 + $0x88] sm:$0x3]
      %v3673 = vld [vmem:[%s3438 + $0x90] sm:$0xff]
      %v3674 = vld [vmem:[%s3438 + $0x98] sm:$0xff]
      %v3675 = vld [vmem:[%s3438 + $0xa0] sm:$0x3]
      %v3676 = vld [vmem:[%s3438 + $0xa8] sm:$0xff]
      %v3677 = vld [vmem:[%s3438 + $0xb0] sm:$0xff]
      %v3678 = vld [vmem:[%s3438 + $0xb8] sm:$0x3]
      %v3703 = vrot.slane %v3655, 1
      %v3704 = vrot.slane %v3656, 1
      %v3705 = vsel %vm666, %v3703, %v3704
      %v3706 = vrot.slane %v3657, 1
      %v3707 = vsel %vm666, %v3704, %v3706
      %v3708 = vrot.slane %v3658, 1
      %v3709 = vrot.slane %v3659, 1
      %v3710 = vsel %vm666, %v3708, %v3709
      %v3711 = vrot.slane %v3660, 1
      %v3712 = vsel %vm666, %v3709, %v3711
      %v3713 = vrot.slane %v3661, 1
      %v3714 = vrot.slane %v3662, 1
      %v3715 = vsel %vm666, %v3713, %v3714
      %v3716 = vrot.slane %v3663, 1
      %v3717 = vsel %vm666, %v3714, %v3716
      %v3718 = vrot.slane %v3664, 1
      %v3719 = vrot.slane %v3665, 1
      %v3720 = vsel %vm666, %v3718, %v3719
      %v3721 = vrot.slane %v3666, 1
      %v3722 = vsel %vm666, %v3719, %v3721
      %v3723 = vrot.slane %v3667, 1
      %v3724 = vrot.slane %v3668, 1
      %v3725 = vsel %vm666, %v3723, %v3724
      %v3726 = vrot.slane %v3669, 1
      %v3727 = vsel %vm666, %v3724, %v3726
      %v3728 = vrot.slane %v3670, 1
      %v3729 = vrot.slane %v3671, 1
      %v3730 = vsel %vm666, %v3728, %v3729
      %v3731 = vrot.slane %v3672, 1
      %v3732 = vsel %vm666, %v3729, %v3731
      %v3733 = vrot.slane %v3673, 1
      %v3734 = vrot.slane %v3674, 1
      %v3735 = vsel %vm666, %v3733, %v3734
      %v3736 = vrot.slane %v3675, 1
      %v3737 = vsel %vm666, %v3734, %v3736
      %v3738 = vrot.slane %v3676, 1
      %v3739 = vrot.slane %v3677, 1
      %v3740 = vsel %vm666, %v3738, %v3739
      %v3741 = vrot.slane %v3678, 1
      %v3742 = vsel %vm666, %v3739, %v3741
      %v3759 = vrot.slane %v3655, 2
      %v3760 = vrot.slane %v3656, 2
      %v3761 = vsel %vm755, %v3759, %v3760
      %v3762 = vrot.slane %v3657, 2
      %v3763 = vsel %vm755, %v3760, %v3762
      %v3764 = vrot.slane %v3658, 2
      %v3765 = vrot.slane %v3659, 2
      %v3766 = vsel %vm755, %v3764, %v3765
      %v3767 = vrot.slane %v3660, 2
      %v3768 = vsel %vm755, %v3765, %v3767
      %v3769 = vrot.slane %v3661, 2
      %v3770 = vrot.slane %v3662, 2
      %v3771 = vsel %vm755, %v3769, %v3770
      %v3772 = vrot.slane %v3663, 2
      %v3773 = vsel %vm755, %v3770, %v3772
      %v3774 = vrot.slane %v3664, 2
      %v3775 = vrot.slane %v3665, 2
      %v3776 = vsel %vm755, %v3774, %v3775
      %v3777 = vrot.slane %v3666, 2
      %v3778 = vsel %vm755, %v3775, %v3777
      %v3779 = vrot.slane %v3667, 2
      %v3780 = vrot.slane %v3668, 2
      %v3781 = vsel %vm755, %v3779, %v3780
      %v3782 = vrot.slane %v3669, 2
      %v3783 = vsel %vm755, %v3780, %v3782
      %v3784 = vrot.slane %v3670, 2
      %v3785 = vrot.slane %v3671, 2
      %v3786 = vsel %vm755, %v3784, %v3785
      %v3787 = vrot.slane %v3672, 2
      %v3788 = vsel %vm755, %v3785, %v3787
      %v3789 = vrot.slane %v3673, 2
      %v3790 = vrot.slane %v3674, 2
      %v3791 = vsel %vm755, %v3789, %v3790
      %v3792 = vrot.slane %v3675, 2
      %v3793 = vsel %vm755, %v3790, %v3792
      %v3794 = vrot.slane %v3676, 2
      %v3795 = vrot.slane %v3677, 2
      %v3796 = vsel %vm755, %v3794, %v3795
      %v3797 = vrot.slane %v3678, 2
      %v3798 = vsel %vm755, %v3795, %v3797
      %v3815 = vpack.c.bf16 %v3656, %v3655
      %v3816 = vpack.c.bf16 %v3707, %v3705
      %v3817 = vpack.c.bf16 %v3763, %v3761
      %v3818 = vpack.c.bf16 %v3659, %v3658
      %v3819 = vpack.c.bf16 %v3712, %v3710
      %v3820 = vpack.c.bf16 %v3768, %v3766
      %v3821 = vpack.c.bf16 %v3662, %v3661
      %v3822 = vpack.c.bf16 %v3717, %v3715
      %v3823 = vpack.c.bf16 %v3773, %v3771
      %v3824 = vpack.c.bf16 %v3665, %v3664
      %v3825 = vpack.c.bf16 %v3722, %v3720
      %v3826 = vpack.c.bf16 %v3778, %v3776
      %v3827 = vpack.c.bf16 %v3668, %v3667
      %v3828 = vpack.c.bf16 %v3727, %v3725
      %v3829 = vpack.c.bf16 %v3783, %v3781
      %v3830 = vpack.c.bf16 %v3671, %v3670
      %v3831 = vpack.c.bf16 %v3732, %v3730
      %v3832 = vpack.c.bf16 %v3788, %v3786
      %v3833 = vpack.c.bf16 %v3674, %v3673
      %v3834 = vpack.c.bf16 %v3737, %v3735
      %v3835 = vpack.c.bf16 %v3793, %v3791
      %v3836 = vpack.c.bf16 %v3677, %v3676
      %v3837 = vpack.c.bf16 %v3742, %v3740
      %v3838 = vpack.c.bf16 %v3798, %v3796
      %v3887 = vunpack.c.l.b16 %v516
      %v3888 = vunpack.c.l.b16 %v517
      %v3889 = vunpack.c.l.b16 %v518
      %v3890 = vunpack.c.l.b16 %v519
      %v3891 = vunpack.c.l.b16 %v520
      %v3892 = vunpack.c.l.b16 %v521
      %v3893 = vunpack.c.l.b16 %v522
      %v3894 = vunpack.c.l.b16 %v523
      %v3895 = vunpack.c.l.b16 %v524
      %v3896 = vunpack.c.l.b16 %v525
      %v3897 = vunpack.c.l.b16 %v526
      %v3898 = vunpack.c.l.b16 %v527
      %v3899 = vunpack.c.l.b16 %v528
      %v3900 = vunpack.c.l.b16 %v529
      %v3901 = vunpack.c.l.b16 %v530
      %v3902 = vunpack.c.l.b16 %v531
      %v3903 = vunpack.c.l.b16 %v532
      %v3904 = vunpack.c.l.b16 %v533
      %v3905 = vunpack.c.l.b16 %v534
      %v3906 = vunpack.c.l.b16 %v535
      %v3907 = vunpack.c.l.b16 %v536
      %v3908 = vunpack.c.l.b16 %v537
      %v3909 = vunpack.c.l.b16 %v538
      %v3910 = vunpack.c.l.b16 %v539
      %v3911 = vunpack.c.l.b16 %v540
      %v3912 = vunpack.c.l.b16 %v541
      %v3913 = vunpack.c.l.b16 %v542
      %v3914 = vunpack.c.l.b16 %v543
      %v3915 = vunpack.c.l.b16 %v544
      %v3916 = vunpack.c.l.b16 %v545
      %v3917 = vunpack.c.l.b16 %v546
      %v3918 = vunpack.c.l.b16 %v547
      %v3919 = vunpack.c.l.b16 %v548
      %v3920 = vunpack.c.l.b16 %v549
      %v3921 = vunpack.c.l.b16 %v550
      %v3922 = vunpack.c.l.b16 %v551
      %v3923 = vunpack.c.l.b16 %v552
      %v3924 = vunpack.c.l.b16 %v553
      %v3925 = vunpack.c.l.b16 %v554
      %v3926 = vunpack.c.l.b16 %v555
      %v3927 = vunpack.c.l.b16 %v556
      %v3928 = vunpack.c.l.b16 %v557
      %v3929 = vunpack.c.l.b16 %v558
      %v3930 = vunpack.c.l.b16 %v559
      %v3931 = vunpack.c.l.b16 %v560
      %v3932 = vunpack.c.l.b16 %v561
      %v3933 = vunpack.c.l.b16 %v562
      %v3934 = vunpack.c.l.b16 %v563
      %v3935 = vpack.c.b16 %v3888, %v3887
      %v3936 = vpack.c.b16 %v3890, %v3889
      %v3937 = vpack.c.b16 %v3892, %v3891
      %v3938 = vpack.c.b16 %v3894, %v3893
      %v3939 = vpack.c.b16 %v3896, %v3895
      %v3940 = vpack.c.b16 %v3898, %v3897
      %v3941 = vpack.c.b16 %v3900, %v3899
      %v3942 = vpack.c.b16 %v3902, %v3901
      %v3943 = vpack.c.b16 %v3904, %v3903
      %v3944 = vpack.c.b16 %v3906, %v3905
      %v3945 = vpack.c.b16 %v3908, %v3907
      %v3946 = vpack.c.b16 %v3910, %v3909
      %v3947 = vpack.c.b16 %v3912, %v3911
      %v3948 = vpack.c.b16 %v3914, %v3913
      %v3949 = vpack.c.b16 %v3916, %v3915
      %v3950 = vpack.c.b16 %v3918, %v3917
      %v3951 = vpack.c.b16 %v3920, %v3919
      %v3952 = vpack.c.b16 %v3922, %v3921
      %v3953 = vpack.c.b16 %v3924, %v3923
      %v3954 = vpack.c.b16 %v3926, %v3925
      %v3955 = vpack.c.b16 %v3928, %v3927
      %v3956 = vpack.c.b16 %v3930, %v3929
      %v3957 = vpack.c.b16 %v3932, %v3931
      %v3958 = vpack.c.b16 %v3934, %v3933
      %3983 = vmatpush.bf16.msra.mxu0 %v3942
      %3984 = vmatpush.bf16.msra.mxu0 %v3941
      %3985 = vmatpush.bf16.msra.mxu0 %v3940
      %3986 = vmatpush.bf16.msra.mxu0 %v3939
      %3987 = vmatpush.bf16.msra.mxu0 %v3938
      %3988 = vmatpush.bf16.msra.mxu0 %v3937
      %3989 = vmatpush.bf16.msra.mxu0 %v3936
      %3990 = vmatpush.bf16.msra.mxu0 %v3935
      %3991 = vmatmul.bf16.gmra.mxu0 %v3815
      %v3992 = vpop.f32.mrf.mxu0
      %v3993 = vadd.f32 0.0, %v3992
      %v3994 = vpop.f32.mrf.mxu0
      %v3995 = vadd.f32 0.0, %v3994
      %3996 = vmatmul.bf16.gmra.mxu0 %v3818
      %v3997 = vpop.f32.mrf.mxu0
      %v3998 = vadd.f32 0.0, %v3997
      %v3999 = vpop.f32.mrf.mxu0
      %v4000 = vadd.f32 0.0, %v3999
      %4001 = vmatmul.bf16.gmra.mxu0 %v3821
      %v4002 = vpop.f32.mrf.mxu0
      %v4003 = vadd.f32 0.0, %v4002
      %v4004 = vpop.f32.mrf.mxu0
      %v4005 = vadd.f32 0.0, %v4004
      %4006 = vmatmul.bf16.gmra.mxu0 %v3824
      %v4007 = vpop.f32.mrf.mxu0
      %v4008 = vadd.f32 0.0, %v4007
      %v4009 = vpop.f32.mrf.mxu0
      %v4010 = vadd.f32 0.0, %v4009
      %4011 = vmatmul.bf16.gmra.mxu0 %v3827
      %v4012 = vpop.f32.mrf.mxu0
      %v4013 = vadd.f32 0.0, %v4012
      %v4014 = vpop.f32.mrf.mxu0
      %v4015 = vadd.f32 0.0, %v4014
      %4016 = vmatmul.bf16.gmra.mxu0 %v3830
      %v4017 = vpop.f32.mrf.mxu0
      %v4018 = vadd.f32 0.0, %v4017
      %v4019 = vpop.f32.mrf.mxu0
      %v4020 = vadd.f32 0.0, %v4019
      %4021 = vmatmul.bf16.gmra.mxu0 %v3833
      %v4022 = vpop.f32.mrf.mxu0
      %v4023 = vadd.f32 0.0, %v4022
      %v4024 = vpop.f32.mrf.mxu0
      %v4025 = vadd.f32 0.0, %v4024
      %4026 = vmatmul.bf16.gmra.mxu0 %v3836
      %v4027 = vpop.f32.mrf.mxu0
      %v4028 = vadd.f32 0.0, %v4027
      %v4029 = vpop.f32.mrf.mxu0
      %v4030 = vadd.f32 0.0, %v4029
      %4031 = vdwg.mxu0
      %4032 = vmatpush.bf16.msra.mxu0 %v3950
      %4033 = vmatpush.bf16.msra.mxu0 %v3949
      %4034 = vmatpush.bf16.msra.mxu0 %v3948
      %4035 = vmatpush.bf16.msra.mxu0 %v3947
      %4036 = vmatpush.bf16.msra.mxu0 %v3946
      %4037 = vmatpush.bf16.msra.mxu0 %v3945
      %4038 = vmatpush.bf16.msra.mxu0 %v3944
      %4039 = vmatpush.bf16.msra.mxu0 %v3943
      %4040 = vmatmul.bf16.gmra.mxu0 %v3816
      %v4041 = vpop.f32.mrf.mxu0
      %v4042 = vadd.f32 %v3993, %v4041
      %v4043 = vpop.f32.mrf.mxu0
      %v4044 = vadd.f32 %v3995, %v4043
      %4045 = vmatmul.bf16.gmra.mxu0 %v3819
      %v4046 = vpop.f32.mrf.mxu0
      %v4047 = vadd.f32 %v3998, %v4046
      %v4048 = vpop.f32.mrf.mxu0
      %v4049 = vadd.f32 %v4000, %v4048
      %4050 = vmatmul.bf16.gmra.mxu0 %v3822
      %v4051 = vpop.f32.mrf.mxu0
      %v4052 = vadd.f32 %v4003, %v4051
      %v4053 = vpop.f32.mrf.mxu0
      %v4054 = vadd.f32 %v4005, %v4053
      %4055 = vmatmul.bf16.gmra.mxu0 %v3825
      %v4056 = vpop.f32.mrf.mxu0
      %v4057 = vadd.f32 %v4008, %v4056
      %v4058 = vpop.f32.mrf.mxu0
      %v4059 = vadd.f32 %v4010, %v4058
      %4060 = vmatmul.bf16.gmra.mxu0 %v3828
      %v4061 = vpop.f32.mrf.mxu0
      %v4062 = vadd.f32 %v4013, %v4061
      %v4063 = vpop.f32.mrf.mxu0
      %v4064 = vadd.f32 %v4015, %v4063
      %4065 = vmatmul.bf16.gmra.mxu0 %v3831
      %v4066 = vpop.f32.mrf.mxu0
      %v4067 = vadd.f32 %v4018, %v4066
      %v4068 = vpop.f32.mrf.mxu0
      %v4069 = vadd.f32 %v4020, %v4068
      %4070 = vmatmul.bf16.gmra.mxu0 %v3834
      %v4071 = vpop.f32.mrf.mxu0
      %v4072 = vadd.f32 %v4023, %v4071
      %v4073 = vpop.f32.mrf.mxu0
      %v4074 = vadd.f32 %v4025, %v4073
      %4075 = vmatmul.bf16.gmra.mxu0 %v3837
      %v4076 = vpop.f32.mrf.mxu0
      %v4077 = vadd.f32 %v4028, %v4076
      %v4078 = vpop.f32.mrf.mxu0
      %v4079 = vadd.f32 %v4030, %v4078
      %4080 = vdwg.mxu0
      %4081 = vmatpush.bf16.msra.mxu0 %v3958
      %4082 = vmatpush.bf16.msra.mxu0 %v3957
      %4083 = vmatpush.bf16.msra.mxu0 %v3956
      %4084 = vmatpush.bf16.msra.mxu0 %v3955
      %4085 = vmatpush.bf16.msra.mxu0 %v3954
      %4086 = vmatpush.bf16.msra.mxu0 %v3953
      %4087 = vmatpush.bf16.msra.mxu0 %v3952
      %4088 = vmatpush.bf16.msra.mxu0 %v3951
      %4089 = vmatmul.bf16.gmra.mxu0 %v3817
      %v4090 = vpop.f32.mrf.mxu0
      %v4091 = vadd.f32 %v4042, %v4090
      %v4092 = vpop.f32.mrf.mxu0
      %v4093 = vadd.f32 %v4044, %v4092
      %4094 = vmatmul.bf16.gmra.mxu0 %v3820
      %v4095 = vpop.f32.mrf.mxu0
      %v4096 = vadd.f32 %v4047, %v4095
      %v4097 = vpop.f32.mrf.mxu0
      %v4098 = vadd.f32 %v4049, %v4097
      %4099 = vmatmul.bf16.gmra.mxu0 %v3823
      %v4100 = vpop.f32.mrf.mxu0
      %v4101 = vadd.f32 %v4052, %v4100
      %v4102 = vpop.f32.mrf.mxu0
      %v4103 = vadd.f32 %v4054, %v4102
      %4104 = vmatmul.bf16.gmra.mxu0 %v3826
      %v4105 = vpop.f32.mrf.mxu0
      %v4106 = vadd.f32 %v4057, %v4105
      %v4107 = vpop.f32.mrf.mxu0
      %v4108 = vadd.f32 %v4059, %v4107
      %4109 = vmatmul.bf16.gmra.mxu0 %v3829
      %v4110 = vpop.f32.mrf.mxu0
      %v4111 = vadd.f32 %v4062, %v4110
      %v4112 = vpop.f32.mrf.mxu0
      %v4113 = vadd.f32 %v4064, %v4112
      %4114 = vmatmul.bf16.gmra.mxu0 %v3832
      %v4115 = vpop.f32.mrf.mxu0
      %v4116 = vadd.f32 %v4067, %v4115
      %v4117 = vpop.f32.mrf.mxu0
      %v4118 = vadd.f32 %v4069, %v4117
      %4119 = vmatmul.bf16.gmra.mxu0 %v3835
      %v4120 = vpop.f32.mrf.mxu0
      %v4121 = vadd.f32 %v4072, %v4120
      %v4122 = vpop.f32.mrf.mxu0
      %v4123 = vadd.f32 %v4074, %v4122
      %4124 = vmatmul.bf16.gmra.mxu0 %v3838
      %v4125 = vpop.f32.mrf.mxu0
      %v4126 = vadd.f32 %v4077, %v4125
      %v4127 = vpop.f32.mrf.mxu0
      %v4128 = vadd.f32 %v4079, %v4127
      %4129 = vdwg.mxu0
      %v4178 = vunpack.c.l.b16 %v468
      %v4179 = vunpack.c.l.b16 %v469
      %v4180 = vunpack.c.l.b16 %v470
      %v4181 = vunpack.c.l.b16 %v471
      %v4182 = vunpack.c.l.b16 %v472
      %v4183 = vunpack.c.l.b16 %v473
      %v4184 = vunpack.c.l.b16 %v474
      %v4185 = vunpack.c.l.b16 %v475
      %v4186 = vunpack.c.l.b16 %v476
      %v4187 = vunpack.c.l.b16 %v477
      %v4188 = vunpack.c.l.b16 %v478
      %v4189 = vunpack.c.l.b16 %v479
      %v4190 = vunpack.c.l.b16 %v480
      %v4191 = vunpack.c.l.b16 %v481
      %v4192 = vunpack.c.l.b16 %v482
      %v4193 = vunpack.c.l.b16 %v483
      %v4194 = vunpack.c.l.b16 %v484
      %v4195 = vunpack.c.l.b16 %v485
      %v4196 = vunpack.c.l.b16 %v486
      %v4197 = vunpack.c.l.b16 %v487
      %v4198 = vunpack.c.l.b16 %v488
      %v4199 = vunpack.c.l.b16 %v489
      %v4200 = vunpack.c.l.b16 %v490
      %v4201 = vunpack.c.l.b16 %v491
      %v4202 = vunpack.c.l.b16 %v492
      %v4203 = vunpack.c.l.b16 %v493
      %v4204 = vunpack.c.l.b16 %v494
      %v4205 = vunpack.c.l.b16 %v495
      %v4206 = vunpack.c.l.b16 %v496
      %v4207 = vunpack.c.l.b16 %v497
      %v4208 = vunpack.c.l.b16 %v498
      %v4209 = vunpack.c.l.b16 %v499
      %v4210 = vunpack.c.l.b16 %v500
      %v4211 = vunpack.c.l.b16 %v501
      %v4212 = vunpack.c.l.b16 %v502
      %v4213 = vunpack.c.l.b16 %v503
      %v4214 = vunpack.c.l.b16 %v504
      %v4215 = vunpack.c.l.b16 %v505
      %v4216 = vunpack.c.l.b16 %v506
      %v4217 = vunpack.c.l.b16 %v507
      %v4218 = vunpack.c.l.b16 %v508
      %v4219 = vunpack.c.l.b16 %v509
      %v4220 = vunpack.c.l.b16 %v510
      %v4221 = vunpack.c.l.b16 %v511
      %v4222 = vunpack.c.l.b16 %v512
      %v4223 = vunpack.c.l.b16 %v513
      %v4224 = vunpack.c.l.b16 %v514
      %v4225 = vunpack.c.l.b16 %v515
      %v4226 = vpack.c.b16 %v4179, %v4178
      %v4227 = vpack.c.b16 %v4181, %v4180
      %v4228 = vpack.c.b16 %v4183, %v4182
      %v4229 = vpack.c.b16 %v4185, %v4184
      %v4230 = vpack.c.b16 %v4187, %v4186
      %v4231 = vpack.c.b16 %v4189, %v4188
      %v4232 = vpack.c.b16 %v4191, %v4190
      %v4233 = vpack.c.b16 %v4193, %v4192
      %v4234 = vpack.c.b16 %v4195, %v4194
      %v4235 = vpack.c.b16 %v4197, %v4196
      %v4236 = vpack.c.b16 %v4199, %v4198
      %v4237 = vpack.c.b16 %v4201, %v4200
      %v4238 = vpack.c.b16 %v4203, %v4202
      %v4239 = vpack.c.b16 %v4205, %v4204
      %v4240 = vpack.c.b16 %v4207, %v4206
      %v4241 = vpack.c.b16 %v4209, %v4208
      %v4242 = vpack.c.b16 %v4211, %v4210
      %v4243 = vpack.c.b16 %v4213, %v4212
      %v4244 = vpack.c.b16 %v4215, %v4214
      %v4245 = vpack.c.b16 %v4217, %v4216
      %v4246 = vpack.c.b16 %v4219, %v4218
      %v4247 = vpack.c.b16 %v4221, %v4220
      %v4248 = vpack.c.b16 %v4223, %v4222
      %v4249 = vpack.c.b16 %v4225, %v4224
      %4274 = vmatpush.bf16.msra.mxu0 %v4233
      %4275 = vmatpush.bf16.msra.mxu0 %v4232
      %4276 = vmatpush.bf16.msra.mxu0 %v4231
      %4277 = vmatpush.bf16.msra.mxu0 %v4230
      %4278 = vmatpush.bf16.msra.mxu0 %v4229
      %4279 = vmatpush.bf16.msra.mxu0 %v4228
      %4280 = vmatpush.bf16.msra.mxu0 %v4227
      %4281 = vmatpush.bf16.msra.mxu0 %v4226
      %4282 = vmatmul.bf16.gmra.mxu0 %v3631
      %v4283 = vpop.f32.mrf.mxu0
      %v4284 = vadd.f32 %v4091, %v4283
      %v4285 = vpop.f32.mrf.mxu0
      %v4286 = vadd.f32 %v4093, %v4285
      %4287 = vmatmul.bf16.gmra.mxu0 %v3634
      %v4288 = vpop.f32.mrf.mxu0
      %v4289 = vadd.f32 %v4096, %v4288
      %v4290 = vpop.f32.mrf.mxu0
      %v4291 = vadd.f32 %v4098, %v4290
      %4292 = vmatmul.bf16.gmra.mxu0 %v3637
      %v4293 = vpop.f32.mrf.mxu0
      %v4294 = vadd.f32 %v4101, %v4293
      %v4295 = vpop.f32.mrf.mxu0
      %v4296 = vadd.f32 %v4103, %v4295
      %4297 = vmatmul.bf16.gmra.mxu0 %v3640
      %v4298 = vpop.f32.mrf.mxu0
      %v4299 = vadd.f32 %v4106, %v4298
      %v4300 = vpop.f32.mrf.mxu0
      %v4301 = vadd.f32 %v4108, %v4300
      %4302 = vmatmul.bf16.gmra.mxu0 %v3643
      %v4303 = vpop.f32.mrf.mxu0
      %v4304 = vadd.f32 %v4111, %v4303
      %v4305 = vpop.f32.mrf.mxu0
      %v4306 = vadd.f32 %v4113, %v4305
      %4307 = vmatmul.bf16.gmra.mxu0 %v3646
      %v4308 = vpop.f32.mrf.mxu0
      %v4309 = vadd.f32 %v4116, %v4308
      %v4310 = vpop.f32.mrf.mxu0
      %v4311 = vadd.f32 %v4118, %v4310
      %4312 = vmatmul.bf16.gmra.mxu0 %v3649
      %v4313 = vpop.f32.mrf.mxu0
      %v4314 = vadd.f32 %v4121, %v4313
      %v4315 = vpop.f32.mrf.mxu0
      %v4316 = vadd.f32 %v4123, %v4315
      %4317 = vmatmul.bf16.gmra.mxu0 %v3652
      %v4318 = vpop.f32.mrf.mxu0
      %v4319 = vadd.f32 %v4126, %v4318
      %v4320 = vpop.f32.mrf.mxu0
      %v4321 = vadd.f32 %v4128, %v4320
      %4322 = vdwg.mxu0
      %4323 = vmatpush.bf16.msra.mxu0 %v4241
      %4324 = vmatpush.bf16.msra.mxu0 %v4240
      %4325 = vmatpush.bf16.msra.mxu0 %v4239
      %4326 = vmatpush.bf16.msra.mxu0 %v4238
      %4327 = vmatpush.bf16.msra.mxu0 %v4237
      %4328 = vmatpush.bf16.msra.mxu0 %v4236
      %4329 = vmatpush.bf16.msra.mxu0 %v4235
      %4330 = vmatpush.bf16.msra.mxu0 %v4234
      %4331 = vmatmul.bf16.gmra.mxu0 %v3632
      %v4332 = vpop.f32.mrf.mxu0
      %v4333 = vadd.f32 %v4284, %v4332
      %v4334 = vpop.f32.mrf.mxu0
      %v4335 = vadd.f32 %v4286, %v4334
      %4336 = vmatmul.bf16.gmra.mxu0 %v3635
      %v4337 = vpop.f32.mrf.mxu0
      %v4338 = vadd.f32 %v4289, %v4337
      %v4339 = vpop.f32.mrf.mxu0
      %v4340 = vadd.f32 %v4291, %v4339
      %4341 = vmatmul.bf16.gmra.mxu0 %v3638
      %v4342 = vpop.f32.mrf.mxu0
      %v4343 = vadd.f32 %v4294, %v4342
      %v4344 = vpop.f32.mrf.mxu0
      %v4345 = vadd.f32 %v4296, %v4344
      %4346 = vmatmul.bf16.gmra.mxu0 %v3641
      %v4347 = vpop.f32.mrf.mxu0
      %v4348 = vadd.f32 %v4299, %v4347
      %v4349 = vpop.f32.mrf.mxu0
      %v4350 = vadd.f32 %v4301, %v4349
      %4351 = vmatmul.bf16.gmra.mxu0 %v3644
      %v4352 = vpop.f32.mrf.mxu0
      %v4353 = vadd.f32 %v4304, %v4352
      %v4354 = vpop.f32.mrf.mxu0
      %v4355 = vadd.f32 %v4306, %v4354
      %4356 = vmatmul.bf16.gmra.mxu0 %v3647
      %v4357 = vpop.f32.mrf.mxu0
      %v4358 = vadd.f32 %v4309, %v4357
      %v4359 = vpop.f32.mrf.mxu0
      %v4360 = vadd.f32 %v4311, %v4359
      %4361 = vmatmul.bf16.gmra.mxu0 %v3650
      %v4362 = vpop.f32.mrf.mxu0
      %v4363 = vadd.f32 %v4314, %v4362
      %v4364 = vpop.f32.mrf.mxu0
      %v4365 = vadd.f32 %v4316, %v4364
      %4366 = vmatmul.bf16.gmra.mxu0 %v3653
      %v4367 = vpop.f32.mrf.mxu0
      %v4368 = vadd.f32 %v4319, %v4367
      %v4369 = vpop.f32.mrf.mxu0
      %v4370 = vadd.f32 %v4321, %v4369
      %4371 = vdwg.mxu0
      %4372 = vmatpush.bf16.msra.mxu0 %v4249
      %4373 = vmatpush.bf16.msra.mxu0 %v4248
      %4374 = vmatpush.bf16.msra.mxu0 %v4247
      %4375 = vmatpush.bf16.msra.mxu0 %v4246
      %4376 = vmatpush.bf16.msra.mxu0 %v4245
      %4377 = vmatpush.bf16.msra.mxu0 %v4244
      %4378 = vmatpush.bf16.msra.mxu0 %v4243
      %4379 = vmatpush.bf16.msra.mxu0 %v4242
      %4380 = vmatmul.bf16.gmra.mxu0 %v3633
      %v4381 = vpop.f32.mrf.mxu0
      %v4382 = vadd.f32 %v4333, %v4381
      %v4383 = vpop.f32.mrf.mxu0
      %v4384 = vadd.f32 %v4335, %v4383
      %4385 = vmatmul.bf16.gmra.mxu0 %v3636
      %v4386 = vpop.f32.mrf.mxu0
      %v4387 = vadd.f32 %v4338, %v4386
      %v4388 = vpop.f32.mrf.mxu0
      %v4389 = vadd.f32 %v4340, %v4388
      %4390 = vmatmul.bf16.gmra.mxu0 %v3639
      %v4391 = vpop.f32.mrf.mxu0
      %v4392 = vadd.f32 %v4343, %v4391
      %v4393 = vpop.f32.mrf.mxu0
      %v4394 = vadd.f32 %v4345, %v4393
      %4395 = vmatmul.bf16.gmra.mxu0 %v3642
      %v4396 = vpop.f32.mrf.mxu0
      %v4397 = vadd.f32 %v4348, %v4396
      %v4398 = vpop.f32.mrf.mxu0
      %v4399 = vadd.f32 %v4350, %v4398
      %4400 = vmatmul.bf16.gmra.mxu0 %v3645
      %v4401 = vpop.f32.mrf.mxu0
      %v4402 = vadd.f32 %v4353, %v4401
      %v4403 = vpop.f32.mrf.mxu0
      %v4404 = vadd.f32 %v4355, %v4403
      %4405 = vmatmul.bf16.gmra.mxu0 %v3648
      %v4406 = vpop.f32.mrf.mxu0
      %v4407 = vadd.f32 %v4358, %v4406
      %v4408 = vpop.f32.mrf.mxu0
      %v4409 = vadd.f32 %v4360, %v4408
      %4410 = vmatmul.bf16.gmra.mxu0 %v3651
      %v4411 = vpop.f32.mrf.mxu0
      %v4412 = vadd.f32 %v4363, %v4411
      %v4413 = vpop.f32.mrf.mxu0
      %v4414 = vadd.f32 %v4365, %v4413
      %4415 = vmatmul.bf16.gmra.mxu0 %v3654
      %v4416 = vpop.f32.mrf.mxu0
      %v4417 = vadd.f32 %v4368, %v4416
      %v4418 = vpop.f32.mrf.mxu0
      %v4419 = vadd.f32 %v4370, %v4418
      %4420 = vdwg.mxu0
      %s4421 = scalar_lea.vmem [#allocation3], 48
      %v4422 = vld [vmem:[%s4421] sm:$0xff]
      %v4423 = vld [vmem:[%s4421 + $0x8] sm:$0xff]
      %v4424 = vld [vmem:[%s4421 + $0x10] sm:$0x3]
      %v4425 = vld [vmem:[%s4421 + $0x18] sm:$0xff]
      %v4426 = vld [vmem:[%s4421 + $0x20] sm:$0xff]
      %v4427 = vld [vmem:[%s4421 + $0x28] sm:$0x3]
      %v4428 = vld [vmem:[%s4421 + $0x30] sm:$0xff]
      %v4429 = vld [vmem:[%s4421 + $0x38] sm:$0xff]
      %v4430 = vld [vmem:[%s4421 + $0x40] sm:$0x3]
      %v4431 = vld [vmem:[%s4421 + $0x48] sm:$0xff]
      %v4432 = vld [vmem:[%s4421 + $0x50] sm:$0xff]
      %v4433 = vld [vmem:[%s4421 + $0x58] sm:$0x3]
      %v4434 = vld [vmem:[%s4421 + $0x60] sm:$0xff]
      %v4435 = vld [vmem:[%s4421 + $0x68] sm:$0xff]
      %v4436 = vld [vmem:[%s4421 + $0x70] sm:$0x3]
      %v4437 = vld [vmem:[%s4421 + $0x78] sm:$0xff]
      %v4438 = vld [vmem:[%s4421 + $0x80] sm:$0xff]
      %v4439 = vld [vmem:[%s4421 + $0x88] sm:$0x3]
      %v4440 = vld [vmem:[%s4421 + $0x90] sm:$0xff]
      %v4441 = vld [vmem:[%s4421 + $0x98] sm:$0xff]
      %v4442 = vld [vmem:[%s4421 + $0xa0] sm:$0x3]
      %v4443 = vld [vmem:[%s4421 + $0xa8] sm:$0xff]
      %v4444 = vld [vmem:[%s4421 + $0xb0] sm:$0xff]
      %v4445 = vld [vmem:[%s4421 + $0xb8] sm:$0x3]
      %v4470 = vrot.slane %v4422, 1
      %v4471 = vrot.slane %v4423, 1
      %v4472 = vsel %vm666, %v4470, %v4471
      %v4473 = vrot.slane %v4424, 1
      %v4474 = vsel %vm666, %v4471, %v4473
      %v4475 = vrot.slane %v4425, 1
      %v4476 = vrot.slane %v4426, 1
      %v4477 = vsel %vm666, %v4475, %v4476
      %v4478 = vrot.slane %v4427, 1
      %v4479 = vsel %vm666, %v4476, %v4478
      %v4480 = vrot.slane %v4428, 1
      %v4481 = vrot.slane %v4429, 1
      %v4482 = vsel %vm666, %v4480, %v4481
      %v4483 = vrot.slane %v4430, 1
      %v4484 = vsel %vm666, %v4481, %v4483
      %v4485 = vrot.slane %v4431, 1
      %v4486 = vrot.slane %v4432, 1
      %v4487 = vsel %vm666, %v4485, %v4486
      %v4488 = vrot.slane %v4433, 1
      %v4489 = vsel %vm666, %v4486, %v4488
      %v4490 = vrot.slane %v4434, 1
      %v4491 = vrot.slane %v4435, 1
      %v4492 = vsel %vm666, %v4490, %v4491
      %v4493 = vrot.slane %v4436, 1
      %v4494 = vsel %vm666, %v4491, %v4493
      %v4495 = vrot.slane %v4437, 1
      %v4496 = vrot.slane %v4438, 1
      %v4497 = vsel %vm666, %v4495, %v4496
      %v4498 = vrot.slane %v4439, 1
      %v4499 = vsel %vm666, %v4496, %v4498
      %v4500 = vrot.slane %v4440, 1
      %v4501 = vrot.slane %v4441, 1
      %v4502 = vsel %vm666, %v4500, %v4501
      %v4503 = vrot.slane %v4442, 1
      %v4504 = vsel %vm666, %v4501, %v4503
      %v4505 = vrot.slane %v4443, 1
      %v4506 = vrot.slane %v4444, 1
      %v4507 = vsel %vm666, %v4505, %v4506
      %v4508 = vrot.slane %v4445, 1
      %v4509 = vsel %vm666, %v4506, %v4508
      %v4526 = vrot.slane %v4422, 2
      %v4527 = vrot.slane %v4423, 2
      %v4528 = vsel %vm755, %v4526, %v4527
      %v4529 = vrot.slane %v4424, 2
      %v4530 = vsel %vm755, %v4527, %v4529
      %v4531 = vrot.slane %v4425, 2
      %v4532 = vrot.slane %v4426, 2
      %v4533 = vsel %vm755, %v4531, %v4532
      %v4534 = vrot.slane %v4427, 2
      %v4535 = vsel %vm755, %v4532, %v4534
      %v4536 = vrot.slane %v4428, 2
      %v4537 = vrot.slane %v4429, 2
      %v4538 = vsel %vm755, %v4536, %v4537
      %v4539 = vrot.slane %v4430, 2
      %v4540 = vsel %vm755, %v4537, %v4539
      %v4541 = vrot.slane %v4431, 2
      %v4542 = vrot.slane %v4432, 2
      %v4543 = vsel %vm755, %v4541, %v4542
      %v4544 = vrot.slane %v4433, 2
      %v4545 = vsel %vm755, %v4542, %v4544
      %v4546 = vrot.slane %v4434, 2
      %v4547 = vrot.slane %v4435, 2
      %v4548 = vsel %vm755, %v4546, %v4547
      %v4549 = vrot.slane %v4436, 2
      %v4550 = vsel %vm755, %v4547, %v4549
      %v4551 = vrot.slane %v4437, 2
      %v4552 = vrot.slane %v4438, 2
      %v4553 = vsel %vm755, %v4551, %v4552
      %v4554 = vrot.slane %v4439, 2
      %v4555 = vsel %vm755, %v4552, %v4554
      %v4556 = vrot.slane %v4440, 2
      %v4557 = vrot.slane %v4441, 2
      %v4558 = vsel %vm755, %v4556, %v4557
      %v4559 = vrot.slane %v4442, 2
      %v4560 = vsel %vm755, %v4557, %v4559
      %v4561 = vrot.slane %v4443, 2
      %v4562 = vrot.slane %v4444, 2
      %v4563 = vsel %vm755, %v4561, %v4562
      %v4564 = vrot.slane %v4445, 2
      %v4565 = vsel %vm755, %v4562, %v4564
      %v4582 = vpack.c.bf16 %v4423, %v4422
      %v4583 = vpack.c.bf16 %v4474, %v4472
      %v4584 = vpack.c.bf16 %v4530, %v4528
      %v4585 = vpack.c.bf16 %v4426, %v4425
      %v4586 = vpack.c.bf16 %v4479, %v4477
      %v4587 = vpack.c.bf16 %v4535, %v4533
      %v4588 = vpack.c.bf16 %v4429, %v4428
      %v4589 = vpack.c.bf16 %v4484, %v4482
      %v4590 = vpack.c.bf16 %v4540, %v4538
      %v4591 = vpack.c.bf16 %v4432, %v4431
      %v4592 = vpack.c.bf16 %v4489, %v4487
      %v4593 = vpack.c.bf16 %v4545, %v4543
      %v4594 = vpack.c.bf16 %v4435, %v4434
      %v4595 = vpack.c.bf16 %v4494, %v4492
      %v4596 = vpack.c.bf16 %v4550, %v4548
      %v4597 = vpack.c.bf16 %v4438, %v4437
      %v4598 = vpack.c.bf16 %v4499, %v4497
      %v4599 = vpack.c.bf16 %v4555, %v4553
      %v4600 = vpack.c.bf16 %v4441, %v4440
      %v4601 = vpack.c.bf16 %v4504, %v4502
      %v4602 = vpack.c.bf16 %v4560, %v4558
      %v4603 = vpack.c.bf16 %v4444, %v4443
      %v4604 = vpack.c.bf16 %v4509, %v4507
      %v4605 = vpack.c.bf16 %v4565, %v4563
      %v4654 = vunpack.c.l.b16 %v564
      %v4655 = vunpack.c.l.b16 %v565
      %v4656 = vunpack.c.l.b16 %v566
      %v4657 = vunpack.c.l.b16 %v567
      %v4658 = vunpack.c.l.b16 %v568
      %v4659 = vunpack.c.l.b16 %v569
      %v4660 = vunpack.c.l.b16 %v570
      %v4661 = vunpack.c.l.b16 %v571
      %v4662 = vunpack.c.l.b16 %v572
      %v4663 = vunpack.c.l.b16 %v573
      %v4664 = vunpack.c.l.b16 %v574
      %v4665 = vunpack.c.l.b16 %v575
      %v4666 = vunpack.c.l.b16 %v576
      %v4667 = vunpack.c.l.b16 %v577
      %v4668 = vunpack.c.l.b16 %v578
      %v4669 = vunpack.c.l.b16 %v579
      %v4670 = vunpack.c.l.b16 %v580
      %v4671 = vunpack.c.l.b16 %v581
      %v4672 = vunpack.c.l.b16 %v582
      %v4673 = vunpack.c.l.b16 %v583
      %v4674 = vunpack.c.l.b16 %v584
      %v4675 = vunpack.c.l.b16 %v585
      %v4676 = vunpack.c.l.b16 %v586
      %v4677 = vunpack.c.l.b16 %v587
      %v4678 = vunpack.c.l.b16 %v588
      %v4679 = vunpack.c.l.b16 %v589
      %v4680 = vunpack.c.l.b16 %v590
      %v4681 = vunpack.c.l.b16 %v591
      %v4682 = vunpack.c.l.b16 %v592
      %v4683 = vunpack.c.l.b16 %v593
      %v4684 = vunpack.c.l.b16 %v594
      %v4685 = vunpack.c.l.b16 %v595
      %v4686 = vunpack.c.l.b16 %v596
      %v4687 = vunpack.c.l.b16 %v597
      %v4688 = vunpack.c.l.b16 %v598
      %v4689 = vunpack.c.l.b16 %v599
      %v4690 = vunpack.c.l.b16 %v600
      %v4691 = vunpack.c.l.b16 %v601
      %v4692 = vunpack.c.l.b16 %v602
      %v4693 = vunpack.c.l.b16 %v603
      %v4694 = vunpack.c.l.b16 %v604
      %v4695 = vunpack.c.l.b16 %v605
      %v4696 = vunpack.c.l.b16 %v606
      %v4697 = vunpack.c.l.b16 %v607
      %v4698 = vunpack.c.l.b16 %v608
      %v4699 = vunpack.c.l.b16 %v609
      %v4700 = vunpack.c.l.b16 %v610
      %v4701 = vunpack.c.l.b16 %v611
      %v4702 = vpack.c.b16 %v4655, %v4654
      %v4703 = vpack.c.b16 %v4657, %v4656
      %v4704 = vpack.c.b16 %v4659, %v4658
      %v4705 = vpack.c.b16 %v4661, %v4660
      %v4706 = vpack.c.b16 %v4663, %v4662
      %v4707 = vpack.c.b16 %v4665, %v4664
      %v4708 = vpack.c.b16 %v4667, %v4666
      %v4709 = vpack.c.b16 %v4669, %v4668
      %v4710 = vpack.c.b16 %v4671, %v4670
      %v4711 = vpack.c.b16 %v4673, %v4672
      %v4712 = vpack.c.b16 %v4675, %v4674
      %v4713 = vpack.c.b16 %v4677, %v4676
      %v4714 = vpack.c.b16 %v4679, %v4678
      %v4715 = vpack.c.b16 %v4681, %v4680
      %v4716 = vpack.c.b16 %v4683, %v4682
      %v4717 = vpack.c.b16 %v4685, %v4684
      %v4718 = vpack.c.b16 %v4687, %v4686
      %v4719 = vpack.c.b16 %v4689, %v4688
      %v4720 = vpack.c.b16 %v4691, %v4690
      %v4721 = vpack.c.b16 %v4693, %v4692
      %v4722 = vpack.c.b16 %v4695, %v4694
      %v4723 = vpack.c.b16 %v4697, %v4696
      %v4724 = vpack.c.b16 %v4699, %v4698
      %v4725 = vpack.c.b16 %v4701, %v4700
      %4750 = vmatpush.bf16.msra.mxu0 %v4709
      %4751 = vmatpush.bf16.msra.mxu0 %v4708
      %4752 = vmatpush.bf16.msra.mxu0 %v4707
      %4753 = vmatpush.bf16.msra.mxu0 %v4706
      %4754 = vmatpush.bf16.msra.mxu0 %v4705
      %4755 = vmatpush.bf16.msra.mxu0 %v4704
      %4756 = vmatpush.bf16.msra.mxu0 %v4703
      %4757 = vmatpush.bf16.msra.mxu0 %v4702
      %4758 = vmatmul.bf16.gmra.mxu0 %v4582
      %v4759 = vpop.f32.mrf.mxu0
      %v4760 = vadd.f32 0.0, %v4759
      %v4761 = vpop.f32.mrf.mxu0
      %v4762 = vadd.f32 0.0, %v4761
      %4763 = vmatmul.bf16.gmra.mxu0 %v4585
      %v4764 = vpop.f32.mrf.mxu0
      %v4765 = vadd.f32 0.0, %v4764
      %v4766 = vpop.f32.mrf.mxu0
      %v4767 = vadd.f32 0.0, %v4766
      %4768 = vmatmul.bf16.gmra.mxu0 %v4588
      %v4769 = vpop.f32.mrf.mxu0
      %v4770 = vadd.f32 0.0, %v4769
      %v4771 = vpop.f32.mrf.mxu0
      %v4772 = vadd.f32 0.0, %v4771
      %4773 = vmatmul.bf16.gmra.mxu0 %v4591
      %v4774 = vpop.f32.mrf.mxu0
      %v4775 = vadd.f32 0.0, %v4774
      %v4776 = vpop.f32.mrf.mxu0
      %v4777 = vadd.f32 0.0, %v4776
      %4778 = vmatmul.bf16.gmra.mxu0 %v4594
      %v4779 = vpop.f32.mrf.mxu0
      %v4780 = vadd.f32 0.0, %v4779
      %v4781 = vpop.f32.mrf.mxu0
      %v4782 = vadd.f32 0.0, %v4781
      %4783 = vmatmul.bf16.gmra.mxu0 %v4597
      %v4784 = vpop.f32.mrf.mxu0
      %v4785 = vadd.f32 0.0, %v4784
      %v4786 = vpop.f32.mrf.mxu0
      %v4787 = vadd.f32 0.0, %v4786
      %4788 = vmatmul.bf16.gmra.mxu0 %v4600
      %v4789 = vpop.f32.mrf.mxu0
      %v4790 = vadd.f32 0.0, %v4789
      %v4791 = vpop.f32.mrf.mxu0
      %v4792 = vadd.f32 0.0, %v4791
      %4793 = vmatmul.bf16.gmra.mxu0 %v4603
      %v4794 = vpop.f32.mrf.mxu0
      %v4795 = vadd.f32 0.0, %v4794
      %v4796 = vpop.f32.mrf.mxu0
      %v4797 = vadd.f32 0.0, %v4796
      %4798 = vdwg.mxu0
      %4799 = vmatpush.bf16.msra.mxu0 %v4717
      %4800 = vmatpush.bf16.msra.mxu0 %v4716
      %4801 = vmatpush.bf16.msra.mxu0 %v4715
      %4802 = vmatpush.bf16.msra.mxu0 %v4714
      %4803 = vmatpush.bf16.msra.mxu0 %v4713
      %4804 = vmatpush.bf16.msra.mxu0 %v4712
      %4805 = vmatpush.bf16.msra.mxu0 %v4711
      %4806 = vmatpush.bf16.msra.mxu0 %v4710
      %4807 = vmatmul.bf16.gmra.mxu0 %v4583
      %v4808 = vpop.f32.mrf.mxu0
      %v4809 = vadd.f32 %v4760, %v4808
      %v4810 = vpop.f32.mrf.mxu0
      %v4811 = vadd.f32 %v4762, %v4810
      %4812 = vmatmul.bf16.gmra.mxu0 %v4586
      %v4813 = vpop.f32.mrf.mxu0
      %v4814 = vadd.f32 %v4765, %v4813
      %v4815 = vpop.f32.mrf.mxu0
      %v4816 = vadd.f32 %v4767, %v4815
      %4817 = vmatmul.bf16.gmra.mxu0 %v4589
      %v4818 = vpop.f32.mrf.mxu0
      %v4819 = vadd.f32 %v4770, %v4818
      %v4820 = vpop.f32.mrf.mxu0
      %v4821 = vadd.f32 %v4772, %v4820
      %4822 = vmatmul.bf16.gmra.mxu0 %v4592
      %v4823 = vpop.f32.mrf.mxu0
      %v4824 = vadd.f32 %v4775, %v4823
      %v4825 = vpop.f32.mrf.mxu0
      %v4826 = vadd.f32 %v4777, %v4825
      %4827 = vmatmul.bf16.gmra.mxu0 %v4595
      %v4828 = vpop.f32.mrf.mxu0
      %v4829 = vadd.f32 %v4780, %v4828
      %v4830 = vpop.f32.mrf.mxu0
      %v4831 = vadd.f32 %v4782, %v4830
      %4832 = vmatmul.bf16.gmra.mxu0 %v4598
      %v4833 = vpop.f32.mrf.mxu0
      %v4834 = vadd.f32 %v4785, %v4833
      %v4835 = vpop.f32.mrf.mxu0
      %v4836 = vadd.f32 %v4787, %v4835
      %4837 = vmatmul.bf16.gmra.mxu0 %v4601
      %v4838 = vpop.f32.mrf.mxu0
      %v4839 = vadd.f32 %v4790, %v4838
      %v4840 = vpop.f32.mrf.mxu0
      %v4841 = vadd.f32 %v4792, %v4840
      %4842 = vmatmul.bf16.gmra.mxu0 %v4604
      %v4843 = vpop.f32.mrf.mxu0
      %v4844 = vadd.f32 %v4795, %v4843
      %v4845 = vpop.f32.mrf.mxu0
      %v4846 = vadd.f32 %v4797, %v4845
      %4847 = vdwg.mxu0
      %4848 = vmatpush.bf16.msra.mxu0 %v4725
      %4849 = vmatpush.bf16.msra.mxu0 %v4724
      %4850 = vmatpush.bf16.msra.mxu0 %v4723
      %4851 = vmatpush.bf16.msra.mxu0 %v4722
      %4852 = vmatpush.bf16.msra.mxu0 %v4721
      %4853 = vmatpush.bf16.msra.mxu0 %v4720
      %4854 = vmatpush.bf16.msra.mxu0 %v4719
      %4855 = vmatpush.bf16.msra.mxu0 %v4718
      %4856 = vmatmul.bf16.gmra.mxu0 %v4584
      %v4857 = vpop.f32.mrf.mxu0
      %v4858 = vadd.f32 %v4809, %v4857
      %v4859 = vpop.f32.mrf.mxu0
      %v4860 = vadd.f32 %v4811, %v4859
      %4861 = vmatmul.bf16.gmra.mxu0 %v4587
      %v4862 = vpop.f32.mrf.mxu0
      %v4863 = vadd.f32 %v4814, %v4862
      %v4864 = vpop.f32.mrf.mxu0
      %v4865 = vadd.f32 %v4816, %v4864
      %4866 = vmatmul.bf16.gmra.mxu0 %v4590
      %v4867 = vpop.f32.mrf.mxu0
      %v4868 = vadd.f32 %v4819, %v4867
      %v4869 = vpop.f32.mrf.mxu0
      %v4870 = vadd.f32 %v4821, %v4869
      %4871 = vmatmul.bf16.gmra.mxu0 %v4593
      %v4872 = vpop.f32.mrf.mxu0
      %v4873 = vadd.f32 %v4824, %v4872
      %v4874 = vpop.f32.mrf.mxu0
      %v4875 = vadd.f32 %v4826, %v4874
      %4876 = vmatmul.bf16.gmra.mxu0 %v4596
      %v4877 = vpop.f32.mrf.mxu0
      %v4878 = vadd.f32 %v4829, %v4877
      %v4879 = vpop.f32.mrf.mxu0
      %v4880 = vadd.f32 %v4831, %v4879
      %4881 = vmatmul.bf16.gmra.mxu0 %v4599
      %v4882 = vpop.f32.mrf.mxu0
      %v4883 = vadd.f32 %v4834, %v4882
      %v4884 = vpop.f32.mrf.mxu0
      %v4885 = vadd.f32 %v4836, %v4884
      %4886 = vmatmul.bf16.gmra.mxu0 %v4602
      %v4887 = vpop.f32.mrf.mxu0
      %v4888 = vadd.f32 %v4839, %v4887
      %v4889 = vpop.f32.mrf.mxu0
      %v4890 = vadd.f32 %v4841, %v4889
      %4891 = vmatmul.bf16.gmra.mxu0 %v4605
      %v4892 = vpop.f32.mrf.mxu0
      %v4893 = vadd.f32 %v4844, %v4892
      %v4894 = vpop.f32.mrf.mxu0
      %v4895 = vadd.f32 %v4846, %v4894
      %4896 = vdwg.mxu0
      %v4897 = vadd.f32 %v4382, %v4858
      %v4898 = vadd.f32 %v4384, %v4860
      %v4899 = vadd.f32 %v4387, %v4863
      %v4900 = vadd.f32 %v4389, %v4865
      %v4901 = vadd.f32 %v4392, %v4868
      %v4902 = vadd.f32 %v4394, %v4870
      %v4903 = vadd.f32 %v4397, %v4873
      %v4904 = vadd.f32 %v4399, %v4875
      %v4905 = vadd.f32 %v4402, %v4878
      %v4906 = vadd.f32 %v4404, %v4880
      %v4907 = vadd.f32 %v4407, %v4883
      %v4908 = vadd.f32 %v4409, %v4885
      %v4909 = vadd.f32 %v4412, %v4888
      %v4910 = vadd.f32 %v4414, %v4890
      %v4911 = vadd.f32 %v4417, %v4893
      %v4912 = vadd.f32 %v4419, %v4895
      %v4913 = vpack.c.bf16 %v308, %v307
      %v4914 = vpack.c.bf16 %v310, %v309
      %v4915 = vpack.c.bf16 %v312, %v311
      %v4916 = vpack.c.bf16 %v314, %v313
      %v4917 = vpack.c.bf16 %v316, %v315
      %v4918 = vpack.c.bf16 %v318, %v317
      %v4919 = vpack.c.bf16 %v320, %v319
      %v4920 = vpack.c.bf16 %v322, %v321
      %v4922 = vsel %vm339, %v4913, 0
      %v4925 = vsel %vm339, %v4914, 0
      %v4928 = vsel %vm339, %v4915, 0
      %v4931 = vsel %vm339, %v4916, 0
      %v4934 = vsel %vm339, %v4917, 0
      %v4937 = vsel %vm339, %v4918, 0
      %v4940 = vsel %vm339, %v4919, 0
      %v4943 = vsel %vm339, %v4920, 0
      %vm4945 = vcmask 1041408
      %v4947 = vsel %vm4945, %v613, 0
      %4949 = vmatpush.bf16.msra.mxu0 0
      %4950 = vmatpush.bf16.msra.mxu0 0
      %4951 = vmatpush.bf16.msra.mxu0 0
      %4952 = vmatpush.bf16.msra.mxu0 0
      %4953 = vmatpush.bf16.msra.mxu0 0
      %4954 = vmatpush.bf16.msra.mxu0 0
      %4955 = vmatpush.bf16.msra.mxu0 0
      %4956 = vmatpush.bf16.msra.mxu0 %v4947
      %4957 = vmatmul.bf16.gmra.mxu0 %v4922
      %v4958 = vpop.f32.mrf.mxu0
      %v4959 = vadd.f32 0.0, %v4958
      %v4960 = vpop.f32.mrf.mxu0
      %v4961 = vadd.f32 0.0, %v4960
      %4962 = vmatmul.bf16.gmra.mxu0 %v4925
      %v4963 = vpop.f32.mrf.mxu0
      %v4964 = vadd.f32 0.0, %v4963
      %v4965 = vpop.f32.mrf.mxu0
      %v4966 = vadd.f32 0.0, %v4965
      %4967 = vmatmul.bf16.gmra.mxu0 %v4928
      %v4968 = vpop.f32.mrf.mxu0
      %v4969 = vadd.f32 0.0, %v4968
      %v4970 = vpop.f32.mrf.mxu0
      %v4971 = vadd.f32 0.0, %v4970
      %4972 = vmatmul.bf16.gmra.mxu0 %v4931
      %v4973 = vpop.f32.mrf.mxu0
      %v4974 = vadd.f32 0.0, %v4973
      %v4975 = vpop.f32.mrf.mxu0
      %v4976 = vadd.f32 0.0, %v4975
      %4977 = vmatmul.bf16.gmra.mxu0 %v4934
      %v4978 = vpop.f32.mrf.mxu0
      %v4979 = vadd.f32 0.0, %v4978
      %v4980 = vpop.f32.mrf.mxu0
      %v4981 = vadd.f32 0.0, %v4980
      %4982 = vmatmul.bf16.gmra.mxu0 %v4937
      %v4983 = vpop.f32.mrf.mxu0
      %v4984 = vadd.f32 0.0, %v4983
      %v4985 = vpop.f32.mrf.mxu0
      %v4986 = vadd.f32 0.0, %v4985
      %4987 = vmatmul.bf16.gmra.mxu0 %v4940
      %v4988 = vpop.f32.mrf.mxu0
      %v4989 = vadd.f32 0.0, %v4988
      %v4990 = vpop.f32.mrf.mxu0
      %v4991 = vadd.f32 0.0, %v4990
      %4992 = vmatmul.bf16.gmra.mxu0 %v4943
      %v4993 = vpop.f32.mrf.mxu0
      %v4994 = vadd.f32 0.0, %v4993
      %v4995 = vpop.f32.mrf.mxu0
      %v4996 = vadd.f32 0.0, %v4995
      %4997 = vdwg.mxu0
      %v4998 = vadd.f32 %v4897, %v4959
      %v4999 = vadd.f32 %v4898, %v4961
      %v5000 = vadd.f32 %v4899, %v4964
      %v5001 = vadd.f32 %v4900, %v4966
      %v5002 = vadd.f32 %v4901, %v4969
      %v5003 = vadd.f32 %v4902, %v4971
      %v5004 = vadd.f32 %v4903, %v4974
      %v5005 = vadd.f32 %v4904, %v4976
      %v5006 = vadd.f32 %v4905, %v4979
      %v5007 = vadd.f32 %v4906, %v4981
      %v5008 = vadd.f32 %v4907, %v4984
      %v5009 = vadd.f32 %v4908, %v4986
      %v5010 = vadd.f32 %v4909, %v4989
      %v5011 = vadd.f32 %v4910, %v4991
      %v5012 = vadd.f32 %v4911, %v4994
      %v5013 = vadd.f32 %v4912, %v4996
      %v5015 = vperm.slane %v612, 0
      %v5017 = vadd.f32 %v4998, %v5015
      %v5018 = vadd.f32 %v4999, %v5015
      %v5019 = vadd.f32 %v5000, %v5015
      %v5020 = vadd.f32 %v5001, %v5015
      %v5021 = vadd.f32 %v5002, %v5015
      %v5022 = vadd.f32 %v5003, %v5015
      %v5023 = vadd.f32 %v5004, %v5015
      %v5024 = vadd.f32 %v5005, %v5015
      %v5025 = vadd.f32 %v5006, %v5015
      %v5026 = vadd.f32 %v5007, %v5015
      %v5027 = vadd.f32 %v5008, %v5015
      %v5028 = vadd.f32 %v5009, %v5015
      %v5029 = vadd.f32 %v5010, %v5015
      %v5030 = vadd.f32 %v5011, %v5015
      %v5031 = vadd.f32 %v5012, %v5015
      %v5032 = vadd.f32 %v5013, %v5015
      %v5033 = vmax.f32 %v5017, 0.0
      %v5034 = vmax.f32 %v5018, 0.0
      %v5035 = vmax.f32 %v5019, 0.0
      %v5036 = vmax.f32 %v5020, 0.0
      %v5037 = vmax.f32 %v5021, 0.0
      %v5038 = vmax.f32 %v5022, 0.0
      %v5039 = vmax.f32 %v5023, 0.0
      %v5040 = vmax.f32 %v5024, 0.0
      %v5041 = vmax.f32 %v5025, 0.0
      %v5042 = vmax.f32 %v5026, 0.0
      %v5043 = vmax.f32 %v5027, 0.0
      %v5044 = vmax.f32 %v5028, 0.0
      %v5045 = vmax.f32 %v5029, 0.0
      %v5046 = vmax.f32 %v5030, 0.0
      %v5047 = vmax.f32 %v5031, 0.0
      %v5048 = vmax.f32 %v5032, 0.0
      %5049 = vst.msk [vmem:[%s385 + $0x1] sm:$0xff] %vm339, %v5033
      %5050 = vst.msk [vmem:[%s385 + $0x9] sm:$0xff] %vm339, %v5034
      %5051 = vst.msk [vmem:[%s385 + $0x19] sm:$0xff] %vm339, %v5035
      %5052 = vst.msk [vmem:[%s385 + $0x21] sm:$0xff] %vm339, %v5036
      %5053 = vst.msk [vmem:[%s385 + $0x31] sm:$0xff] %vm339, %v5037
      %5054 = vst.msk [vmem:[%s385 + $0x39] sm:$0xff] %vm339, %v5038
      %5055 = vst.msk [vmem:[%s385 + $0x49] sm:$0xff] %vm339, %v5039
      %5056 = vst.msk [vmem:[%s385 + $0x51] sm:$0xff] %vm339, %v5040
      %5057 = vst.msk [vmem:[%s385 + $0x61] sm:$0xff] %vm339, %v5041
      %5058 = vst.msk [vmem:[%s385 + $0x69] sm:$0xff] %vm339, %v5042
      %5059 = vst.msk [vmem:[%s385 + $0x79] sm:$0xff] %vm339, %v5043
      %5060 = vst.msk [vmem:[%s385 + $0x81] sm:$0xff] %vm339, %v5044
      %5061 = vst.msk [vmem:[%s385 + $0x91] sm:$0xff] %vm339, %v5045
      %5062 = vst.msk [vmem:[%s385 + $0x99] sm:$0xff] %vm339, %v5046
      %5063 = vst.msk [vmem:[%s385 + $0xa9] sm:$0xff] %vm339, %v5047
      %5064 = vst.msk [vmem:[%s385 + $0xb1] sm:$0xff] %vm339, %v5048
      %s5065 = scalar_lea.vmem [#allocation3], 192
      %v5066 = vld [vmem:[%s5065] sm:$0xff]
      %v5067 = vld [vmem:[%s5065 + $0x8] sm:$0xff]
      %v5068 = vld [vmem:[%s5065 + $0x10] sm:$0x3]
      %v5069 = vld [vmem:[%s5065 + $0x18] sm:$0xff]
      %v5070 = vld [vmem:[%s5065 + $0x20] sm:$0xff]
      %v5071 = vld [vmem:[%s5065 + $0x28] sm:$0x3]
      %v5072 = vld [vmem:[%s5065 + $0x30] sm:$0xff]
      %v5073 = vld [vmem:[%s5065 + $0x38] sm:$0xff]
      %v5074 = vld [vmem:[%s5065 + $0x40] sm:$0x3]
      %v5075 = vld [vmem:[%s5065 + $0x48] sm:$0xff]
      %v5076 = vld [vmem:[%s5065 + $0x50] sm:$0xff]
      %v5077 = vld [vmem:[%s5065 + $0x58] sm:$0x3]
      %v5078 = vld [vmem:[%s5065 + $0x60] sm:$0xff]
      %v5079 = vld [vmem:[%s5065 + $0x68] sm:$0xff]
      %v5080 = vld [vmem:[%s5065 + $0x70] sm:$0x3]
      %v5081 = vld [vmem:[%s5065 + $0x78] sm:$0xff]
      %v5082 = vld [vmem:[%s5065 + $0x80] sm:$0xff]
      %v5083 = vld [vmem:[%s5065 + $0x88] sm:$0x3]
      %v5084 = vld [vmem:[%s5065 + $0x90] sm:$0xff]
      %v5085 = vld [vmem:[%s5065 + $0x98] sm:$0xff]
      %v5086 = vld [vmem:[%s5065 + $0xa0] sm:$0x3]
      %v5087 = vld [vmem:[%s5065 + $0xa8] sm:$0xff]
      %v5088 = vld [vmem:[%s5065 + $0xb0] sm:$0xff]
      %v5089 = vld [vmem:[%s5065 + $0xb8] sm:$0x3]
      %v5114 = vrot.slane %v5066, 1
      %v5115 = vrot.slane %v5067, 1
      %v5116 = vsel %vm666, %v5114, %v5115
      %v5117 = vrot.slane %v5068, 1
      %v5118 = vsel %vm666, %v5115, %v5117
      %v5119 = vrot.slane %v5069, 1
      %v5120 = vrot.slane %v5070, 1
      %v5121 = vsel %vm666, %v5119, %v5120
      %v5122 = vrot.slane %v5071, 1
      %v5123 = vsel %vm666, %v5120, %v5122
      %v5124 = vrot.slane %v5072, 1
      %v5125 = vrot.slane %v5073, 1
      %v5126 = vsel %vm666, %v5124, %v5125
      %v5127 = vrot.slane %v5074, 1
      %v5128 = vsel %vm666, %v5125, %v5127
      %v5129 = vrot.slane %v5075, 1
      %v5130 = vrot.slane %v5076, 1
      %v5131 = vsel %vm666, %v5129, %v5130
      %v5132 = vrot.slane %v5077, 1
      %v5133 = vsel %vm666, %v5130, %v5132
      %v5134 = vrot.slane %v5078, 1
      %v5135 = vrot.slane %v5079, 1
      %v5136 = vsel %vm666, %v5134, %v5135
      %v5137 = vrot.slane %v5080, 1
      %v5138 = vsel %vm666, %v5135, %v5137
      %v5139 = vrot.slane %v5081, 1
      %v5140 = vrot.slane %v5082, 1
      %v5141 = vsel %vm666, %v5139, %v5140
      %v5142 = vrot.slane %v5083, 1
      %v5143 = vsel %vm666, %v5140, %v5142
      %v5144 = vrot.slane %v5084, 1
      %v5145 = vrot.slane %v5085, 1
      %v5146 = vsel %vm666, %v5144, %v5145
      %v5147 = vrot.slane %v5086, 1
      %v5148 = vsel %vm666, %v5145, %v5147
      %v5149 = vrot.slane %v5087, 1
      %v5150 = vrot.slane %v5088, 1
      %v5151 = vsel %vm666, %v5149, %v5150
      %v5152 = vrot.slane %v5089, 1
      %v5153 = vsel %vm666, %v5150, %v5152
      %v5170 = vrot.slane %v5066, 2
      %v5171 = vrot.slane %v5067, 2
      %v5172 = vsel %vm755, %v5170, %v5171
      %v5173 = vrot.slane %v5068, 2
      %v5174 = vsel %vm755, %v5171, %v5173
      %v5175 = vrot.slane %v5069, 2
      %v5176 = vrot.slane %v5070, 2
      %v5177 = vsel %vm755, %v5175, %v5176
      %v5178 = vrot.slane %v5071, 2
      %v5179 = vsel %vm755, %v5176, %v5178
      %v5180 = vrot.slane %v5072, 2
      %v5181 = vrot.slane %v5073, 2
      %v5182 = vsel %vm755, %v5180, %v5181
      %v5183 = vrot.slane %v5074, 2
      %v5184 = vsel %vm755, %v5181, %v5183
      %v5185 = vrot.slane %v5075, 2
      %v5186 = vrot.slane %v5076, 2
      %v5187 = vsel %vm755, %v5185, %v5186
      %v5188 = vrot.slane %v5077, 2
      %v5189 = vsel %vm755, %v5186, %v5188
      %v5190 = vrot.slane %v5078, 2
      %v5191 = vrot.slane %v5079, 2
      %v5192 = vsel %vm755, %v5190, %v5191
      %v5193 = vrot.slane %v5080, 2
      %v5194 = vsel %vm755, %v5191, %v5193
      %v5195 = vrot.slane %v5081, 2
      %v5196 = vrot.slane %v5082, 2
      %v5197 = vsel %vm755, %v5195, %v5196
      %v5198 = vrot.slane %v5083, 2
      %v5199 = vsel %vm755, %v5196, %v5198
      %v5200 = vrot.slane %v5084, 2
      %v5201 = vrot.slane %v5085, 2
      %v5202 = vsel %vm755, %v5200, %v5201
      %v5203 = vrot.slane %v5086, 2
      %v5204 = vsel %vm755, %v5201, %v5203
      %v5205 = vrot.slane %v5087, 2
      %v5206 = vrot.slane %v5088, 2
      %v5207 = vsel %vm755, %v5205, %v5206
      %v5208 = vrot.slane %v5089, 2
      %v5209 = vsel %vm755, %v5206, %v5208
      %v5226 = vpack.c.bf16 %v5067, %v5066
      %v5227 = vpack.c.bf16 %v5118, %v5116
      %v5228 = vpack.c.bf16 %v5174, %v5172
      %v5229 = vpack.c.bf16 %v5070, %v5069
      %v5230 = vpack.c.bf16 %v5123, %v5121
      %v5231 = vpack.c.bf16 %v5179, %v5177
      %v5232 = vpack.c.bf16 %v5073, %v5072
      %v5233 = vpack.c.bf16 %v5128, %v5126
      %v5234 = vpack.c.bf16 %v5184, %v5182
      %v5235 = vpack.c.bf16 %v5076, %v5075
      %v5236 = vpack.c.bf16 %v5133, %v5131
      %v5237 = vpack.c.bf16 %v5189, %v5187
      %v5238 = vpack.c.bf16 %v5079, %v5078
      %v5239 = vpack.c.bf16 %v5138, %v5136
      %v5240 = vpack.c.bf16 %v5194, %v5192
      %v5241 = vpack.c.bf16 %v5082, %v5081
      %v5242 = vpack.c.bf16 %v5143, %v5141
      %v5243 = vpack.c.bf16 %v5199, %v5197
      %v5244 = vpack.c.bf16 %v5085, %v5084
      %v5245 = vpack.c.bf16 %v5148, %v5146
      %v5246 = vpack.c.bf16 %v5204, %v5202
      %v5247 = vpack.c.bf16 %v5088, %v5087
      %v5248 = vpack.c.bf16 %v5153, %v5151
      %v5249 = vpack.c.bf16 %v5209, %v5207
      %s5250 = scalar_lea.vmem [#allocation3], 216
      %v5251 = vld [vmem:[%s5250] sm:$0xff]
      %v5252 = vld [vmem:[%s5250 + $0x8] sm:$0xff]
      %v5253 = vld [vmem:[%s5250 + $0x10] sm:$0x3]
      %v5254 = vld [vmem:[%s5250 + $0x18] sm:$0xff]
      %v5255 = vld [vmem:[%s5250 + $0x20] sm:$0xff]
      %v5256 = vld [vmem:[%s5250 + $0x28] sm:$0x3]
      %v5257 = vld [vmem:[%s5250 + $0x30] sm:$0xff]
      %v5258 = vld [vmem:[%s5250 + $0x38] sm:$0xff]
      %v5259 = vld [vmem:[%s5250 + $0x40] sm:$0x3]
      %v5260 = vld [vmem:[%s5250 + $0x48] sm:$0xff]
      %v5261 = vld [vmem:[%s5250 + $0x50] sm:$0xff]
      %v5262 = vld [vmem:[%s5250 + $0x58] sm:$0x3]
      %v5263 = vld [vmem:[%s5250 + $0x60] sm:$0xff]
      %v5264 = vld [vmem:[%s5250 + $0x68] sm:$0xff]
      %v5265 = vld [vmem:[%s5250 + $0x70] sm:$0x3]
      %v5266 = vld [vmem:[%s5250 + $0x78] sm:$0xff]
      %v5267 = vld [vmem:[%s5250 + $0x80] sm:$0xff]
      %v5268 = vld [vmem:[%s5250 + $0x88] sm:$0x3]
      %v5269 = vld [vmem:[%s5250 + $0x90] sm:$0xff]
      %v5270 = vld [vmem:[%s5250 + $0x98] sm:$0xff]
      %v5271 = vld [vmem:[%s5250 + $0xa0] sm:$0x3]
      %v5272 = vld [vmem:[%s5250 + $0xa8] sm:$0xff]
      %v5273 = vld [vmem:[%s5250 + $0xb0] sm:$0xff]
      %v5274 = vld [vmem:[%s5250 + $0xb8] sm:$0x3]
      %v5299 = vrot.slane %v5251, 1
      %v5300 = vrot.slane %v5252, 1
      %v5301 = vsel %vm666, %v5299, %v5300
      %v5302 = vrot.slane %v5253, 1
      %v5303 = vsel %vm666, %v5300, %v5302
      %v5304 = vrot.slane %v5254, 1
      %v5305 = vrot.slane %v5255, 1
      %v5306 = vsel %vm666, %v5304, %v5305
      %v5307 = vrot.slane %v5256, 1
      %v5308 = vsel %vm666, %v5305, %v5307
      %v5309 = vrot.slane %v5257, 1
      %v5310 = vrot.slane %v5258, 1
      %v5311 = vsel %vm666, %v5309, %v5310
      %v5312 = vrot.slane %v5259, 1
      %v5313 = vsel %vm666, %v5310, %v5312
      %v5314 = vrot.slane %v5260, 1
      %v5315 = vrot.slane %v5261, 1
      %v5316 = vsel %vm666, %v5314, %v5315
      %v5317 = vrot.slane %v5262, 1
      %v5318 = vsel %vm666, %v5315, %v5317
      %v5319 = vrot.slane %v5263, 1
      %v5320 = vrot.slane %v5264, 1
      %v5321 = vsel %vm666, %v5319, %v5320
      %v5322 = vrot.slane %v5265, 1
      %v5323 = vsel %vm666, %v5320, %v5322
      %v5324 = vrot.slane %v5266, 1
      %v5325 = vrot.slane %v5267, 1
      %v5326 = vsel %vm666, %v5324, %v5325
      %v5327 = vrot.slane %v5268, 1
      %v5328 = vsel %vm666, %v5325, %v5327
      %v5329 = vrot.slane %v5269, 1
      %v5330 = vrot.slane %v5270, 1
      %v5331 = vsel %vm666, %v5329, %v5330
      %v5332 = vrot.slane %v5271, 1
      %v5333 = vsel %vm666, %v5330, %v5332
      %v5334 = vrot.slane %v5272, 1
      %v5335 = vrot.slane %v5273, 1
      %v5336 = vsel %vm666, %v5334, %v5335
      %v5337 = vrot.slane %v5274, 1
      %v5338 = vsel %vm666, %v5335, %v5337
      %v5355 = vrot.slane %v5251, 2
      %v5356 = vrot.slane %v5252, 2
      %v5357 = vsel %vm755, %v5355, %v5356
      %v5358 = vrot.slane %v5253, 2
      %v5359 = vsel %vm755, %v5356, %v5358
      %v5360 = vrot.slane %v5254, 2
      %v5361 = vrot.slane %v5255, 2
      %v5362 = vsel %vm755, %v5360, %v5361
      %v5363 = vrot.slane %v5256, 2
      %v5364 = vsel %vm755, %v5361, %v5363
      %v5365 = vrot.slane %v5257, 2
      %v5366 = vrot.slane %v5258, 2
      %v5367 = vsel %vm755, %v5365, %v5366
      %v5368 = vrot.slane %v5259, 2
      %v5369 = vsel %vm755, %v5366, %v5368
      %v5370 = vrot.slane %v5260, 2
      %v5371 = vrot.slane %v5261, 2
      %v5372 = vsel %vm755, %v5370, %v5371
      %v5373 = vrot.slane %v5262, 2
      %v5374 = vsel %vm755, %v5371, %v5373
      %v5375 = vrot.slane %v5263, 2
      %v5376 = vrot.slane %v5264, 2
      %v5377 = vsel %vm755, %v5375, %v5376
      %v5378 = vrot.slane %v5265, 2
      %v5379 = vsel %vm755, %v5376, %v5378
      %v5380 = vrot.slane %v5266, 2
      %v5381 = vrot.slane %v5267, 2
      %v5382 = vsel %vm755, %v5380, %v5381
      %v5383 = vrot.slane %v5268, 2
      %v5384 = vsel %vm755, %v5381, %v5383
      %v5385 = vrot.slane %v5269, 2
      %v5386 = vrot.slane %v5270, 2
      %v5387 = vsel %vm755, %v5385, %v5386
      %v5388 = vrot.slane %v5271, 2
      %v5389 = vsel %vm755, %v5386, %v5388
      %v5390 = vrot.slane %v5272, 2
      %v5391 = vrot.slane %v5273, 2
      %v5392 = vsel %vm755, %v5390, %v5391
      %v5393 = vrot.slane %v5274, 2
      %v5394 = vsel %vm755, %v5391, %v5393
      %v5411 = vpack.c.bf16 %v5252, %v5251
      %v5412 = vpack.c.bf16 %v5303, %v5301
      %v5413 = vpack.c.bf16 %v5359, %v5357
      %v5414 = vpack.c.bf16 %v5255, %v5254
      %v5415 = vpack.c.bf16 %v5308, %v5306
      %v5416 = vpack.c.bf16 %v5364, %v5362
      %v5417 = vpack.c.bf16 %v5258, %v5257
      %v5418 = vpack.c.bf16 %v5313, %v5311
      %v5419 = vpack.c.bf16 %v5369, %v5367
      %v5420 = vpack.c.bf16 %v5261, %v5260
      %v5421 = vpack.c.bf16 %v5318, %v5316
      %v5422 = vpack.c.bf16 %v5374, %v5372
      %v5423 = vpack.c.bf16 %v5264, %v5263
      %v5424 = vpack.c.bf16 %v5323, %v5321
      %v5425 = vpack.c.bf16 %v5379, %v5377
      %v5426 = vpack.c.bf16 %v5267, %v5266
      %v5427 = vpack.c.bf16 %v5328, %v5326
      %v5428 = vpack.c.bf16 %v5384, %v5382
      %v5429 = vpack.c.bf16 %v5270, %v5269
      %v5430 = vpack.c.bf16 %v5333, %v5331
      %v5431 = vpack.c.bf16 %v5389, %v5387
      %v5432 = vpack.c.bf16 %v5273, %v5272
      %v5433 = vpack.c.bf16 %v5338, %v5336
      %v5434 = vpack.c.bf16 %v5394, %v5392
      %5435 = vmatpush.bf16.msra.mxu0 %v3942
      %5436 = vmatpush.bf16.msra.mxu0 %v3941
      %5437 = vmatpush.bf16.msra.mxu0 %v3940
      %5438 = vmatpush.bf16.msra.mxu0 %v3939
      %5439 = vmatpush.bf16.msra.mxu0 %v3938
      %5440 = vmatpush.bf16.msra.mxu0 %v3937
      %5441 = vmatpush.bf16.msra.mxu0 %v3936
      %5442 = vmatpush.bf16.msra.mxu0 %v3935
      %5443 = vmatmul.bf16.gmra.mxu0 %v5411
      %v5444 = vpop.f32.mrf.mxu0
      %v5445 = vadd.f32 0.0, %v5444
      %v5446 = vpop.f32.mrf.mxu0
      %v5447 = vadd.f32 0.0, %v5446
      %5448 = vmatmul.bf16.gmra.mxu0 %v5414
      %v5449 = vpop.f32.mrf.mxu0
      %v5450 = vadd.f32 0.0, %v5449
      %v5451 = vpop.f32.mrf.mxu0
      %v5452 = vadd.f32 0.0, %v5451
      %5453 = vmatmul.bf16.gmra.mxu0 %v5417
      %v5454 = vpop.f32.mrf.mxu0
      %v5455 = vadd.f32 0.0, %v5454
      %v5456 = vpop.f32.mrf.mxu0
      %v5457 = vadd.f32 0.0, %v5456
      %5458 = vmatmul.bf16.gmra.mxu0 %v5420
      %v5459 = vpop.f32.mrf.mxu0
      %v5460 = vadd.f32 0.0, %v5459
      %v5461 = vpop.f32.mrf.mxu0
      %v5462 = vadd.f32 0.0, %v5461
      %5463 = vmatmul.bf16.gmra.mxu0 %v5423
      %v5464 = vpop.f32.mrf.mxu0
      %v5465 = vadd.f32 0.0, %v5464
      %v5466 = vpop.f32.mrf.mxu0
      %v5467 = vadd.f32 0.0, %v5466
      %5468 = vmatmul.bf16.gmra.mxu0 %v5426
      %v5469 = vpop.f32.mrf.mxu0
      %v5470 = vadd.f32 0.0, %v5469
      %v5471 = vpop.f32.mrf.mxu0
      %v5472 = vadd.f32 0.0, %v5471
      %5473 = vmatmul.bf16.gmra.mxu0 %v5429
      %v5474 = vpop.f32.mrf.mxu0
      %v5475 = vadd.f32 0.0, %v5474
      %v5476 = vpop.f32.mrf.mxu0
      %v5477 = vadd.f32 0.0, %v5476
      %5478 = vmatmul.bf16.gmra.mxu0 %v5432
      %v5479 = vpop.f32.mrf.mxu0
      %v5480 = vadd.f32 0.0, %v5479
      %v5481 = vpop.f32.mrf.mxu0
      %v5482 = vadd.f32 0.0, %v5481
      %5483 = vdwg.mxu0
      %5484 = vmatpush.bf16.msra.mxu0 %v3950
      %5485 = vmatpush.bf16.msra.mxu0 %v3949
      %5486 = vmatpush.bf16.msra.mxu0 %v3948
      %5487 = vmatpush.bf16.msra.mxu0 %v3947
      %5488 = vmatpush.bf16.msra.mxu0 %v3946
      %5489 = vmatpush.bf16.msra.mxu0 %v3945
      %5490 = vmatpush.bf16.msra.mxu0 %v3944
      %5491 = vmatpush.bf16.msra.mxu0 %v3943
      %5492 = vmatmul.bf16.gmra.mxu0 %v5412
      %v5493 = vpop.f32.mrf.mxu0
      %v5494 = vadd.f32 %v5445, %v5493
      %v5495 = vpop.f32.mrf.mxu0
      %v5496 = vadd.f32 %v5447, %v5495
      %5497 = vmatmul.bf16.gmra.mxu0 %v5415
      %v5498 = vpop.f32.mrf.mxu0
      %v5499 = vadd.f32 %v5450, %v5498
      %v5500 = vpop.f32.mrf.mxu0
      %v5501 = vadd.f32 %v5452, %v5500
      %5502 = vmatmul.bf16.gmra.mxu0 %v5418
      %v5503 = vpop.f32.mrf.mxu0
      %v5504 = vadd.f32 %v5455, %v5503
      %v5505 = vpop.f32.mrf.mxu0
      %v5506 = vadd.f32 %v5457, %v5505
      %5507 = vmatmul.bf16.gmra.mxu0 %v5421
      %v5508 = vpop.f32.mrf.mxu0
      %v5509 = vadd.f32 %v5460, %v5508
      %v5510 = vpop.f32.mrf.mxu0
      %v5511 = vadd.f32 %v5462, %v5510
      %5512 = vmatmul.bf16.gmra.mxu0 %v5424
      %v5513 = vpop.f32.mrf.mxu0
      %v5514 = vadd.f32 %v5465, %v5513
      %v5515 = vpop.f32.mrf.mxu0
      %v5516 = vadd.f32 %v5467, %v5515
      %5517 = vmatmul.bf16.gmra.mxu0 %v5427
      %v5518 = vpop.f32.mrf.mxu0
      %v5519 = vadd.f32 %v5470, %v5518
      %v5520 = vpop.f32.mrf.mxu0
      %v5521 = vadd.f32 %v5472, %v5520
      %5522 = vmatmul.bf16.gmra.mxu0 %v5430
      %v5523 = vpop.f32.mrf.mxu0
      %v5524 = vadd.f32 %v5475, %v5523
      %v5525 = vpop.f32.mrf.mxu0
      %v5526 = vadd.f32 %v5477, %v5525
      %5527 = vmatmul.bf16.gmra.mxu0 %v5433
      %v5528 = vpop.f32.mrf.mxu0
      %v5529 = vadd.f32 %v5480, %v5528
      %v5530 = vpop.f32.mrf.mxu0
      %v5531 = vadd.f32 %v5482, %v5530
      %5532 = vdwg.mxu0
      %5533 = vmatpush.bf16.msra.mxu0 %v3958
      %5534 = vmatpush.bf16.msra.mxu0 %v3957
      %5535 = vmatpush.bf16.msra.mxu0 %v3956
      %5536 = vmatpush.bf16.msra.mxu0 %v3955
      %5537 = vmatpush.bf16.msra.mxu0 %v3954
      %5538 = vmatpush.bf16.msra.mxu0 %v3953
      %5539 = vmatpush.bf16.msra.mxu0 %v3952
      %5540 = vmatpush.bf16.msra.mxu0 %v3951
      %5541 = vmatmul.bf16.gmra.mxu0 %v5413
      %v5542 = vpop.f32.mrf.mxu0
      %v5543 = vadd.f32 %v5494, %v5542
      %v5544 = vpop.f32.mrf.mxu0
      %v5545 = vadd.f32 %v5496, %v5544
      %5546 = vmatmul.bf16.gmra.mxu0 %v5416
      %v5547 = vpop.f32.mrf.mxu0
      %v5548 = vadd.f32 %v5499, %v5547
      %v5549 = vpop.f32.mrf.mxu0
      %v5550 = vadd.f32 %v5501, %v5549
      %5551 = vmatmul.bf16.gmra.mxu0 %v5419
      %v5552 = vpop.f32.mrf.mxu0
      %v5553 = vadd.f32 %v5504, %v5552
      %v5554 = vpop.f32.mrf.mxu0
      %v5555 = vadd.f32 %v5506, %v5554
      %5556 = vmatmul.bf16.gmra.mxu0 %v5422
      %v5557 = vpop.f32.mrf.mxu0
      %v5558 = vadd.f32 %v5509, %v5557
      %v5559 = vpop.f32.mrf.mxu0
      %v5560 = vadd.f32 %v5511, %v5559
      %5561 = vmatmul.bf16.gmra.mxu0 %v5425
      %v5562 = vpop.f32.mrf.mxu0
      %v5563 = vadd.f32 %v5514, %v5562
      %v5564 = vpop.f32.mrf.mxu0
      %v5565 = vadd.f32 %v5516, %v5564
      %5566 = vmatmul.bf16.gmra.mxu0 %v5428
      %v5567 = vpop.f32.mrf.mxu0
      %v5568 = vadd.f32 %v5519, %v5567
      %v5569 = vpop.f32.mrf.mxu0
      %v5570 = vadd.f32 %v5521, %v5569
      %5571 = vmatmul.bf16.gmra.mxu0 %v5431
      %v5572 = vpop.f32.mrf.mxu0
      %v5573 = vadd.f32 %v5524, %v5572
      %v5574 = vpop.f32.mrf.mxu0
      %v5575 = vadd.f32 %v5526, %v5574
      %5576 = vmatmul.bf16.gmra.mxu0 %v5434
      %v5577 = vpop.f32.mrf.mxu0
      %v5578 = vadd.f32 %v5529, %v5577
      %v5579 = vpop.f32.mrf.mxu0
      %v5580 = vadd.f32 %v5531, %v5579
      %5581 = vdwg.mxu0
      %5582 = vmatpush.bf16.msra.mxu0 %v4233
      %5583 = vmatpush.bf16.msra.mxu0 %v4232
      %5584 = vmatpush.bf16.msra.mxu0 %v4231
      %5585 = vmatpush.bf16.msra.mxu0 %v4230
      %5586 = vmatpush.bf16.msra.mxu0 %v4229
      %5587 = vmatpush.bf16.msra.mxu0 %v4228
      %5588 = vmatpush.bf16.msra.mxu0 %v4227
      %5589 = vmatpush.bf16.msra.mxu0 %v4226
      %5590 = vmatmul.bf16.gmra.mxu0 %v5226
      %v5591 = vpop.f32.mrf.mxu0
      %v5592 = vadd.f32 %v5543, %v5591
      %v5593 = vpop.f32.mrf.mxu0
      %v5594 = vadd.f32 %v5545, %v5593
      %5595 = vmatmul.bf16.gmra.mxu0 %v5229
      %v5596 = vpop.f32.mrf.mxu0
      %v5597 = vadd.f32 %v5548, %v5596
      %v5598 = vpop.f32.mrf.mxu0
      %v5599 = vadd.f32 %v5550, %v5598
      %5600 = vmatmul.bf16.gmra.mxu0 %v5232
      %v5601 = vpop.f32.mrf.mxu0
      %v5602 = vadd.f32 %v5553, %v5601
      %v5603 = vpop.f32.mrf.mxu0
      %v5604 = vadd.f32 %v5555, %v5603
      %5605 = vmatmul.bf16.gmra.mxu0 %v5235
      %v5606 = vpop.f32.mrf.mxu0
      %v5607 = vadd.f32 %v5558, %v5606
      %v5608 = vpop.f32.mrf.mxu0
      %v5609 = vadd.f32 %v5560, %v5608
      %5610 = vmatmul.bf16.gmra.mxu0 %v5238
      %v5611 = vpop.f32.mrf.mxu0
      %v5612 = vadd.f32 %v5563, %v5611
      %v5613 = vpop.f32.mrf.mxu0
      %v5614 = vadd.f32 %v5565, %v5613
      %5615 = vmatmul.bf16.gmra.mxu0 %v5241
      %v5616 = vpop.f32.mrf.mxu0
      %v5617 = vadd.f32 %v5568, %v5616
      %v5618 = vpop.f32.mrf.mxu0
      %v5619 = vadd.f32 %v5570, %v5618
      %5620 = vmatmul.bf16.gmra.mxu0 %v5244
      %v5621 = vpop.f32.mrf.mxu0
      %v5622 = vadd.f32 %v5573, %v5621
      %v5623 = vpop.f32.mrf.mxu0
      %v5624 = vadd.f32 %v5575, %v5623
      %5625 = vmatmul.bf16.gmra.mxu0 %v5247
      %v5626 = vpop.f32.mrf.mxu0
      %v5627 = vadd.f32 %v5578, %v5626
      %v5628 = vpop.f32.mrf.mxu0
      %v5629 = vadd.f32 %v5580, %v5628
      %5630 = vdwg.mxu0
      %5631 = vmatpush.bf16.msra.mxu0 %v4241
      %5632 = vmatpush.bf16.msra.mxu0 %v4240
      %5633 = vmatpush.bf16.msra.mxu0 %v4239
      %5634 = vmatpush.bf16.msra.mxu0 %v4238
      %5635 = vmatpush.bf16.msra.mxu0 %v4237
      %5636 = vmatpush.bf16.msra.mxu0 %v4236
      %5637 = vmatpush.bf16.msra.mxu0 %v4235
      %5638 = vmatpush.bf16.msra.mxu0 %v4234
      %5639 = vmatmul.bf16.gmra.mxu0 %v5227
      %v5640 = vpop.f32.mrf.mxu0
      %v5641 = vadd.f32 %v5592, %v5640
      %v5642 = vpop.f32.mrf.mxu0
      %v5643 = vadd.f32 %v5594, %v5642
      %5644 = vmatmul.bf16.gmra.mxu0 %v5230
      %v5645 = vpop.f32.mrf.mxu0
      %v5646 = vadd.f32 %v5597, %v5645
      %v5647 = vpop.f32.mrf.mxu0
      %v5648 = vadd.f32 %v5599, %v5647
      %5649 = vmatmul.bf16.gmra.mxu0 %v5233
      %v5650 = vpop.f32.mrf.mxu0
      %v5651 = vadd.f32 %v5602, %v5650
      %v5652 = vpop.f32.mrf.mxu0
      %v5653 = vadd.f32 %v5604, %v5652
      %5654 = vmatmul.bf16.gmra.mxu0 %v5236
      %v5655 = vpop.f32.mrf.mxu0
      %v5656 = vadd.f32 %v5607, %v5655
      %v5657 = vpop.f32.mrf.mxu0
      %v5658 = vadd.f32 %v5609, %v5657
      %5659 = vmatmul.bf16.gmra.mxu0 %v5239
      %v5660 = vpop.f32.mrf.mxu0
      %v5661 = vadd.f32 %v5612, %v5660
      %v5662 = vpop.f32.mrf.mxu0
      %v5663 = vadd.f32 %v5614, %v5662
      %5664 = vmatmul.bf16.gmra.mxu0 %v5242
      %v5665 = vpop.f32.mrf.mxu0
      %v5666 = vadd.f32 %v5617, %v5665
      %v5667 = vpop.f32.mrf.mxu0
      %v5668 = vadd.f32 %v5619, %v5667
      %5669 = vmatmul.bf16.gmra.mxu0 %v5245
      %v5670 = vpop.f32.mrf.mxu0
      %v5671 = vadd.f32 %v5622, %v5670
      %v5672 = vpop.f32.mrf.mxu0
      %v5673 = vadd.f32 %v5624, %v5672
      %5674 = vmatmul.bf16.gmra.mxu0 %v5248
      %v5675 = vpop.f32.mrf.mxu0
      %v5676 = vadd.f32 %v5627, %v5675
      %v5677 = vpop.f32.mrf.mxu0
      %v5678 = vadd.f32 %v5629, %v5677
      %5679 = vdwg.mxu0
      %5680 = vmatpush.bf16.msra.mxu0 %v4249
      %5681 = vmatpush.bf16.msra.mxu0 %v4248
      %5682 = vmatpush.bf16.msra.mxu0 %v4247
      %5683 = vmatpush.bf16.msra.mxu0 %v4246
      %5684 = vmatpush.bf16.msra.mxu0 %v4245
      %5685 = vmatpush.bf16.msra.mxu0 %v4244
      %5686 = vmatpush.bf16.msra.mxu0 %v4243
      %5687 = vmatpush.bf16.msra.mxu0 %v4242
      %5688 = vmatmul.bf16.gmra.mxu0 %v5228
      %v5689 = vpop.f32.mrf.mxu0
      %v5690 = vadd.f32 %v5641, %v5689
      %v5691 = vpop.f32.mrf.mxu0
      %v5692 = vadd.f32 %v5643, %v5691
      %5693 = vmatmul.bf16.gmra.mxu0 %v5231
      %v5694 = vpop.f32.mrf.mxu0
      %v5695 = vadd.f32 %v5646, %v5694
      %v5696 = vpop.f32.mrf.mxu0
      %v5697 = vadd.f32 %v5648, %v5696
      %5698 = vmatmul.bf16.gmra.mxu0 %v5234
      %v5699 = vpop.f32.mrf.mxu0
      %v5700 = vadd.f32 %v5651, %v5699
      %v5701 = vpop.f32.mrf.mxu0
      %v5702 = vadd.f32 %v5653, %v5701
      %5703 = vmatmul.bf16.gmra.mxu0 %v5237
      %v5704 = vpop.f32.mrf.mxu0
      %v5705 = vadd.f32 %v5656, %v5704
      %v5706 = vpop.f32.mrf.mxu0
      %v5707 = vadd.f32 %v5658, %v5706
      %5708 = vmatmul.bf16.gmra.mxu0 %v5240
      %v5709 = vpop.f32.mrf.mxu0
      %v5710 = vadd.f32 %v5661, %v5709
      %v5711 = vpop.f32.mrf.mxu0
      %v5712 = vadd.f32 %v5663, %v5711
      %5713 = vmatmul.bf16.gmra.mxu0 %v5243
      %v5714 = vpop.f32.mrf.mxu0
      %v5715 = vadd.f32 %v5666, %v5714
      %v5716 = vpop.f32.mrf.mxu0
      %v5717 = vadd.f32 %v5668, %v5716
      %5718 = vmatmul.bf16.gmra.mxu0 %v5246
      %v5719 = vpop.f32.mrf.mxu0
      %v5720 = vadd.f32 %v5671, %v5719
      %v5721 = vpop.f32.mrf.mxu0
      %v5722 = vadd.f32 %v5673, %v5721
      %5723 = vmatmul.bf16.gmra.mxu0 %v5249
      %v5724 = vpop.f32.mrf.mxu0
      %v5725 = vadd.f32 %v5676, %v5724
      %v5726 = vpop.f32.mrf.mxu0
      %v5727 = vadd.f32 %v5678, %v5726
      %5728 = vdwg.mxu0
      %s5729 = scalar_lea.vmem [#allocation3], 240
      %v5730 = vld [vmem:[%s5729] sm:$0xff]
      %v5731 = vld [vmem:[%s5729 + $0x8] sm:$0xff]
      %v5732 = vld [vmem:[%s5729 + $0x10] sm:$0x3]
      %v5733 = vld [vmem:[%s5729 + $0x18] sm:$0xff]
      %v5734 = vld [vmem:[%s5729 + $0x20] sm:$0xff]
      %v5735 = vld [vmem:[%s5729 + $0x28] sm:$0x3]
      %v5736 = vld [vmem:[%s5729 + $0x30] sm:$0xff]
      %v5737 = vld [vmem:[%s5729 + $0x38] sm:$0xff]
      %v5738 = vld [vmem:[%s5729 + $0x40] sm:$0x3]
      %v5739 = vld [vmem:[%s5729 + $0x48] sm:$0xff]
      %v5740 = vld [vmem:[%s5729 + $0x50] sm:$0xff]
      %v5741 = vld [vmem:[%s5729 + $0x58] sm:$0x3]
      %v5742 = vld [vmem:[%s5729 + $0x60] sm:$0xff]
      %v5743 = vld [vmem:[%s5729 + $0x68] sm:$0xff]
      %v5744 = vld [vmem:[%s5729 + $0x70] sm:$0x3]
      %v5745 = vld [vmem:[%s5729 + $0x78] sm:$0xff]
      %v5746 = vld [vmem:[%s5729 + $0x80] sm:$0xff]
      %v5747 = vld [vmem:[%s5729 + $0x88] sm:$0x3]
      %v5748 = vld [vmem:[%s5729 + $0x90] sm:$0xff]
      %v5749 = vld [vmem:[%s5729 + $0x98] sm:$0xff]
      %v5750 = vld [vmem:[%s5729 + $0xa0] sm:$0x3]
      %v5751 = vld [vmem:[%s5729 + $0xa8] sm:$0xff]
      %v5752 = vld [vmem:[%s5729 + $0xb0] sm:$0xff]
      %v5753 = vld [vmem:[%s5729 + $0xb8] sm:$0x3]
      %v5778 = vrot.slane %v5730, 1
      %v5779 = vrot.slane %v5731, 1
      %v5780 = vsel %vm666, %v5778, %v5779
      %v5781 = vrot.slane %v5732, 1
      %v5782 = vsel %vm666, %v5779, %v5781
      %v5783 = vrot.slane %v5733, 1
      %v5784 = vrot.slane %v5734, 1
      %v5785 = vsel %vm666, %v5783, %v5784
      %v5786 = vrot.slane %v5735, 1
      %v5787 = vsel %vm666, %v5784, %v5786
      %v5788 = vrot.slane %v5736, 1
      %v5789 = vrot.slane %v5737, 1
      %v5790 = vsel %vm666, %v5788, %v5789
      %v5791 = vrot.slane %v5738, 1
      %v5792 = vsel %vm666, %v5789, %v5791
      %v5793 = vrot.slane %v5739, 1
      %v5794 = vrot.slane %v5740, 1
      %v5795 = vsel %vm666, %v5793, %v5794
      %v5796 = vrot.slane %v5741, 1
      %v5797 = vsel %vm666, %v5794, %v5796
      %v5798 = vrot.slane %v5742, 1
      %v5799 = vrot.slane %v5743, 1
      %v5800 = vsel %vm666, %v5798, %v5799
      %v5801 = vrot.slane %v5744, 1
      %v5802 = vsel %vm666, %v5799, %v5801
      %v5803 = vrot.slane %v5745, 1
      %v5804 = vrot.slane %v5746, 1
      %v5805 = vsel %vm666, %v5803, %v5804
      %v5806 = vrot.slane %v5747, 1
      %v5807 = vsel %vm666, %v5804, %v5806
      %v5808 = vrot.slane %v5748, 1
      %v5809 = vrot.slane %v5749, 1
      %v5810 = vsel %vm666, %v5808, %v5809
      %v5811 = vrot.slane %v5750, 1
      %v5812 = vsel %vm666, %v5809, %v5811
      %v5813 = vrot.slane %v5751, 1
      %v5814 = vrot.slane %v5752, 1
      %v5815 = vsel %vm666, %v5813, %v5814
      %v5816 = vrot.slane %v5753, 1
      %v5817 = vsel %vm666, %v5814, %v5816
      %v5834 = vrot.slane %v5730, 2
      %v5835 = vrot.slane %v5731, 2
      %v5836 = vsel %vm755, %v5834, %v5835
      %v5837 = vrot.slane %v5732, 2
      %v5838 = vsel %vm755, %v5835, %v5837
      %v5839 = vrot.slane %v5733, 2
      %v5840 = vrot.slane %v5734, 2
      %v5841 = vsel %vm755, %v5839, %v5840
      %v5842 = vrot.slane %v5735, 2
      %v5843 = vsel %vm755, %v5840, %v5842
      %v5844 = vrot.slane %v5736, 2
      %v5845 = vrot.slane %v5737, 2
      %v5846 = vsel %vm755, %v5844, %v5845
      %v5847 = vrot.slane %v5738, 2
      %v5848 = vsel %vm755, %v5845, %v5847
      %v5849 = vrot.slane %v5739, 2
      %v5850 = vrot.slane %v5740, 2
      %v5851 = vsel %vm755, %v5849, %v5850
      %v5852 = vrot.slane %v5741, 2
      %v5853 = vsel %vm755, %v5850, %v5852
      %v5854 = vrot.slane %v5742, 2
      %v5855 = vrot.slane %v5743, 2
      %v5856 = vsel %vm755, %v5854, %v5855
      %v5857 = vrot.slane %v5744, 2
      %v5858 = vsel %vm755, %v5855, %v5857
      %v5859 = vrot.slane %v5745, 2
      %v5860 = vrot.slane %v5746, 2
      %v5861 = vsel %vm755, %v5859, %v5860
      %v5862 = vrot.slane %v5747, 2
      %v5863 = vsel %vm755, %v5860, %v5862
      %v5864 = vrot.slane %v5748, 2
      %v5865 = vrot.slane %v5749, 2
      %v5866 = vsel %vm755, %v5864, %v5865
      %v5867 = vrot.slane %v5750, 2
      %v5868 = vsel %vm755, %v5865, %v5867
      %v5869 = vrot.slane %v5751, 2
      %v5870 = vrot.slane %v5752, 2
      %v5871 = vsel %vm755, %v5869, %v5870
      %v5872 = vrot.slane %v5753, 2
      %v5873 = vsel %vm755, %v5870, %v5872
      %v5890 = vpack.c.bf16 %v5731, %v5730
      %v5891 = vpack.c.bf16 %v5782, %v5780
      %v5892 = vpack.c.bf16 %v5838, %v5836
      %v5893 = vpack.c.bf16 %v5734, %v5733
      %v5894 = vpack.c.bf16 %v5787, %v5785
      %v5895 = vpack.c.bf16 %v5843, %v5841
      %v5896 = vpack.c.bf16 %v5737, %v5736
      %v5897 = vpack.c.bf16 %v5792, %v5790
      %v5898 = vpack.c.bf16 %v5848, %v5846
      %v5899 = vpack.c.bf16 %v5740, %v5739
      %v5900 = vpack.c.bf16 %v5797, %v5795
      %v5901 = vpack.c.bf16 %v5853, %v5851
      %v5902 = vpack.c.bf16 %v5743, %v5742
      %v5903 = vpack.c.bf16 %v5802, %v5800
      %v5904 = vpack.c.bf16 %v5858, %v5856
      %v5905 = vpack.c.bf16 %v5746, %v5745
      %v5906 = vpack.c.bf16 %v5807, %v5805
      %v5907 = vpack.c.bf16 %v5863, %v5861
      %v5908 = vpack.c.bf16 %v5749, %v5748
      %v5909 = vpack.c.bf16 %v5812, %v5810
      %v5910 = vpack.c.bf16 %v5868, %v5866
      %v5911 = vpack.c.bf16 %v5752, %v5751
      %v5912 = vpack.c.bf16 %v5817, %v5815
      %v5913 = vpack.c.bf16 %v5873, %v5871
      %5914 = vmatpush.bf16.msra.mxu0 %v4709
      %5915 = vmatpush.bf16.msra.mxu0 %v4708
      %5916 = vmatpush.bf16.msra.mxu0 %v4707
      %5917 = vmatpush.bf16.msra.mxu0 %v4706
      %5918 = vmatpush.bf16.msra.mxu0 %v4705
      %5919 = vmatpush.bf16.msra.mxu0 %v4704
      %5920 = vmatpush.bf16.msra.mxu0 %v4703
      %5921 = vmatpush.bf16.msra.mxu0 %v4702
      %5922 = vmatmul.bf16.gmra.mxu0 %v5890
      %v5923 = vpop.f32.mrf.mxu0
      %v5924 = vadd.f32 0.0, %v5923
      %v5925 = vpop.f32.mrf.mxu0
      %v5926 = vadd.f32 0.0, %v5925
      %5927 = vmatmul.bf16.gmra.mxu0 %v5893
      %v5928 = vpop.f32.mrf.mxu0
      %v5929 = vadd.f32 0.0, %v5928
      %v5930 = vpop.f32.mrf.mxu0
      %v5931 = vadd.f32 0.0, %v5930
      %5932 = vmatmul.bf16.gmra.mxu0 %v5896
      %v5933 = vpop.f32.mrf.mxu0
      %v5934 = vadd.f32 0.0, %v5933
      %v5935 = vpop.f32.mrf.mxu0
      %v5936 = vadd.f32 0.0, %v5935
      %5937 = vmatmul.bf16.gmra.mxu0 %v5899
      %v5938 = vpop.f32.mrf.mxu0
      %v5939 = vadd.f32 0.0, %v5938
      %v5940 = vpop.f32.mrf.mxu0
      %v5941 = vadd.f32 0.0, %v5940
      %5942 = vmatmul.bf16.gmra.mxu0 %v5902
      %v5943 = vpop.f32.mrf.mxu0
      %v5944 = vadd.f32 0.0, %v5943
      %v5945 = vpop.f32.mrf.mxu0
      %v5946 = vadd.f32 0.0, %v5945
      %5947 = vmatmul.bf16.gmra.mxu0 %v5905
      %v5948 = vpop.f32.mrf.mxu0
      %v5949 = vadd.f32 0.0, %v5948
      %v5950 = vpop.f32.mrf.mxu0
      %v5951 = vadd.f32 0.0, %v5950
      %5952 = vmatmul.bf16.gmra.mxu0 %v5908
      %v5953 = vpop.f32.mrf.mxu0
      %v5954 = vadd.f32 0.0, %v5953
      %v5955 = vpop.f32.mrf.mxu0
      %v5956 = vadd.f32 0.0, %v5955
      %5957 = vmatmul.bf16.gmra.mxu0 %v5911
      %v5958 = vpop.f32.mrf.mxu0
      %v5959 = vadd.f32 0.0, %v5958
      %v5960 = vpop.f32.mrf.mxu0
      %v5961 = vadd.f32 0.0, %v5960
      %5962 = vdwg.mxu0
      %5963 = vmatpush.bf16.msra.mxu0 %v4717
      %5964 = vmatpush.bf16.msra.mxu0 %v4716
      %5965 = vmatpush.bf16.msra.mxu0 %v4715
      %5966 = vmatpush.bf16.msra.mxu0 %v4714
      %5967 = vmatpush.bf16.msra.mxu0 %v4713
      %5968 = vmatpush.bf16.msra.mxu0 %v4712
      %5969 = vmatpush.bf16.msra.mxu0 %v4711
      %5970 = vmatpush.bf16.msra.mxu0 %v4710
      %5971 = vmatmul.bf16.gmra.mxu0 %v5891
      %v5972 = vpop.f32.mrf.mxu0
      %v5973 = vadd.f32 %v5924, %v5972
      %v5974 = vpop.f32.mrf.mxu0
      %v5975 = vadd.f32 %v5926, %v5974
      %5976 = vmatmul.bf16.gmra.mxu0 %v5894
      %v5977 = vpop.f32.mrf.mxu0
      %v5978 = vadd.f32 %v5929, %v5977
      %v5979 = vpop.f32.mrf.mxu0
      %v5980 = vadd.f32 %v5931, %v5979
      %5981 = vmatmul.bf16.gmra.mxu0 %v5897
      %v5982 = vpop.f32.mrf.mxu0
      %v5983 = vadd.f32 %v5934, %v5982
      %v5984 = vpop.f32.mrf.mxu0
      %v5985 = vadd.f32 %v5936, %v5984
      %5986 = vmatmul.bf16.gmra.mxu0 %v5900
      %v5987 = vpop.f32.mrf.mxu0
      %v5988 = vadd.f32 %v5939, %v5987
      %v5989 = vpop.f32.mrf.mxu0
      %v5990 = vadd.f32 %v5941, %v5989
      %5991 = vmatmul.bf16.gmra.mxu0 %v5903
      %v5992 = vpop.f32.mrf.mxu0
      %v5993 = vadd.f32 %v5944, %v5992
      %v5994 = vpop.f32.mrf.mxu0
      %v5995 = vadd.f32 %v5946, %v5994
      %5996 = vmatmul.bf16.gmra.mxu0 %v5906
      %v5997 = vpop.f32.mrf.mxu0
      %v5998 = vadd.f32 %v5949, %v5997
      %v5999 = vpop.f32.mrf.mxu0
      %v6000 = vadd.f32 %v5951, %v5999
      %6001 = vmatmul.bf16.gmra.mxu0 %v5909
      %v6002 = vpop.f32.mrf.mxu0
      %v6003 = vadd.f32 %v5954, %v6002
      %v6004 = vpop.f32.mrf.mxu0
      %v6005 = vadd.f32 %v5956, %v6004
      %6006 = vmatmul.bf16.gmra.mxu0 %v5912
      %v6007 = vpop.f32.mrf.mxu0
      %v6008 = vadd.f32 %v5959, %v6007
      %v6009 = vpop.f32.mrf.mxu0
      %v6010 = vadd.f32 %v5961, %v6009
      %6011 = vdwg.mxu0
      %6012 = vmatpush.bf16.msra.mxu0 %v4725
      %6013 = vmatpush.bf16.msra.mxu0 %v4724
      %6014 = vmatpush.bf16.msra.mxu0 %v4723
      %6015 = vmatpush.bf16.msra.mxu0 %v4722
      %6016 = vmatpush.bf16.msra.mxu0 %v4721
      %6017 = vmatpush.bf16.msra.mxu0 %v4720
      %6018 = vmatpush.bf16.msra.mxu0 %v4719
      %6019 = vmatpush.bf16.msra.mxu0 %v4718
      %6020 = vmatmul.bf16.gmra.mxu0 %v5892
      %v6021 = vpop.f32.mrf.mxu0
      %v6022 = vadd.f32 %v5973, %v6021
      %v6023 = vpop.f32.mrf.mxu0
      %v6024 = vadd.f32 %v5975, %v6023
      %6025 = vmatmul.bf16.gmra.mxu0 %v5895
      %v6026 = vpop.f32.mrf.mxu0
      %v6027 = vadd.f32 %v5978, %v6026
      %v6028 = vpop.f32.mrf.mxu0
      %v6029 = vadd.f32 %v5980, %v6028
      %6030 = vmatmul.bf16.gmra.mxu0 %v5898
      %v6031 = vpop.f32.mrf.mxu0
      %v6032 = vadd.f32 %v5983, %v6031
      %v6033 = vpop.f32.mrf.mxu0
      %v6034 = vadd.f32 %v5985, %v6033
      %6035 = vmatmul.bf16.gmra.mxu0 %v5901
      %v6036 = vpop.f32.mrf.mxu0
      %v6037 = vadd.f32 %v5988, %v6036
      %v6038 = vpop.f32.mrf.mxu0
      %v6039 = vadd.f32 %v5990, %v6038
      %6040 = vmatmul.bf16.gmra.mxu0 %v5904
      %v6041 = vpop.f32.mrf.mxu0
      %v6042 = vadd.f32 %v5993, %v6041
      %v6043 = vpop.f32.mrf.mxu0
      %v6044 = vadd.f32 %v5995, %v6043
      %6045 = vmatmul.bf16.gmra.mxu0 %v5907
      %v6046 = vpop.f32.mrf.mxu0
      %v6047 = vadd.f32 %v5998, %v6046
      %v6048 = vpop.f32.mrf.mxu0
      %v6049 = vadd.f32 %v6000, %v6048
      %6050 = vmatmul.bf16.gmra.mxu0 %v5910
      %v6051 = vpop.f32.mrf.mxu0
      %v6052 = vadd.f32 %v6003, %v6051
      %v6053 = vpop.f32.mrf.mxu0
      %v6054 = vadd.f32 %v6005, %v6053
      %6055 = vmatmul.bf16.gmra.mxu0 %v5913
      %v6056 = vpop.f32.mrf.mxu0
      %v6057 = vadd.f32 %v6008, %v6056
      %v6058 = vpop.f32.mrf.mxu0
      %v6059 = vadd.f32 %v6010, %v6058
      %6060 = vdwg.mxu0
      %v6061 = vadd.f32 %v5690, %v6022
      %v6062 = vadd.f32 %v5692, %v6024
      %v6063 = vadd.f32 %v5695, %v6027
      %v6064 = vadd.f32 %v5697, %v6029
      %v6065 = vadd.f32 %v5700, %v6032
      %v6066 = vadd.f32 %v5702, %v6034
      %v6067 = vadd.f32 %v5705, %v6037
      %v6068 = vadd.f32 %v5707, %v6039
      %v6069 = vadd.f32 %v5710, %v6042
      %v6070 = vadd.f32 %v5712, %v6044
      %v6071 = vadd.f32 %v5715, %v6047
      %v6072 = vadd.f32 %v5717, %v6049
      %v6073 = vadd.f32 %v5720, %v6052
      %v6074 = vadd.f32 %v5722, %v6054
      %v6075 = vadd.f32 %v5725, %v6057
      %v6076 = vadd.f32 %v5727, %v6059
      %v6077 = vpack.c.bf16 %v324, %v323
      %v6078 = vpack.c.bf16 %v326, %v325
      %v6079 = vpack.c.bf16 %v328, %v327
      %v6080 = vpack.c.bf16 %v330, %v329
      %v6081 = vpack.c.bf16 %v332, %v331
      %v6082 = vpack.c.bf16 %v334, %v333
      %v6083 = vpack.c.bf16 %v336, %v335
      %v6084 = vpack.c.bf16 %v338, %v337
      %v6086 = vsel %vm339, %v6077, 0
      %v6089 = vsel %vm339, %v6078, 0
      %v6092 = vsel %vm339, %v6079, 0
      %v6095 = vsel %vm339, %v6080, 0
      %v6098 = vsel %vm339, %v6081, 0
      %v6101 = vsel %vm339, %v6082, 0
      %v6104 = vsel %vm339, %v6083, 0
      %v6107 = vsel %vm339, %v6084, 0
      %6109 = vmatpush.bf16.msra.mxu0 0
      %6110 = vmatpush.bf16.msra.mxu0 0
      %6111 = vmatpush.bf16.msra.mxu0 0
      %6112 = vmatpush.bf16.msra.mxu0 0
      %6113 = vmatpush.bf16.msra.mxu0 0
      %6114 = vmatpush.bf16.msra.mxu0 0
      %6115 = vmatpush.bf16.msra.mxu0 0
      %6116 = vmatpush.bf16.msra.mxu0 %v4947
      %6117 = vmatmul.bf16.gmra.mxu0 %v6086
      %v6118 = vpop.f32.mrf.mxu0
      %v6119 = vadd.f32 0.0, %v6118
      %v6120 = vpop.f32.mrf.mxu0
      %v6121 = vadd.f32 0.0, %v6120
      %6122 = vmatmul.bf16.gmra.mxu0 %v6089
      %v6123 = vpop.f32.mrf.mxu0
      %v6124 = vadd.f32 0.0, %v6123
      %v6125 = vpop.f32.mrf.mxu0
      %v6126 = vadd.f32 0.0, %v6125
      %6127 = vmatmul.bf16.gmra.mxu0 %v6092
      %v6128 = vpop.f32.mrf.mxu0
      %v6129 = vadd.f32 0.0, %v6128
      %v6130 = vpop.f32.mrf.mxu0
      %v6131 = vadd.f32 0.0, %v6130
      %6132 = vmatmul.bf16.gmra.mxu0 %v6095
      %v6133 = vpop.f32.mrf.mxu0
      %v6134 = vadd.f32 0.0, %v6133
      %v6135 = vpop.f32.mrf.mxu0
      %v6136 = vadd.f32 0.0, %v6135
      %6137 = vmatmul.bf16.gmra.mxu0 %v6098
      %v6138 = vpop.f32.mrf.mxu0
      %v6139 = vadd.f32 0.0, %v6138
      %v6140 = vpop.f32.mrf.mxu0
      %v6141 = vadd.f32 0.0, %v6140
      %6142 = vmatmul.bf16.gmra.mxu0 %v6101
      %v6143 = vpop.f32.mrf.mxu0
      %v6144 = vadd.f32 0.0, %v6143
      %v6145 = vpop.f32.mrf.mxu0
      %v6146 = vadd.f32 0.0, %v6145
      %6147 = vmatmul.bf16.gmra.mxu0 %v6104
      %v6148 = vpop.f32.mrf.mxu0
      %v6149 = vadd.f32 0.0, %v6148
      %v6150 = vpop.f32.mrf.mxu0
      %v6151 = vadd.f32 0.0, %v6150
      %6152 = vmatmul.bf16.gmra.mxu0 %v6107
      %v6153 = vpop.f32.mrf.mxu0
      %v6154 = vadd.f32 0.0, %v6153
      %v6155 = vpop.f32.mrf.mxu0
      %v6156 = vadd.f32 0.0, %v6155
      %6157 = vdwg.mxu0
      %v6158 = vadd.f32 %v6061, %v6119
      %v6159 = vadd.f32 %v6062, %v6121
      %v6160 = vadd.f32 %v6063, %v6124
      %v6161 = vadd.f32 %v6064, %v6126
      %v6162 = vadd.f32 %v6065, %v6129
      %v6163 = vadd.f32 %v6066, %v6131
      %v6164 = vadd.f32 %v6067, %v6134
      %v6165 = vadd.f32 %v6068, %v6136
      %v6166 = vadd.f32 %v6069, %v6139
      %v6167 = vadd.f32 %v6070, %v6141
      %v6168 = vadd.f32 %v6071, %v6144
      %v6169 = vadd.f32 %v6072, %v6146
      %v6170 = vadd.f32 %v6073, %v6149
      %v6171 = vadd.f32 %v6074, %v6151
      %v6172 = vadd.f32 %v6075, %v6154
      %v6173 = vadd.f32 %v6076, %v6156
      %v6174 = vadd.f32 %v6158, %v5015
      %v6175 = vadd.f32 %v6159, %v5015
      %v6176 = vadd.f32 %v6160, %v5015
      %v6177 = vadd.f32 %v6161, %v5015
      %v6178 = vadd.f32 %v6162, %v5015
      %v6179 = vadd.f32 %v6163, %v5015
      %v6180 = vadd.f32 %v6164, %v5015
      %v6181 = vadd.f32 %v6165, %v5015
      %v6182 = vadd.f32 %v6166, %v5015
      %v6183 = vadd.f32 %v6167, %v5015
      %v6184 = vadd.f32 %v6168, %v5015
      %v6185 = vadd.f32 %v6169, %v5015
      %v6186 = vadd.f32 %v6170, %v5015
      %v6187 = vadd.f32 %v6171, %v5015
      %v6188 = vadd.f32 %v6172, %v5015
      %v6189 = vadd.f32 %v6173, %v5015
      %v6190 = vmax.f32 %v6174, 0.0
      %v6191 = vmax.f32 %v6175, 0.0
      %v6192 = vmax.f32 %v6176, 0.0
      %v6193 = vmax.f32 %v6177, 0.0
      %v6194 = vmax.f32 %v6178, 0.0
      %v6195 = vmax.f32 %v6179, 0.0
      %v6196 = vmax.f32 %v6180, 0.0
      %v6197 = vmax.f32 %v6181, 0.0
      %v6198 = vmax.f32 %v6182, 0.0
      %v6199 = vmax.f32 %v6183, 0.0
      %v6200 = vmax.f32 %v6184, 0.0
      %v6201 = vmax.f32 %v6185, 0.0
      %v6202 = vmax.f32 %v6186, 0.0
      %v6203 = vmax.f32 %v6187, 0.0
      %v6204 = vmax.f32 %v6188, 0.0
      %v6205 = vmax.f32 %v6189, 0.0
      %6206 = vst.msk [vmem:[%s2259 + $0x1] sm:$0xff] %vm339, %v6190
      %6207 = vst.msk [vmem:[%s2259 + $0x9] sm:$0xff] %vm339, %v6191
      %6208 = vst.msk [vmem:[%s2259 + $0x19] sm:$0xff] %vm339, %v6192
      %6209 = vst.msk [vmem:[%s2259 + $0x21] sm:$0xff] %vm339, %v6193
      %6210 = vst.msk [vmem:[%s2259 + $0x31] sm:$0xff] %vm339, %v6194
      %6211 = vst.msk [vmem:[%s2259 + $0x39] sm:$0xff] %vm339, %v6195
      %6212 = vst.msk [vmem:[%s2259 + $0x49] sm:$0xff] %vm339, %v6196
      %6213 = vst.msk [vmem:[%s2259 + $0x51] sm:$0xff] %vm339, %v6197
      %6214 = vst.msk [vmem:[%s2259 + $0x61] sm:$0xff] %vm339, %v6198
      %6215 = vst.msk [vmem:[%s2259 + $0x69] sm:$0xff] %vm339, %v6199
      %6216 = vst.msk [vmem:[%s2259 + $0x79] sm:$0xff] %vm339, %v6200
      %6217 = vst.msk [vmem:[%s2259 + $0x81] sm:$0xff] %vm339, %v6201
      %6218 = vst.msk [vmem:[%s2259 + $0x91] sm:$0xff] %vm339, %v6202
      %6219 = vst.msk [vmem:[%s2259 + $0x99] sm:$0xff] %vm339, %v6203
      %6220 = vst.msk [vmem:[%s2259 + $0xa9] sm:$0xff] %vm339, %v6204
      %6221 = vst.msk [vmem:[%s2259 + $0xb1] sm:$0xff] %vm339, %v6205
      %v6222 = vld [vmem:[#allocation2] sm:$0xff]
      %v6223 = vld [vmem:[#allocation2 + $0x8] sm:$0xff]
      %v6224 = vld [vmem:[#allocation2 + $0x10] sm:$0x3]
      %v6225 = vld [vmem:[#allocation2 + $0x18] sm:$0xff]
      %v6226 = vld [vmem:[#allocation2 + $0x20] sm:$0xff]
      %v6227 = vld [vmem:[#allocation2 + $0x28] sm:$0x3]
      %v6228 = vld [vmem:[#allocation2 + $0x30] sm:$0xff]
      %v6229 = vld [vmem:[#allocation2 + $0x38] sm:$0xff]
      %v6230 = vld [vmem:[#allocation2 + $0x40] sm:$0x3]
      %v6231 = vld [vmem:[#allocation2 + $0x48] sm:$0xff]
      %v6232 = vld [vmem:[#allocation2 + $0x50] sm:$0xff]
      %v6233 = vld [vmem:[#allocation2 + $0x58] sm:$0x3]
      %v6234 = vld [vmem:[#allocation2 + $0x60] sm:$0xff]
      %v6235 = vld [vmem:[#allocation2 + $0x68] sm:$0xff]
      %v6236 = vld [vmem:[#allocation2 + $0x70] sm:$0x3]
      %v6237 = vld [vmem:[#allocation2 + $0x78] sm:$0xff]
      %v6238 = vld [vmem:[#allocation2 + $0x80] sm:$0xff]
      %v6239 = vld [vmem:[#allocation2 + $0x88] sm:$0x3]
      %v6240 = vld [vmem:[#allocation2 + $0x90] sm:$0xff]
      %v6241 = vld [vmem:[#allocation2 + $0x98] sm:$0xff]
      %v6242 = vld [vmem:[#allocation2 + $0xa0] sm:$0x3]
      %v6243 = vld [vmem:[#allocation2 + $0xa8] sm:$0xff]
      %v6244 = vld [vmem:[#allocation2 + $0xb0] sm:$0xff]
      %v6245 = vld [vmem:[#allocation2 + $0xb8] sm:$0x3]
      %v6270 = vrot.slane %v6222, 1
      %v6271 = vrot.slane %v6223, 1
      %v6272 = vsel %vm666, %v6270, %v6271
      %v6273 = vrot.slane %v6224, 1
      %v6274 = vsel %vm666, %v6271, %v6273
      %v6275 = vrot.slane %v6225, 1
      %v6276 = vrot.slane %v6226, 1
      %v6277 = vsel %vm666, %v6275, %v6276
      %v6278 = vrot.slane %v6227, 1
      %v6279 = vsel %vm666, %v6276, %v6278
      %v6280 = vrot.slane %v6228, 1
      %v6281 = vrot.slane %v6229, 1
      %v6282 = vsel %vm666, %v6280, %v6281
      %v6283 = vrot.slane %v6230, 1
      %v6284 = vsel %vm666, %v6281, %v6283
      %v6285 = vrot.slane %v6231, 1
      %v6286 = vrot.slane %v6232, 1
      %v6287 = vsel %vm666, %v6285, %v6286
      %v6288 = vrot.slane %v6233, 1
      %v6289 = vsel %vm666, %v6286, %v6288
      %v6290 = vrot.slane %v6234, 1
      %v6291 = vrot.slane %v6235, 1
      %v6292 = vsel %vm666, %v6290, %v6291
      %v6293 = vrot.slane %v6236, 1
      %v6294 = vsel %vm666, %v6291, %v6293
      %v6295 = vrot.slane %v6237, 1
      %v6296 = vrot.slane %v6238, 1
      %v6297 = vsel %vm666, %v6295, %v6296
      %v6298 = vrot.slane %v6239, 1
      %v6299 = vsel %vm666, %v6296, %v6298
      %v6300 = vrot.slane %v6240, 1
      %v6301 = vrot.slane %v6241, 1
      %v6302 = vsel %vm666, %v6300, %v6301
      %v6303 = vrot.slane %v6242, 1
      %v6304 = vsel %vm666, %v6301, %v6303
      %v6305 = vrot.slane %v6243, 1
      %v6306 = vrot.slane %v6244, 1
      %v6307 = vsel %vm666, %v6305, %v6306
      %v6308 = vrot.slane %v6245, 1
      %v6309 = vsel %vm666, %v6306, %v6308
      %6310 = vrot.lane.b32.xlu0 %v6272, 4
      %v6311 = vpop.permute.xlu0 %6310
      %6312 = vrot.lane.b32.xlu0 %v6274, 4
      %v6313 = vpop.permute.xlu0 %6312
      %6314 = vrot.lane.b32.xlu0 %v6277, 4
      %v6315 = vpop.permute.xlu0 %6314
      %6316 = vrot.lane.b32.xlu0 %v6279, 4
      %v6317 = vpop.permute.xlu0 %6316
      %6318 = vrot.lane.b32.xlu0 %v6282, 4
      %v6319 = vpop.permute.xlu0 %6318
      %6320 = vrot.lane.b32.xlu0 %v6284, 4
      %v6321 = vpop.permute.xlu0 %6320
      %6322 = vrot.lane.b32.xlu0 %v6287, 4
      %v6323 = vpop.permute.xlu0 %6322
      %6324 = vrot.lane.b32.xlu0 %v6289, 4
      %v6325 = vpop.permute.xlu0 %6324
      %6326 = vrot.lane.b32.xlu0 %v6292, 4
      %v6327 = vpop.permute.xlu0 %6326
      %6328 = vrot.lane.b32.xlu0 %v6294, 4
      %v6329 = vpop.permute.xlu0 %6328
      %6330 = vrot.lane.b32.xlu0 %v6297, 4
      %v6331 = vpop.permute.xlu0 %6330
      %6332 = vrot.lane.b32.xlu0 %v6299, 4
      %v6333 = vpop.permute.xlu0 %6332
      %6334 = vrot.lane.b32.xlu0 %v6302, 4
      %v6335 = vpop.permute.xlu0 %6334
      %6336 = vrot.lane.b32.xlu0 %v6304, 4
      %v6337 = vpop.permute.xlu0 %6336
      %6338 = vrot.lane.b32.xlu0 %v6307, 4
      %v6339 = vpop.permute.xlu0 %6338
      %6340 = vrot.lane.b32.xlu0 %v6309, 4
      %v6341 = vpop.permute.xlu0 %6340
      %v6358 = vrot.slane %v6222, 2
      %v6359 = vrot.slane %v6223, 2
      %v6360 = vsel %vm755, %v6358, %v6359
      %v6361 = vrot.slane %v6224, 2
      %v6362 = vsel %vm755, %v6359, %v6361
      %v6363 = vrot.slane %v6225, 2
      %v6364 = vrot.slane %v6226, 2
      %v6365 = vsel %vm755, %v6363, %v6364
      %v6366 = vrot.slane %v6227, 2
      %v6367 = vsel %vm755, %v6364, %v6366
      %v6368 = vrot.slane %v6228, 2
      %v6369 = vrot.slane %v6229, 2
      %v6370 = vsel %vm755, %v6368, %v6369
      %v6371 = vrot.slane %v6230, 2
      %v6372 = vsel %vm755, %v6369, %v6371
      %v6373 = vrot.slane %v6231, 2
      %v6374 = vrot.slane %v6232, 2
      %v6375 = vsel %vm755, %v6373, %v6374
      %v6376 = vrot.slane %v6233, 2
      %v6377 = vsel %vm755, %v6374, %v6376
      %v6378 = vrot.slane %v6234, 2
      %v6379 = vrot.slane %v6235, 2
      %v6380 = vsel %vm755, %v6378, %v6379
      %v6381 = vrot.slane %v6236, 2
      %v6382 = vsel %vm755, %v6379, %v6381
      %v6383 = vrot.slane %v6237, 2
      %v6384 = vrot.slane %v6238, 2
      %v6385 = vsel %vm755, %v6383, %v6384
      %v6386 = vrot.slane %v6239, 2
      %v6387 = vsel %vm755, %v6384, %v6386
      %v6388 = vrot.slane %v6240, 2
      %v6389 = vrot.slane %v6241, 2
      %v6390 = vsel %vm755, %v6388, %v6389
      %v6391 = vrot.slane %v6242, 2
      %v6392 = vsel %vm755, %v6389, %v6391
      %v6393 = vrot.slane %v6243, 2
      %v6394 = vrot.slane %v6244, 2
      %v6395 = vsel %vm755, %v6393, %v6394
      %v6396 = vrot.slane %v6245, 2
      %v6397 = vsel %vm755, %v6394, %v6396
      %6398 = vrot.lane.b32.xlu0 %v6360, 8
      %v6399 = vpop.permute.xlu0 %6398
      %6400 = vrot.lane.b32.xlu0 %v6362, 8
      %v6401 = vpop.permute.xlu0 %6400
      %6402 = vrot.lane.b32.xlu0 %v6365, 8
      %v6403 = vpop.permute.xlu0 %6402
      %6404 = vrot.lane.b32.xlu0 %v6367, 8
      %v6405 = vpop.permute.xlu0 %6404
      %6406 = vrot.lane.b32.xlu0 %v6370, 8
      %v6407 = vpop.permute.xlu0 %6406
      %6408 = vrot.lane.b32.xlu0 %v6372, 8
      %v6409 = vpop.permute.xlu0 %6408
      %6410 = vrot.lane.b32.xlu0 %v6375, 8
      %v6411 = vpop.permute.xlu0 %6410
      %6412 = vrot.lane.b32.xlu0 %v6377, 8
      %v6413 = vpop.permute.xlu0 %6412
      %6414 = vrot.lane.b32.xlu0 %v6380, 8
      %v6415 = vpop.permute.xlu0 %6414
      %6416 = vrot.lane.b32.xlu0 %v6382, 8
      %v6417 = vpop.permute.xlu0 %6416
      %6418 = vrot.lane.b32.xlu0 %v6385, 8
      %v6419 = vpop.permute.xlu0 %6418
      %6420 = vrot.lane.b32.xlu0 %v6387, 8
      %v6421 = vpop.permute.xlu0 %6420
      %6422 = vrot.lane.b32.xlu0 %v6390, 8
      %v6423 = vpop.permute.xlu0 %6422
      %6424 = vrot.lane.b32.xlu0 %v6392, 8
      %v6425 = vpop.permute.xlu0 %6424
      %6426 = vrot.lane.b32.xlu0 %v6395, 8
      %v6427 = vpop.permute.xlu0 %6426
      %6428 = vrot.lane.b32.xlu0 %v6397, 8
      %v6429 = vpop.permute.xlu0 %6428
      %v6446 = vsel %vm339, %v6222, %v6311
      %v6447 = vsel %vm339, %v6223, %v6313
      %v6448 = vsel %vm339, %v6225, %v6315
      %v6449 = vsel %vm339, %v6226, %v6317
      %v6450 = vsel %vm339, %v6228, %v6319
      %v6451 = vsel %vm339, %v6229, %v6321
      %v6452 = vsel %vm339, %v6231, %v6323
      %v6453 = vsel %vm339, %v6232, %v6325
      %v6454 = vsel %vm339, %v6234, %v6327
      %v6455 = vsel %vm339, %v6235, %v6329
      %v6456 = vsel %vm339, %v6237, %v6331
      %v6457 = vsel %vm339, %v6238, %v6333
      %v6458 = vsel %vm339, %v6240, %v6335
      %v6459 = vsel %vm339, %v6241, %v6337
      %v6460 = vsel %vm339, %v6243, %v6339
      %v6461 = vsel %vm339, %v6244, %v6341
      %v6462 = vsel %vm860, %v6446, %v6399
      %v6463 = vsel %vm860, %v6447, %v6401
      %v6464 = vsel %vm860, %v6448, %v6403
      %v6465 = vsel %vm860, %v6449, %v6405
      %v6466 = vsel %vm860, %v6450, %v6407
      %v6467 = vsel %vm860, %v6451, %v6409
      %v6468 = vsel %vm860, %v6452, %v6411
      %v6469 = vsel %vm860, %v6453, %v6413
      %v6470 = vsel %vm860, %v6454, %v6415
      %v6471 = vsel %vm860, %v6455, %v6417
      %v6472 = vsel %vm860, %v6456, %v6419
      %v6473 = vsel %vm860, %v6457, %v6421
      %v6474 = vsel %vm860, %v6458, %v6423
      %v6475 = vsel %vm860, %v6459, %v6425
      %v6476 = vsel %vm860, %v6460, %v6427
      %v6477 = vsel %vm860, %v6461, %v6429
      %v6478 = vpack.c.bf16 %v6463, %v6462
      %v6479 = vpack.c.bf16 %v6465, %v6464
      %v6480 = vpack.c.bf16 %v6467, %v6466
      %v6481 = vpack.c.bf16 %v6469, %v6468
      %v6482 = vpack.c.bf16 %v6471, %v6470
      %v6483 = vpack.c.bf16 %v6473, %v6472
      %v6484 = vpack.c.bf16 %v6475, %v6474
      %v6485 = vpack.c.bf16 %v6477, %v6476
      %v6486 = vld [vmem:[%s385] sm:$0xff]
      %v6487 = vld [vmem:[%s385 + $0x8] sm:$0xff]
      %v6488 = vld [vmem:[%s385 + $0x10] sm:$0x3]
      %v6489 = vld [vmem:[%s385 + $0x18] sm:$0xff]
      %v6490 = vld [vmem:[%s385 + $0x20] sm:$0xff]
      %v6491 = vld [vmem:[%s385 + $0x28] sm:$0x3]
      %v6492 = vld [vmem:[%s385 + $0x30] sm:$0xff]
      %v6493 = vld [vmem:[%s385 + $0x38] sm:$0xff]
      %v6494 = vld [vmem:[%s385 + $0x40] sm:$0x3]
      %v6495 = vld [vmem:[%s385 + $0x48] sm:$0xff]
      %v6496 = vld [vmem:[%s385 + $0x50] sm:$0xff]
      %v6497 = vld [vmem:[%s385 + $0x58] sm:$0x3]
      %v6498 = vld [vmem:[%s385 + $0x60] sm:$0xff]
      %v6499 = vld [vmem:[%s385 + $0x68] sm:$0xff]
      %v6500 = vld [vmem:[%s385 + $0x70] sm:$0x3]
      %v6501 = vld [vmem:[%s385 + $0x78] sm:$0xff]
      %v6502 = vld [vmem:[%s385 + $0x80] sm:$0xff]
      %v6503 = vld [vmem:[%s385 + $0x88] sm:$0x3]
      %v6504 = vld [vmem:[%s385 + $0x90] sm:$0xff]
      %v6505 = vld [vmem:[%s385 + $0x98] sm:$0xff]
      %v6506 = vld [vmem:[%s385 + $0xa0] sm:$0x3]
      %v6507 = vld [vmem:[%s385 + $0xa8] sm:$0xff]
      %v6508 = vld [vmem:[%s385 + $0xb0] sm:$0xff]
      %v6509 = vld [vmem:[%s385 + $0xb8] sm:$0x3]
      %v6534 = vrot.slane %v6486, 1
      %v6535 = vrot.slane %v6487, 1
      %v6536 = vsel %vm666, %v6534, %v6535
      %v6537 = vrot.slane %v6488, 1
      %v6538 = vsel %vm666, %v6535, %v6537
      %v6539 = vrot.slane %v6489, 1
      %v6540 = vrot.slane %v6490, 1
      %v6541 = vsel %vm666, %v6539, %v6540
      %v6542 = vrot.slane %v6491, 1
      %v6543 = vsel %vm666, %v6540, %v6542
      %v6544 = vrot.slane %v6492, 1
      %v6545 = vrot.slane %v6493, 1
      %v6546 = vsel %vm666, %v6544, %v6545
      %v6547 = vrot.slane %v6494, 1
      %v6548 = vsel %vm666, %v6545, %v6547
      %v6549 = vrot.slane %v6495, 1
      %v6550 = vrot.slane %v6496, 1
      %v6551 = vsel %vm666, %v6549, %v6550
      %v6552 = vrot.slane %v6497, 1
      %v6553 = vsel %vm666, %v6550, %v6552
      %v6554 = vrot.slane %v6498, 1
      %v6555 = vrot.slane %v6499, 1
      %v6556 = vsel %vm666, %v6554, %v6555
      %v6557 = vrot.slane %v6500, 1
      %v6558 = vsel %vm666, %v6555, %v6557
      %v6559 = vrot.slane %v6501, 1
      %v6560 = vrot.slane %v6502, 1
      %v6561 = vsel %vm666, %v6559, %v6560
      %v6562 = vrot.slane %v6503, 1
      %v6563 = vsel %vm666, %v6560, %v6562
      %v6564 = vrot.slane %v6504, 1
      %v6565 = vrot.slane %v6505, 1
      %v6566 = vsel %vm666, %v6564, %v6565
      %v6567 = vrot.slane %v6506, 1
      %v6568 = vsel %vm666, %v6565, %v6567
      %v6569 = vrot.slane %v6507, 1
      %v6570 = vrot.slane %v6508, 1
      %v6571 = vsel %vm666, %v6569, %v6570
      %v6572 = vrot.slane %v6509, 1
      %v6573 = vsel %vm666, %v6570, %v6572
      %6574 = vrot.lane.b32.xlu0 %v6536, 4
      %v6575 = vpop.permute.xlu0 %6574
      %6576 = vrot.lane.b32.xlu0 %v6538, 4
      %v6577 = vpop.permute.xlu0 %6576
      %6578 = vrot.lane.b32.xlu0 %v6541, 4
      %v6579 = vpop.permute.xlu0 %6578
      %6580 = vrot.lane.b32.xlu0 %v6543, 4
      %v6581 = vpop.permute.xlu0 %6580
      %6582 = vrot.lane.b32.xlu0 %v6546, 4
      %v6583 = vpop.permute.xlu0 %6582
      %6584 = vrot.lane.b32.xlu0 %v6548, 4
      %v6585 = vpop.permute.xlu0 %6584
      %6586 = vrot.lane.b32.xlu0 %v6551, 4
      %v6587 = vpop.permute.xlu0 %6586
      %6588 = vrot.lane.b32.xlu0 %v6553, 4
      %v6589 = vpop.permute.xlu0 %6588
      %6590 = vrot.lane.b32.xlu0 %v6556, 4
      %v6591 = vpop.permute.xlu0 %6590
      %6592 = vrot.lane.b32.xlu0 %v6558, 4
      %v6593 = vpop.permute.xlu0 %6592
      %6594 = vrot.lane.b32.xlu0 %v6561, 4
      %v6595 = vpop.permute.xlu0 %6594
      %6596 = vrot.lane.b32.xlu0 %v6563, 4
      %v6597 = vpop.permute.xlu0 %6596
      %6598 = vrot.lane.b32.xlu0 %v6566, 4
      %v6599 = vpop.permute.xlu0 %6598
      %6600 = vrot.lane.b32.xlu0 %v6568, 4
      %v6601 = vpop.permute.xlu0 %6600
      %6602 = vrot.lane.b32.xlu0 %v6571, 4
      %v6603 = vpop.permute.xlu0 %6602
      %6604 = vrot.lane.b32.xlu0 %v6573, 4
      %v6605 = vpop.permute.xlu0 %6604
      %v6622 = vrot.slane %v6486, 2
      %v6623 = vrot.slane %v6487, 2
      %v6624 = vsel %vm755, %v6622, %v6623
      %v6625 = vrot.slane %v6488, 2
      %v6626 = vsel %vm755, %v6623, %v6625
      %v6627 = vrot.slane %v6489, 2
      %v6628 = vrot.slane %v6490, 2
      %v6629 = vsel %vm755, %v6627, %v6628
      %v6630 = vrot.slane %v6491, 2
      %v6631 = vsel %vm755, %v6628, %v6630
      %v6632 = vrot.slane %v6492, 2
      %v6633 = vrot.slane %v6493, 2
      %v6634 = vsel %vm755, %v6632, %v6633
      %v6635 = vrot.slane %v6494, 2
      %v6636 = vsel %vm755, %v6633, %v6635
      %v6637 = vrot.slane %v6495, 2
      %v6638 = vrot.slane %v6496, 2
      %v6639 = vsel %vm755, %v6637, %v6638
      %v6640 = vrot.slane %v6497, 2
      %v6641 = vsel %vm755, %v6638, %v6640
      %v6642 = vrot.slane %v6498, 2
      %v6643 = vrot.slane %v6499, 2
      %v6644 = vsel %vm755, %v6642, %v6643
      %v6645 = vrot.slane %v6500, 2
      %v6646 = vsel %vm755, %v6643, %v6645
      %v6647 = vrot.slane %v6501, 2
      %v6648 = vrot.slane %v6502, 2
      %v6649 = vsel %vm755, %v6647, %v6648
      %v6650 = vrot.slane %v6503, 2
      %v6651 = vsel %vm755, %v6648, %v6650
      %v6652 = vrot.slane %v6504, 2
      %v6653 = vrot.slane %v6505, 2
      %v6654 = vsel %vm755, %v6652, %v6653
      %v6655 = vrot.slane %v6506, 2
      %v6656 = vsel %vm755, %v6653, %v6655
      %v6657 = vrot.slane %v6507, 2
      %v6658 = vrot.slane %v6508, 2
      %v6659 = vsel %vm755, %v6657, %v6658
      %v6660 = vrot.slane %v6509, 2
      %v6661 = vsel %vm755, %v6658, %v6660
      %6662 = vrot.lane.b32.xlu0 %v6624, 8
      %v6663 = vpop.permute.xlu0 %6662
      %6664 = vrot.lane.b32.xlu0 %v6626, 8
      %v6665 = vpop.permute.xlu0 %6664
      %6666 = vrot.lane.b32.xlu0 %v6629, 8
      %v6667 = vpop.permute.xlu0 %6666
      %6668 = vrot.lane.b32.xlu0 %v6631, 8
      %v6669 = vpop.permute.xlu0 %6668
      %6670 = vrot.lane.b32.xlu0 %v6634, 8
      %v6671 = vpop.permute.xlu0 %6670
      %6672 = vrot.lane.b32.xlu0 %v6636, 8
      %v6673 = vpop.permute.xlu0 %6672
      %6674 = vrot.lane.b32.xlu0 %v6639, 8
      %v6675 = vpop.permute.xlu0 %6674
      %6676 = vrot.lane.b32.xlu0 %v6641, 8
      %v6677 = vpop.permute.xlu0 %6676
      %6678 = vrot.lane.b32.xlu0 %v6644, 8
      %v6679 = vpop.permute.xlu0 %6678
      %6680 = vrot.lane.b32.xlu0 %v6646, 8
      %v6681 = vpop.permute.xlu0 %6680
      %6682 = vrot.lane.b32.xlu0 %v6649, 8
      %v6683 = vpop.permute.xlu0 %6682
      %6684 = vrot.lane.b32.xlu0 %v6651, 8
      %v6685 = vpop.permute.xlu0 %6684
      %6686 = vrot.lane.b32.xlu0 %v6654, 8
      %v6687 = vpop.permute.xlu0 %6686
      %6688 = vrot.lane.b32.xlu0 %v6656, 8
      %v6689 = vpop.permute.xlu0 %6688
      %6690 = vrot.lane.b32.xlu0 %v6659, 8
      %v6691 = vpop.permute.xlu0 %6690
      %6692 = vrot.lane.b32.xlu0 %v6661, 8
      %v6693 = vpop.permute.xlu0 %6692
      %v6710 = vsel %vm339, %v6486, %v6575
      %v6711 = vsel %vm339, %v6487, %v6577
      %v6712 = vsel %vm339, %v6489, %v6579
      %v6713 = vsel %vm339, %v6490, %v6581
      %v6714 = vsel %vm339, %v6492, %v6583
      %v6715 = vsel %vm339, %v6493, %v6585
      %v6716 = vsel %vm339, %v6495, %v6587
      %v6717 = vsel %vm339, %v6496, %v6589
      %v6718 = vsel %vm339, %v6498, %v6591
      %v6719 = vsel %vm339, %v6499, %v6593
      %v6720 = vsel %vm339, %v6501, %v6595
      %v6721 = vsel %vm339, %v6502, %v6597
      %v6722 = vsel %vm339, %v6504, %v6599
      %v6723 = vsel %vm339, %v6505, %v6601
      %v6724 = vsel %vm339, %v6507, %v6603
      %v6725 = vsel %vm339, %v6508, %v6605
      %v6726 = vsel %vm860, %v6710, %v6663
      %v6727 = vsel %vm860, %v6711, %v6665
      %v6728 = vsel %vm860, %v6712, %v6667
      %v6729 = vsel %vm860, %v6713, %v6669
      %v6730 = vsel %vm860, %v6714, %v6671
      %v6731 = vsel %vm860, %v6715, %v6673
      %v6732 = vsel %vm860, %v6716, %v6675
      %v6733 = vsel %vm860, %v6717, %v6677
      %v6734 = vsel %vm860, %v6718, %v6679
      %v6735 = vsel %vm860, %v6719, %v6681
      %v6736 = vsel %vm860, %v6720, %v6683
      %v6737 = vsel %vm860, %v6721, %v6685
      %v6738 = vsel %vm860, %v6722, %v6687
      %v6739 = vsel %vm860, %v6723, %v6689
      %v6740 = vsel %vm860, %v6724, %v6691
      %v6741 = vsel %vm860, %v6725, %v6693
      %v6742 = vpack.c.bf16 %v6727, %v6726
      %v6743 = vpack.c.bf16 %v6729, %v6728
      %v6744 = vpack.c.bf16 %v6731, %v6730
      %v6745 = vpack.c.bf16 %v6733, %v6732
      %v6746 = vpack.c.bf16 %v6735, %v6734
      %v6747 = vpack.c.bf16 %v6737, %v6736
      %v6748 = vpack.c.bf16 %v6739, %v6738
      %v6749 = vpack.c.bf16 %v6741, %v6740
      %v6751 = vsel %vm1157, %v615, 0
      %v6754 = vsel %vm1157, %v6742, 0
      %v6757 = vsel %vm1157, %v6743, 0
      %v6760 = vsel %vm1157, %v6744, 0
      %v6763 = vsel %vm1157, %v6745, 0
      %v6766 = vsel %vm1157, %v6746, 0
      %v6769 = vsel %vm1157, %v6747, 0
      %v6772 = vsel %vm1157, %v6748, 0
      %v6775 = vsel %vm1157, %v6749, 0
      %6777 = vmatpush.bf16.xpose.msra.mxu0 %v6775
      %6778 = vmatpush.bf16.xpose.msra.mxu0 %v6772
      %6779 = vmatpush.bf16.xpose.msra.mxu0 %v6769
      %6780 = vmatpush.bf16.xpose.msra.mxu0 %v6766
      %6781 = vmatpush.bf16.xpose.msra.mxu0 %v6763
      %6782 = vmatpush.bf16.xpose.msra.mxu0 %v6760
      %6783 = vmatpush.bf16.xpose.msra.mxu0 %v6757
      %6784 = vmatpush.bf16.xpose.msra.mxu0 %v6754
      %6785 = vmatmul.bf16.gmra.mxu0 %v6751
      %v6786 = vpop.f32.mrf.mxu0
      %v6787 = vadd.f32 0.0, %v6786
      %v6788 = vpop.f32.mrf.mxu0
      %6789 = vdwg.mxu0
      %v6791 = vsel %vm1157, %v614, 0
      %v6794 = vsel %vm1157, %v6478, 0
      %v6797 = vsel %vm1157, %v6479, 0
      %v6800 = vsel %vm1157, %v6480, 0
      %v6803 = vsel %vm1157, %v6481, 0
      %v6806 = vsel %vm1157, %v6482, 0
      %v6809 = vsel %vm1157, %v6483, 0
      %v6812 = vsel %vm1157, %v6484, 0
      %v6815 = vsel %vm1157, %v6485, 0
      %6817 = vmatpush.bf16.xpose.msra.mxu0 %v6815
      %6818 = vmatpush.bf16.xpose.msra.mxu0 %v6812
      %6819 = vmatpush.bf16.xpose.msra.mxu0 %v6809
      %6820 = vmatpush.bf16.xpose.msra.mxu0 %v6806
      %6821 = vmatpush.bf16.xpose.msra.mxu0 %v6803
      %6822 = vmatpush.bf16.xpose.msra.mxu0 %v6800
      %6823 = vmatpush.bf16.xpose.msra.mxu0 %v6797
      %6824 = vmatpush.bf16.xpose.msra.mxu0 %v6794
      %6825 = vmatmul.bf16.gmra.mxu0 %v6791
      %v6826 = vpop.f32.mrf.mxu0
      %v6827 = vadd.f32 %v6787, %v6826
      %v6828 = vpop.f32.mrf.mxu0
      %6829 = vdwg.mxu0
      %v6830 = vld [vmem:[%s1422] sm:$0xff]
      %v6831 = vld [vmem:[%s1422 + $0x8] sm:$0xff]
      %v6832 = vld [vmem:[%s1422 + $0x10] sm:$0x3]
      %v6833 = vld [vmem:[%s1422 + $0x18] sm:$0xff]
      %v6834 = vld [vmem:[%s1422 + $0x20] sm:$0xff]
      %v6835 = vld [vmem:[%s1422 + $0x28] sm:$0x3]
      %v6836 = vld [vmem:[%s1422 + $0x30] sm:$0xff]
      %v6837 = vld [vmem:[%s1422 + $0x38] sm:$0xff]
      %v6838 = vld [vmem:[%s1422 + $0x40] sm:$0x3]
      %v6839 = vld [vmem:[%s1422 + $0x48] sm:$0xff]
      %v6840 = vld [vmem:[%s1422 + $0x50] sm:$0xff]
      %v6841 = vld [vmem:[%s1422 + $0x58] sm:$0x3]
      %v6842 = vld [vmem:[%s1422 + $0x60] sm:$0xff]
      %v6843 = vld [vmem:[%s1422 + $0x68] sm:$0xff]
      %v6844 = vld [vmem:[%s1422 + $0x70] sm:$0x3]
      %v6845 = vld [vmem:[%s1422 + $0x78] sm:$0xff]
      %v6846 = vld [vmem:[%s1422 + $0x80] sm:$0xff]
      %v6847 = vld [vmem:[%s1422 + $0x88] sm:$0x3]
      %v6848 = vld [vmem:[%s1422 + $0x90] sm:$0xff]
      %v6849 = vld [vmem:[%s1422 + $0x98] sm:$0xff]
      %v6850 = vld [vmem:[%s1422 + $0xa0] sm:$0x3]
      %v6851 = vld [vmem:[%s1422 + $0xa8] sm:$0xff]
      %v6852 = vld [vmem:[%s1422 + $0xb0] sm:$0xff]
      %v6853 = vld [vmem:[%s1422 + $0xb8] sm:$0x3]
      %v6878 = vrot.slane %v6830, 1
      %v6879 = vrot.slane %v6831, 1
      %v6880 = vsel %vm666, %v6878, %v6879
      %v6881 = vrot.slane %v6832, 1
      %v6882 = vsel %vm666, %v6879, %v6881
      %v6883 = vrot.slane %v6833, 1
      %v6884 = vrot.slane %v6834, 1
      %v6885 = vsel %vm666, %v6883, %v6884
      %v6886 = vrot.slane %v6835, 1
      %v6887 = vsel %vm666, %v6884, %v6886
      %v6888 = vrot.slane %v6836, 1
      %v6889 = vrot.slane %v6837, 1
      %v6890 = vsel %vm666, %v6888, %v6889
      %v6891 = vrot.slane %v6838, 1
      %v6892 = vsel %vm666, %v6889, %v6891
      %v6893 = vrot.slane %v6839, 1
      %v6894 = vrot.slane %v6840, 1
      %v6895 = vsel %vm666, %v6893, %v6894
      %v6896 = vrot.slane %v6841, 1
      %v6897 = vsel %vm666, %v6894, %v6896
      %v6898 = vrot.slane %v6842, 1
      %v6899 = vrot.slane %v6843, 1
      %v6900 = vsel %vm666, %v6898, %v6899
      %v6901 = vrot.slane %v6844, 1
      %v6902 = vsel %vm666, %v6899, %v6901
      %v6903 = vrot.slane %v6845, 1
      %v6904 = vrot.slane %v6846, 1
      %v6905 = vsel %vm666, %v6903, %v6904
      %v6906 = vrot.slane %v6847, 1
      %v6907 = vsel %vm666, %v6904, %v6906
      %v6908 = vrot.slane %v6848, 1
      %v6909 = vrot.slane %v6849, 1
      %v6910 = vsel %vm666, %v6908, %v6909
      %v6911 = vrot.slane %v6850, 1
      %v6912 = vsel %vm666, %v6909, %v6911
      %v6913 = vrot.slane %v6851, 1
      %v6914 = vrot.slane %v6852, 1
      %v6915 = vsel %vm666, %v6913, %v6914
      %v6916 = vrot.slane %v6853, 1
      %v6917 = vsel %vm666, %v6914, %v6916
      %6918 = vrot.lane.b32.xlu0 %v6880, 4
      %v6919 = vpop.permute.xlu0 %6918
      %6920 = vrot.lane.b32.xlu0 %v6882, 4
      %v6921 = vpop.permute.xlu0 %6920
      %6922 = vrot.lane.b32.xlu0 %v6885, 4
      %v6923 = vpop.permute.xlu0 %6922
      %6924 = vrot.lane.b32.xlu0 %v6887, 4
      %v6925 = vpop.permute.xlu0 %6924
      %6926 = vrot.lane.b32.xlu0 %v6890, 4
      %v6927 = vpop.permute.xlu0 %6926
      %6928 = vrot.lane.b32.xlu0 %v6892, 4
      %v6929 = vpop.permute.xlu0 %6928
      %6930 = vrot.lane.b32.xlu0 %v6895, 4
      %v6931 = vpop.permute.xlu0 %6930
      %6932 = vrot.lane.b32.xlu0 %v6897, 4
      %v6933 = vpop.permute.xlu0 %6932
      %6934 = vrot.lane.b32.xlu0 %v6900, 4
      %v6935 = vpop.permute.xlu0 %6934
      %6936 = vrot.lane.b32.xlu0 %v6902, 4
      %v6937 = vpop.permute.xlu0 %6936
      %6938 = vrot.lane.b32.xlu0 %v6905, 4
      %v6939 = vpop.permute.xlu0 %6938
      %6940 = vrot.lane.b32.xlu0 %v6907, 4
      %v6941 = vpop.permute.xlu0 %6940
      %6942 = vrot.lane.b32.xlu0 %v6910, 4
      %v6943 = vpop.permute.xlu0 %6942
      %6944 = vrot.lane.b32.xlu0 %v6912, 4
      %v6945 = vpop.permute.xlu0 %6944
      %6946 = vrot.lane.b32.xlu0 %v6915, 4
      %v6947 = vpop.permute.xlu0 %6946
      %6948 = vrot.lane.b32.xlu0 %v6917, 4
      %v6949 = vpop.permute.xlu0 %6948
      %v6966 = vrot.slane %v6830, 2
      %v6967 = vrot.slane %v6831, 2
      %v6968 = vsel %vm755, %v6966, %v6967
      %v6969 = vrot.slane %v6832, 2
      %v6970 = vsel %vm755, %v6967, %v6969
      %v6971 = vrot.slane %v6833, 2
      %v6972 = vrot.slane %v6834, 2
      %v6973 = vsel %vm755, %v6971, %v6972
      %v6974 = vrot.slane %v6835, 2
      %v6975 = vsel %vm755, %v6972, %v6974
      %v6976 = vrot.slane %v6836, 2
      %v6977 = vrot.slane %v6837, 2
      %v6978 = vsel %vm755, %v6976, %v6977
      %v6979 = vrot.slane %v6838, 2
      %v6980 = vsel %vm755, %v6977, %v6979
      %v6981 = vrot.slane %v6839, 2
      %v6982 = vrot.slane %v6840, 2
      %v6983 = vsel %vm755, %v6981, %v6982
      %v6984 = vrot.slane %v6841, 2
      %v6985 = vsel %vm755, %v6982, %v6984
      %v6986 = vrot.slane %v6842, 2
      %v6987 = vrot.slane %v6843, 2
      %v6988 = vsel %vm755, %v6986, %v6987
      %v6989 = vrot.slane %v6844, 2
      %v6990 = vsel %vm755, %v6987, %v6989
      %v6991 = vrot.slane %v6845, 2
      %v6992 = vrot.slane %v6846, 2
      %v6993 = vsel %vm755, %v6991, %v6992
      %v6994 = vrot.slane %v6847, 2
      %v6995 = vsel %vm755, %v6992, %v6994
      %v6996 = vrot.slane %v6848, 2
      %v6997 = vrot.slane %v6849, 2
      %v6998 = vsel %vm755, %v6996, %v6997
      %v6999 = vrot.slane %v6850, 2
      %v7000 = vsel %vm755, %v6997, %v6999
      %v7001 = vrot.slane %v6851, 2
      %v7002 = vrot.slane %v6852, 2
      %v7003 = vsel %vm755, %v7001, %v7002
      %v7004 = vrot.slane %v6853, 2
      %v7005 = vsel %vm755, %v7002, %v7004
      %7006 = vrot.lane.b32.xlu0 %v6968, 8
      %v7007 = vpop.permute.xlu0 %7006
      %7008 = vrot.lane.b32.xlu0 %v6970, 8
      %v7009 = vpop.permute.xlu0 %7008
      %7010 = vrot.lane.b32.xlu0 %v6973, 8
      %v7011 = vpop.permute.xlu0 %7010
      %7012 = vrot.lane.b32.xlu0 %v6975, 8
      %v7013 = vpop.permute.xlu0 %7012
      %7014 = vrot.lane.b32.xlu0 %v6978, 8
      %v7015 = vpop.permute.xlu0 %7014
      %7016 = vrot.lane.b32.xlu0 %v6980, 8
      %v7017 = vpop.permute.xlu0 %7016
      %7018 = vrot.lane.b32.xlu0 %v6983, 8
      %v7019 = vpop.permute.xlu0 %7018
      %7020 = vrot.lane.b32.xlu0 %v6985, 8
      %v7021 = vpop.permute.xlu0 %7020
      %7022 = vrot.lane.b32.xlu0 %v6988, 8
      %v7023 = vpop.permute.xlu0 %7022
      %7024 = vrot.lane.b32.xlu0 %v6990, 8
      %v7025 = vpop.permute.xlu0 %7024
      %7026 = vrot.lane.b32.xlu0 %v6993, 8
      %v7027 = vpop.permute.xlu0 %7026
      %7028 = vrot.lane.b32.xlu0 %v6995, 8
      %v7029 = vpop.permute.xlu0 %7028
      %7030 = vrot.lane.b32.xlu0 %v6998, 8
      %v7031 = vpop.permute.xlu0 %7030
      %7032 = vrot.lane.b32.xlu0 %v7000, 8
      %v7033 = vpop.permute.xlu0 %7032
      %7034 = vrot.lane.b32.xlu0 %v7003, 8
      %v7035 = vpop.permute.xlu0 %7034
      %7036 = vrot.lane.b32.xlu0 %v7005, 8
      %v7037 = vpop.permute.xlu0 %7036
      %v7054 = vsel %vm339, %v6830, %v6919
      %v7055 = vsel %vm339, %v6831, %v6921
      %v7056 = vsel %vm339, %v6833, %v6923
      %v7057 = vsel %vm339, %v6834, %v6925
      %v7058 = vsel %vm339, %v6836, %v6927
      %v7059 = vsel %vm339, %v6837, %v6929
      %v7060 = vsel %vm339, %v6839, %v6931
      %v7061 = vsel %vm339, %v6840, %v6933
      %v7062 = vsel %vm339, %v6842, %v6935
      %v7063 = vsel %vm339, %v6843, %v6937
      %v7064 = vsel %vm339, %v6845, %v6939
      %v7065 = vsel %vm339, %v6846, %v6941
      %v7066 = vsel %vm339, %v6848, %v6943
      %v7067 = vsel %vm339, %v6849, %v6945
      %v7068 = vsel %vm339, %v6851, %v6947
      %v7069 = vsel %vm339, %v6852, %v6949
      %v7070 = vsel %vm860, %v7054, %v7007
      %v7071 = vsel %vm860, %v7055, %v7009
      %v7072 = vsel %vm860, %v7056, %v7011
      %v7073 = vsel %vm860, %v7057, %v7013
      %v7074 = vsel %vm860, %v7058, %v7015
      %v7075 = vsel %vm860, %v7059, %v7017
      %v7076 = vsel %vm860, %v7060, %v7019
      %v7077 = vsel %vm860, %v7061, %v7021
      %v7078 = vsel %vm860, %v7062, %v7023
      %v7079 = vsel %vm860, %v7063, %v7025
      %v7080 = vsel %vm860, %v7064, %v7027
      %v7081 = vsel %vm860, %v7065, %v7029
      %v7082 = vsel %vm860, %v7066, %v7031
      %v7083 = vsel %vm860, %v7067, %v7033
      %v7084 = vsel %vm860, %v7068, %v7035
      %v7085 = vsel %vm860, %v7069, %v7037
      %v7086 = vpack.c.bf16 %v7071, %v7070
      %v7087 = vpack.c.bf16 %v7073, %v7072
      %v7088 = vpack.c.bf16 %v7075, %v7074
      %v7089 = vpack.c.bf16 %v7077, %v7076
      %v7090 = vpack.c.bf16 %v7079, %v7078
      %v7091 = vpack.c.bf16 %v7081, %v7080
      %v7092 = vpack.c.bf16 %v7083, %v7082
      %v7093 = vpack.c.bf16 %v7085, %v7084
      %v7095 = vsel %vm1157, %v616, 0
      %v7098 = vsel %vm1157, %v7086, 0
      %v7101 = vsel %vm1157, %v7087, 0
      %v7104 = vsel %vm1157, %v7088, 0
      %v7107 = vsel %vm1157, %v7089, 0
      %v7110 = vsel %vm1157, %v7090, 0
      %v7113 = vsel %vm1157, %v7091, 0
      %v7116 = vsel %vm1157, %v7092, 0
      %v7119 = vsel %vm1157, %v7093, 0
      %7121 = vmatpush.bf16.xpose.msra.mxu0 %v7119
      %7122 = vmatpush.bf16.xpose.msra.mxu0 %v7116
      %7123 = vmatpush.bf16.xpose.msra.mxu0 %v7113
      %7124 = vmatpush.bf16.xpose.msra.mxu0 %v7110
      %7125 = vmatpush.bf16.xpose.msra.mxu0 %v7107
      %7126 = vmatpush.bf16.xpose.msra.mxu0 %v7104
      %7127 = vmatpush.bf16.xpose.msra.mxu0 %v7101
      %7128 = vmatpush.bf16.xpose.msra.mxu0 %v7098
      %7129 = vmatmul.bf16.gmra.mxu0 %v7095
      %v7130 = vpop.f32.mrf.mxu0
      %v7131 = vadd.f32 0.0, %v7130
      %v7132 = vpop.f32.mrf.mxu0
      %7133 = vdwg.mxu0
      %v7134 = vadd.f32 %v6827, %v7131
      %7136 = vset.pattern.permute.xlu0 0
      %7137 = vperm.xlu0 %7136, %v617
      %v7138 = vpop.permute.xlu0 %7137
      %v7140 = vadd.f32 %v7134, %v7138
      %v7141 = vmax.f32 %v7140, 0.0
      %7142 = vst [vmem:[%s305] sm:$0xf] %v7141
      %v7143 = vld [vmem:[%s1994] sm:$0xff]
      %v7144 = vld [vmem:[%s1994 + $0x8] sm:$0xff]
      %v7145 = vld [vmem:[%s1994 + $0x10] sm:$0x3]
      %v7146 = vld [vmem:[%s1994 + $0x18] sm:$0xff]
      %v7147 = vld [vmem:[%s1994 + $0x20] sm:$0xff]
      %v7148 = vld [vmem:[%s1994 + $0x28] sm:$0x3]
      %v7149 = vld [vmem:[%s1994 + $0x30] sm:$0xff]
      %v7150 = vld [vmem:[%s1994 + $0x38] sm:$0xff]
      %v7151 = vld [vmem:[%s1994 + $0x40] sm:$0x3]
      %v7152 = vld [vmem:[%s1994 + $0x48] sm:$0xff]
      %v7153 = vld [vmem:[%s1994 + $0x50] sm:$0xff]
      %v7154 = vld [vmem:[%s1994 + $0x58] sm:$0x3]
      %v7155 = vld [vmem:[%s1994 + $0x60] sm:$0xff]
      %v7156 = vld [vmem:[%s1994 + $0x68] sm:$0xff]
      %v7157 = vld [vmem:[%s1994 + $0x70] sm:$0x3]
      %v7158 = vld [vmem:[%s1994 + $0x78] sm:$0xff]
      %v7159 = vld [vmem:[%s1994 + $0x80] sm:$0xff]
      %v7160 = vld [vmem:[%s1994 + $0x88] sm:$0x3]
      %v7161 = vld [vmem:[%s1994 + $0x90] sm:$0xff]
      %v7162 = vld [vmem:[%s1994 + $0x98] sm:$0xff]
      %v7163 = vld [vmem:[%s1994 + $0xa0] sm:$0x3]
      %v7164 = vld [vmem:[%s1994 + $0xa8] sm:$0xff]
      %v7165 = vld [vmem:[%s1994 + $0xb0] sm:$0xff]
      %v7166 = vld [vmem:[%s1994 + $0xb8] sm:$0x3]
      %v7191 = vrot.slane %v7143, 1
      %v7192 = vrot.slane %v7144, 1
      %v7193 = vsel %vm666, %v7191, %v7192
      %v7194 = vrot.slane %v7145, 1
      %v7195 = vsel %vm666, %v7192, %v7194
      %v7196 = vrot.slane %v7146, 1
      %v7197 = vrot.slane %v7147, 1
      %v7198 = vsel %vm666, %v7196, %v7197
      %v7199 = vrot.slane %v7148, 1
      %v7200 = vsel %vm666, %v7197, %v7199
      %v7201 = vrot.slane %v7149, 1
      %v7202 = vrot.slane %v7150, 1
      %v7203 = vsel %vm666, %v7201, %v7202
      %v7204 = vrot.slane %v7151, 1
      %v7205 = vsel %vm666, %v7202, %v7204
      %v7206 = vrot.slane %v7152, 1
      %v7207 = vrot.slane %v7153, 1
      %v7208 = vsel %vm666, %v7206, %v7207
      %v7209 = vrot.slane %v7154, 1
      %v7210 = vsel %vm666, %v7207, %v7209
      %v7211 = vrot.slane %v7155, 1
      %v7212 = vrot.slane %v7156, 1
      %v7213 = vsel %vm666, %v7211, %v7212
      %v7214 = vrot.slane %v7157, 1
      %v7215 = vsel %vm666, %v7212, %v7214
      %v7216 = vrot.slane %v7158, 1
      %v7217 = vrot.slane %v7159, 1
      %v7218 = vsel %vm666, %v7216, %v7217
      %v7219 = vrot.slane %v7160, 1
      %v7220 = vsel %vm666, %v7217, %v7219
      %v7221 = vrot.slane %v7161, 1
      %v7222 = vrot.slane %v7162, 1
      %v7223 = vsel %vm666, %v7221, %v7222
      %v7224 = vrot.slane %v7163, 1
      %v7225 = vsel %vm666, %v7222, %v7224
      %v7226 = vrot.slane %v7164, 1
      %v7227 = vrot.slane %v7165, 1
      %v7228 = vsel %vm666, %v7226, %v7227
      %v7229 = vrot.slane %v7166, 1
      %v7230 = vsel %vm666, %v7227, %v7229
      %7231 = vrot.lane.b32.xlu0 %v7193, 4
      %v7232 = vpop.permute.xlu0 %7231
      %7233 = vrot.lane.b32.xlu0 %v7195, 4
      %v7234 = vpop.permute.xlu0 %7233
      %7235 = vrot.lane.b32.xlu0 %v7198, 4
      %v7236 = vpop.permute.xlu0 %7235
      %7237 = vrot.lane.b32.xlu0 %v7200, 4
      %v7238 = vpop.permute.xlu0 %7237
      %7239 = vrot.lane.b32.xlu0 %v7203, 4
      %v7240 = vpop.permute.xlu0 %7239
      %7241 = vrot.lane.b32.xlu0 %v7205, 4
      %v7242 = vpop.permute.xlu0 %7241
      %7243 = vrot.lane.b32.xlu0 %v7208, 4
      %v7244 = vpop.permute.xlu0 %7243
      %7245 = vrot.lane.b32.xlu0 %v7210, 4
      %v7246 = vpop.permute.xlu0 %7245
      %7247 = vrot.lane.b32.xlu0 %v7213, 4
      %v7248 = vpop.permute.xlu0 %7247
      %7249 = vrot.lane.b32.xlu0 %v7215, 4
      %v7250 = vpop.permute.xlu0 %7249
      %7251 = vrot.lane.b32.xlu0 %v7218, 4
      %v7252 = vpop.permute.xlu0 %7251
      %7253 = vrot.lane.b32.xlu0 %v7220, 4
      %v7254 = vpop.permute.xlu0 %7253
      %7255 = vrot.lane.b32.xlu0 %v7223, 4
      %v7256 = vpop.permute.xlu0 %7255
      %7257 = vrot.lane.b32.xlu0 %v7225, 4
      %v7258 = vpop.permute.xlu0 %7257
      %7259 = vrot.lane.b32.xlu0 %v7228, 4
      %v7260 = vpop.permute.xlu0 %7259
      %7261 = vrot.lane.b32.xlu0 %v7230, 4
      %v7262 = vpop.permute.xlu0 %7261
      %v7279 = vrot.slane %v7143, 2
      %v7280 = vrot.slane %v7144, 2
      %v7281 = vsel %vm755, %v7279, %v7280
      %v7282 = vrot.slane %v7145, 2
      %v7283 = vsel %vm755, %v7280, %v7282
      %v7284 = vrot.slane %v7146, 2
      %v7285 = vrot.slane %v7147, 2
      %v7286 = vsel %vm755, %v7284, %v7285
      %v7287 = vrot.slane %v7148, 2
      %v7288 = vsel %vm755, %v7285, %v7287
      %v7289 = vrot.slane %v7149, 2
      %v7290 = vrot.slane %v7150, 2
      %v7291 = vsel %vm755, %v7289, %v7290
      %v7292 = vrot.slane %v7151, 2
      %v7293 = vsel %vm755, %v7290, %v7292
      %v7294 = vrot.slane %v7152, 2
      %v7295 = vrot.slane %v7153, 2
      %v7296 = vsel %vm755, %v7294, %v7295
      %v7297 = vrot.slane %v7154, 2
      %v7298 = vsel %vm755, %v7295, %v7297
      %v7299 = vrot.slane %v7155, 2
      %v7300 = vrot.slane %v7156, 2
      %v7301 = vsel %vm755, %v7299, %v7300
      %v7302 = vrot.slane %v7157, 2
      %v7303 = vsel %vm755, %v7300, %v7302
      %v7304 = vrot.slane %v7158, 2
      %v7305 = vrot.slane %v7159, 2
      %v7306 = vsel %vm755, %v7304, %v7305
      %v7307 = vrot.slane %v7160, 2
      %v7308 = vsel %vm755, %v7305, %v7307
      %v7309 = vrot.slane %v7161, 2
      %v7310 = vrot.slane %v7162, 2
      %v7311 = vsel %vm755, %v7309, %v7310
      %v7312 = vrot.slane %v7163, 2
      %v7313 = vsel %vm755, %v7310, %v7312
      %v7314 = vrot.slane %v7164, 2
      %v7315 = vrot.slane %v7165, 2
      %v7316 = vsel %vm755, %v7314, %v7315
      %v7317 = vrot.slane %v7166, 2
      %v7318 = vsel %vm755, %v7315, %v7317
      %7319 = vrot.lane.b32.xlu0 %v7281, 8
      %v7320 = vpop.permute.xlu0 %7319
      %7321 = vrot.lane.b32.xlu0 %v7283, 8
      %v7322 = vpop.permute.xlu0 %7321
      %7323 = vrot.lane.b32.xlu0 %v7286, 8
      %v7324 = vpop.permute.xlu0 %7323
      %7325 = vrot.lane.b32.xlu0 %v7288, 8
      %v7326 = vpop.permute.xlu0 %7325
      %7327 = vrot.lane.b32.xlu0 %v7291, 8
      %v7328 = vpop.permute.xlu0 %7327
      %7329 = vrot.lane.b32.xlu0 %v7293, 8
      %v7330 = vpop.permute.xlu0 %7329
      %7331 = vrot.lane.b32.xlu0 %v7296, 8
      %v7332 = vpop.permute.xlu0 %7331
      %7333 = vrot.lane.b32.xlu0 %v7298, 8
      %v7334 = vpop.permute.xlu0 %7333
      %7335 = vrot.lane.b32.xlu0 %v7301, 8
      %v7336 = vpop.permute.xlu0 %7335
      %7337 = vrot.lane.b32.xlu0 %v7303, 8
      %v7338 = vpop.permute.xlu0 %7337
      %7339 = vrot.lane.b32.xlu0 %v7306, 8
      %v7340 = vpop.permute.xlu0 %7339
      %7341 = vrot.lane.b32.xlu0 %v7308, 8
      %v7342 = vpop.permute.xlu0 %7341
      %7343 = vrot.lane.b32.xlu0 %v7311, 8
      %v7344 = vpop.permute.xlu0 %7343
      %7345 = vrot.lane.b32.xlu0 %v7313, 8
      %v7346 = vpop.permute.xlu0 %7345
      %7347 = vrot.lane.b32.xlu0 %v7316, 8
      %v7348 = vpop.permute.xlu0 %7347
      %7349 = vrot.lane.b32.xlu0 %v7318, 8
      %v7350 = vpop.permute.xlu0 %7349
      %v7367 = vsel %vm339, %v7143, %v7232
      %v7368 = vsel %vm339, %v7144, %v7234
      %v7369 = vsel %vm339, %v7146, %v7236
      %v7370 = vsel %vm339, %v7147, %v7238
      %v7371 = vsel %vm339, %v7149, %v7240
      %v7372 = vsel %vm339, %v7150, %v7242
      %v7373 = vsel %vm339, %v7152, %v7244
      %v7374 = vsel %vm339, %v7153, %v7246
      %v7375 = vsel %vm339, %v7155, %v7248
      %v7376 = vsel %vm339, %v7156, %v7250
      %v7377 = vsel %vm339, %v7158, %v7252
      %v7378 = vsel %vm339, %v7159, %v7254
      %v7379 = vsel %vm339, %v7161, %v7256
      %v7380 = vsel %vm339, %v7162, %v7258
      %v7381 = vsel %vm339, %v7164, %v7260
      %v7382 = vsel %vm339, %v7165, %v7262
      %v7383 = vsel %vm860, %v7367, %v7320
      %v7384 = vsel %vm860, %v7368, %v7322
      %v7385 = vsel %vm860, %v7369, %v7324
      %v7386 = vsel %vm860, %v7370, %v7326
      %v7387 = vsel %vm860, %v7371, %v7328
      %v7388 = vsel %vm860, %v7372, %v7330
      %v7389 = vsel %vm860, %v7373, %v7332
      %v7390 = vsel %vm860, %v7374, %v7334
      %v7391 = vsel %vm860, %v7375, %v7336
      %v7392 = vsel %vm860, %v7376, %v7338
      %v7393 = vsel %vm860, %v7377, %v7340
      %v7394 = vsel %vm860, %v7378, %v7342
      %v7395 = vsel %vm860, %v7379, %v7344
      %v7396 = vsel %vm860, %v7380, %v7346
      %v7397 = vsel %vm860, %v7381, %v7348
      %v7398 = vsel %vm860, %v7382, %v7350
      %v7399 = vpack.c.bf16 %v7384, %v7383
      %v7400 = vpack.c.bf16 %v7386, %v7385
      %v7401 = vpack.c.bf16 %v7388, %v7387
      %v7402 = vpack.c.bf16 %v7390, %v7389
      %v7403 = vpack.c.bf16 %v7392, %v7391
      %v7404 = vpack.c.bf16 %v7394, %v7393
      %v7405 = vpack.c.bf16 %v7396, %v7395
      %v7406 = vpack.c.bf16 %v7398, %v7397
      %v7407 = vld [vmem:[%s2259] sm:$0xff]
      %v7408 = vld [vmem:[%s2259 + $0x8] sm:$0xff]
      %v7409 = vld [vmem:[%s2259 + $0x10] sm:$0x3]
      %v7410 = vld [vmem:[%s2259 + $0x18] sm:$0xff]
      %v7411 = vld [vmem:[%s2259 + $0x20] sm:$0xff]
      %v7412 = vld [vmem:[%s2259 + $0x28] sm:$0x3]
      %v7413 = vld [vmem:[%s2259 + $0x30] sm:$0xff]
      %v7414 = vld [vmem:[%s2259 + $0x38] sm:$0xff]
      %v7415 = vld [vmem:[%s2259 + $0x40] sm:$0x3]
      %v7416 = vld [vmem:[%s2259 + $0x48] sm:$0xff]
      %v7417 = vld [vmem:[%s2259 + $0x50] sm:$0xff]
      %v7418 = vld [vmem:[%s2259 + $0x58] sm:$0x3]
      %v7419 = vld [vmem:[%s2259 + $0x60] sm:$0xff]
      %v7420 = vld [vmem:[%s2259 + $0x68] sm:$0xff]
      %v7421 = vld [vmem:[%s2259 + $0x70] sm:$0x3]
      %v7422 = vld [vmem:[%s2259 + $0x78] sm:$0xff]
      %v7423 = vld [vmem:[%s2259 + $0x80] sm:$0xff]
      %v7424 = vld [vmem:[%s2259 + $0x88] sm:$0x3]
      %v7425 = vld [vmem:[%s2259 + $0x90] sm:$0xff]
      %v7426 = vld [vmem:[%s2259 + $0x98] sm:$0xff]
      %v7427 = vld [vmem:[%s2259 + $0xa0] sm:$0x3]
      %v7428 = vld [vmem:[%s2259 + $0xa8] sm:$0xff]
      %v7429 = vld [vmem:[%s2259 + $0xb0] sm:$0xff]
      %v7430 = vld [vmem:[%s2259 + $0xb8] sm:$0x3]
      %v7455 = vrot.slane %v7407, 1
      %v7456 = vrot.slane %v7408, 1
      %v7457 = vsel %vm666, %v7455, %v7456
      %v7458 = vrot.slane %v7409, 1
      %v7459 = vsel %vm666, %v7456, %v7458
      %v7460 = vrot.slane %v7410, 1
      %v7461 = vrot.slane %v7411, 1
      %v7462 = vsel %vm666, %v7460, %v7461
      %v7463 = vrot.slane %v7412, 1
      %v7464 = vsel %vm666, %v7461, %v7463
      %v7465 = vrot.slane %v7413, 1
      %v7466 = vrot.slane %v7414, 1
      %v7467 = vsel %vm666, %v7465, %v7466
      %v7468 = vrot.slane %v7415, 1
      %v7469 = vsel %vm666, %v7466, %v7468
      %v7470 = vrot.slane %v7416, 1
      %v7471 = vrot.slane %v7417, 1
      %v7472 = vsel %vm666, %v7470, %v7471
      %v7473 = vrot.slane %v7418, 1
      %v7474 = vsel %vm666, %v7471, %v7473
      %v7475 = vrot.slane %v7419, 1
      %v7476 = vrot.slane %v7420, 1
      %v7477 = vsel %vm666, %v7475, %v7476
      %v7478 = vrot.slane %v7421, 1
      %v7479 = vsel %vm666, %v7476, %v7478
      %v7480 = vrot.slane %v7422, 1
      %v7481 = vrot.slane %v7423, 1
      %v7482 = vsel %vm666, %v7480, %v7481
      %v7483 = vrot.slane %v7424, 1
      %v7484 = vsel %vm666, %v7481, %v7483
      %v7485 = vrot.slane %v7425, 1
      %v7486 = vrot.slane %v7426, 1
      %v7487 = vsel %vm666, %v7485, %v7486
      %v7488 = vrot.slane %v7427, 1
      %v7489 = vsel %vm666, %v7486, %v7488
      %v7490 = vrot.slane %v7428, 1
      %v7491 = vrot.slane %v7429, 1
      %v7492 = vsel %vm666, %v7490, %v7491
      %v7493 = vrot.slane %v7430, 1
      %v7494 = vsel %vm666, %v7491, %v7493
      %7495 = vrot.lane.b32.xlu0 %v7457, 4
      %v7496 = vpop.permute.xlu0 %7495
      %7497 = vrot.lane.b32.xlu0 %v7459, 4
      %v7498 = vpop.permute.xlu0 %7497
      %7499 = vrot.lane.b32.xlu0 %v7462, 4
      %v7500 = vpop.permute.xlu0 %7499
      %7501 = vrot.lane.b32.xlu0 %v7464, 4
      %v7502 = vpop.permute.xlu0 %7501
      %7503 = vrot.lane.b32.xlu0 %v7467, 4
      %v7504 = vpop.permute.xlu0 %7503
      %7505 = vrot.lane.b32.xlu0 %v7469, 4
      %v7506 = vpop.permute.xlu0 %7505
      %7507 = vrot.lane.b32.xlu0 %v7472, 4
      %v7508 = vpop.permute.xlu0 %7507
      %7509 = vrot.lane.b32.xlu0 %v7474, 4
      %v7510 = vpop.permute.xlu0 %7509
      %7511 = vrot.lane.b32.xlu0 %v7477, 4
      %v7512 = vpop.permute.xlu0 %7511
      %7513 = vrot.lane.b32.xlu0 %v7479, 4
      %v7514 = vpop.permute.xlu0 %7513
      %7515 = vrot.lane.b32.xlu0 %v7482, 4
      %v7516 = vpop.permute.xlu0 %7515
      %7517 = vrot.lane.b32.xlu0 %v7484, 4
      %v7518 = vpop.permute.xlu0 %7517
      %7519 = vrot.lane.b32.xlu0 %v7487, 4
      %v7520 = vpop.permute.xlu0 %7519
      %7521 = vrot.lane.b32.xlu0 %v7489, 4
      %v7522 = vpop.permute.xlu0 %7521
      %7523 = vrot.lane.b32.xlu0 %v7492, 4
      %v7524 = vpop.permute.xlu0 %7523
      %7525 = vrot.lane.b32.xlu0 %v7494, 4
      %v7526 = vpop.permute.xlu0 %7525
      %v7543 = vrot.slane %v7407, 2
      %v7544 = vrot.slane %v7408, 2
      %v7545 = vsel %vm755, %v7543, %v7544
      %v7546 = vrot.slane %v7409, 2
      %v7547 = vsel %vm755, %v7544, %v7546
      %v7548 = vrot.slane %v7410, 2
      %v7549 = vrot.slane %v7411, 2
      %v7550 = vsel %vm755, %v7548, %v7549
      %v7551 = vrot.slane %v7412, 2
      %v7552 = vsel %vm755, %v7549, %v7551
      %v7553 = vrot.slane %v7413, 2
      %v7554 = vrot.slane %v7414, 2
      %v7555 = vsel %vm755, %v7553, %v7554
      %v7556 = vrot.slane %v7415, 2
      %v7557 = vsel %vm755, %v7554, %v7556
      %v7558 = vrot.slane %v7416, 2
      %v7559 = vrot.slane %v7417, 2
      %v7560 = vsel %vm755, %v7558, %v7559
      %v7561 = vrot.slane %v7418, 2
      %v7562 = vsel %vm755, %v7559, %v7561
      %v7563 = vrot.slane %v7419, 2
      %v7564 = vrot.slane %v7420, 2
      %v7565 = vsel %vm755, %v7563, %v7564
      %v7566 = vrot.slane %v7421, 2
      %v7567 = vsel %vm755, %v7564, %v7566
      %v7568 = vrot.slane %v7422, 2
      %v7569 = vrot.slane %v7423, 2
      %v7570 = vsel %vm755, %v7568, %v7569
      %v7571 = vrot.slane %v7424, 2
      %v7572 = vsel %vm755, %v7569, %v7571
      %v7573 = vrot.slane %v7425, 2
      %v7574 = vrot.slane %v7426, 2
      %v7575 = vsel %vm755, %v7573, %v7574
      %v7576 = vrot.slane %v7427, 2
      %v7577 = vsel %vm755, %v7574, %v7576
      %v7578 = vrot.slane %v7428, 2
      %v7579 = vrot.slane %v7429, 2
      %v7580 = vsel %vm755, %v7578, %v7579
      %v7581 = vrot.slane %v7430, 2
      %v7582 = vsel %vm755, %v7579, %v7581
      %7583 = vrot.lane.b32.xlu0 %v7545, 8
      %v7584 = vpop.permute.xlu0 %7583
      %7585 = vrot.lane.b32.xlu0 %v7547, 8
      %v7586 = vpop.permute.xlu0 %7585
      %7587 = vrot.lane.b32.xlu0 %v7550, 8
      %v7588 = vpop.permute.xlu0 %7587
      %7589 = vrot.lane.b32.xlu0 %v7552, 8
      %v7590 = vpop.permute.xlu0 %7589
      %7591 = vrot.lane.b32.xlu0 %v7555, 8
      %v7592 = vpop.permute.xlu0 %7591
      %7593 = vrot.lane.b32.xlu0 %v7557, 8
      %v7594 = vpop.permute.xlu0 %7593
      %7595 = vrot.lane.b32.xlu0 %v7560, 8
      %v7596 = vpop.permute.xlu0 %7595
      %7597 = vrot.lane.b32.xlu0 %v7562, 8
      %v7598 = vpop.permute.xlu0 %7597
      %7599 = vrot.lane.b32.xlu0 %v7565, 8
      %v7600 = vpop.permute.xlu0 %7599
      %7601 = vrot.lane.b32.xlu0 %v7567, 8
      %v7602 = vpop.permute.xlu0 %7601
      %7603 = vrot.lane.b32.xlu0 %v7570, 8
      %v7604 = vpop.permute.xlu0 %7603
      %7605 = vrot.lane.b32.xlu0 %v7572, 8
      %v7606 = vpop.permute.xlu0 %7605
      %7607 = vrot.lane.b32.xlu0 %v7575, 8
      %v7608 = vpop.permute.xlu0 %7607
      %7609 = vrot.lane.b32.xlu0 %v7577, 8
      %v7610 = vpop.permute.xlu0 %7609
      %7611 = vrot.lane.b32.xlu0 %v7580, 8
      %v7612 = vpop.permute.xlu0 %7611
      %7613 = vrot.lane.b32.xlu0 %v7582, 8
      %v7614 = vpop.permute.xlu0 %7613
      %v7631 = vsel %vm339, %v7407, %v7496
      %v7632 = vsel %vm339, %v7408, %v7498
      %v7633 = vsel %vm339, %v7410, %v7500
      %v7634 = vsel %vm339, %v7411, %v7502
      %v7635 = vsel %vm339, %v7413, %v7504
      %v7636 = vsel %vm339, %v7414, %v7506
      %v7637 = vsel %vm339, %v7416, %v7508
      %v7638 = vsel %vm339, %v7417, %v7510
      %v7639 = vsel %vm339, %v7419, %v7512
      %v7640 = vsel %vm339, %v7420, %v7514
      %v7641 = vsel %vm339, %v7422, %v7516
      %v7642 = vsel %vm339, %v7423, %v7518
      %v7643 = vsel %vm339, %v7425, %v7520
      %v7644 = vsel %vm339, %v7426, %v7522
      %v7645 = vsel %vm339, %v7428, %v7524
      %v7646 = vsel %vm339, %v7429, %v7526
      %v7647 = vsel %vm860, %v7631, %v7584
      %v7648 = vsel %vm860, %v7632, %v7586
      %v7649 = vsel %vm860, %v7633, %v7588
      %v7650 = vsel %vm860, %v7634, %v7590
      %v7651 = vsel %vm860, %v7635, %v7592
      %v7652 = vsel %vm860, %v7636, %v7594
      %v7653 = vsel %vm860, %v7637, %v7596
      %v7654 = vsel %vm860, %v7638, %v7598
      %v7655 = vsel %vm860, %v7639, %v7600
      %v7656 = vsel %vm860, %v7640, %v7602
      %v7657 = vsel %vm860, %v7641, %v7604
      %v7658 = vsel %vm860, %v7642, %v7606
      %v7659 = vsel %vm860, %v7643, %v7608
      %v7660 = vsel %vm860, %v7644, %v7610
      %v7661 = vsel %vm860, %v7645, %v7612
      %v7662 = vsel %vm860, %v7646, %v7614
      %v7663 = vpack.c.bf16 %v7648, %v7647
      %v7664 = vpack.c.bf16 %v7650, %v7649
      %v7665 = vpack.c.bf16 %v7652, %v7651
      %v7666 = vpack.c.bf16 %v7654, %v7653
      %v7667 = vpack.c.bf16 %v7656, %v7655
      %v7668 = vpack.c.bf16 %v7658, %v7657
      %v7669 = vpack.c.bf16 %v7660, %v7659
      %v7670 = vpack.c.bf16 %v7662, %v7661
      %v7672 = vsel %vm1157, %v7663, 0
      %v7675 = vsel %vm1157, %v7664, 0
      %v7678 = vsel %vm1157, %v7665, 0
      %v7681 = vsel %vm1157, %v7666, 0
      %v7684 = vsel %vm1157, %v7667, 0
      %v7687 = vsel %vm1157, %v7668, 0
      %v7690 = vsel %vm1157, %v7669, 0
      %v7693 = vsel %vm1157, %v7670, 0
      %7695 = vmatpush.bf16.xpose.msra.mxu0 %v7693
      %7696 = vmatpush.bf16.xpose.msra.mxu0 %v7690
      %7697 = vmatpush.bf16.xpose.msra.mxu0 %v7687
      %7698 = vmatpush.bf16.xpose.msra.mxu0 %v7684
      %7699 = vmatpush.bf16.xpose.msra.mxu0 %v7681
      %7700 = vmatpush.bf16.xpose.msra.mxu0 %v7678
      %7701 = vmatpush.bf16.xpose.msra.mxu0 %v7675
      %7702 = vmatpush.bf16.xpose.msra.mxu0 %v7672
      %7703 = vmatmul.bf16.gmra.mxu0 %v6751
      %v7704 = vpop.f32.mrf.mxu0
      %v7705 = vadd.f32 0.0, %v7704
      %v7706 = vpop.f32.mrf.mxu0
      %7707 = vdwg.mxu0
      %v7709 = vsel %vm1157, %v7399, 0
      %v7712 = vsel %vm1157, %v7400, 0
      %v7715 = vsel %vm1157, %v7401, 0
      %v7718 = vsel %vm1157, %v7402, 0
      %v7721 = vsel %vm1157, %v7403, 0
      %v7724 = vsel %vm1157, %v7404, 0
      %v7727 = vsel %vm1157, %v7405, 0
      %v7730 = vsel %vm1157, %v7406, 0
      %7732 = vmatpush.bf16.xpose.msra.mxu0 %v7730
      %7733 = vmatpush.bf16.xpose.msra.mxu0 %v7727
      %7734 = vmatpush.bf16.xpose.msra.mxu0 %v7724
      %7735 = vmatpush.bf16.xpose.msra.mxu0 %v7721
      %7736 = vmatpush.bf16.xpose.msra.mxu0 %v7718
      %7737 = vmatpush.bf16.xpose.msra.mxu0 %v7715
      %7738 = vmatpush.bf16.xpose.msra.mxu0 %v7712
      %7739 = vmatpush.bf16.xpose.msra.mxu0 %v7709
      %7740 = vmatmul.bf16.gmra.mxu0 %v6791
      %v7741 = vpop.f32.mrf.mxu0
      %v7742 = vadd.f32 %v7705, %v7741
      %v7743 = vpop.f32.mrf.mxu0
      %7744 = vdwg.mxu0
      %v7745 = vld [vmem:[%s2768] sm:$0xff]
      %v7746 = vld [vmem:[%s2768 + $0x8] sm:$0xff]
      %v7747 = vld [vmem:[%s2768 + $0x10] sm:$0x3]
      %v7748 = vld [vmem:[%s2768 + $0x18] sm:$0xff]
      %v7749 = vld [vmem:[%s2768 + $0x20] sm:$0xff]
      %v7750 = vld [vmem:[%s2768 + $0x28] sm:$0x3]
      %v7751 = vld [vmem:[%s2768 + $0x30] sm:$0xff]
      %v7752 = vld [vmem:[%s2768 + $0x38] sm:$0xff]
      %v7753 = vld [vmem:[%s2768 + $0x40] sm:$0x3]
      %v7754 = vld [vmem:[%s2768 + $0x48] sm:$0xff]
      %v7755 = vld [vmem:[%s2768 + $0x50] sm:$0xff]
      %v7756 = vld [vmem:[%s2768 + $0x58] sm:$0x3]
      %v7757 = vld [vmem:[%s2768 + $0x60] sm:$0xff]
      %v7758 = vld [vmem:[%s2768 + $0x68] sm:$0xff]
      %v7759 = vld [vmem:[%s2768 + $0x70] sm:$0x3]
      %v7760 = vld [vmem:[%s2768 + $0x78] sm:$0xff]
      %v7761 = vld [vmem:[%s2768 + $0x80] sm:$0xff]
      %v7762 = vld [vmem:[%s2768 + $0x88] sm:$0x3]
      %v7763 = vld [vmem:[%s2768 + $0x90] sm:$0xff]
      %v7764 = vld [vmem:[%s2768 + $0x98] sm:$0xff]
      %v7765 = vld [vmem:[%s2768 + $0xa0] sm:$0x3]
      %v7766 = vld [vmem:[%s2768 + $0xa8] sm:$0xff]
      %v7767 = vld [vmem:[%s2768 + $0xb0] sm:$0xff]
      %v7768 = vld [vmem:[%s2768 + $0xb8] sm:$0x3]
      %v7793 = vrot.slane %v7745, 1
      %v7794 = vrot.slane %v7746, 1
      %v7795 = vsel %vm666, %v7793, %v7794
      %v7796 = vrot.slane %v7747, 1
      %v7797 = vsel %vm666, %v7794, %v7796
      %v7798 = vrot.slane %v7748, 1
      %v7799 = vrot.slane %v7749, 1
      %v7800 = vsel %vm666, %v7798, %v7799
      %v7801 = vrot.slane %v7750, 1
      %v7802 = vsel %vm666, %v7799, %v7801
      %v7803 = vrot.slane %v7751, 1
      %v7804 = vrot.slane %v7752, 1
      %v7805 = vsel %vm666, %v7803, %v7804
      %v7806 = vrot.slane %v7753, 1
      %v7807 = vsel %vm666, %v7804, %v7806
      %v7808 = vrot.slane %v7754, 1
      %v7809 = vrot.slane %v7755, 1
      %v7810 = vsel %vm666, %v7808, %v7809
      %v7811 = vrot.slane %v7756, 1
      %v7812 = vsel %vm666, %v7809, %v7811
      %v7813 = vrot.slane %v7757, 1
      %v7814 = vrot.slane %v7758, 1
      %v7815 = vsel %vm666, %v7813, %v7814
      %v7816 = vrot.slane %v7759, 1
      %v7817 = vsel %vm666, %v7814, %v7816
      %v7818 = vrot.slane %v7760, 1
      %v7819 = vrot.slane %v7761, 1
      %v7820 = vsel %vm666, %v7818, %v7819
      %v7821 = vrot.slane %v7762, 1
      %v7822 = vsel %vm666, %v7819, %v7821
      %v7823 = vrot.slane %v7763, 1
      %v7824 = vrot.slane %v7764, 1
      %v7825 = vsel %vm666, %v7823, %v7824
      %v7826 = vrot.slane %v7765, 1
      %v7827 = vsel %vm666, %v7824, %v7826
      %v7828 = vrot.slane %v7766, 1
      %v7829 = vrot.slane %v7767, 1
      %v7830 = vsel %vm666, %v7828, %v7829
      %v7831 = vrot.slane %v7768, 1
      %v7832 = vsel %vm666, %v7829, %v7831
      %7833 = vrot.lane.b32.xlu0 %v7795, 4
      %v7834 = vpop.permute.xlu0 %7833
      %7835 = vrot.lane.b32.xlu0 %v7797, 4
      %v7836 = vpop.permute.xlu0 %7835
      %7837 = vrot.lane.b32.xlu0 %v7800, 4
      %v7838 = vpop.permute.xlu0 %7837
      %7839 = vrot.lane.b32.xlu0 %v7802, 4
      %v7840 = vpop.permute.xlu0 %7839
      %7841 = vrot.lane.b32.xlu0 %v7805, 4
      %v7842 = vpop.permute.xlu0 %7841
      %7843 = vrot.lane.b32.xlu0 %v7807, 4
      %v7844 = vpop.permute.xlu0 %7843
      %7845 = vrot.lane.b32.xlu0 %v7810, 4
      %v7846 = vpop.permute.xlu0 %7845
      %7847 = vrot.lane.b32.xlu0 %v7812, 4
      %v7848 = vpop.permute.xlu0 %7847
      %7849 = vrot.lane.b32.xlu0 %v7815, 4
      %v7850 = vpop.permute.xlu0 %7849
      %7851 = vrot.lane.b32.xlu0 %v7817, 4
      %v7852 = vpop.permute.xlu0 %7851
      %7853 = vrot.lane.b32.xlu0 %v7820, 4
      %v7854 = vpop.permute.xlu0 %7853
      %7855 = vrot.lane.b32.xlu0 %v7822, 4
      %v7856 = vpop.permute.xlu0 %7855
      %7857 = vrot.lane.b32.xlu0 %v7825, 4
      %v7858 = vpop.permute.xlu0 %7857
      %7859 = vrot.lane.b32.xlu0 %v7827, 4
      %v7860 = vpop.permute.xlu0 %7859
      %7861 = vrot.lane.b32.xlu0 %v7830, 4
      %v7862 = vpop.permute.xlu0 %7861
      %7863 = vrot.lane.b32.xlu0 %v7832, 4
      %v7864 = vpop.permute.xlu0 %7863
      %v7881 = vrot.slane %v7745, 2
      %v7882 = vrot.slane %v7746, 2
      %v7883 = vsel %vm755, %v7881, %v7882
      %v7884 = vrot.slane %v7747, 2
      %v7885 = vsel %vm755, %v7882, %v7884
      %v7886 = vrot.slane %v7748, 2
      %v7887 = vrot.slane %v7749, 2
      %v7888 = vsel %vm755, %v7886, %v7887
      %v7889 = vrot.slane %v7750, 2
      %v7890 = vsel %vm755, %v7887, %v7889
      %v7891 = vrot.slane %v7751, 2
      %v7892 = vrot.slane %v7752, 2
      %v7893 = vsel %vm755, %v7891, %v7892
      %v7894 = vrot.slane %v7753, 2
      %v7895 = vsel %vm755, %v7892, %v7894
      %v7896 = vrot.slane %v7754, 2
      %v7897 = vrot.slane %v7755, 2
      %v7898 = vsel %vm755, %v7896, %v7897
      %v7899 = vrot.slane %v7756, 2
      %v7900 = vsel %vm755, %v7897, %v7899
      %v7901 = vrot.slane %v7757, 2
      %v7902 = vrot.slane %v7758, 2
      %v7903 = vsel %vm755, %v7901, %v7902
      %v7904 = vrot.slane %v7759, 2
      %v7905 = vsel %vm755, %v7902, %v7904
      %v7906 = vrot.slane %v7760, 2
      %v7907 = vrot.slane %v7761, 2
      %v7908 = vsel %vm755, %v7906, %v7907
      %v7909 = vrot.slane %v7762, 2
      %v7910 = vsel %vm755, %v7907, %v7909
      %v7911 = vrot.slane %v7763, 2
      %v7912 = vrot.slane %v7764, 2
      %v7913 = vsel %vm755, %v7911, %v7912
      %v7914 = vrot.slane %v7765, 2
      %v7915 = vsel %vm755, %v7912, %v7914
      %v7916 = vrot.slane %v7766, 2
      %v7917 = vrot.slane %v7767, 2
      %v7918 = vsel %vm755, %v7916, %v7917
      %v7919 = vrot.slane %v7768, 2
      %v7920 = vsel %vm755, %v7917, %v7919
      %7921 = vrot.lane.b32.xlu0 %v7883, 8
      %v7922 = vpop.permute.xlu0 %7921
      %7923 = vrot.lane.b32.xlu0 %v7885, 8
      %v7924 = vpop.permute.xlu0 %7923
      %7925 = vrot.lane.b32.xlu0 %v7888, 8
      %v7926 = vpop.permute.xlu0 %7925
      %7927 = vrot.lane.b32.xlu0 %v7890, 8
      %v7928 = vpop.permute.xlu0 %7927
      %7929 = vrot.lane.b32.xlu0 %v7893, 8
      %v7930 = vpop.permute.xlu0 %7929
      %7931 = vrot.lane.b32.xlu0 %v7895, 8
      %v7932 = vpop.permute.xlu0 %7931
      %7933 = vrot.lane.b32.xlu0 %v7898, 8
      %v7934 = vpop.permute.xlu0 %7933
      %7935 = vrot.lane.b32.xlu0 %v7900, 8
      %v7936 = vpop.permute.xlu0 %7935
      %7937 = vrot.lane.b32.xlu0 %v7903, 8
      %v7938 = vpop.permute.xlu0 %7937
      %7939 = vrot.lane.b32.xlu0 %v7905, 8
      %v7940 = vpop.permute.xlu0 %7939
      %7941 = vrot.lane.b32.xlu0 %v7908, 8
      %v7942 = vpop.permute.xlu0 %7941
      %7943 = vrot.lane.b32.xlu0 %v7910, 8
      %v7944 = vpop.permute.xlu0 %7943
      %7945 = vrot.lane.b32.xlu0 %v7913, 8
      %v7946 = vpop.permute.xlu0 %7945
      %7947 = vrot.lane.b32.xlu0 %v7915, 8
      %v7948 = vpop.permute.xlu0 %7947
      %7949 = vrot.lane.b32.xlu0 %v7918, 8
      %v7950 = vpop.permute.xlu0 %7949
      %7951 = vrot.lane.b32.xlu0 %v7920, 8
      %v7952 = vpop.permute.xlu0 %7951
      %v7969 = vsel %vm339, %v7745, %v7834
      %v7970 = vsel %vm339, %v7746, %v7836
      %v7971 = vsel %vm339, %v7748, %v7838
      %v7972 = vsel %vm339, %v7749, %v7840
      %v7973 = vsel %vm339, %v7751, %v7842
      %v7974 = vsel %vm339, %v7752, %v7844
      %v7975 = vsel %vm339, %v7754, %v7846
      %v7976 = vsel %vm339, %v7755, %v7848
      %v7977 = vsel %vm339, %v7757, %v7850
      %v7978 = vsel %vm339, %v7758, %v7852
      %v7979 = vsel %vm339, %v7760, %v7854
      %v7980 = vsel %vm339, %v7761, %v7856
      %v7981 = vsel %vm339, %v7763, %v7858
      %v7982 = vsel %vm339, %v7764, %v7860
      %v7983 = vsel %vm339, %v7766, %v7862
      %v7984 = vsel %vm339, %v7767, %v7864
      %v7985 = vsel %vm860, %v7969, %v7922
      %v7986 = vsel %vm860, %v7970, %v7924
      %v7987 = vsel %vm860, %v7971, %v7926
      %v7988 = vsel %vm860, %v7972, %v7928
      %v7989 = vsel %vm860, %v7973, %v7930
      %v7990 = vsel %vm860, %v7974, %v7932
      %v7991 = vsel %vm860, %v7975, %v7934
      %v7992 = vsel %vm860, %v7976, %v7936
      %v7993 = vsel %vm860, %v7977, %v7938
      %v7994 = vsel %vm860, %v7978, %v7940
      %v7995 = vsel %vm860, %v7979, %v7942
      %v7996 = vsel %vm860, %v7980, %v7944
      %v7997 = vsel %vm860, %v7981, %v7946
      %v7998 = vsel %vm860, %v7982, %v7948
      %v7999 = vsel %vm860, %v7983, %v7950
      %v8000 = vsel %vm860, %v7984, %v7952
      %v8001 = vpack.c.bf16 %v7986, %v7985
      %v8002 = vpack.c.bf16 %v7988, %v7987
      %v8003 = vpack.c.bf16 %v7990, %v7989
      %v8004 = vpack.c.bf16 %v7992, %v7991
      %v8005 = vpack.c.bf16 %v7994, %v7993
      %v8006 = vpack.c.bf16 %v7996, %v7995
      %v8007 = vpack.c.bf16 %v7998, %v7997
      %v8008 = vpack.c.bf16 %v8000, %v7999
      %v8010 = vsel %vm1157, %v8001, 0
      %v8013 = vsel %vm1157, %v8002, 0
      %v8016 = vsel %vm1157, %v8003, 0
      %v8019 = vsel %vm1157, %v8004, 0
      %v8022 = vsel %vm1157, %v8005, 0
      %v8025 = vsel %vm1157, %v8006, 0
      %v8028 = vsel %vm1157, %v8007, 0
      %v8031 = vsel %vm1157, %v8008, 0
      %8033 = vmatpush.bf16.xpose.msra.mxu0 %v8031
      %8034 = vmatpush.bf16.xpose.msra.mxu0 %v8028
      %8035 = vmatpush.bf16.xpose.msra.mxu0 %v8025
      %8036 = vmatpush.bf16.xpose.msra.mxu0 %v8022
      %8037 = vmatpush.bf16.xpose.msra.mxu0 %v8019
      %8038 = vmatpush.bf16.xpose.msra.mxu0 %v8016
      %8039 = vmatpush.bf16.xpose.msra.mxu0 %v8013
      %8040 = vmatpush.bf16.xpose.msra.mxu0 %v8010
      %8041 = vmatmul.bf16.gmra.mxu0 %v7095
      %v8042 = vpop.f32.mrf.mxu0
      %v8043 = vadd.f32 0.0, %v8042
      %v8044 = vpop.f32.mrf.mxu0
      %8045 = vdwg.mxu0
      %v8046 = vadd.f32 %v7742, %v8043
      %v8047 = vadd.f32 %v8046, %v7138
      %v8048 = vmax.f32 %v8047, 0.0
      %8049 = vst [vmem:[%s305 + $0x4] sm:$0xf] %v8048
      %p8050 = scmp.lt.s32.totalorder %s19, 1
      %s8051 = scalar_select %p8050, %s19, 1
      %s8052 = smul.addr %s8051, 2
      %s8053 = smul.addr %s8052, 4
      %s8054 = scalar_lea.vmem %s8, %s8053
      // Predicated region
      $region53: #{pool_cross_forward.1} parent=51 // pred_check
        %p8055 = pneg %p210
      $region54: #{pool_cross_forward.1} parent=51 // pred_check_branch
        %8057 = sbr.rel (%p8055) target = $region56
      $region55: #{pool_cross_forward.1} parent=51 // pred_region
        _
      $region56: #{pool_cross_forward.1} parent=51 // pred_fallthru
        _
    $region52: #{pool_cross_forward.1} parent=5 // pred_fallthru
      _
    %p8058 = scmp.le.s32.totalorder 2, %s14
    // Predicated region
    $region57: #{pool_cross_forward.1} parent=5 // pred_check
      %p8059 = pneg %p8058
    $region58: #{pool_cross_forward.1} parent=5 // pred_check_branch
      %8061 = sbr.rel (%p8059) target = $region60
    $region59: #{pool_cross_forward.1} parent=5 // pred_region
      %s8062 = ssub.s32 %s14, 2
      // Predicated region
      $region61: #{pool_cross_forward.1} parent=59 // pred_check
        %p8063 = pneg %p216
      $region62: #{pool_cross_forward.1} parent=59 // pred_check_branch
        %8065 = sbr.rel (%p8063) target = $region64
      $region63: #{pool_cross_forward.1} parent=59 // pred_region
        %p8066 = scmp.lt.s32.totalorder %s20, 1
        %s8067 = scalar_select %p8066, %s20, 1
        %s8068 = smul.addr %s8067, 2
        %s8069 = smul.addr %s8068, 4
        %s8070 = scalar_lea.vmem %s8, %s8069
      $region64: #{pool_cross_forward.1} parent=59 // pred_fallthru
        _
    $region60: #{pool_cross_forward.1} parent=5 // pred_fallthru
      _
  $region6: #{pool_cross_forward.1} parent=0 // loop_footer
    %s18 = sadd.s32 1, %s14
  $region7: #{pool_cross_forward.1} parent=0 // loop_footer_branch
    %13 = sbr.rel target = $region3
  $region8: #{pool_cross_forward.1} parent=0 // loop_exit
    _

</llo_original>
